<compile_context>
chip_gen: v7x
topology: tpu7x:2x2x1
jax: 0.10.0
libtpu: 0.0.40
codegen_flags: <defaults>
</compile_context>

<pallas_src>
import jax
import jax.numpy as jnp
from jax.experimental import pallas as pl
from jax.experimental.pallas import tpu as pltpu


# -----------------------------------------------------------------------------
# Pallas kernels
# -----------------------------------------------------------------------------
def _mm_bias_relu_kernel(a_ref, w_ref, b_ref, o_ref):
    """o = relu(a @ w + b); bf16 operands, f32 MXU accumulation."""
    acc = jnp.dot(a_ref[...], w_ref[...], preferred_element_type=jnp.float32)
    o_ref[...] = jnp.maximum(acc + b_ref[...], 0.0).astype(o_ref.dtype)


def _fc_fused_kernel(h_ref, x2_ref, w1a_ref, w1b_ref, b1_ref, w2_ref, b2_ref,
                     o_ref):
    """Fused fc1 (split weights, no concat) + ReLU + fc2 (N=1, on VPU/XLU)."""
    # conv-feature part of fc1 on the MXU (bf16 in, f32 acc)
    acc = jnp.dot(h_ref[...], w1a_ref[...], preferred_element_type=jnp.float32)
    # x2 part of fc1: 3 rank-1 updates on the VPU (avoids a K=3 matmul)
    x2v = x2_ref[...]                 # (B, 3)  f32
    w1b = w1b_ref[...]                # (3, 128) f32
    for t in range(3):
        acc = acc + x2v[:, t:t + 1] * w1b[t:t + 1, :]
    h1 = jnp.maximum(acc + b1_ref[...], 0.0)            # (B, 128) f32
    # fc2 is a degenerate N=1 matmul: VPU multiply + lane reduction
    o_ref[...] = jnp.sum(h1 * w2_ref[...], axis=1, keepdims=True) + b2_ref[...]


# -----------------------------------------------------------------------------
# Wrappers
# -----------------------------------------------------------------------------
def _pick_tm(m, max_tm=1024):
    """Largest row tile <= max_tm that is a multiple of 8 and divides m."""
    for t in range(min(m, max_tm), 7, -1):
        if t % 8 == 0 and m % t == 0:
            return t
    return m  # fall back to a single full-extent block


def matmul_bias_relu(a, w, b, out_dtype=jnp.bfloat16):
    """a: (M, K) bf16, w: (K, N) bf16, b: (1, N) f32 -> relu(a @ w + b)."""
    M, K = a.shape
    N = w.shape[1]
    tm = _pick_tm(M)
    grid = (M // tm,)
    return pl.pallas_call(
        _mm_bias_relu_kernel,
        out_shape=jax.ShapeDtypeStruct((M, N), out_dtype),
        grid=grid,
        in_specs=[
            pl.BlockSpec((tm, K), lambda i: (i, 0)),
            pl.BlockSpec((K, N), lambda i: (0, 0)),   # resident across grid
            pl.BlockSpec((1, N), lambda i: (0, 0)),
        ],
        out_specs=pl.BlockSpec((tm, N), lambda i: (i, 0)),
        compiler_params=pltpu.CompilerParams(
            dimension_semantics=("parallel",)),
    )(a, w, b)


def _im2col_nhwc(x, k, stride, pad):
    """x: (B, H, W, C) -> (B*Ho*Wo, k*k*C), columns in (kh, kw, C) order."""
    B, H, W, C = x.shape
    Ho = (H + 2 * pad - k) // stride + 1
    Wo = (W + 2 * pad - k) // stride + 1
    xp = jnp.pad(x, ((0, 0), (pad, pad), (pad, pad), (0, 0)))
    cols = [xp[:, i:i + stride * Ho:stride, j:j + stride * Wo:stride, :]
            for i in range(k) for j in range(k)]
    patches = jnp.stack(cols, axis=3)                 # (B, Ho, Wo, k*k, C)
    return patches.reshape(B * Ho * Wo, k * k * C), Ho, Wo


def conv2d_relu(x, w_mat, b, *, k=5, stride=2, pad=2):
    """x: (B, H, W, Cin) NHWC bf16; w_mat: (k*k*Cin, Cout) bf16; b: (1, Cout)."""
    B = x.shape[0]
    Cout = w_mat.shape[1]
    patches, Ho, Wo = _im2col_nhwc(x, k, stride, pad)
    out = matmul_bias_relu(patches, w_mat, b)         # (B*Ho*Wo, Cout) bf16
    return out.reshape(B, Ho, Wo, Cout)


def fc_fused(h, x2, p):
    """h: (B, 6400) bf16 (NHWC flatten), x2: (B, 3) f32 -> (B, 1) f32."""
    B = h.shape[0]
    return pl.pallas_call(
        _fc_fused_kernel,
        out_shape=jax.ShapeDtypeStruct((B, 1), jnp.float32),
        in_specs=[
            pl.BlockSpec(h.shape, lambda: (0, 0)),
            pl.BlockSpec(x2.shape, lambda: (0, 0)),
            pl.BlockSpec(p["wf1a"].shape, lambda: (0, 0)),
            pl.BlockSpec(p["wf1b"].shape, lambda: (0, 0)),
            pl.BlockSpec(p["bf1"].shape, lambda: (0, 0)),
            pl.BlockSpec(p["wf2"].shape, lambda: (0, 0)),
            pl.BlockSpec(p["bf2"].shape, lambda: (0, 0)),
        ],
        out_specs=pl.BlockSpec((B, 1), lambda: (0, 0)),
    )(h, x2, p["wf1a"], p["wf1b"], p["bf1"], p["wf2"], p["bf2"])


# -----------------------------------------------------------------------------
# Parameters: PyTorch-layout init + one-time packing for the Pallas path
# -----------------------------------------------------------------------------
def _init_params(key):
    """Deterministic PyTorch-default-style uniform(-1/sqrt(fan_in)) params."""
    def u(key, shape, fan_in):
        bound = 1.0 / jnp.sqrt(float(fan_in))
        return jax.random.uniform(key, shape, jnp.float32, -bound, bound)

    ks = jax.random.split(key, 10)
    p = {}
    p["w1"] = u(ks[0], (16, 3, 5, 5), 3 * 25)
    p["b1"] = u(ks[1], (16,), 3 * 25)
    p["w2"] = u(ks[2], (32, 16, 5, 5), 16 * 25)
    p["b2"] = u(ks[3], (32,), 16 * 25)
    p["w3"] = u(ks[4], (64, 32, 5, 5), 32 * 25)
    p["b3"] = u(ks[5], (64,), 32 * 25)
    p["wf1"] = u(ks[6], (10 * 10 * 64 + 3, 100), 10 * 10 * 64 + 3)  # (K, N)
    p["bf1"] = u(ks[7], (100,), 10 * 10 * 64 + 3)
    p["wf2"] = u(ks[8], (100, 1), 100)
    p["bf2"] = u(ks[9], (1,), 100)
    return p


def prepare_params(p):
    """One-time weight packing (NOT in the per-step path):
    conv weights -> (k*k*Cin, Cout) bf16 matching the NHWC im2col column order;
    fc1 split into conv-feature / x2 blocks with the torch NCHW flatten order
    folded into a row permutation; 128-lane padding of fc weights/bias."""
    q = {}
    for i, (wk, bk) in enumerate([("w1", "b1"), ("w2", "b2"), ("w3", "b3")], 1):
        w = p[wk]                                               # (Cout,Cin,5,5)
        w_mat = w.transpose(2, 3, 1, 0).reshape(-1, w.shape[0]) # (k*k*Cin,Cout)
        q[f"cw{i}"] = w_mat.astype(jnp.bfloat16)
        q[f"cb{i}"] = p[bk].reshape(1, -1).astype(jnp.float32)

    # perm[h*640 + w*64 + c] = c*100 + h*10 + w   (NHWC position -> NCHW row)
    perm = jnp.arange(6400).reshape(64, 10, 10).transpose(1, 2, 0).reshape(-1)
    wf1a = p["wf1"][:6400][perm]                                # (6400, 100)
    wf1b = p["wf1"][6400:]                                      # (3, 100)
    q["wf1a"] = jnp.zeros((6400, 128), jnp.bfloat16).at[:, :100].set(
        wf1a.astype(jnp.bfloat16))
    q["wf1b"] = jnp.zeros((3, 128), jnp.float32).at[:, :100].set(wf1b)
    q["bf1"] = jnp.zeros((1, 128), jnp.float32).at[0, :100].set(p["bf1"])
    q["wf2"] = jnp.zeros((1, 128), jnp.float32).at[0, :100].set(p["wf2"][:, 0])
    q["bf2"] = p["bf2"].reshape(1, 1).astype(jnp.float32)
    return q


# -----------------------------------------------------------------------------
# Full forward (Pallas path)
# -----------------------------------------------------------------------------
def cnn_critic_forward(packed, x1, x2):
    """x1: (B, 3, 80, 80) NCHW (PyTorch interface), x2: (B, 3) -> (B, 1)."""
    B = x1.shape[0]
    x = x1.transpose(0, 2, 3, 1).astype(jnp.bfloat16)    # one-time NCHW->NHWC
    h = conv2d_relu(x, packed["cw1"], packed["cb1"])     # (B, 40, 40, 16)
    h = conv2d_relu(h, packed["cw2"], packed["cb2"])     # (B, 20, 20, 32)
    h = conv2d_relu(h, packed["cw3"], packed["cb3"])     # (B, 10, 10, 64)
    h = h.reshape(B, 6400)            # NHWC flatten (perm folded into wf1a)
    return fc_fused(h, x2.astype(jnp.float32), packed)   # (B, 1) f32


# -----------------------------------------------------------------------------
# Pure-JAX f32 reference (exact PyTorch semantics, NCHW + concat)
# -----------------------------------------------------------------------------
def cnn_critic_reference(params, x1, x2):
    def conv(x, w, b):
        y = jax.lax.conv_general_dilated(
            x, w, window_strides=(2, 2), padding=((2, 2), (2, 2)),
            dimension_numbers=("NCHW", "OIHW", "NCHW"))
        return jnp.maximum(y + b[None, :, None, None], 0.0)

    B = x1.shape[0]
    h = conv(x1, params["w1"], params["b1"])
    h = conv(h, params["w2"], params["b2"])
    h = conv(h, params["w3"], params["b3"])
    h = h.reshape(B, -1)
    h = jnp.concatenate([h, x2], axis=1)
    h = jnp.maximum(h @ params["wf1"] + params["bf1"], 0.0)
    return h @ params["wf2"] + params["bf2"]


if __name__ == "__main__":
    key = jax.random.PRNGKey(0)
    kp, kx1, kx2 = jax.random.split(key, 3)
    params = _init_params(kp)
    packed = prepare_params(params)   # one-time packing, outside per-step path

    # Input spatial size 80x80 is implied by fc1.in_features = 10*10*64 + 3.
    x1 = jax.random.normal(kx1, (2, 3, 80, 80), jnp.float32)
    x2 = jax.random.normal(kx2, (2, 3), jnp.float32)

    fwd = jax.jit(cnn_critic_forward)
    out = jax.block_until_ready(fwd(packed, x1, x2))

    ref = cnn_critic_reference(params, x1, x2)
    assert out.shape == (2, 1), out.shape
    # bf16 operands (f32 accumulation) -> loosened tolerance vs. f32 reference
    assert jnp.allclose(out, ref, atol=1e-2, rtol=1e-2), (out, ref)

    print("KERNEL_OK")
</pallas_src>

<mosaic_0001>
module attributes {stable_mosaic.version = 11 : i64} {
  func.func @_mm_bias_relu_kernel(%arg0: i32, %arg1: memref<800x75xbf16, #tpu.memory_space<vmem>>, %arg2: memref<75x16xbf16, #tpu.memory_space<vmem>>, %arg3: memref<1x16xf32, #tpu.memory_space<vmem>>, %arg4: memref<800x16xbf16, #tpu.memory_space<vmem>>) attributes {dimension_semantics = [#tpu.dimension_semantics<parallel>], iteration_bounds = array<i64: 4>, scalar_prefetch = 0 : i64, scratch_operands = 0 : i64, tpu.core_type = #tpu.core_type<tc>, window_params = [{transform_indices = @transform_0, window_bounds = array<i64: 800, 75>}, {pipeline_mode = #tpu.pipeline_mode<synchronous>, transform_indices = @transform_1, window_bounds = array<i64: 75, 16>}, {pipeline_mode = #tpu.pipeline_mode<synchronous>, transform_indices = @transform_2, window_bounds = array<i64: 1, 16>}, {transform_indices = @transform_3, window_bounds = array<i64: 800, 16>}]} {
    %c0 = arith.constant 0 : index
    %c0_0 = arith.constant 0 : index
    %0 = vector.load %arg1[%c0, %c0_0] : memref<800x75xbf16, #tpu.memory_space<vmem>>, vector<800x75xbf16>
    %c0_1 = arith.constant 0 : index
    %c0_2 = arith.constant 0 : index
    %1 = vector.load %arg2[%c0_1, %c0_2] : memref<75x16xbf16, #tpu.memory_space<vmem>>, vector<75x16xbf16>
    %cst = arith.constant dense<0.000000e+00> : vector<800x16xf32>
    %2 = tpu.matmul %0, %1, %cst {dimension_numbers = #tpu.dot_dimension_numbers<[1], [0], [0], [1], [0, 0, 1, 1], [], []>} : vector<800x75xbf16>, vector<75x16xbf16>, vector<800x16xf32> -> vector<800x16xf32>
    %c0_3 = arith.constant 0 : index
    %c0_4 = arith.constant 0 : index
    %3 = vector.load %arg3[%c0_3, %c0_4] : memref<1x16xf32, #tpu.memory_space<vmem>>, vector<1x16xf32>
    %4 = vector.broadcast %3 : vector<1x16xf32> to vector<800x16xf32>
    %5 = arith.addf %2, %4 : vector<800x16xf32>
    %cst_5 = arith.constant 0.000000e+00 : f32
    %6 = vector.broadcast %cst_5 : f32 to vector<800x16xf32>
    %7 = arith.maximumf %5, %6 : vector<800x16xf32>
    %8 = arith.truncf %7 : vector<800x16xf32> to vector<800x16xbf16>
    %c0_6 = arith.constant 0 : index
    %c0_7 = arith.constant 0 : index
    %9 = vector.load %arg4[%c0_6, %c0_7] : memref<800x16xbf16, #tpu.memory_space<vmem>>, vector<800x16xbf16>
    tpu.vector_store %arg4[%c0_6, %c0_7], %8 {strides = array<i32>} : memref<800x16xbf16, #tpu.memory_space<vmem>>, vector<800x16xbf16>,
    return
  }
  func.func @transform_0(%arg0: i32) -> (i32, i32) {
    %c0_i32 = arith.constant 0 : i32
    %c0_i32_0 = arith.constant 0 : i32
    return %arg0, %c0_i32 : i32, i32
  }
  func.func @transform_1(%arg0: i32) -> (i32, i32) {
    %c0_i32 = arith.constant 0 : i32
    %c0_i32_0 = arith.constant 0 : i32
    %c0_i32_1 = arith.constant 0 : i32
    return %c0_i32, %c0_i32_0 : i32, i32
  }
  func.func @transform_2(%arg0: i32) -> (i32, i32) {
    %c0_i32 = arith.constant 0 : i32
    %c0_i32_0 = arith.constant 0 : i32
    %c0_i32_1 = arith.constant 0 : i32
    return %c0_i32, %c0_i32_0 : i32, i32
  }
  func.func @transform_3(%arg0: i32) -> (i32, i32) {
    %c0_i32 = arith.constant 0 : i32
    %c0_i32_0 = arith.constant 0 : i32
    return %arg0, %c0_i32 : i32, i32
  }
}

module attributes {stable_mosaic.version = 11 : i64} {
  func.func @_mm_bias_relu_kernel(%arg0: i32, %arg1: memref<800x400xbf16, #tpu.memory_space<vmem>>, %arg2: memref<400x32xbf16, #tpu.memory_space<vmem>>, %arg3: memref<1x32xf32, #tpu.memory_space<vmem>>, %arg4: memref<800x32xbf16, #tpu.memory_space<vmem>>) attributes {dimension_semantics = [#tpu.dimension_semantics<parallel>], iteration_bounds = array<i64: 1>, scalar_prefetch = 0 : i64, scratch_operands = 0 : i64, tpu.core_type = #tpu.core_type<tc>, window_params = [{transform_indices = @transform_0, window_bounds = array<i64: 800, 400>}, {pipeline_mode = #tpu.pipeline_mode<synchronous>, transform_indices = @transform_1, window_bounds = array<i64: 400, 32>}, {pipeline_mode = #tpu.pipeline_mode<synchronous>, transform_indices = @transform_2, window_bounds = array<i64: 1, 32>}, {transform_indices = @transform_3, window_bounds = array<i64: 800, 32>}]} {
    %c0 = arith.constant 0 : index
    %c0_0 = arith.constant 0 : index
    %0 = vector.load %arg1[%c0, %c0_0] : memref<800x400xbf16, #tpu.memory_space<vmem>>, vector<800x400xbf16>
    %c0_1 = arith.constant 0 : index
    %c0_2 = arith.constant 0 : index
    %1 = vector.load %arg2[%c0_1, %c0_2] : memref<400x32xbf16, #tpu.memory_space<vmem>>, vector<400x32xbf16>
    %cst = arith.constant dense<0.000000e+00> : vector<800x32xf32>
    %2 = tpu.matmul %0, %1, %cst {dimension_numbers = #tpu.dot_dimension_numbers<[1], [0], [0], [1], [0, 0, 1, 1], [], []>} : vector<800x400xbf16>, vector<400x32xbf16>, vector<800x32xf32> -> vector<800x32xf32>
    %c0_3 = arith.constant 0 : index
    %c0_4 = arith.constant 0 : index
    %3 = vector.load %arg3[%c0_3, %c0_4] : memref<1x32xf32, #tpu.memory_space<vmem>>, vector<1x32xf32>
    %4 = vector.broadcast %3 : vector<1x32xf32> to vector<800x32xf32>
    %5 = arith.addf %2, %4 : vector<800x32xf32>
    %cst_5 = arith.constant 0.000000e+00 : f32
    %6 = vector.broadcast %cst_5 : f32 to vector<800x32xf32>
    %7 = arith.maximumf %5, %6 : vector<800x32xf32>
    %8 = arith.truncf %7 : vector<800x32xf32> to vector<800x32xbf16>
    %c0_6 = arith.constant 0 : index
    %c0_7 = arith.constant 0 : index
    %9 = vector.load %arg4[%c0_6, %c0_7] : memref<800x32xbf16, #tpu.memory_space<vmem>>, vector<800x32xbf16>
    tpu.vector_store %arg4[%c0_6, %c0_7], %8 {strides = array<i32>} : memref<800x32xbf16, #tpu.memory_space<vmem>>, vector<800x32xbf16>,
    return
  }
  func.func @transform_0(%arg0: i32) -> (i32, i32) {
    %c0_i32 = arith.constant 0 : i32
    %c0_i32_0 = arith.constant 0 : i32
    return %arg0, %c0_i32 : i32, i32
  }
  func.func @transform_1(%arg0: i32) -> (i32, i32) {
    %c0_i32 = arith.constant 0 : i32
    %c0_i32_0 = arith.constant 0 : i32
    %c0_i32_1 = arith.constant 0 : i32
    return %c0_i32, %c0_i32_0 : i32, i32
  }
  func.func @transform_2(%arg0: i32) -> (i32, i32) {
    %c0_i32 = arith.constant 0 : i32
    %c0_i32_0 = arith.constant 0 : i32
    %c0_i32_1 = arith.constant 0 : i32
    return %c0_i32, %c0_i32_0 : i32, i32
  }
  func.func @transform_3(%arg0: i32) -> (i32, i32) {
    %c0_i32 = arith.constant 0 : i32
    %c0_i32_0 = arith.constant 0 : i32
    return %arg0, %c0_i32 : i32, i32
  }
}

module attributes {stable_mosaic.version = 11 : i64} {
  func.func @_mm_bias_relu_kernel(%arg0: i32, %arg1: memref<200x800xbf16, #tpu.memory_space<vmem>>, %arg2: memref<800x64xbf16, #tpu.memory_space<vmem>>, %arg3: memref<1x64xf32, #tpu.memory_space<vmem>>, %arg4: memref<200x64xbf16, #tpu.memory_space<vmem>>) attributes {dimension_semantics = [#tpu.dimension_semantics<parallel>], iteration_bounds = array<i64: 1>, scalar_prefetch = 0 : i64, scratch_operands = 0 : i64, tpu.core_type = #tpu.core_type<tc>, window_params = [{transform_indices = @transform_0, window_bounds = array<i64: 200, 800>}, {pipeline_mode = #tpu.pipeline_mode<synchronous>, transform_indices = @transform_1, window_bounds = array<i64: 800, 64>}, {pipeline_mode = #tpu.pipeline_mode<synchronous>, transform_indices = @transform_2, window_bounds = array<i64: 1, 64>}, {transform_indices = @transform_3, window_bounds = array<i64: 200, 64>}]} {
    %c0 = arith.constant 0 : index
    %c0_0 = arith.constant 0 : index
    %0 = vector.load %arg1[%c0, %c0_0] : memref<200x800xbf16, #tpu.memory_space<vmem>>, vector<200x800xbf16>
    %c0_1 = arith.constant 0 : index
    %c0_2 = arith.constant 0 : index
    %1 = vector.load %arg2[%c0_1, %c0_2] : memref<800x64xbf16, #tpu.memory_space<vmem>>, vector<800x64xbf16>
    %cst = arith.constant dense<0.000000e+00> : vector<200x64xf32>
    %2 = tpu.matmul %0, %1, %cst {dimension_numbers = #tpu.dot_dimension_numbers<[1], [0], [0], [1], [0, 0, 1, 1], [], []>} : vector<200x800xbf16>, vector<800x64xbf16>, vector<200x64xf32> -> vector<200x64xf32>
    %c0_3 = arith.constant 0 : index
    %c0_4 = arith.constant 0 : index
    %3 = vector.load %arg3[%c0_3, %c0_4] : memref<1x64xf32, #tpu.memory_space<vmem>>, vector<1x64xf32>
    %4 = vector.broadcast %3 : vector<1x64xf32> to vector<200x64xf32>
    %5 = arith.addf %2, %4 : vector<200x64xf32>
    %cst_5 = arith.constant 0.000000e+00 : f32
    %6 = vector.broadcast %cst_5 : f32 to vector<200x64xf32>
    %7 = arith.maximumf %5, %6 : vector<200x64xf32>
    %8 = arith.truncf %7 : vector<200x64xf32> to vector<200x64xbf16>
    %c0_6 = arith.constant 0 : index
    %c0_7 = arith.constant 0 : index
    %9 = vector.load %arg4[%c0_6, %c0_7] : memref<200x64xbf16, #tpu.memory_space<vmem>>, vector<200x64xbf16>
    tpu.vector_store %arg4[%c0_6, %c0_7], %8 {strides = array<i32>} : memref<200x64xbf16, #tpu.memory_space<vmem>>, vector<200x64xbf16>,
    return
  }
  func.func @transform_0(%arg0: i32) -> (i32, i32) {
    %c0_i32 = arith.constant 0 : i32
    %c0_i32_0 = arith.constant 0 : i32
    return %arg0, %c0_i32 : i32, i32
  }
  func.func @transform_1(%arg0: i32) -> (i32, i32) {
    %c0_i32 = arith.constant 0 : i32
    %c0_i32_0 = arith.constant 0 : i32
    %c0_i32_1 = arith.constant 0 : i32
    return %c0_i32, %c0_i32_0 : i32, i32
  }
  func.func @transform_2(%arg0: i32) -> (i32, i32) {
    %c0_i32 = arith.constant 0 : i32
    %c0_i32_0 = arith.constant 0 : i32
    %c0_i32_1 = arith.constant 0 : i32
    return %c0_i32, %c0_i32_0 : i32, i32
  }
  func.func @transform_3(%arg0: i32) -> (i32, i32) {
    %c0_i32 = arith.constant 0 : i32
    %c0_i32_0 = arith.constant 0 : i32
    return %arg0, %c0_i32 : i32, i32
  }
}

module attributes {stable_mosaic.version = 11 : i64} {
  func.func @_fc_fused_kernel(%arg0: memref<2x6400xbf16, #tpu.memory_space<vmem>>, %arg1: memref<2x3xf32, #tpu.memory_space<vmem>>, %arg2: memref<6400x128xbf16, #tpu.memory_space<vmem>>, %arg3: memref<3x128xf32, #tpu.memory_space<vmem>>, %arg4: memref<1x128xf32, #tpu.memory_space<vmem>>, %arg5: memref<1x128xf32, #tpu.memory_space<vmem>>, %arg6: memref<1x1xf32, #tpu.memory_space<vmem>>, %arg7: memref<2x1xf32, #tpu.memory_space<vmem>>) attributes {dimension_semantics = [], scalar_prefetch = 0 : i64, scratch_operands = 0 : i64, tpu.core_type = #tpu.core_type<tc>} {
    %c0 = arith.constant 0 : index
    %c0_0 = arith.constant 0 : index
    %0 = vector.load %arg0[%c0, %c0_0] : memref<2x6400xbf16, #tpu.memory_space<vmem>>, vector<2x6400xbf16>
    %c0_1 = arith.constant 0 : index
    %c0_2 = arith.constant 0 : index
    %1 = vector.load %arg2[%c0_1, %c0_2] : memref<6400x128xbf16, #tpu.memory_space<vmem>>, vector<6400x128xbf16>
    %cst = arith.constant dense<0.000000e+00> : vector<2x128xf32>
    %2 = tpu.matmul %0, %1, %cst {dimension_numbers = #tpu.dot_dimension_numbers<[1], [0], [0], [1], [0, 0, 1, 1], [], []>} : vector<2x6400xbf16>, vector<6400x128xbf16>, vector<2x128xf32> -> vector<2x128xf32>
    %c0_3 = arith.constant 0 : index
    %c0_4 = arith.constant 0 : index
    %3 = vector.load %arg1[%c0_3, %c0_4] : memref<2x3xf32, #tpu.memory_space<vmem>>, vector<2x3xf32>
    %c0_5 = arith.constant 0 : index
    %c0_6 = arith.constant 0 : index
    %4 = vector.load %arg3[%c0_5, %c0_6] : memref<3x128xf32, #tpu.memory_space<vmem>>, vector<3x128xf32>
    %5 = vector.extract_strided_slice %3 {offsets = [0, 0], sizes = [2, 1], strides = [1, 1]} : vector<2x3xf32> to vector<2x1xf32>
    %6 = vector.extract_strided_slice %4 {offsets = [0, 0], sizes = [1, 128], strides = [1, 1]} : vector<3x128xf32> to vector<1x128xf32>
    %7 = vector.broadcast %5 : vector<2x1xf32> to vector<2x128xf32>
    %8 = vector.broadcast %6 : vector<1x128xf32> to vector<2x128xf32>
    %9 = arith.mulf %7, %8 : vector<2x128xf32>
    %10 = arith.addf %2, %9 : vector<2x128xf32>
    %11 = vector.extract_strided_slice %3 {offsets = [0, 1], sizes = [2, 1], strides = [1, 1]} : vector<2x3xf32> to vector<2x1xf32>
    %12 = vector.extract_strided_slice %4 {offsets = [1, 0], sizes = [1, 128], strides = [1, 1]} : vector<3x128xf32> to vector<1x128xf32>
    %13 = vector.broadcast %11 : vector<2x1xf32> to vector<2x128xf32>
    %14 = vector.broadcast %12 : vector<1x128xf32> to vector<2x128xf32>
    %15 = arith.mulf %13, %14 : vector<2x128xf32>
    %16 = arith.addf %10, %15 : vector<2x128xf32>
    %17 = vector.extract_strided_slice %3 {offsets = [0, 2], sizes = [2, 1], strides = [1, 1]} : vector<2x3xf32> to vector<2x1xf32>
    %18 = vector.extract_strided_slice %4 {offsets = [2, 0], sizes = [1, 128], strides = [1, 1]} : vector<3x128xf32> to vector<1x128xf32>
    %19 = vector.broadcast %17 : vector<2x1xf32> to vector<2x128xf32>
    %20 = vector.broadcast %18 : vector<1x128xf32> to vector<2x128xf32>
    %21 = arith.mulf %19, %20 : vector<2x128xf32>
    %22 = arith.addf %16, %21 : vector<2x128xf32>
    %c0_7 = arith.constant 0 : index
    %c0_8 = arith.constant 0 : index
    %23 = vector.load %arg4[%c0_7, %c0_8] : memref<1x128xf32, #tpu.memory_space<vmem>>, vector<1x128xf32>
    %24 = vector.broadcast %23 : vector<1x128xf32> to vector<2x128xf32>
    %25 = arith.addf %22, %24 : vector<2x128xf32>
    %cst_9 = arith.constant 0.000000e+00 : f32
    %26 = vector.broadcast %cst_9 : f32 to vector<2x128xf32>
    %27 = arith.maximumf %25, %26 : vector<2x128xf32>
    %c0_10 = arith.constant 0 : index
    %c0_11 = arith.constant 0 : index
    %28 = vector.load %arg5[%c0_10, %c0_11] : memref<1x128xf32, #tpu.memory_space<vmem>>, vector<1x128xf32>
    %29 = vector.broadcast %28 : vector<1x128xf32> to vector<2x128xf32>
    %30 = arith.mulf %27, %29 : vector<2x128xf32>
    %cst_12 = arith.constant dense<0.000000e+00> : vector<2xf32>
    %31 = vector.multi_reduction <add>, %30, %cst_12 [1] : vector<2x128xf32> to vector<2xf32>
    %32 = vector.shape_cast %31 : vector<2xf32> to vector<2x1xf32>
    %c0_13 = arith.constant 0 : index
    %c0_14 = arith.constant 0 : index
    %33 = vector.load %arg6[%c0_13, %c0_14] : memref<1x1xf32, #tpu.memory_space<vmem>>, vector<1x1xf32>
    %34 = vector.broadcast %33 : vector<1x1xf32> to vector<2x1xf32>
    %35 = arith.addf %32, %34 : vector<2x1xf32>
    %c0_15 = arith.constant 0 : index
    %c0_16 = arith.constant 0 : index
    %36 = vector.load %arg7[%c0_15, %c0_16] : memref<2x1xf32, #tpu.memory_space<vmem>>, vector<2x1xf32>
    tpu.vector_store %arg7[%c0_15, %c0_16], %35 {strides = array<i32>} : memref<2x1xf32, #tpu.memory_space<vmem>>, vector<2x1xf32>,
    return
  }
}

</mosaic_0001>

<llo_original>
// kernel: cnn_critic_forward.4
$region0: #{cnn_critic_forward.4}
  #allocation0 [shape = 'u32[]', space=smem, size = 0x4, offset = 0x4, fixed_abs, tag = 'smem constant byte address 0x4 - core index']
  #allocation1 [shape = 'u32[144,128]{1,0:T(1,128)}', space=vmem, size = 0x12000, scoped, tag = 'internal scratch']
  %s0 = inlined_call_operand.vmem [shape: bf16[3200,75], index: 0, kind: input, shape index: {}]
  %s1 = inlined_call_operand.vmem [shape: bf16[75,16], index: 1, kind: input, shape index: {}]
  %s2 = inlined_call_operand.vmem [shape: f32[1,16], index: 2, kind: input, shape index: {}]
  %s3 = inlined_call_operand.vmem [shape: bf16[3200,16], index: 3, kind: output, shape index: {}]
  %s4 = sld [smem:[#allocation0]]
  $region45: #{cnn_critic_forward.4} parent=0
    _
  %s6 = ssub.s32 1, %s4
  %s7 = scalar_select 0, %s6, %s4
  loop: start=0, step=1, limit=6
  $region2: #{cnn_critic_forward.4} parent=0 // loop_pre_header
    _
  $region3: #{cnn_critic_forward.4} parent=0 // loop_header
    %s9 = sphi 0, %s13
    %p10 = scmp.ge.s32.totalorder %s9, 6
    %s19 = sphi 0, %s21
    %s22 = sphi 0, %s19
    %s23 = sphi 0, %s22
    %s39 = sphi 0, %s23
    %s43 = sphi 0, %s43
    %s45 = sphi 0, %s43
    %s46 = sphi 0, %s45
    %s60 = sphi 0, %s46
    %s64 = sphi 0, %s64
    %s66 = sphi 0, %s64
    %s67 = sphi 0, %s66
    %s81 = sphi 0, %s67
    %s87 = sphi 0, %s89
    %s90 = sphi 0, %s87
    %s91 = sphi 0, %s90
    %s107 = sphi 0, %s91
  $region4: #{cnn_critic_forward.4} parent=0 // loop_header_branch
    %12 = sbr.rel (%p10) target = $region8
  $region5: #{cnn_critic_forward.4} parent=0 // loop_body
    %s14 = ssub.s32 %s9, 1
    %s15 = ssub.s32 %s9, 2
    %s16 = sadd.s32 %s9, 1
    %s17 = ssub.s32 %s9, %s16
    %p18 = scmp.eq.s32.totalorder %s17, 0
    %s20 = sadd.s32 %s19, 1
    %s21 = scalar_select %p18, %s19, %s20
    %p24 = pneg %p18
    %p25 = scmp.eq.s32.totalorder %s9, 3
    %p26 = por %p24, %p25
    %p27 = scmp.ne.s32.totalorder %s19, %s22
    %p28 = scmp.eq.s32.totalorder %s9, 0
    %p29 = por %p27, %p28
    %p30 = scmp.ne.s32.totalorder %s19, %s22
    %p31 = scmp.eq.s32.totalorder %s14, 3
    %p32 = por %p30, %p31
    %p33 = scmp.ne.s32.totalorder %s22, %s23
    %p34 = scmp.eq.s32.totalorder %s14, 0
    %p35 = por %p33, %p34
    %p36 = scmp.ne.s32.totalorder %s22, %s23
    %p37 = scmp.eq.s32.totalorder %s15, 3
    %p38 = por %p36, %p37
    %p40 = scmp.ne.s32.totalorder %s23, %s39
    %p41 = scmp.eq.s32.totalorder %s15, 0
    %p42 = por %p40, %p41
    %s44 = sadd.s32 %s43, 1
    %p47 = scmp.eq.s32.totalorder %s9, 3
    %p48 = scmp.ne.s32.totalorder %s43, %s45
    %p49 = scmp.eq.s32.totalorder %s9, 0
    %p50 = por %p48, %p49
    %p51 = scmp.ne.s32.totalorder %s43, %s45
    %p52 = scmp.eq.s32.totalorder %s14, 3
    %p53 = por %p51, %p52
    %p54 = scmp.ne.s32.totalorder %s45, %s46
    %p55 = scmp.eq.s32.totalorder %s14, 0
    %p56 = por %p54, %p55
    %p57 = scmp.ne.s32.totalorder %s45, %s46
    %p58 = scmp.eq.s32.totalorder %s15, 3
    %p59 = por %p57, %p58
    %p61 = scmp.ne.s32.totalorder %s46, %s60
    %p62 = scmp.eq.s32.totalorder %s15, 0
    %p63 = por %p61, %p62
    %s65 = sadd.s32 %s64, 1
    %p68 = scmp.eq.s32.totalorder %s9, 3
    %p69 = scmp.ne.s32.totalorder %s64, %s66
    %p70 = scmp.eq.s32.totalorder %s9, 0
    %p71 = por %p69, %p70
    %p72 = scmp.ne.s32.totalorder %s64, %s66
    %p73 = scmp.eq.s32.totalorder %s14, 3
    %p74 = por %p72, %p73
    %p75 = scmp.ne.s32.totalorder %s66, %s67
    %p76 = scmp.eq.s32.totalorder %s14, 0
    %p77 = por %p75, %p76
    %p78 = scmp.ne.s32.totalorder %s66, %s67
    %p79 = scmp.eq.s32.totalorder %s15, 3
    %p80 = por %p78, %p79
    %p82 = scmp.ne.s32.totalorder %s67, %s81
    %p83 = scmp.eq.s32.totalorder %s15, 0
    %p84 = por %p82, %p83
    %s85 = ssub.s32 %s9, %s16
    %p86 = scmp.eq.s32.totalorder %s85, 0
    %s88 = sadd.s32 %s87, 1
    %s89 = scalar_select %p86, %s87, %s88
    %p92 = pneg %p86
    %p93 = scmp.eq.s32.totalorder %s9, 3
    %p94 = por %p92, %p93
    %p95 = scmp.ne.s32.totalorder %s87, %s90
    %p96 = scmp.eq.s32.totalorder %s9, 0
    %p97 = por %p95, %p96
    %p98 = scmp.ne.s32.totalorder %s87, %s90
    %p99 = scmp.eq.s32.totalorder %s14, 3
    %p100 = por %p98, %p99
    %p101 = scmp.ne.s32.totalorder %s90, %s91
    %p102 = scmp.eq.s32.totalorder %s14, 0
    %p103 = por %p101, %p102
    %p104 = scmp.ne.s32.totalorder %s90, %s91
    %p105 = scmp.eq.s32.totalorder %s15, 3
    %p106 = por %p104, %p105
    %p108 = scmp.ne.s32.totalorder %s91, %s107
    %p109 = scmp.eq.s32.totalorder %s15, 0
    %p110 = por %p108, %p109
    %p111 = scmp.le.s32.totalorder 1, %s9
    %p112 = scmp.lt.s32.totalorder %s9, 5
    %p113 = pnand %p111, %p112
    %p114 = pneg %p113
    // Predicated region
    $region9: #{cnn_critic_forward.4} parent=5 // pred_check
      _
    $region10: #{cnn_critic_forward.4} parent=5 // pred_check_branch
      %116 = sbr.rel (%p113) target = $region12
    $region11: #{cnn_critic_forward.4} parent=5 // pred_region
      %s117 = ssub.s32 %s9, 1
      // Predicated region
      $region13: #{cnn_critic_forward.4} parent=11 // pred_check
        %p118 = pneg %p56
      $region14: #{cnn_critic_forward.4} parent=11 // pred_check_branch
        %120 = sbr.rel (%p118) target = $region16
      $region15: #{cnn_critic_forward.4} parent=11 // pred_region
        _
      $region16: #{cnn_critic_forward.4} parent=11 // pred_fallthru
        _
      // Predicated region
      $region17: #{cnn_critic_forward.4} parent=11 // pred_check
        %p121 = pneg %p77
      $region18: #{cnn_critic_forward.4} parent=11 // pred_check_branch
        %123 = sbr.rel (%p121) target = $region20
      $region19: #{cnn_critic_forward.4} parent=11 // pred_region
        _
      $region20: #{cnn_critic_forward.4} parent=11 // pred_fallthru
        _
    $region12: #{cnn_critic_forward.4} parent=5 // pred_fallthru
      _
    %p124 = scmp.lt.s32.totalorder %s9, 4
    // Predicated region
    $region21: #{cnn_critic_forward.4} parent=5 // pred_check
      %p125 = pneg %p124
    $region22: #{cnn_critic_forward.4} parent=5 // pred_check_branch
      %127 = sbr.rel (%p125) target = $region24
    $region23: #{cnn_critic_forward.4} parent=5 // pred_region
      // Predicated region
      $region25: #{cnn_critic_forward.4} parent=23 // pred_check
        %p128 = pneg %p29
      $region26: #{cnn_critic_forward.4} parent=23 // pred_check_branch
        %130 = sbr.rel (%p128) target = $region28
      $region27: #{cnn_critic_forward.4} parent=23 // pred_region
        %s131 = smul.u32 100, %s9
        %p132 = scmp.lt.s32.totalorder %s131, 399
        %s133 = scalar_select %p132, %s131, 399
        %s134 = smul.addr %s133, 4
        %s135 = scalar_lea.vmem %s0, %s134
        %s136 = smul.u32 100, %s9
      $region28: #{cnn_critic_forward.4} parent=23 // pred_fallthru
        _
    $region24: #{cnn_critic_forward.4} parent=5 // pred_fallthru
      _
    %p137 = scmp.le.s32.totalorder 1, %s9
    %p138 = scmp.lt.s32.totalorder %s9, 5
    %p139 = pnand %p137, %p138
    %p140 = pneg %p139
    // Predicated region
    $region29: #{cnn_critic_forward.4} parent=5 // pred_check
      _
    $region30: #{cnn_critic_forward.4} parent=5 // pred_check_branch
      %142 = sbr.rel (%p139) target = $region32
    $region31: #{cnn_critic_forward.4} parent=5 // pred_region
      %s143 = ssub.s32 %s9, 1
      %s144 = smul.u32 100, %s14
      %p145 = scmp.lt.s32.totalorder %s144, 399
      %s146 = scalar_select %p145, %s144, 399
      %s147 = smul.addr %s146, 4
      %s148 = scalar_lea.vmem %s0, %s147
      %p149 = pneg %p35
      %p150 = pneg %p32
      %p151 = pneg %p56
      %p152 = pneg %p53
      %p153 = pneg %p77
      %p154 = pneg %p74
      %p155 = pneg %p103
      %p156 = pneg %p100
      %s157 = smul.u32 100, %s14
      %p158 = scmp.lt.s32.totalorder %s157, 399
      %s159 = scalar_select %p158, %s157, 399
      %s160 = smul.addr %s159, 4
      %s161 = scalar_lea.vmem %s3, %s160
      %s162 = smul.u32 100, %s14
      %p163 = scmp.lt.s32.totalorder %s162, 399
      %s164 = scalar_select %p163, %s162, 399
      %s165 = smul.addr %s164, 4
      %s166 = scalar_lea.vmem %s0, %s165
      %s167 = smul.u32 100, %s14
      %s168 = smul.u32 100, %s14
      %p169 = scmp.lt.s32.totalorder %s168, 399
      %s170 = scalar_select %p169, %s168, 399
      %s171 = smul.addr %s170, 4
      %s172 = scalar_lea.vmem %s3, %s171
      %s173 = smul.u32 100, %s14
      %v175 = vld [vmem:[%s166] sm:$0xf]
      %v176 = vld [vmem:[%s166 + $0x4] sm:$0xf]
      %v177 = vld [vmem:[%s166 + $0x8] sm:$0xf]
      %v178 = vld [vmem:[%s166 + $0xc] sm:$0xf]
      %v179 = vld [vmem:[%s166 + $0x10] sm:$0xf]
      %v180 = vld [vmem:[%s166 + $0x14] sm:$0xf]
      %v181 = vld [vmem:[%s166 + $0x18] sm:$0xf]
      %v182 = vld [vmem:[%s166 + $0x1c] sm:$0xf]
      %v183 = vld [vmem:[%s166 + $0x20] sm:$0xf]
      %v184 = vld [vmem:[%s166 + $0x24] sm:$0xf]
      %v185 = vld [vmem:[%s166 + $0x28] sm:$0xf]
      %v186 = vld [vmem:[%s166 + $0x2c] sm:$0xf]
      %v187 = vld [vmem:[%s166 + $0x30] sm:$0xf]
      %v188 = vld [vmem:[%s166 + $0x34] sm:$0xf]
      %v189 = vld [vmem:[%s166 + $0x38] sm:$0xf]
      %v190 = vld [vmem:[%s166 + $0x3c] sm:$0xf]
      %v191 = vld [vmem:[%s166 + $0x40] sm:$0xf]
      %v192 = vld [vmem:[%s166 + $0x44] sm:$0xf]
      %v193 = vld [vmem:[%s166 + $0x48] sm:$0xf]
      %v194 = vld [vmem:[%s166 + $0x4c] sm:$0xf]
      %v195 = vld [vmem:[%s166 + $0x50] sm:$0xf]
      %v196 = vld [vmem:[%s166 + $0x54] sm:$0xf]
      %v197 = vld [vmem:[%s166 + $0x58] sm:$0xf]
      %v198 = vld [vmem:[%s166 + $0x5c] sm:$0xf]
      %v199 = vld [vmem:[%s166 + $0x60] sm:$0xf]
      %v200 = vld [vmem:[%s166 + $0x64] sm:$0xf]
      %v201 = vld [vmem:[%s166 + $0x68] sm:$0xf]
      %v202 = vld [vmem:[%s166 + $0x6c] sm:$0xf]
      %v203 = vld [vmem:[%s166 + $0x70] sm:$0xf]
      %v204 = vld [vmem:[%s166 + $0x74] sm:$0xf]
      %v205 = vld [vmem:[%s166 + $0x78] sm:$0xf]
      %v206 = vld [vmem:[%s166 + $0x7c] sm:$0xf]
      %v207 = vld [vmem:[%s166 + $0x80] sm:$0xf]
      %v208 = vld [vmem:[%s166 + $0x84] sm:$0xf]
      %v209 = vld [vmem:[%s166 + $0x88] sm:$0xf]
      %v210 = vld [vmem:[%s166 + $0x8c] sm:$0xf]
      %v211 = vld [vmem:[%s166 + $0x90] sm:$0xf]
      %v212 = vld [vmem:[%s166 + $0x94] sm:$0xf]
      %v213 = vld [vmem:[%s166 + $0x98] sm:$0xf]
      %v214 = vld [vmem:[%s166 + $0x9c] sm:$0xf]
      %v215 = vld [vmem:[%s166 + $0xa0] sm:$0xf]
      %v216 = vld [vmem:[%s166 + $0xa4] sm:$0xf]
      %v217 = vld [vmem:[%s166 + $0xa8] sm:$0xf]
      %v218 = vld [vmem:[%s166 + $0xac] sm:$0xf]
      %v219 = vld [vmem:[%s166 + $0xb0] sm:$0xf]
      %v220 = vld [vmem:[%s166 + $0xb4] sm:$0xf]
      %v221 = vld [vmem:[%s166 + $0xb8] sm:$0xf]
      %v222 = vld [vmem:[%s166 + $0xbc] sm:$0xf]
      %v223 = vld [vmem:[%s166 + $0xc0] sm:$0xf]
      %v224 = vld [vmem:[%s166 + $0xc4] sm:$0xf]
      %v225 = vld [vmem:[%s166 + $0xc8] sm:$0xf]
      %v226 = vld [vmem:[%s166 + $0xcc] sm:$0xf]
      %v227 = vld [vmem:[%s166 + $0xd0] sm:$0xf]
      %v228 = vld [vmem:[%s166 + $0xd4] sm:$0xf]
      %v229 = vld [vmem:[%s166 + $0xd8] sm:$0xf]
      %v230 = vld [vmem:[%s166 + $0xdc] sm:$0xf]
      %v231 = vld [vmem:[%s166 + $0xe0] sm:$0xf]
      %v232 = vld [vmem:[%s166 + $0xe4] sm:$0xf]
      %v233 = vld [vmem:[%s166 + $0xe8] sm:$0xf]
      %v234 = vld [vmem:[%s166 + $0xec] sm:$0xf]
      %v235 = vld [vmem:[%s166 + $0xf0] sm:$0xf]
      %v236 = vld [vmem:[%s166 + $0xf4] sm:$0xf]
      %v237 = vld [vmem:[%s166 + $0xf8] sm:$0xf]
      %v238 = vld [vmem:[%s166 + $0xfc] sm:$0xf]
      %v239 = vld [vmem:[%s166 + $0x100] sm:$0xf]
      %v240 = vld [vmem:[%s166 + $0x104] sm:$0xf]
      %v241 = vld [vmem:[%s166 + $0x108] sm:$0xf]
      %v242 = vld [vmem:[%s166 + $0x10c] sm:$0xf]
      %v243 = vld [vmem:[%s166 + $0x110] sm:$0xf]
      %v244 = vld [vmem:[%s166 + $0x114] sm:$0xf]
      %v245 = vld [vmem:[%s166 + $0x118] sm:$0xf]
      %v246 = vld [vmem:[%s166 + $0x11c] sm:$0xf]
      %v247 = vld [vmem:[%s166 + $0x120] sm:$0xf]
      %v248 = vld [vmem:[%s166 + $0x124] sm:$0xf]
      %v249 = vld [vmem:[%s166 + $0x128] sm:$0xf]
      %v250 = vld [vmem:[%s166 + $0x12c] sm:$0xf]
      %v251 = vld [vmem:[%s166 + $0x130] sm:$0xf]
      %v252 = vld [vmem:[%s166 + $0x134] sm:$0xf]
      %v253 = vld [vmem:[%s166 + $0x138] sm:$0xf]
      %v254 = vld [vmem:[%s166 + $0x13c] sm:$0xf]
      %v255 = vld [vmem:[%s166 + $0x140] sm:$0xf]
      %v256 = vld [vmem:[%s166 + $0x144] sm:$0xf]
      %v257 = vld [vmem:[%s166 + $0x148] sm:$0xf]
      %v258 = vld [vmem:[%s166 + $0x14c] sm:$0xf]
      %v259 = vld [vmem:[%s166 + $0x150] sm:$0xf]
      %v260 = vld [vmem:[%s166 + $0x154] sm:$0xf]
      %v261 = vld [vmem:[%s166 + $0x158] sm:$0xf]
      %v262 = vld [vmem:[%s166 + $0x15c] sm:$0xf]
      %v263 = vld [vmem:[%s166 + $0x160] sm:$0xf]
      %v264 = vld [vmem:[%s166 + $0x164] sm:$0xf]
      %v265 = vld [vmem:[%s166 + $0x168] sm:$0xf]
      %v266 = vld [vmem:[%s166 + $0x16c] sm:$0xf]
      %v267 = vld [vmem:[%s166 + $0x170] sm:$0xf]
      %v268 = vld [vmem:[%s166 + $0x174] sm:$0xf]
      %v269 = vld [vmem:[%s166 + $0x178] sm:$0xf]
      %v270 = vld [vmem:[%s166 + $0x17c] sm:$0xf]
      %v271 = vld [vmem:[%s166 + $0x180] sm:$0xf]
      %v272 = vld [vmem:[%s166 + $0x184] sm:$0xf]
      %v273 = vld [vmem:[%s166 + $0x188] sm:$0xf]
      %v274 = vld [vmem:[%s166 + $0x18c] sm:$0xf]
      %v275 = vld [vmem:[%s1] sm:$0xf]
      %v276 = vld [vmem:[%s1 + $0x4] sm:$0xf]
      %v277 = vld [vmem:[%s1 + $0x8] sm:$0xf]
      %v278 = vld [vmem:[%s1 + $0xc] sm:$0xf]
      %v279 = vld [vmem:[%s1 + $0x10] sm:$0xf]
      %v280 = vld [vmem:[%s1 + $0x14] sm:$0xf]
      %v281 = vld [vmem:[%s1 + $0x18] sm:$0xf]
      %v282 = vld [vmem:[%s1 + $0x1c] sm:$0xf]
      %v283 = vld [vmem:[%s1 + $0x20] sm:$0xf]
      %v284 = vld [vmem:[%s1 + $0x24] sm:$0x3]
      %v285 = vld [vmem:[%s2] sm:$0x1]
      %v287 = vlaneseq
      %v288 = vshrl.u32 %v287, 7
      %v289 = vsub.s32 0, %v288
      %v290 = vrot.slane %v285, %v289
      %v392 = vunpack.c.l.b16 %v175
      %v393 = vunpack.c.l.b16 %v176
      %v394 = vunpack.c.l.b16 %v177
      %v395 = vunpack.c.l.b16 %v178
      %v396 = vunpack.c.l.b16 %v179
      %v397 = vunpack.c.l.b16 %v180
      %v398 = vunpack.c.l.b16 %v181
      %v399 = vunpack.c.l.b16 %v182
      %v400 = vunpack.c.l.b16 %v183
      %v401 = vunpack.c.l.b16 %v184
      %v402 = vunpack.c.l.b16 %v185
      %v403 = vunpack.c.l.b16 %v186
      %v404 = vunpack.c.l.b16 %v187
      %v405 = vunpack.c.l.b16 %v188
      %v406 = vunpack.c.l.b16 %v189
      %v407 = vunpack.c.l.b16 %v190
      %v408 = vunpack.c.l.b16 %v191
      %v409 = vunpack.c.l.b16 %v192
      %v410 = vunpack.c.l.b16 %v193
      %v411 = vunpack.c.l.b16 %v194
      %v412 = vunpack.c.l.b16 %v195
      %v413 = vunpack.c.l.b16 %v196
      %v414 = vunpack.c.l.b16 %v197
      %v415 = vunpack.c.l.b16 %v198
      %v416 = vunpack.c.l.b16 %v199
      %v417 = vunpack.c.l.b16 %v200
      %v418 = vunpack.c.l.b16 %v201
      %v419 = vunpack.c.l.b16 %v202
      %v420 = vunpack.c.l.b16 %v203
      %v421 = vunpack.c.l.b16 %v204
      %v422 = vunpack.c.l.b16 %v205
      %v423 = vunpack.c.l.b16 %v206
      %v424 = vunpack.c.l.b16 %v207
      %v425 = vunpack.c.l.b16 %v208
      %v426 = vunpack.c.l.b16 %v209
      %v427 = vunpack.c.l.b16 %v210
      %v428 = vunpack.c.l.b16 %v211
      %v429 = vunpack.c.l.b16 %v212
      %v430 = vunpack.c.l.b16 %v213
      %v431 = vunpack.c.l.b16 %v214
      %v432 = vunpack.c.l.b16 %v215
      %v433 = vunpack.c.l.b16 %v216
      %v434 = vunpack.c.l.b16 %v217
      %v435 = vunpack.c.l.b16 %v218
      %v436 = vunpack.c.l.b16 %v219
      %v437 = vunpack.c.l.b16 %v220
      %v438 = vunpack.c.l.b16 %v221
      %v439 = vunpack.c.l.b16 %v222
      %v440 = vunpack.c.l.b16 %v223
      %v441 = vunpack.c.l.b16 %v224
      %v442 = vunpack.c.l.b16 %v225
      %v443 = vunpack.c.l.b16 %v226
      %v444 = vunpack.c.l.b16 %v227
      %v445 = vunpack.c.l.b16 %v228
      %v446 = vunpack.c.l.b16 %v229
      %v447 = vunpack.c.l.b16 %v230
      %v448 = vunpack.c.l.b16 %v231
      %v449 = vunpack.c.l.b16 %v232
      %v450 = vunpack.c.l.b16 %v233
      %v451 = vunpack.c.l.b16 %v234
      %v452 = vunpack.c.l.b16 %v235
      %v453 = vunpack.c.l.b16 %v236
      %v454 = vunpack.c.l.b16 %v237
      %v455 = vunpack.c.l.b16 %v238
      %v456 = vunpack.c.l.b16 %v239
      %v457 = vunpack.c.l.b16 %v240
      %v458 = vunpack.c.l.b16 %v241
      %v459 = vunpack.c.l.b16 %v242
      %v460 = vunpack.c.l.b16 %v243
      %v461 = vunpack.c.l.b16 %v244
      %v462 = vunpack.c.l.b16 %v245
      %v463 = vunpack.c.l.b16 %v246
      %v464 = vunpack.c.l.b16 %v247
      %v465 = vunpack.c.l.b16 %v248
      %v466 = vunpack.c.l.b16 %v249
      %v467 = vunpack.c.l.b16 %v250
      %v468 = vunpack.c.l.b16 %v251
      %v469 = vunpack.c.l.b16 %v252
      %v470 = vunpack.c.l.b16 %v253
      %v471 = vunpack.c.l.b16 %v254
      %v472 = vunpack.c.l.b16 %v255
      %v473 = vunpack.c.l.b16 %v256
      %v474 = vunpack.c.l.b16 %v257
      %v475 = vunpack.c.l.b16 %v258
      %v476 = vunpack.c.l.b16 %v259
      %v477 = vunpack.c.l.b16 %v260
      %v478 = vunpack.c.l.b16 %v261
      %v479 = vunpack.c.l.b16 %v262
      %v480 = vunpack.c.l.b16 %v263
      %v481 = vunpack.c.l.b16 %v264
      %v482 = vunpack.c.l.b16 %v265
      %v483 = vunpack.c.l.b16 %v266
      %v484 = vunpack.c.l.b16 %v267
      %v485 = vunpack.c.l.b16 %v268
      %v486 = vunpack.c.l.b16 %v269
      %v487 = vunpack.c.l.b16 %v270
      %v488 = vunpack.c.l.b16 %v271
      %v489 = vunpack.c.l.b16 %v272
      %v490 = vunpack.c.l.b16 %v273
      %v491 = vunpack.c.l.b16 %v274
      %v492 = vpack.c.b16 %v393, %v392
      %v493 = vpack.c.b16 %v395, %v394
      %v494 = vpack.c.b16 %v397, %v396
      %v495 = vpack.c.b16 %v399, %v398
      %v496 = vpack.c.b16 %v401, %v400
      %v497 = vpack.c.b16 %v403, %v402
      %v498 = vpack.c.b16 %v405, %v404
      %v499 = vpack.c.b16 %v407, %v406
      %v500 = vpack.c.b16 %v409, %v408
      %v501 = vpack.c.b16 %v411, %v410
      %v502 = vpack.c.b16 %v413, %v412
      %v503 = vpack.c.b16 %v415, %v414
      %v504 = vpack.c.b16 %v417, %v416
      %v505 = vpack.c.b16 %v419, %v418
      %v506 = vpack.c.b16 %v421, %v420
      %v507 = vpack.c.b16 %v423, %v422
      %v508 = vpack.c.b16 %v425, %v424
      %v509 = vpack.c.b16 %v427, %v426
      %v510 = vpack.c.b16 %v429, %v428
      %v511 = vpack.c.b16 %v431, %v430
      %v512 = vpack.c.b16 %v433, %v432
      %v513 = vpack.c.b16 %v435, %v434
      %v514 = vpack.c.b16 %v437, %v436
      %v515 = vpack.c.b16 %v439, %v438
      %v516 = vpack.c.b16 %v441, %v440
      %v517 = vpack.c.b16 %v443, %v442
      %v518 = vpack.c.b16 %v445, %v444
      %v519 = vpack.c.b16 %v447, %v446
      %v520 = vpack.c.b16 %v449, %v448
      %v521 = vpack.c.b16 %v451, %v450
      %v522 = vpack.c.b16 %v453, %v452
      %v523 = vpack.c.b16 %v455, %v454
      %v524 = vpack.c.b16 %v457, %v456
      %v525 = vpack.c.b16 %v459, %v458
      %v526 = vpack.c.b16 %v461, %v460
      %v527 = vpack.c.b16 %v463, %v462
      %v528 = vpack.c.b16 %v465, %v464
      %v529 = vpack.c.b16 %v467, %v466
      %v530 = vpack.c.b16 %v469, %v468
      %v531 = vpack.c.b16 %v471, %v470
      %v532 = vpack.c.b16 %v473, %v472
      %v533 = vpack.c.b16 %v475, %v474
      %v534 = vpack.c.b16 %v477, %v476
      %v535 = vpack.c.b16 %v479, %v478
      %v536 = vpack.c.b16 %v481, %v480
      %v537 = vpack.c.b16 %v483, %v482
      %v538 = vpack.c.b16 %v485, %v484
      %v539 = vpack.c.b16 %v487, %v486
      %v540 = vpack.c.b16 %v489, %v488
      %v541 = vpack.c.b16 %v491, %v490
      %v552 = vunpack.c.l.b16 %v275
      %v553 = vunpack.c.l.b16 %v276
      %v554 = vunpack.c.l.b16 %v277
      %v555 = vunpack.c.l.b16 %v278
      %v556 = vunpack.c.l.b16 %v279
      %v557 = vunpack.c.l.b16 %v280
      %v558 = vunpack.c.l.b16 %v281
      %v559 = vunpack.c.l.b16 %v282
      %v560 = vunpack.c.l.b16 %v283
      %v561 = vunpack.c.l.b16 %v284
      %v562 = vpack.c.b16 %v553, %v552
      %v563 = vpack.c.b16 %v555, %v554
      %v564 = vpack.c.b16 %v557, %v556
      %v565 = vpack.c.b16 %v559, %v558
      %v566 = vpack.c.b16 %v561, %v560
      %vm571 = vcmask 613376
      %v573 = vsel %vm571, %v492, 0
      %v576 = vsel %vm571, %v493, 0
      %v579 = vsel %vm571, %v494, 0
      %v582 = vsel %vm571, %v495, 0
      %v585 = vsel %vm571, %v496, 0
      %v588 = vsel %vm571, %v497, 0
      %v591 = vsel %vm571, %v498, 0
      %v594 = vsel %vm571, %v499, 0
      %v597 = vsel %vm571, %v500, 0
      %v600 = vsel %vm571, %v501, 0
      %v603 = vsel %vm571, %v502, 0
      %v606 = vsel %vm571, %v503, 0
      %v609 = vsel %vm571, %v504, 0
      %v612 = vsel %vm571, %v505, 0
      %v615 = vsel %vm571, %v506, 0
      %v618 = vsel %vm571, %v507, 0
      %v621 = vsel %vm571, %v508, 0
      %v624 = vsel %vm571, %v509, 0
      %v627 = vsel %vm571, %v510, 0
      %v630 = vsel %vm571, %v511, 0
      %v633 = vsel %vm571, %v512, 0
      %v636 = vsel %vm571, %v513, 0
      %v639 = vsel %vm571, %v514, 0
      %v642 = vsel %vm571, %v515, 0
      %v645 = vsel %vm571, %v516, 0
      %v648 = vsel %vm571, %v517, 0
      %v651 = vsel %vm571, %v518, 0
      %v654 = vsel %vm571, %v519, 0
      %v657 = vsel %vm571, %v520, 0
      %v660 = vsel %vm571, %v521, 0
      %v663 = vsel %vm571, %v522, 0
      %v666 = vsel %vm571, %v523, 0
      %v669 = vsel %vm571, %v524, 0
      %v672 = vsel %vm571, %v525, 0
      %v675 = vsel %vm571, %v526, 0
      %v678 = vsel %vm571, %v527, 0
      %v681 = vsel %vm571, %v528, 0
      %v684 = vsel %vm571, %v529, 0
      %v687 = vsel %vm571, %v530, 0
      %v690 = vsel %vm571, %v531, 0
      %v693 = vsel %vm571, %v532, 0
      %v696 = vsel %vm571, %v533, 0
      %v699 = vsel %vm571, %v534, 0
      %v702 = vsel %vm571, %v535, 0
      %v705 = vsel %vm571, %v536, 0
      %v708 = vsel %vm571, %v537, 0
      %v711 = vsel %vm571, %v538, 0
      %v714 = vsel %vm571, %v539, 0
      %v717 = vsel %vm571, %v540, 0
      %v720 = vsel %vm571, %v541, 0
      %vm722 = vcmask 1044480
      %vm723 = vcmask 1045504
      %v724 = vsel %vm722, 4294967295, 65535
      %v725 = vsel %vm723, %v724, 0
      %v727 = vand.u32 %v566, %v725
      %729 = vmatprep.subr.bf16.mxu0 0
      %730 = vmatpush1.bf16.msra.mxu0 %v562
      %731 = vmatprep.subr.bf16.mxu0 0
      %732 = vmatpush1.bf16.msra.mxu0 %v563
      %733 = vmatprep.subr.bf16.mxu0 0
      %734 = vmatpush1.bf16.msra.mxu0 %v564
      %735 = vmatprep.subr.bf16.mxu0 0
      %736 = vmatpush1.bf16.msra.mxu0 %v565
      %737 = vmatprep.subr.bf16.mxu0 0
      %738 = vmatpush1.bf16.msra.mxu0 %v727
      %739 = vmatprep.subr.bf16.mxu0 0
      %740 = vmatpush1.bf16.msra.mxu0 0
      %741 = vmatprep.subr.bf16.mxu0 0
      %742 = vmatpush1.bf16.msra.mxu0 0
      %743 = vmatprep.subr.bf16.mxu0 0
      %744 = vmatpush1.bf16.msra.mxu0 0
      %745 = vmatprep.subr.bf16.mxu0 0
      %746 = vmatpush1.bf16.msra.mxu0 0
      %747 = vmatprep.subr.bf16.mxu0 0
      %748 = vmatpush1.bf16.msra.mxu0 0
      %749 = vmatprep.subr.bf16.mxu0 0
      %750 = vmatpush1.bf16.msra.mxu0 0
      %751 = vmatprep.subr.bf16.mxu0 0
      %752 = vmatpush1.bf16.msra.mxu0 0
      %753 = vmatprep.subr.bf16.mxu0 0
      %754 = vmatpush1.bf16.msra.mxu0 0
      %755 = vmatprep.subr.bf16.mxu0 0
      %756 = vmatpush1.bf16.msra.mxu0 0
      %757 = vmatprep.subr.bf16.mxu0 0
      %758 = vmatpush1.bf16.msra.mxu0 0
      %759 = vmatprep.subr.bf16.mxu0 0
      %760 = vmatpush1.bf16.msra.mxu0 0
      %761 = vmatprep.mubr.bf16.mxu0 0
      %762 = vmatmul.mubr.bf16.gmra.mrb[0].mxu0 %v573
      %v763 = vpop.f32.mrb[0].mxu0
      %v764 = vadd.f32 %v290, %v763
      %v765 = vpop.f32.mrb[0].mxu0
      %v766 = vpop.f32.mrb[0].mxu0
      %v767 = vadd.f32 %v290, %v766
      %v768 = vpop.f32.mrb[0].mxu0
      %769 = vmatprep.mubr.bf16.mxu0 0
      %770 = vmatmul.mubr.bf16.gmra.mrb[0].mxu0 %v576
      %v771 = vpop.f32.mrb[0].mxu0
      %v772 = vadd.f32 %v290, %v771
      %v773 = vpop.f32.mrb[0].mxu0
      %v774 = vpop.f32.mrb[0].mxu0
      %v775 = vadd.f32 %v290, %v774
      %v776 = vpop.f32.mrb[0].mxu0
      %777 = vmatprep.mubr.bf16.mxu0 0
      %778 = vmatmul.mubr.bf16.gmra.mrb[0].mxu0 %v579
      %v779 = vpop.f32.mrb[0].mxu0
      %v780 = vadd.f32 %v290, %v779
      %v781 = vpop.f32.mrb[0].mxu0
      %v782 = vpop.f32.mrb[0].mxu0
      %v783 = vadd.f32 %v290, %v782
      %v784 = vpop.f32.mrb[0].mxu0
      %785 = vmatprep.mubr.bf16.mxu0 0
      %786 = vmatmul.mubr.bf16.gmra.mrb[0].mxu0 %v582
      %v787 = vpop.f32.mrb[0].mxu0
      %v788 = vadd.f32 %v290, %v787
      %v789 = vpop.f32.mrb[0].mxu0
      %v790 = vpop.f32.mrb[0].mxu0
      %v791 = vadd.f32 %v290, %v790
      %v792 = vpop.f32.mrb[0].mxu0
      %793 = vmatprep.mubr.bf16.mxu0 0
      %794 = vmatmul.mubr.bf16.gmra.mrb[0].mxu0 %v585
      %v795 = vpop.f32.mrb[0].mxu0
      %v796 = vadd.f32 %v290, %v795
      %v797 = vpop.f32.mrb[0].mxu0
      %v798 = vpop.f32.mrb[0].mxu0
      %v799 = vadd.f32 %v290, %v798
      %v800 = vpop.f32.mrb[0].mxu0
      %801 = vmatprep.mubr.bf16.mxu0 0
      %802 = vmatmul.mubr.bf16.gmra.mrb[0].mxu0 %v588
      %v803 = vpop.f32.mrb[0].mxu0
      %v804 = vadd.f32 %v290, %v803
      %v805 = vpop.f32.mrb[0].mxu0
      %v806 = vpop.f32.mrb[0].mxu0
      %v807 = vadd.f32 %v290, %v806
      %v808 = vpop.f32.mrb[0].mxu0
      %809 = vmatprep.mubr.bf16.mxu0 0
      %810 = vmatmul.mubr.bf16.gmra.mrb[0].mxu0 %v591
      %v811 = vpop.f32.mrb[0].mxu0
      %v812 = vadd.f32 %v290, %v811
      %v813 = vpop.f32.mrb[0].mxu0
      %v814 = vpop.f32.mrb[0].mxu0
      %v815 = vadd.f32 %v290, %v814
      %v816 = vpop.f32.mrb[0].mxu0
      %817 = vmatprep.mubr.bf16.mxu0 0
      %818 = vmatmul.mubr.bf16.gmra.mrb[0].mxu0 %v594
      %v819 = vpop.f32.mrb[0].mxu0
      %v820 = vadd.f32 %v290, %v819
      %v821 = vpop.f32.mrb[0].mxu0
      %v822 = vpop.f32.mrb[0].mxu0
      %v823 = vadd.f32 %v290, %v822
      %v824 = vpop.f32.mrb[0].mxu0
      %825 = vmatprep.mubr.bf16.mxu0 0
      %826 = vmatmul.mubr.bf16.gmra.mrb[0].mxu0 %v597
      %v827 = vpop.f32.mrb[0].mxu0
      %v828 = vadd.f32 %v290, %v827
      %v829 = vpop.f32.mrb[0].mxu0
      %v830 = vpop.f32.mrb[0].mxu0
      %v831 = vadd.f32 %v290, %v830
      %v832 = vpop.f32.mrb[0].mxu0
      %833 = vmatprep.mubr.bf16.mxu0 0
      %834 = vmatmul.mubr.bf16.gmra.mrb[0].mxu0 %v600
      %v835 = vpop.f32.mrb[0].mxu0
      %v836 = vadd.f32 %v290, %v835
      %v837 = vpop.f32.mrb[0].mxu0
      %v838 = vpop.f32.mrb[0].mxu0
      %v839 = vadd.f32 %v290, %v838
      %v840 = vpop.f32.mrb[0].mxu0
      %841 = vmatprep.mubr.bf16.mxu0 0
      %842 = vmatmul.mubr.bf16.gmra.mrb[0].mxu0 %v603
      %v843 = vpop.f32.mrb[0].mxu0
      %v844 = vadd.f32 %v290, %v843
      %v845 = vpop.f32.mrb[0].mxu0
      %v846 = vpop.f32.mrb[0].mxu0
      %v847 = vadd.f32 %v290, %v846
      %v848 = vpop.f32.mrb[0].mxu0
      %849 = vmatprep.mubr.bf16.mxu0 0
      %850 = vmatmul.mubr.bf16.gmra.mrb[0].mxu0 %v606
      %v851 = vpop.f32.mrb[0].mxu0
      %v852 = vadd.f32 %v290, %v851
      %v853 = vpop.f32.mrb[0].mxu0
      %v854 = vpop.f32.mrb[0].mxu0
      %v855 = vadd.f32 %v290, %v854
      %v856 = vpop.f32.mrb[0].mxu0
      %857 = vmatprep.mubr.bf16.mxu0 0
      %858 = vmatmul.mubr.bf16.gmra.mrb[0].mxu0 %v609
      %v859 = vpop.f32.mrb[0].mxu0
      %v860 = vadd.f32 %v290, %v859
      %v861 = vpop.f32.mrb[0].mxu0
      %v862 = vpop.f32.mrb[0].mxu0
      %v863 = vadd.f32 %v290, %v862
      %v864 = vpop.f32.mrb[0].mxu0
      %865 = vmatprep.mubr.bf16.mxu0 0
      %866 = vmatmul.mubr.bf16.gmra.mrb[0].mxu0 %v612
      %v867 = vpop.f32.mrb[0].mxu0
      %v868 = vadd.f32 %v290, %v867
      %v869 = vpop.f32.mrb[0].mxu0
      %v870 = vpop.f32.mrb[0].mxu0
      %v871 = vadd.f32 %v290, %v870
      %v872 = vpop.f32.mrb[0].mxu0
      %873 = vmatprep.mubr.bf16.mxu0 0
      %874 = vmatmul.mubr.bf16.gmra.mrb[0].mxu0 %v615
      %v875 = vpop.f32.mrb[0].mxu0
      %v876 = vadd.f32 %v290, %v875
      %v877 = vpop.f32.mrb[0].mxu0
      %v878 = vpop.f32.mrb[0].mxu0
      %v879 = vadd.f32 %v290, %v878
      %v880 = vpop.f32.mrb[0].mxu0
      %881 = vmatprep.mubr.bf16.mxu0 0
      %882 = vmatmul.mubr.bf16.gmra.mrb[0].mxu0 %v618
      %v883 = vpop.f32.mrb[0].mxu0
      %v884 = vadd.f32 %v290, %v883
      %v885 = vpop.f32.mrb[0].mxu0
      %v886 = vpop.f32.mrb[0].mxu0
      %v887 = vadd.f32 %v290, %v886
      %v888 = vpop.f32.mrb[0].mxu0
      %889 = vmatprep.mubr.bf16.mxu0 0
      %890 = vmatmul.mubr.bf16.gmra.mrb[0].mxu0 %v621
      %v891 = vpop.f32.mrb[0].mxu0
      %v892 = vadd.f32 %v290, %v891
      %v893 = vpop.f32.mrb[0].mxu0
      %v894 = vpop.f32.mrb[0].mxu0
      %v895 = vadd.f32 %v290, %v894
      %v896 = vpop.f32.mrb[0].mxu0
      %897 = vmatprep.mubr.bf16.mxu0 0
      %898 = vmatmul.mubr.bf16.gmra.mrb[0].mxu0 %v624
      %v899 = vpop.f32.mrb[0].mxu0
      %v900 = vadd.f32 %v290, %v899
      %v901 = vpop.f32.mrb[0].mxu0
      %v902 = vpop.f32.mrb[0].mxu0
      %v903 = vadd.f32 %v290, %v902
      %v904 = vpop.f32.mrb[0].mxu0
      %905 = vmatprep.mubr.bf16.mxu0 0
      %906 = vmatmul.mubr.bf16.gmra.mrb[0].mxu0 %v627
      %v907 = vpop.f32.mrb[0].mxu0
      %v908 = vadd.f32 %v290, %v907
      %v909 = vpop.f32.mrb[0].mxu0
      %v910 = vpop.f32.mrb[0].mxu0
      %v911 = vadd.f32 %v290, %v910
      %v912 = vpop.f32.mrb[0].mxu0
      %913 = vmatprep.mubr.bf16.mxu0 0
      %914 = vmatmul.mubr.bf16.gmra.mrb[0].mxu0 %v630
      %v915 = vpop.f32.mrb[0].mxu0
      %v916 = vadd.f32 %v290, %v915
      %v917 = vpop.f32.mrb[0].mxu0
      %v918 = vpop.f32.mrb[0].mxu0
      %v919 = vadd.f32 %v290, %v918
      %v920 = vpop.f32.mrb[0].mxu0
      %921 = vmatprep.mubr.bf16.mxu0 0
      %922 = vmatmul.mubr.bf16.gmra.mrb[0].mxu0 %v633
      %v923 = vpop.f32.mrb[0].mxu0
      %v924 = vadd.f32 %v290, %v923
      %v925 = vpop.f32.mrb[0].mxu0
      %v926 = vpop.f32.mrb[0].mxu0
      %v927 = vadd.f32 %v290, %v926
      %v928 = vpop.f32.mrb[0].mxu0
      %929 = vmatprep.mubr.bf16.mxu0 0
      %930 = vmatmul.mubr.bf16.gmra.mrb[0].mxu0 %v636
      %v931 = vpop.f32.mrb[0].mxu0
      %v932 = vadd.f32 %v290, %v931
      %v933 = vpop.f32.mrb[0].mxu0
      %v934 = vpop.f32.mrb[0].mxu0
      %v935 = vadd.f32 %v290, %v934
      %v936 = vpop.f32.mrb[0].mxu0
      %937 = vmatprep.mubr.bf16.mxu0 0
      %938 = vmatmul.mubr.bf16.gmra.mrb[0].mxu0 %v639
      %v939 = vpop.f32.mrb[0].mxu0
      %v940 = vadd.f32 %v290, %v939
      %v941 = vpop.f32.mrb[0].mxu0
      %v942 = vpop.f32.mrb[0].mxu0
      %v943 = vadd.f32 %v290, %v942
      %v944 = vpop.f32.mrb[0].mxu0
      %945 = vmatprep.mubr.bf16.mxu0 0
      %946 = vmatmul.mubr.bf16.gmra.mrb[0].mxu0 %v642
      %v947 = vpop.f32.mrb[0].mxu0
      %v948 = vadd.f32 %v290, %v947
      %v949 = vpop.f32.mrb[0].mxu0
      %v950 = vpop.f32.mrb[0].mxu0
      %v951 = vadd.f32 %v290, %v950
      %v952 = vpop.f32.mrb[0].mxu0
      %953 = vmatprep.mubr.bf16.mxu0 0
      %954 = vmatmul.mubr.bf16.gmra.mrb[0].mxu0 %v645
      %v955 = vpop.f32.mrb[0].mxu0
      %v956 = vadd.f32 %v290, %v955
      %v957 = vpop.f32.mrb[0].mxu0
      %v958 = vpop.f32.mrb[0].mxu0
      %v959 = vadd.f32 %v290, %v958
      %v960 = vpop.f32.mrb[0].mxu0
      %961 = vmatprep.mubr.bf16.mxu0 0
      %962 = vmatmul.mubr.bf16.gmra.mrb[0].mxu0 %v648
      %v963 = vpop.f32.mrb[0].mxu0
      %v964 = vadd.f32 %v290, %v963
      %v965 = vpop.f32.mrb[0].mxu0
      %v966 = vpop.f32.mrb[0].mxu0
      %v967 = vadd.f32 %v290, %v966
      %v968 = vpop.f32.mrb[0].mxu0
      %969 = vmatprep.mubr.bf16.mxu0 0
      %970 = vmatmul.mubr.bf16.gmra.mrb[0].mxu0 %v651
      %v971 = vpop.f32.mrb[0].mxu0
      %v972 = vadd.f32 %v290, %v971
      %v973 = vpop.f32.mrb[0].mxu0
      %v974 = vpop.f32.mrb[0].mxu0
      %v975 = vadd.f32 %v290, %v974
      %v976 = vpop.f32.mrb[0].mxu0
      %977 = vmatprep.mubr.bf16.mxu0 0
      %978 = vmatmul.mubr.bf16.gmra.mrb[0].mxu0 %v654
      %v979 = vpop.f32.mrb[0].mxu0
      %v980 = vadd.f32 %v290, %v979
      %v981 = vpop.f32.mrb[0].mxu0
      %v982 = vpop.f32.mrb[0].mxu0
      %v983 = vadd.f32 %v290, %v982
      %v984 = vpop.f32.mrb[0].mxu0
      %985 = vmatprep.mubr.bf16.mxu0 0
      %986 = vmatmul.mubr.bf16.gmra.mrb[0].mxu0 %v657
      %v987 = vpop.f32.mrb[0].mxu0
      %v988 = vadd.f32 %v290, %v987
      %v989 = vpop.f32.mrb[0].mxu0
      %v990 = vpop.f32.mrb[0].mxu0
      %v991 = vadd.f32 %v290, %v990
      %v992 = vpop.f32.mrb[0].mxu0
      %993 = vmatprep.mubr.bf16.mxu0 0
      %994 = vmatmul.mubr.bf16.gmra.mrb[0].mxu0 %v660
      %v995 = vpop.f32.mrb[0].mxu0
      %v996 = vadd.f32 %v290, %v995
      %v997 = vpop.f32.mrb[0].mxu0
      %v998 = vpop.f32.mrb[0].mxu0
      %v999 = vadd.f32 %v290, %v998
      %v1000 = vpop.f32.mrb[0].mxu0
      %1001 = vmatprep.mubr.bf16.mxu0 0
      %1002 = vmatmul.mubr.bf16.gmra.mrb[0].mxu0 %v663
      %v1003 = vpop.f32.mrb[0].mxu0
      %v1004 = vadd.f32 %v290, %v1003
      %v1005 = vpop.f32.mrb[0].mxu0
      %v1006 = vpop.f32.mrb[0].mxu0
      %v1007 = vadd.f32 %v290, %v1006
      %v1008 = vpop.f32.mrb[0].mxu0
      %1009 = vmatprep.mubr.bf16.mxu0 0
      %1010 = vmatmul.mubr.bf16.gmra.mrb[0].mxu0 %v666
      %v1011 = vpop.f32.mrb[0].mxu0
      %v1012 = vadd.f32 %v290, %v1011
      %v1013 = vpop.f32.mrb[0].mxu0
      %v1014 = vpop.f32.mrb[0].mxu0
      %v1015 = vadd.f32 %v290, %v1014
      %v1016 = vpop.f32.mrb[0].mxu0
      %1017 = vmatprep.mubr.bf16.mxu0 0
      %1018 = vmatmul.mubr.bf16.gmra.mrb[0].mxu0 %v669
      %v1019 = vpop.f32.mrb[0].mxu0
      %v1020 = vadd.f32 %v290, %v1019
      %v1021 = vpop.f32.mrb[0].mxu0
      %v1022 = vpop.f32.mrb[0].mxu0
      %v1023 = vadd.f32 %v290, %v1022
      %v1024 = vpop.f32.mrb[0].mxu0
      %1025 = vmatprep.mubr.bf16.mxu0 0
      %1026 = vmatmul.mubr.bf16.gmra.mrb[0].mxu0 %v672
      %v1027 = vpop.f32.mrb[0].mxu0
      %v1028 = vadd.f32 %v290, %v1027
      %v1029 = vpop.f32.mrb[0].mxu0
      %v1030 = vpop.f32.mrb[0].mxu0
      %v1031 = vadd.f32 %v290, %v1030
      %v1032 = vpop.f32.mrb[0].mxu0
      %1033 = vmatprep.mubr.bf16.mxu0 0
      %1034 = vmatmul.mubr.bf16.gmra.mrb[0].mxu0 %v675
      %v1035 = vpop.f32.mrb[0].mxu0
      %v1036 = vadd.f32 %v290, %v1035
      %v1037 = vpop.f32.mrb[0].mxu0
      %v1038 = vpop.f32.mrb[0].mxu0
      %v1039 = vadd.f32 %v290, %v1038
      %v1040 = vpop.f32.mrb[0].mxu0
      %1041 = vmatprep.mubr.bf16.mxu0 0
      %1042 = vmatmul.mubr.bf16.gmra.mrb[0].mxu0 %v678
      %v1043 = vpop.f32.mrb[0].mxu0
      %v1044 = vadd.f32 %v290, %v1043
      %v1045 = vpop.f32.mrb[0].mxu0
      %v1046 = vpop.f32.mrb[0].mxu0
      %v1047 = vadd.f32 %v290, %v1046
      %v1048 = vpop.f32.mrb[0].mxu0
      %1049 = vmatprep.mubr.bf16.mxu0 0
      %1050 = vmatmul.mubr.bf16.gmra.mrb[0].mxu0 %v681
      %v1051 = vpop.f32.mrb[0].mxu0
      %v1052 = vadd.f32 %v290, %v1051
      %v1053 = vpop.f32.mrb[0].mxu0
      %v1054 = vpop.f32.mrb[0].mxu0
      %v1055 = vadd.f32 %v290, %v1054
      %v1056 = vpop.f32.mrb[0].mxu0
      %1057 = vmatprep.mubr.bf16.mxu0 0
      %1058 = vmatmul.mubr.bf16.gmra.mrb[0].mxu0 %v684
      %v1059 = vpop.f32.mrb[0].mxu0
      %v1060 = vadd.f32 %v290, %v1059
      %v1061 = vpop.f32.mrb[0].mxu0
      %v1062 = vpop.f32.mrb[0].mxu0
      %v1063 = vadd.f32 %v290, %v1062
      %v1064 = vpop.f32.mrb[0].mxu0
      %1065 = vmatprep.mubr.bf16.mxu0 0
      %1066 = vmatmul.mubr.bf16.gmra.mrb[0].mxu0 %v687
      %v1067 = vpop.f32.mrb[0].mxu0
      %v1068 = vadd.f32 %v290, %v1067
      %v1069 = vpop.f32.mrb[0].mxu0
      %v1070 = vpop.f32.mrb[0].mxu0
      %v1071 = vadd.f32 %v290, %v1070
      %v1072 = vpop.f32.mrb[0].mxu0
      %1073 = vmatprep.mubr.bf16.mxu0 0
      %1074 = vmatmul.mubr.bf16.gmra.mrb[0].mxu0 %v690
      %v1075 = vpop.f32.mrb[0].mxu0
      %v1076 = vadd.f32 %v290, %v1075
      %v1077 = vpop.f32.mrb[0].mxu0
      %v1078 = vpop.f32.mrb[0].mxu0
      %v1079 = vadd.f32 %v290, %v1078
      %v1080 = vpop.f32.mrb[0].mxu0
      %1081 = vmatprep.mubr.bf16.mxu0 0
      %1082 = vmatmul.mubr.bf16.gmra.mrb[0].mxu0 %v693
      %v1083 = vpop.f32.mrb[0].mxu0
      %v1084 = vadd.f32 %v290, %v1083
      %v1085 = vpop.f32.mrb[0].mxu0
      %v1086 = vpop.f32.mrb[0].mxu0
      %v1087 = vadd.f32 %v290, %v1086
      %v1088 = vpop.f32.mrb[0].mxu0
      %1089 = vmatprep.mubr.bf16.mxu0 0
      %1090 = vmatmul.mubr.bf16.gmra.mrb[0].mxu0 %v696
      %v1091 = vpop.f32.mrb[0].mxu0
      %v1092 = vadd.f32 %v290, %v1091
      %v1093 = vpop.f32.mrb[0].mxu0
      %v1094 = vpop.f32.mrb[0].mxu0
      %v1095 = vadd.f32 %v290, %v1094
      %v1096 = vpop.f32.mrb[0].mxu0
      %1097 = vmatprep.mubr.bf16.mxu0 0
      %1098 = vmatmul.mubr.bf16.gmra.mrb[0].mxu0 %v699
      %v1099 = vpop.f32.mrb[0].mxu0
      %v1100 = vadd.f32 %v290, %v1099
      %v1101 = vpop.f32.mrb[0].mxu0
      %v1102 = vpop.f32.mrb[0].mxu0
      %v1103 = vadd.f32 %v290, %v1102
      %v1104 = vpop.f32.mrb[0].mxu0
      %1105 = vmatprep.mubr.bf16.mxu0 0
      %1106 = vmatmul.mubr.bf16.gmra.mrb[0].mxu0 %v702
      %v1107 = vpop.f32.mrb[0].mxu0
      %v1108 = vadd.f32 %v290, %v1107
      %v1109 = vpop.f32.mrb[0].mxu0
      %v1110 = vpop.f32.mrb[0].mxu0
      %v1111 = vadd.f32 %v290, %v1110
      %v1112 = vpop.f32.mrb[0].mxu0
      %1113 = vmatprep.mubr.bf16.mxu0 0
      %1114 = vmatmul.mubr.bf16.gmra.mrb[0].mxu0 %v705
      %v1115 = vpop.f32.mrb[0].mxu0
      %v1116 = vadd.f32 %v290, %v1115
      %v1117 = vpop.f32.mrb[0].mxu0
      %v1118 = vpop.f32.mrb[0].mxu0
      %v1119 = vadd.f32 %v290, %v1118
      %v1120 = vpop.f32.mrb[0].mxu0
      %1121 = vmatprep.mubr.bf16.mxu0 0
      %1122 = vmatmul.mubr.bf16.gmra.mrb[0].mxu0 %v708
      %v1123 = vpop.f32.mrb[0].mxu0
      %v1124 = vadd.f32 %v290, %v1123
      %v1125 = vpop.f32.mrb[0].mxu0
      %v1126 = vpop.f32.mrb[0].mxu0
      %v1127 = vadd.f32 %v290, %v1126
      %v1128 = vpop.f32.mrb[0].mxu0
      %1129 = vmatprep.mubr.bf16.mxu0 0
      %1130 = vmatmul.mubr.bf16.gmra.mrb[0].mxu0 %v711
      %v1131 = vpop.f32.mrb[0].mxu0
      %v1132 = vadd.f32 %v290, %v1131
      %v1133 = vpop.f32.mrb[0].mxu0
      %v1134 = vpop.f32.mrb[0].mxu0
      %v1135 = vadd.f32 %v290, %v1134
      %v1136 = vpop.f32.mrb[0].mxu0
      %1137 = vmatprep.mubr.bf16.mxu0 0
      %1138 = vmatmul.mubr.bf16.gmra.mrb[0].mxu0 %v714
      %v1139 = vpop.f32.mrb[0].mxu0
      %v1140 = vadd.f32 %v290, %v1139
      %v1141 = vpop.f32.mrb[0].mxu0
      %v1142 = vpop.f32.mrb[0].mxu0
      %v1143 = vadd.f32 %v290, %v1142
      %v1144 = vpop.f32.mrb[0].mxu0
      %1145 = vmatprep.mubr.bf16.mxu0 0
      %1146 = vmatmul.mubr.bf16.gmra.mrb[0].mxu0 %v717
      %v1147 = vpop.f32.mrb[0].mxu0
      %v1148 = vadd.f32 %v290, %v1147
      %v1149 = vpop.f32.mrb[0].mxu0
      %v1150 = vpop.f32.mrb[0].mxu0
      %v1151 = vadd.f32 %v290, %v1150
      %v1152 = vpop.f32.mrb[0].mxu0
      %1153 = vmatprep.mubr.bf16.mxu0 0
      %1154 = vmatmul.mubr.bf16.gmra.mrb[0].mxu0 %v720
      %v1155 = vpop.f32.mrb[0].mxu0
      %v1156 = vadd.f32 %v290, %v1155
      %v1157 = vpop.f32.mrb[0].mxu0
      %v1158 = vpop.f32.mrb[0].mxu0
      %v1159 = vadd.f32 %v290, %v1158
      %v1160 = vpop.f32.mrb[0].mxu0
      %1161 = vdwg.mxu0
      %v1162 = vmax.f32 %v764, 0.0
      %v1163 = vmax.f32 %v767, 0.0
      %v1164 = vmax.f32 %v772, 0.0
      %v1165 = vmax.f32 %v775, 0.0
      %v1166 = vmax.f32 %v780, 0.0
      %v1167 = vmax.f32 %v783, 0.0
      %v1168 = vmax.f32 %v788, 0.0
      %v1169 = vmax.f32 %v791, 0.0
      %v1170 = vmax.f32 %v796, 0.0
      %v1171 = vmax.f32 %v799, 0.0
      %v1172 = vmax.f32 %v804, 0.0
      %v1173 = vmax.f32 %v807, 0.0
      %v1174 = vmax.f32 %v812, 0.0
      %v1175 = vmax.f32 %v815, 0.0
      %v1176 = vmax.f32 %v820, 0.0
      %v1177 = vmax.f32 %v823, 0.0
      %v1178 = vmax.f32 %v828, 0.0
      %v1179 = vmax.f32 %v831, 0.0
      %v1180 = vmax.f32 %v836, 0.0
      %v1181 = vmax.f32 %v839, 0.0
      %v1182 = vmax.f32 %v844, 0.0
      %v1183 = vmax.f32 %v847, 0.0
      %v1184 = vmax.f32 %v852, 0.0
      %v1185 = vmax.f32 %v855, 0.0
      %v1186 = vmax.f32 %v860, 0.0
      %v1187 = vmax.f32 %v863, 0.0
      %v1188 = vmax.f32 %v868, 0.0
      %v1189 = vmax.f32 %v871, 0.0
      %v1190 = vmax.f32 %v876, 0.0
      %v1191 = vmax.f32 %v879, 0.0
      %v1192 = vmax.f32 %v884, 0.0
      %v1193 = vmax.f32 %v887, 0.0
      %v1194 = vmax.f32 %v892, 0.0
      %v1195 = vmax.f32 %v895, 0.0
      %v1196 = vmax.f32 %v900, 0.0
      %v1197 = vmax.f32 %v903, 0.0
      %v1198 = vmax.f32 %v908, 0.0
      %v1199 = vmax.f32 %v911, 0.0
      %v1200 = vmax.f32 %v916, 0.0
      %v1201 = vmax.f32 %v919, 0.0
      %v1202 = vmax.f32 %v924, 0.0
      %v1203 = vmax.f32 %v927, 0.0
      %v1204 = vmax.f32 %v932, 0.0
      %v1205 = vmax.f32 %v935, 0.0
      %v1206 = vmax.f32 %v940, 0.0
      %v1207 = vmax.f32 %v943, 0.0
      %v1208 = vmax.f32 %v948, 0.0
      %v1209 = vmax.f32 %v951, 0.0
      %v1210 = vmax.f32 %v956, 0.0
      %v1211 = vmax.f32 %v959, 0.0
      %v1212 = vmax.f32 %v964, 0.0
      %v1213 = vmax.f32 %v967, 0.0
      %v1214 = vmax.f32 %v972, 0.0
      %v1215 = vmax.f32 %v975, 0.0
      %v1216 = vmax.f32 %v980, 0.0
      %v1217 = vmax.f32 %v983, 0.0
      %v1218 = vmax.f32 %v988, 0.0
      %v1219 = vmax.f32 %v991, 0.0
      %v1220 = vmax.f32 %v996, 0.0
      %v1221 = vmax.f32 %v999, 0.0
      %v1222 = vmax.f32 %v1004, 0.0
      %v1223 = vmax.f32 %v1007, 0.0
      %v1224 = vmax.f32 %v1012, 0.0
      %v1225 = vmax.f32 %v1015, 0.0
      %v1226 = vmax.f32 %v1020, 0.0
      %v1227 = vmax.f32 %v1023, 0.0
      %v1228 = vmax.f32 %v1028, 0.0
      %v1229 = vmax.f32 %v1031, 0.0
      %v1230 = vmax.f32 %v1036, 0.0
      %v1231 = vmax.f32 %v1039, 0.0
      %v1232 = vmax.f32 %v1044, 0.0
      %v1233 = vmax.f32 %v1047, 0.0
      %v1234 = vmax.f32 %v1052, 0.0
      %v1235 = vmax.f32 %v1055, 0.0
      %v1236 = vmax.f32 %v1060, 0.0
      %v1237 = vmax.f32 %v1063, 0.0
      %v1238 = vmax.f32 %v1068, 0.0
      %v1239 = vmax.f32 %v1071, 0.0
      %v1240 = vmax.f32 %v1076, 0.0
      %v1241 = vmax.f32 %v1079, 0.0
      %v1242 = vmax.f32 %v1084, 0.0
      %v1243 = vmax.f32 %v1087, 0.0
      %v1244 = vmax.f32 %v1092, 0.0
      %v1245 = vmax.f32 %v1095, 0.0
      %v1246 = vmax.f32 %v1100, 0.0
      %v1247 = vmax.f32 %v1103, 0.0
      %v1248 = vmax.f32 %v1108, 0.0
      %v1249 = vmax.f32 %v1111, 0.0
      %v1250 = vmax.f32 %v1116, 0.0
      %v1251 = vmax.f32 %v1119, 0.0
      %v1252 = vmax.f32 %v1124, 0.0
      %v1253 = vmax.f32 %v1127, 0.0
      %v1254 = vmax.f32 %v1132, 0.0
      %v1255 = vmax.f32 %v1135, 0.0
      %v1256 = vmax.f32 %v1140, 0.0
      %v1257 = vmax.f32 %v1143, 0.0
      %v1258 = vmax.f32 %v1148, 0.0
      %v1259 = vmax.f32 %v1151, 0.0
      %v1260 = vmax.f32 %v1156, 0.0
      %v1261 = vmax.f32 %v1159, 0.0
      %v1262 = vpack.c.bf16 %v1163, %v1162
      %v1263 = vpack.c.bf16 %v1165, %v1164
      %v1264 = vpack.c.bf16 %v1167, %v1166
      %v1265 = vpack.c.bf16 %v1169, %v1168
      %v1266 = vpack.c.bf16 %v1171, %v1170
      %v1267 = vpack.c.bf16 %v1173, %v1172
      %v1268 = vpack.c.bf16 %v1175, %v1174
      %v1269 = vpack.c.bf16 %v1177, %v1176
      %v1270 = vpack.c.bf16 %v1179, %v1178
      %v1271 = vpack.c.bf16 %v1181, %v1180
      %v1272 = vpack.c.bf16 %v1183, %v1182
      %v1273 = vpack.c.bf16 %v1185, %v1184
      %v1274 = vpack.c.bf16 %v1187, %v1186
      %v1275 = vpack.c.bf16 %v1189, %v1188
      %v1276 = vpack.c.bf16 %v1191, %v1190
      %v1277 = vpack.c.bf16 %v1193, %v1192
      %v1278 = vpack.c.bf16 %v1195, %v1194
      %v1279 = vpack.c.bf16 %v1197, %v1196
      %v1280 = vpack.c.bf16 %v1199, %v1198
      %v1281 = vpack.c.bf16 %v1201, %v1200
      %v1282 = vpack.c.bf16 %v1203, %v1202
      %v1283 = vpack.c.bf16 %v1205, %v1204
      %v1284 = vpack.c.bf16 %v1207, %v1206
      %v1285 = vpack.c.bf16 %v1209, %v1208
      %v1286 = vpack.c.bf16 %v1211, %v1210
      %v1287 = vpack.c.bf16 %v1213, %v1212
      %v1288 = vpack.c.bf16 %v1215, %v1214
      %v1289 = vpack.c.bf16 %v1217, %v1216
      %v1290 = vpack.c.bf16 %v1219, %v1218
      %v1291 = vpack.c.bf16 %v1221, %v1220
      %v1292 = vpack.c.bf16 %v1223, %v1222
      %v1293 = vpack.c.bf16 %v1225, %v1224
      %v1294 = vpack.c.bf16 %v1227, %v1226
      %v1295 = vpack.c.bf16 %v1229, %v1228
      %v1296 = vpack.c.bf16 %v1231, %v1230
      %v1297 = vpack.c.bf16 %v1233, %v1232
      %v1298 = vpack.c.bf16 %v1235, %v1234
      %v1299 = vpack.c.bf16 %v1237, %v1236
      %v1300 = vpack.c.bf16 %v1239, %v1238
      %v1301 = vpack.c.bf16 %v1241, %v1240
      %v1302 = vpack.c.bf16 %v1243, %v1242
      %v1303 = vpack.c.bf16 %v1245, %v1244
      %v1304 = vpack.c.bf16 %v1247, %v1246
      %v1305 = vpack.c.bf16 %v1249, %v1248
      %v1306 = vpack.c.bf16 %v1251, %v1250
      %v1307 = vpack.c.bf16 %v1253, %v1252
      %v1308 = vpack.c.bf16 %v1255, %v1254
      %v1309 = vpack.c.bf16 %v1257, %v1256
      %v1310 = vpack.c.bf16 %v1259, %v1258
      %v1311 = vpack.c.bf16 %v1261, %v1260
      %v1362 = vunpack.c.l.b16 %v1262
      %v1363 = vunpack.c.h.b16 %v1262
      %v1364 = vunpack.c.l.b16 %v1263
      %v1365 = vunpack.c.h.b16 %v1263
      %v1366 = vunpack.c.l.b16 %v1264
      %v1367 = vunpack.c.h.b16 %v1264
      %v1368 = vunpack.c.l.b16 %v1265
      %v1369 = vunpack.c.h.b16 %v1265
      %v1370 = vunpack.c.l.b16 %v1266
      %v1371 = vunpack.c.h.b16 %v1266
      %v1372 = vunpack.c.l.b16 %v1267
      %v1373 = vunpack.c.h.b16 %v1267
      %v1374 = vunpack.c.l.b16 %v1268
      %v1375 = vunpack.c.h.b16 %v1268
      %v1376 = vunpack.c.l.b16 %v1269
      %v1377 = vunpack.c.h.b16 %v1269
      %v1378 = vunpack.c.l.b16 %v1270
      %v1379 = vunpack.c.h.b16 %v1270
      %v1380 = vunpack.c.l.b16 %v1271
      %v1381 = vunpack.c.h.b16 %v1271
      %v1382 = vunpack.c.l.b16 %v1272
      %v1383 = vunpack.c.h.b16 %v1272
      %v1384 = vunpack.c.l.b16 %v1273
      %v1385 = vunpack.c.h.b16 %v1273
      %v1386 = vunpack.c.l.b16 %v1274
      %v1387 = vunpack.c.h.b16 %v1274
      %v1388 = vunpack.c.l.b16 %v1275
      %v1389 = vunpack.c.h.b16 %v1275
      %v1390 = vunpack.c.l.b16 %v1276
      %v1391 = vunpack.c.h.b16 %v1276
      %v1392 = vunpack.c.l.b16 %v1277
      %v1393 = vunpack.c.h.b16 %v1277
      %v1394 = vunpack.c.l.b16 %v1278
      %v1395 = vunpack.c.h.b16 %v1278
      %v1396 = vunpack.c.l.b16 %v1279
      %v1397 = vunpack.c.h.b16 %v1279
      %v1398 = vunpack.c.l.b16 %v1280
      %v1399 = vunpack.c.h.b16 %v1280
      %v1400 = vunpack.c.l.b16 %v1281
      %v1401 = vunpack.c.h.b16 %v1281
      %v1402 = vunpack.c.l.b16 %v1282
      %v1403 = vunpack.c.h.b16 %v1282
      %v1404 = vunpack.c.l.b16 %v1283
      %v1405 = vunpack.c.h.b16 %v1283
      %v1406 = vunpack.c.l.b16 %v1284
      %v1407 = vunpack.c.h.b16 %v1284
      %v1408 = vunpack.c.l.b16 %v1285
      %v1409 = vunpack.c.h.b16 %v1285
      %v1410 = vunpack.c.l.b16 %v1286
      %v1411 = vunpack.c.h.b16 %v1286
      %v1412 = vunpack.c.l.b16 %v1287
      %v1413 = vunpack.c.h.b16 %v1287
      %v1414 = vunpack.c.l.b16 %v1288
      %v1415 = vunpack.c.h.b16 %v1288
      %v1416 = vunpack.c.l.b16 %v1289
      %v1417 = vunpack.c.h.b16 %v1289
      %v1418 = vunpack.c.l.b16 %v1290
      %v1419 = vunpack.c.h.b16 %v1290
      %v1420 = vunpack.c.l.b16 %v1291
      %v1421 = vunpack.c.h.b16 %v1291
      %v1422 = vunpack.c.l.b16 %v1292
      %v1423 = vunpack.c.h.b16 %v1292
      %v1424 = vunpack.c.l.b16 %v1293
      %v1425 = vunpack.c.h.b16 %v1293
      %v1426 = vunpack.c.l.b16 %v1294
      %v1427 = vunpack.c.h.b16 %v1294
      %v1428 = vunpack.c.l.b16 %v1295
      %v1429 = vunpack.c.h.b16 %v1295
      %v1430 = vunpack.c.l.b16 %v1296
      %v1431 = vunpack.c.h.b16 %v1296
      %v1432 = vunpack.c.l.b16 %v1297
      %v1433 = vunpack.c.h.b16 %v1297
      %v1434 = vunpack.c.l.b16 %v1298
      %v1435 = vunpack.c.h.b16 %v1298
      %v1436 = vunpack.c.l.b16 %v1299
      %v1437 = vunpack.c.h.b16 %v1299
      %v1438 = vunpack.c.l.b16 %v1300
      %v1439 = vunpack.c.h.b16 %v1300
      %v1440 = vunpack.c.l.b16 %v1301
      %v1441 = vunpack.c.h.b16 %v1301
      %v1442 = vunpack.c.l.b16 %v1302
      %v1443 = vunpack.c.h.b16 %v1302
      %v1444 = vunpack.c.l.b16 %v1303
      %v1445 = vunpack.c.h.b16 %v1303
      %v1446 = vunpack.c.l.b16 %v1304
      %v1447 = vunpack.c.h.b16 %v1304
      %v1448 = vunpack.c.l.b16 %v1305
      %v1449 = vunpack.c.h.b16 %v1305
      %v1450 = vunpack.c.l.b16 %v1306
      %v1451 = vunpack.c.h.b16 %v1306
      %v1452 = vunpack.c.l.b16 %v1307
      %v1453 = vunpack.c.h.b16 %v1307
      %v1454 = vunpack.c.l.b16 %v1308
      %v1455 = vunpack.c.h.b16 %v1308
      %v1456 = vunpack.c.l.b16 %v1309
      %v1457 = vunpack.c.h.b16 %v1309
      %v1458 = vunpack.c.l.b16 %v1310
      %v1459 = vunpack.c.h.b16 %v1310
      %v1460 = vunpack.c.l.b16 %v1311
      %v1461 = vunpack.c.h.b16 %v1311
      %v1462 = vpack.c.b16 %v1362, %v1362
      %v1463 = vpack.c.b16 %v1363, %v1363
      %v1464 = vpack.c.b16 %v1364, %v1364
      %v1465 = vpack.c.b16 %v1365, %v1365
      %v1466 = vpack.c.b16 %v1366, %v1366
      %v1467 = vpack.c.b16 %v1367, %v1367
      %v1468 = vpack.c.b16 %v1368, %v1368
      %v1469 = vpack.c.b16 %v1369, %v1369
      %v1470 = vpack.c.b16 %v1370, %v1370
      %v1471 = vpack.c.b16 %v1371, %v1371
      %v1472 = vpack.c.b16 %v1372, %v1372
      %v1473 = vpack.c.b16 %v1373, %v1373
      %v1474 = vpack.c.b16 %v1374, %v1374
      %v1475 = vpack.c.b16 %v1375, %v1375
      %v1476 = vpack.c.b16 %v1376, %v1376
      %v1477 = vpack.c.b16 %v1377, %v1377
      %v1478 = vpack.c.b16 %v1378, %v1378
      %v1479 = vpack.c.b16 %v1379, %v1379
      %v1480 = vpack.c.b16 %v1380, %v1380
      %v1481 = vpack.c.b16 %v1381, %v1381
      %v1482 = vpack.c.b16 %v1382, %v1382
      %v1483 = vpack.c.b16 %v1383, %v1383
      %v1484 = vpack.c.b16 %v1384, %v1384
      %v1485 = vpack.c.b16 %v1385, %v1385
      %v1486 = vpack.c.b16 %v1386, %v1386
      %v1487 = vpack.c.b16 %v1387, %v1387
      %v1488 = vpack.c.b16 %v1388, %v1388
      %v1489 = vpack.c.b16 %v1389, %v1389
      %v1490 = vpack.c.b16 %v1390, %v1390
      %v1491 = vpack.c.b16 %v1391, %v1391
      %v1492 = vpack.c.b16 %v1392, %v1392
      %v1493 = vpack.c.b16 %v1393, %v1393
      %v1494 = vpack.c.b16 %v1394, %v1394
      %v1495 = vpack.c.b16 %v1395, %v1395
      %v1496 = vpack.c.b16 %v1396, %v1396
      %v1497 = vpack.c.b16 %v1397, %v1397
      %v1498 = vpack.c.b16 %v1398, %v1398
      %v1499 = vpack.c.b16 %v1399, %v1399
      %v1500 = vpack.c.b16 %v1400, %v1400
      %v1501 = vpack.c.b16 %v1401, %v1401
      %v1502 = vpack.c.b16 %v1402, %v1402
      %v1503 = vpack.c.b16 %v1403, %v1403
      %v1504 = vpack.c.b16 %v1404, %v1404
      %v1505 = vpack.c.b16 %v1405, %v1405
      %v1506 = vpack.c.b16 %v1406, %v1406
      %v1507 = vpack.c.b16 %v1407, %v1407
      %v1508 = vpack.c.b16 %v1408, %v1408
      %v1509 = vpack.c.b16 %v1409, %v1409
      %v1510 = vpack.c.b16 %v1410, %v1410
      %v1511 = vpack.c.b16 %v1411, %v1411
      %v1512 = vpack.c.b16 %v1412, %v1412
      %v1513 = vpack.c.b16 %v1413, %v1413
      %v1514 = vpack.c.b16 %v1414, %v1414
      %v1515 = vpack.c.b16 %v1415, %v1415
      %v1516 = vpack.c.b16 %v1416, %v1416
      %v1517 = vpack.c.b16 %v1417, %v1417
      %v1518 = vpack.c.b16 %v1418, %v1418
      %v1519 = vpack.c.b16 %v1419, %v1419
      %v1520 = vpack.c.b16 %v1420, %v1420
      %v1521 = vpack.c.b16 %v1421, %v1421
      %v1522 = vpack.c.b16 %v1422, %v1422
      %v1523 = vpack.c.b16 %v1423, %v1423
      %v1524 = vpack.c.b16 %v1424, %v1424
      %v1525 = vpack.c.b16 %v1425, %v1425
      %v1526 = vpack.c.b16 %v1426, %v1426
      %v1527 = vpack.c.b16 %v1427, %v1427
      %v1528 = vpack.c.b16 %v1428, %v1428
      %v1529 = vpack.c.b16 %v1429, %v1429
      %v1530 = vpack.c.b16 %v1430, %v1430
      %v1531 = vpack.c.b16 %v1431, %v1431
      %v1532 = vpack.c.b16 %v1432, %v1432
      %v1533 = vpack.c.b16 %v1433, %v1433
      %v1534 = vpack.c.b16 %v1434, %v1434
      %v1535 = vpack.c.b16 %v1435, %v1435
      %v1536 = vpack.c.b16 %v1436, %v1436
      %v1537 = vpack.c.b16 %v1437, %v1437
      %v1538 = vpack.c.b16 %v1438, %v1438
      %v1539 = vpack.c.b16 %v1439, %v1439
      %v1540 = vpack.c.b16 %v1440, %v1440
      %v1541 = vpack.c.b16 %v1441, %v1441
      %v1542 = vpack.c.b16 %v1442, %v1442
      %v1543 = vpack.c.b16 %v1443, %v1443
      %v1544 = vpack.c.b16 %v1444, %v1444
      %v1545 = vpack.c.b16 %v1445, %v1445
      %v1546 = vpack.c.b16 %v1446, %v1446
      %v1547 = vpack.c.b16 %v1447, %v1447
      %v1548 = vpack.c.b16 %v1448, %v1448
      %v1549 = vpack.c.b16 %v1449, %v1449
      %v1550 = vpack.c.b16 %v1450, %v1450
      %v1551 = vpack.c.b16 %v1451, %v1451
      %v1552 = vpack.c.b16 %v1452, %v1452
      %v1553 = vpack.c.b16 %v1453, %v1453
      %v1554 = vpack.c.b16 %v1454, %v1454
      %v1555 = vpack.c.b16 %v1455, %v1455
      %v1556 = vpack.c.b16 %v1456, %v1456
      %v1557 = vpack.c.b16 %v1457, %v1457
      %v1558 = vpack.c.b16 %v1458, %v1458
      %v1559 = vpack.c.b16 %v1459, %v1459
      %v1560 = vpack.c.b16 %v1460, %v1460
      %v1561 = vpack.c.b16 %v1461, %v1461
      %vm1662 = vcmask 125952
      %1663 = vst.msk [vmem:[%s172] sm:$0xf] %vm1662, %v1462
      %1664 = vst.msk [vmem:[%s172 + $0x4] sm:$0xf] %vm1662, %v1463
      %1665 = vst.msk [vmem:[%s172 + $0x8] sm:$0xf] %vm1662, %v1464
      %1666 = vst.msk [vmem:[%s172 + $0xc] sm:$0xf] %vm1662, %v1465
      %1667 = vst.msk [vmem:[%s172 + $0x10] sm:$0xf] %vm1662, %v1466
      %1668 = vst.msk [vmem:[%s172 + $0x14] sm:$0xf] %vm1662, %v1467
      %1669 = vst.msk [vmem:[%s172 + $0x18] sm:$0xf] %vm1662, %v1468
      %1670 = vst.msk [vmem:[%s172 + $0x1c] sm:$0xf] %vm1662, %v1469
      %1671 = vst.msk [vmem:[%s172 + $0x20] sm:$0xf] %vm1662, %v1470
      %1672 = vst.msk [vmem:[%s172 + $0x24] sm:$0xf] %vm1662, %v1471
      %1673 = vst.msk [vmem:[%s172 + $0x28] sm:$0xf] %vm1662, %v1472
      %1674 = vst.msk [vmem:[%s172 + $0x2c] sm:$0xf] %vm1662, %v1473
      %1675 = vst.msk [vmem:[%s172 + $0x30] sm:$0xf] %vm1662, %v1474
      %1676 = vst.msk [vmem:[%s172 + $0x34] sm:$0xf] %vm1662, %v1475
      %1677 = vst.msk [vmem:[%s172 + $0x38] sm:$0xf] %vm1662, %v1476
      %1678 = vst.msk [vmem:[%s172 + $0x3c] sm:$0xf] %vm1662, %v1477
      %1679 = vst.msk [vmem:[%s172 + $0x40] sm:$0xf] %vm1662, %v1478
      %1680 = vst.msk [vmem:[%s172 + $0x44] sm:$0xf] %vm1662, %v1479
      %1681 = vst.msk [vmem:[%s172 + $0x48] sm:$0xf] %vm1662, %v1480
      %1682 = vst.msk [vmem:[%s172 + $0x4c] sm:$0xf] %vm1662, %v1481
      %1683 = vst.msk [vmem:[%s172 + $0x50] sm:$0xf] %vm1662, %v1482
      %1684 = vst.msk [vmem:[%s172 + $0x54] sm:$0xf] %vm1662, %v1483
      %1685 = vst.msk [vmem:[%s172 + $0x58] sm:$0xf] %vm1662, %v1484
      %1686 = vst.msk [vmem:[%s172 + $0x5c] sm:$0xf] %vm1662, %v1485
      %1687 = vst.msk [vmem:[%s172 + $0x60] sm:$0xf] %vm1662, %v1486
      %1688 = vst.msk [vmem:[%s172 + $0x64] sm:$0xf] %vm1662, %v1487
      %1689 = vst.msk [vmem:[%s172 + $0x68] sm:$0xf] %vm1662, %v1488
      %1690 = vst.msk [vmem:[%s172 + $0x6c] sm:$0xf] %vm1662, %v1489
      %1691 = vst.msk [vmem:[%s172 + $0x70] sm:$0xf] %vm1662, %v1490
      %1692 = vst.msk [vmem:[%s172 + $0x74] sm:$0xf] %vm1662, %v1491
      %1693 = vst.msk [vmem:[%s172 + $0x78] sm:$0xf] %vm1662, %v1492
      %1694 = vst.msk [vmem:[%s172 + $0x7c] sm:$0xf] %vm1662, %v1493
      %1695 = vst.msk [vmem:[%s172 + $0x80] sm:$0xf] %vm1662, %v1494
      %1696 = vst.msk [vmem:[%s172 + $0x84] sm:$0xf] %vm1662, %v1495
      %1697 = vst.msk [vmem:[%s172 + $0x88] sm:$0xf] %vm1662, %v1496
      %1698 = vst.msk [vmem:[%s172 + $0x8c] sm:$0xf] %vm1662, %v1497
      %1699 = vst.msk [vmem:[%s172 + $0x90] sm:$0xf] %vm1662, %v1498
      %1700 = vst.msk [vmem:[%s172 + $0x94] sm:$0xf] %vm1662, %v1499
      %1701 = vst.msk [vmem:[%s172 + $0x98] sm:$0xf] %vm1662, %v1500
      %1702 = vst.msk [vmem:[%s172 + $0x9c] sm:$0xf] %vm1662, %v1501
      %1703 = vst.msk [vmem:[%s172 + $0xa0] sm:$0xf] %vm1662, %v1502
      %1704 = vst.msk [vmem:[%s172 + $0xa4] sm:$0xf] %vm1662, %v1503
      %1705 = vst.msk [vmem:[%s172 + $0xa8] sm:$0xf] %vm1662, %v1504
      %1706 = vst.msk [vmem:[%s172 + $0xac] sm:$0xf] %vm1662, %v1505
      %1707 = vst.msk [vmem:[%s172 + $0xb0] sm:$0xf] %vm1662, %v1506
      %1708 = vst.msk [vmem:[%s172 + $0xb4] sm:$0xf] %vm1662, %v1507
      %1709 = vst.msk [vmem:[%s172 + $0xb8] sm:$0xf] %vm1662, %v1508
      %1710 = vst.msk [vmem:[%s172 + $0xbc] sm:$0xf] %vm1662, %v1509
      %1711 = vst.msk [vmem:[%s172 + $0xc0] sm:$0xf] %vm1662, %v1510
      %1712 = vst.msk [vmem:[%s172 + $0xc4] sm:$0xf] %vm1662, %v1511
      %1713 = vst.msk [vmem:[%s172 + $0xc8] sm:$0xf] %vm1662, %v1512
      %1714 = vst.msk [vmem:[%s172 + $0xcc] sm:$0xf] %vm1662, %v1513
      %1715 = vst.msk [vmem:[%s172 + $0xd0] sm:$0xf] %vm1662, %v1514
      %1716 = vst.msk [vmem:[%s172 + $0xd4] sm:$0xf] %vm1662, %v1515
      %1717 = vst.msk [vmem:[%s172 + $0xd8] sm:$0xf] %vm1662, %v1516
      %1718 = vst.msk [vmem:[%s172 + $0xdc] sm:$0xf] %vm1662, %v1517
      %1719 = vst.msk [vmem:[%s172 + $0xe0] sm:$0xf] %vm1662, %v1518
      %1720 = vst.msk [vmem:[%s172 + $0xe4] sm:$0xf] %vm1662, %v1519
      %1721 = vst.msk [vmem:[%s172 + $0xe8] sm:$0xf] %vm1662, %v1520
      %1722 = vst.msk [vmem:[%s172 + $0xec] sm:$0xf] %vm1662, %v1521
      %1723 = vst.msk [vmem:[%s172 + $0xf0] sm:$0xf] %vm1662, %v1522
      %1724 = vst.msk [vmem:[%s172 + $0xf4] sm:$0xf] %vm1662, %v1523
      %1725 = vst.msk [vmem:[%s172 + $0xf8] sm:$0xf] %vm1662, %v1524
      %1726 = vst.msk [vmem:[%s172 + $0xfc] sm:$0xf] %vm1662, %v1525
      %1727 = vst.msk [vmem:[%s172 + $0x100] sm:$0xf] %vm1662, %v1526
      %1728 = vst.msk [vmem:[%s172 + $0x104] sm:$0xf] %vm1662, %v1527
      %1729 = vst.msk [vmem:[%s172 + $0x108] sm:$0xf] %vm1662, %v1528
      %1730 = vst.msk [vmem:[%s172 + $0x10c] sm:$0xf] %vm1662, %v1529
      %1731 = vst.msk [vmem:[%s172 + $0x110] sm:$0xf] %vm1662, %v1530
      %1732 = vst.msk [vmem:[%s172 + $0x114] sm:$0xf] %vm1662, %v1531
      %1733 = vst.msk [vmem:[%s172 + $0x118] sm:$0xf] %vm1662, %v1532
      %1734 = vst.msk [vmem:[%s172 + $0x11c] sm:$0xf] %vm1662, %v1533
      %1735 = vst.msk [vmem:[%s172 + $0x120] sm:$0xf] %vm1662, %v1534
      %1736 = vst.msk [vmem:[%s172 + $0x124] sm:$0xf] %vm1662, %v1535
      %1737 = vst.msk [vmem:[%s172 + $0x128] sm:$0xf] %vm1662, %v1536
      %1738 = vst.msk [vmem:[%s172 + $0x12c] sm:$0xf] %vm1662, %v1537
      %1739 = vst.msk [vmem:[%s172 + $0x130] sm:$0xf] %vm1662, %v1538
      %1740 = vst.msk [vmem:[%s172 + $0x134] sm:$0xf] %vm1662, %v1539
      %1741 = vst.msk [vmem:[%s172 + $0x138] sm:$0xf] %vm1662, %v1540
      %1742 = vst.msk [vmem:[%s172 + $0x13c] sm:$0xf] %vm1662, %v1541
      %1743 = vst.msk [vmem:[%s172 + $0x140] sm:$0xf] %vm1662, %v1542
      %1744 = vst.msk [vmem:[%s172 + $0x144] sm:$0xf] %vm1662, %v1543
      %1745 = vst.msk [vmem:[%s172 + $0x148] sm:$0xf] %vm1662, %v1544
      %1746 = vst.msk [vmem:[%s172 + $0x14c] sm:$0xf] %vm1662, %v1545
      %1747 = vst.msk [vmem:[%s172 + $0x150] sm:$0xf] %vm1662, %v1546
      %1748 = vst.msk [vmem:[%s172 + $0x154] sm:$0xf] %vm1662, %v1547
      %1749 = vst.msk [vmem:[%s172 + $0x158] sm:$0xf] %vm1662, %v1548
      %1750 = vst.msk [vmem:[%s172 + $0x15c] sm:$0xf] %vm1662, %v1549
      %1751 = vst.msk [vmem:[%s172 + $0x160] sm:$0xf] %vm1662, %v1550
      %1752 = vst.msk [vmem:[%s172 + $0x164] sm:$0xf] %vm1662, %v1551
      %1753 = vst.msk [vmem:[%s172 + $0x168] sm:$0xf] %vm1662, %v1552
      %1754 = vst.msk [vmem:[%s172 + $0x16c] sm:$0xf] %vm1662, %v1553
      %1755 = vst.msk [vmem:[%s172 + $0x170] sm:$0xf] %vm1662, %v1554
      %1756 = vst.msk [vmem:[%s172 + $0x174] sm:$0xf] %vm1662, %v1555
      %1757 = vst.msk [vmem:[%s172 + $0x178] sm:$0xf] %vm1662, %v1556
      %1758 = vst.msk [vmem:[%s172 + $0x17c] sm:$0xf] %vm1662, %v1557
      %1759 = vst.msk [vmem:[%s172 + $0x180] sm:$0xf] %vm1662, %v1558
      %1760 = vst.msk [vmem:[%s172 + $0x184] sm:$0xf] %vm1662, %v1559
      %1761 = vst.msk [vmem:[%s172 + $0x188] sm:$0xf] %vm1662, %v1560
      %1762 = vst.msk [vmem:[%s172 + $0x18c] sm:$0xf] %vm1662, %v1561
      %s1763 = smul.u32 100, %s14
      %p1764 = scmp.lt.s32.totalorder %s1763, 399
      %s1765 = scalar_select %p1764, %s1763, 399
      %s1766 = smul.addr %s1765, 4
      %s1767 = scalar_lea.vmem %s3, %s1766
      // Predicated region
      $region33: #{cnn_critic_forward.4} parent=31 // pred_check
        %p1768 = pneg %p100
      $region34: #{cnn_critic_forward.4} parent=31 // pred_check_branch
        %1770 = sbr.rel (%p1768) target = $region36
      $region35: #{cnn_critic_forward.4} parent=31 // pred_region
        %s1771 = smul.u32 100, %s14
      $region36: #{cnn_critic_forward.4} parent=31 // pred_fallthru
        _
    $region32: #{cnn_critic_forward.4} parent=5 // pred_fallthru
      _
    %p1772 = scmp.le.s32.totalorder 2, %s9
    // Predicated region
    $region37: #{cnn_critic_forward.4} parent=5 // pred_check
      %p1773 = pneg %p1772
    $region38: #{cnn_critic_forward.4} parent=5 // pred_check_branch
      %1775 = sbr.rel (%p1773) target = $region40
    $region39: #{cnn_critic_forward.4} parent=5 // pred_region
      %s1776 = ssub.s32 %s9, 2
      // Predicated region
      $region41: #{cnn_critic_forward.4} parent=39 // pred_check
        %p1777 = pneg %p106
      $region42: #{cnn_critic_forward.4} parent=39 // pred_check_branch
        %1779 = sbr.rel (%p1777) target = $region44
      $region43: #{cnn_critic_forward.4} parent=39 // pred_region
        %s1780 = smul.u32 100, %s15
        %p1781 = scmp.lt.s32.totalorder %s1780, 399
        %s1782 = scalar_select %p1781, %s1780, 399
        %s1783 = smul.addr %s1782, 4
        %s1784 = scalar_lea.vmem %s3, %s1783
      $region44: #{cnn_critic_forward.4} parent=39 // pred_fallthru
        _
    $region40: #{cnn_critic_forward.4} parent=5 // pred_fallthru
      _
  $region6: #{cnn_critic_forward.4} parent=0 // loop_footer
    %s13 = sadd.s32 1, %s9
  $region7: #{cnn_critic_forward.4} parent=0 // loop_footer_branch
    %8 = sbr.rel target = $region3
  $region8: #{cnn_critic_forward.4} parent=0 // loop_exit
    _

// kernel: cnn_critic_forward.5
$region0: #{cnn_critic_forward.5}
  #allocation0 [shape = 'u32[]', space=smem, size = 0x4, offset = 0x4, fixed_abs, tag = 'smem constant byte address 0x4 - core index']
  #allocation1 [shape = 'u32[144,128]{1,0:T(1,128)}', space=vmem, size = 0x12000, scoped, tag = 'internal scratch']
  %s0 = inlined_call_operand.vmem [shape: bf16[800,400], index: 0, kind: input, shape index: {}]
  %s1 = inlined_call_operand.vmem [shape: bf16[400,32], index: 1, kind: input, shape index: {}]
  %s2 = inlined_call_operand.vmem [shape: f32[1,32], index: 2, kind: input, shape index: {}]
  %s3 = inlined_call_operand.vmem [shape: bf16[800,32], index: 3, kind: output, shape index: {}]
  %s4 = sld [smem:[#allocation0]]
  $region22: #{cnn_critic_forward.5} parent=0
    _
  %s6 = ssub.s32 1, %s4
  %s7 = scalar_select 0, %s6, %s4
  // Predicated region
  $region2: #{cnn_critic_forward.5} parent=0 // pred_check
    _
  $region3: #{cnn_critic_forward.5} parent=0 // pred_check_branch
    %9 = sbr.rel (0) target = $region5
  $region4: #{cnn_critic_forward.5} parent=0 // pred_region
    _
  $region5: #{cnn_critic_forward.5} parent=0 // pred_fallthru
    _
  // Predicated region
  $region6: #{cnn_critic_forward.5} parent=0 // pred_check
    _
  $region7: #{cnn_critic_forward.5} parent=0 // pred_check_branch
    %11 = sbr.rel (0) target = $region9
  $region8: #{cnn_critic_forward.5} parent=0 // pred_region
    _
  $region9: #{cnn_critic_forward.5} parent=0 // pred_fallthru
    _
  // Predicated region
  $region10: #{cnn_critic_forward.5} parent=0 // pred_check
    _
  $region11: #{cnn_critic_forward.5} parent=0 // pred_check_branch
    %13 = sbr.rel (0) target = $region13
  $region12: #{cnn_critic_forward.5} parent=0 // pred_region
    _
  $region13: #{cnn_critic_forward.5} parent=0 // pred_fallthru
    _
  %v15 = vld [vmem:[%s0] sm:$0xff]
  %v16 = vld [vmem:[%s0 + $0x8] sm:$0xff]
  %v17 = vld [vmem:[%s0 + $0x10] sm:$0xff]
  %v18 = vld [vmem:[%s0 + $0x18] sm:$0xff]
  %v19 = vld [vmem:[%s0 + $0x20] sm:$0xff]
  %v20 = vld [vmem:[%s0 + $0x28] sm:$0xff]
  %v21 = vld [vmem:[%s0 + $0x30] sm:$0xff]
  %v22 = vld [vmem:[%s0 + $0x38] sm:$0xff]
  %v23 = vld [vmem:[%s0 + $0x40] sm:$0xff]
  %v24 = vld [vmem:[%s0 + $0x48] sm:$0xff]
  %v25 = vld [vmem:[%s0 + $0x50] sm:$0xff]
  %v26 = vld [vmem:[%s0 + $0x58] sm:$0xff]
  %v27 = vld [vmem:[%s0 + $0x60] sm:$0xff]
  %v28 = vld [vmem:[%s0 + $0x68] sm:$0xff]
  %v29 = vld [vmem:[%s0 + $0x70] sm:$0xff]
  %v30 = vld [vmem:[%s0 + $0x78] sm:$0xff]
  %v31 = vld [vmem:[%s0 + $0x80] sm:$0xff]
  %v32 = vld [vmem:[%s0 + $0x88] sm:$0xff]
  %v33 = vld [vmem:[%s0 + $0x90] sm:$0xff]
  %v34 = vld [vmem:[%s0 + $0x98] sm:$0xff]
  %v35 = vld [vmem:[%s0 + $0xa0] sm:$0xff]
  %v36 = vld [vmem:[%s0 + $0xa8] sm:$0xff]
  %v37 = vld [vmem:[%s0 + $0xb0] sm:$0xff]
  %v38 = vld [vmem:[%s0 + $0xb8] sm:$0xff]
  %v39 = vld [vmem:[%s0 + $0xc0] sm:$0xff]
  %v40 = vld [vmem:[%s0 + $0xc8] sm:$0xff]
  %v41 = vld [vmem:[%s0 + $0xd0] sm:$0xff]
  %v42 = vld [vmem:[%s0 + $0xd8] sm:$0xff]
  %v43 = vld [vmem:[%s0 + $0xe0] sm:$0xff]
  %v44 = vld [vmem:[%s0 + $0xe8] sm:$0xff]
  %v45 = vld [vmem:[%s0 + $0xf0] sm:$0xff]
  %v46 = vld [vmem:[%s0 + $0xf8] sm:$0xff]
  %v47 = vld [vmem:[%s0 + $0x100] sm:$0xff]
  %v48 = vld [vmem:[%s0 + $0x108] sm:$0xff]
  %v49 = vld [vmem:[%s0 + $0x110] sm:$0xff]
  %v50 = vld [vmem:[%s0 + $0x118] sm:$0xff]
  %v51 = vld [vmem:[%s0 + $0x120] sm:$0xff]
  %v52 = vld [vmem:[%s0 + $0x128] sm:$0xff]
  %v53 = vld [vmem:[%s0 + $0x130] sm:$0xff]
  %v54 = vld [vmem:[%s0 + $0x138] sm:$0xff]
  %v55 = vld [vmem:[%s0 + $0x140] sm:$0xff]
  %v56 = vld [vmem:[%s0 + $0x148] sm:$0xff]
  %v57 = vld [vmem:[%s0 + $0x150] sm:$0xff]
  %v58 = vld [vmem:[%s0 + $0x158] sm:$0xff]
  %v59 = vld [vmem:[%s0 + $0x160] sm:$0xff]
  %v60 = vld [vmem:[%s0 + $0x168] sm:$0xff]
  %v61 = vld [vmem:[%s0 + $0x170] sm:$0xff]
  %v62 = vld [vmem:[%s0 + $0x178] sm:$0xff]
  %v63 = vld [vmem:[%s0 + $0x180] sm:$0xff]
  %v64 = vld [vmem:[%s0 + $0x188] sm:$0xff]
  %v65 = vld [vmem:[%s0 + $0x190] sm:$0xff]
  %v66 = vld [vmem:[%s0 + $0x198] sm:$0xff]
  %v67 = vld [vmem:[%s0 + $0x1a0] sm:$0xff]
  %v68 = vld [vmem:[%s0 + $0x1a8] sm:$0xff]
  %v69 = vld [vmem:[%s0 + $0x1b0] sm:$0xff]
  %v70 = vld [vmem:[%s0 + $0x1b8] sm:$0xff]
  %v71 = vld [vmem:[%s0 + $0x1c0] sm:$0xff]
  %v72 = vld [vmem:[%s0 + $0x1c8] sm:$0xff]
  %v73 = vld [vmem:[%s0 + $0x1d0] sm:$0xff]
  %v74 = vld [vmem:[%s0 + $0x1d8] sm:$0xff]
  %v75 = vld [vmem:[%s0 + $0x1e0] sm:$0xff]
  %v76 = vld [vmem:[%s0 + $0x1e8] sm:$0xff]
  %v77 = vld [vmem:[%s0 + $0x1f0] sm:$0xff]
  %v78 = vld [vmem:[%s0 + $0x1f8] sm:$0xff]
  %v79 = vld [vmem:[%s0 + $0x200] sm:$0xff]
  %v80 = vld [vmem:[%s0 + $0x208] sm:$0xff]
  %v81 = vld [vmem:[%s0 + $0x210] sm:$0xff]
  %v82 = vld [vmem:[%s0 + $0x218] sm:$0xff]
  %v83 = vld [vmem:[%s0 + $0x220] sm:$0xff]
  %v84 = vld [vmem:[%s0 + $0x228] sm:$0xff]
  %v85 = vld [vmem:[%s0 + $0x230] sm:$0xff]
  %v86 = vld [vmem:[%s0 + $0x238] sm:$0xff]
  %v87 = vld [vmem:[%s0 + $0x240] sm:$0xff]
  %v88 = vld [vmem:[%s0 + $0x248] sm:$0xff]
  %v89 = vld [vmem:[%s0 + $0x250] sm:$0xff]
  %v90 = vld [vmem:[%s0 + $0x258] sm:$0xff]
  %v91 = vld [vmem:[%s0 + $0x260] sm:$0xff]
  %v92 = vld [vmem:[%s0 + $0x268] sm:$0xff]
  %v93 = vld [vmem:[%s0 + $0x270] sm:$0xff]
  %v94 = vld [vmem:[%s0 + $0x278] sm:$0xff]
  %v95 = vld [vmem:[%s0 + $0x280] sm:$0xff]
  %v96 = vld [vmem:[%s0 + $0x288] sm:$0xff]
  %v97 = vld [vmem:[%s0 + $0x290] sm:$0xff]
  %v98 = vld [vmem:[%s0 + $0x298] sm:$0xff]
  %v99 = vld [vmem:[%s0 + $0x2a0] sm:$0xff]
  %v100 = vld [vmem:[%s0 + $0x2a8] sm:$0xff]
  %v101 = vld [vmem:[%s0 + $0x2b0] sm:$0xff]
  %v102 = vld [vmem:[%s0 + $0x2b8] sm:$0xff]
  %v103 = vld [vmem:[%s0 + $0x2c0] sm:$0xff]
  %v104 = vld [vmem:[%s0 + $0x2c8] sm:$0xff]
  %v105 = vld [vmem:[%s0 + $0x2d0] sm:$0xff]
  %v106 = vld [vmem:[%s0 + $0x2d8] sm:$0xff]
  %v107 = vld [vmem:[%s0 + $0x2e0] sm:$0xff]
  %v108 = vld [vmem:[%s0 + $0x2e8] sm:$0xff]
  %v109 = vld [vmem:[%s0 + $0x2f0] sm:$0xff]
  %v110 = vld [vmem:[%s0 + $0x2f8] sm:$0xff]
  %v111 = vld [vmem:[%s0 + $0x300] sm:$0xff]
  %v112 = vld [vmem:[%s0 + $0x308] sm:$0xff]
  %v113 = vld [vmem:[%s0 + $0x310] sm:$0xff]
  %v114 = vld [vmem:[%s0 + $0x318] sm:$0xff]
  %v115 = vld [vmem:[%s0 + $0x320] sm:$0xff]
  %v116 = vld [vmem:[%s0 + $0x328] sm:$0xff]
  %v117 = vld [vmem:[%s0 + $0x330] sm:$0xff]
  %v118 = vld [vmem:[%s0 + $0x338] sm:$0xff]
  %v119 = vld [vmem:[%s0 + $0x340] sm:$0xff]
  %v120 = vld [vmem:[%s0 + $0x348] sm:$0xff]
  %v121 = vld [vmem:[%s0 + $0x350] sm:$0xff]
  %v122 = vld [vmem:[%s0 + $0x358] sm:$0xff]
  %v123 = vld [vmem:[%s0 + $0x360] sm:$0xff]
  %v124 = vld [vmem:[%s0 + $0x368] sm:$0xff]
  %v125 = vld [vmem:[%s0 + $0x370] sm:$0xff]
  %v126 = vld [vmem:[%s0 + $0x378] sm:$0xff]
  %v127 = vld [vmem:[%s0 + $0x380] sm:$0xff]
  %v128 = vld [vmem:[%s0 + $0x388] sm:$0xff]
  %v129 = vld [vmem:[%s0 + $0x390] sm:$0xff]
  %v130 = vld [vmem:[%s0 + $0x398] sm:$0xff]
  %v131 = vld [vmem:[%s0 + $0x3a0] sm:$0xff]
  %v132 = vld [vmem:[%s0 + $0x3a8] sm:$0xff]
  %v133 = vld [vmem:[%s0 + $0x3b0] sm:$0xff]
  %v134 = vld [vmem:[%s0 + $0x3b8] sm:$0xff]
  %v135 = vld [vmem:[%s0 + $0x3c0] sm:$0xff]
  %v136 = vld [vmem:[%s0 + $0x3c8] sm:$0xff]
  %v137 = vld [vmem:[%s0 + $0x3d0] sm:$0xff]
  %v138 = vld [vmem:[%s0 + $0x3d8] sm:$0xff]
  %v139 = vld [vmem:[%s0 + $0x3e0] sm:$0xff]
  %v140 = vld [vmem:[%s0 + $0x3e8] sm:$0xff]
  %v141 = vld [vmem:[%s0 + $0x3f0] sm:$0xff]
  %v142 = vld [vmem:[%s0 + $0x3f8] sm:$0xff]
  %v143 = vld [vmem:[%s0 + $0x400] sm:$0xff]
  %v144 = vld [vmem:[%s0 + $0x408] sm:$0xff]
  %v145 = vld [vmem:[%s0 + $0x410] sm:$0xff]
  %v146 = vld [vmem:[%s0 + $0x418] sm:$0xff]
  %v147 = vld [vmem:[%s0 + $0x420] sm:$0xff]
  %v148 = vld [vmem:[%s0 + $0x428] sm:$0xff]
  %v149 = vld [vmem:[%s0 + $0x430] sm:$0xff]
  %v150 = vld [vmem:[%s0 + $0x438] sm:$0xff]
  %v151 = vld [vmem:[%s0 + $0x440] sm:$0xff]
  %v152 = vld [vmem:[%s0 + $0x448] sm:$0xff]
  %v153 = vld [vmem:[%s0 + $0x450] sm:$0xff]
  %v154 = vld [vmem:[%s0 + $0x458] sm:$0xff]
  %v155 = vld [vmem:[%s0 + $0x460] sm:$0xff]
  %v156 = vld [vmem:[%s0 + $0x468] sm:$0xff]
  %v157 = vld [vmem:[%s0 + $0x470] sm:$0xff]
  %v158 = vld [vmem:[%s0 + $0x478] sm:$0xff]
  %v159 = vld [vmem:[%s0 + $0x480] sm:$0xff]
  %v160 = vld [vmem:[%s0 + $0x488] sm:$0xff]
  %v161 = vld [vmem:[%s0 + $0x490] sm:$0xff]
  %v162 = vld [vmem:[%s0 + $0x498] sm:$0xff]
  %v163 = vld [vmem:[%s0 + $0x4a0] sm:$0xff]
  %v164 = vld [vmem:[%s0 + $0x4a8] sm:$0xff]
  %v165 = vld [vmem:[%s0 + $0x4b0] sm:$0xff]
  %v166 = vld [vmem:[%s0 + $0x4b8] sm:$0xff]
  %v167 = vld [vmem:[%s0 + $0x4c0] sm:$0xff]
  %v168 = vld [vmem:[%s0 + $0x4c8] sm:$0xff]
  %v169 = vld [vmem:[%s0 + $0x4d0] sm:$0xff]
  %v170 = vld [vmem:[%s0 + $0x4d8] sm:$0xff]
  %v171 = vld [vmem:[%s0 + $0x4e0] sm:$0xff]
  %v172 = vld [vmem:[%s0 + $0x4e8] sm:$0xff]
  %v173 = vld [vmem:[%s0 + $0x4f0] sm:$0xff]
  %v174 = vld [vmem:[%s0 + $0x4f8] sm:$0xff]
  %v175 = vld [vmem:[%s0 + $0x500] sm:$0xff]
  %v176 = vld [vmem:[%s0 + $0x508] sm:$0xff]
  %v177 = vld [vmem:[%s0 + $0x510] sm:$0xff]
  %v178 = vld [vmem:[%s0 + $0x518] sm:$0xff]
  %v179 = vld [vmem:[%s0 + $0x520] sm:$0xff]
  %v180 = vld [vmem:[%s0 + $0x528] sm:$0xff]
  %v181 = vld [vmem:[%s0 + $0x530] sm:$0xff]
  %v182 = vld [vmem:[%s0 + $0x538] sm:$0xff]
  %v183 = vld [vmem:[%s0 + $0x540] sm:$0xff]
  %v184 = vld [vmem:[%s0 + $0x548] sm:$0xff]
  %v185 = vld [vmem:[%s0 + $0x550] sm:$0xff]
  %v186 = vld [vmem:[%s0 + $0x558] sm:$0xff]
  %v187 = vld [vmem:[%s0 + $0x560] sm:$0xff]
  %v188 = vld [vmem:[%s0 + $0x568] sm:$0xff]
  %v189 = vld [vmem:[%s0 + $0x570] sm:$0xff]
  %v190 = vld [vmem:[%s0 + $0x578] sm:$0xff]
  %v191 = vld [vmem:[%s0 + $0x580] sm:$0xff]
  %v192 = vld [vmem:[%s0 + $0x588] sm:$0xff]
  %v193 = vld [vmem:[%s0 + $0x590] sm:$0xff]
  %v194 = vld [vmem:[%s0 + $0x598] sm:$0xff]
  %v195 = vld [vmem:[%s0 + $0x5a0] sm:$0xff]
  %v196 = vld [vmem:[%s0 + $0x5a8] sm:$0xff]
  %v197 = vld [vmem:[%s0 + $0x5b0] sm:$0xff]
  %v198 = vld [vmem:[%s0 + $0x5b8] sm:$0xff]
  %v199 = vld [vmem:[%s0 + $0x5c0] sm:$0xff]
  %v200 = vld [vmem:[%s0 + $0x5c8] sm:$0xff]
  %v201 = vld [vmem:[%s0 + $0x5d0] sm:$0xff]
  %v202 = vld [vmem:[%s0 + $0x5d8] sm:$0xff]
  %v203 = vld [vmem:[%s0 + $0x5e0] sm:$0xff]
  %v204 = vld [vmem:[%s0 + $0x5e8] sm:$0xff]
  %v205 = vld [vmem:[%s0 + $0x5f0] sm:$0xff]
  %v206 = vld [vmem:[%s0 + $0x5f8] sm:$0xff]
  %v207 = vld [vmem:[%s0 + $0x600] sm:$0xff]
  %v208 = vld [vmem:[%s0 + $0x608] sm:$0xff]
  %v209 = vld [vmem:[%s0 + $0x610] sm:$0xff]
  %v210 = vld [vmem:[%s0 + $0x618] sm:$0xff]
  %v211 = vld [vmem:[%s0 + $0x620] sm:$0xff]
  %v212 = vld [vmem:[%s0 + $0x628] sm:$0xff]
  %v213 = vld [vmem:[%s0 + $0x630] sm:$0xff]
  %v214 = vld [vmem:[%s0 + $0x638] sm:$0xff]
  %v215 = vld [vmem:[%s1] sm:$0xf]
  %v216 = vld [vmem:[%s1 + $0x4] sm:$0xf]
  %v217 = vld [vmem:[%s1 + $0x8] sm:$0xf]
  %v218 = vld [vmem:[%s1 + $0xc] sm:$0xf]
  %v219 = vld [vmem:[%s1 + $0x10] sm:$0xf]
  %v220 = vld [vmem:[%s1 + $0x14] sm:$0xf]
  %v221 = vld [vmem:[%s1 + $0x18] sm:$0xf]
  %v222 = vld [vmem:[%s1 + $0x1c] sm:$0xf]
  %v223 = vld [vmem:[%s1 + $0x20] sm:$0xf]
  %v224 = vld [vmem:[%s1 + $0x24] sm:$0xf]
  %v225 = vld [vmem:[%s1 + $0x28] sm:$0xf]
  %v226 = vld [vmem:[%s1 + $0x2c] sm:$0xf]
  %v227 = vld [vmem:[%s1 + $0x30] sm:$0xf]
  %v228 = vld [vmem:[%s1 + $0x34] sm:$0xf]
  %v229 = vld [vmem:[%s1 + $0x38] sm:$0xf]
  %v230 = vld [vmem:[%s1 + $0x3c] sm:$0xf]
  %v231 = vld [vmem:[%s1 + $0x40] sm:$0xf]
  %v232 = vld [vmem:[%s1 + $0x44] sm:$0xf]
  %v233 = vld [vmem:[%s1 + $0x48] sm:$0xf]
  %v234 = vld [vmem:[%s1 + $0x4c] sm:$0xf]
  %v235 = vld [vmem:[%s1 + $0x50] sm:$0xf]
  %v236 = vld [vmem:[%s1 + $0x54] sm:$0xf]
  %v237 = vld [vmem:[%s1 + $0x58] sm:$0xf]
  %v238 = vld [vmem:[%s1 + $0x5c] sm:$0xf]
  %v239 = vld [vmem:[%s1 + $0x60] sm:$0xf]
  %v240 = vld [vmem:[%s1 + $0x64] sm:$0xf]
  %v241 = vld [vmem:[%s1 + $0x68] sm:$0xf]
  %v242 = vld [vmem:[%s1 + $0x6c] sm:$0xf]
  %v243 = vld [vmem:[%s1 + $0x70] sm:$0xf]
  %v244 = vld [vmem:[%s1 + $0x74] sm:$0xf]
  %v245 = vld [vmem:[%s1 + $0x78] sm:$0xf]
  %v246 = vld [vmem:[%s1 + $0x7c] sm:$0xf]
  %v247 = vld [vmem:[%s1 + $0x80] sm:$0xf]
  %v248 = vld [vmem:[%s1 + $0x84] sm:$0xf]
  %v249 = vld [vmem:[%s1 + $0x88] sm:$0xf]
  %v250 = vld [vmem:[%s1 + $0x8c] sm:$0xf]
  %v251 = vld [vmem:[%s1 + $0x90] sm:$0xf]
  %v252 = vld [vmem:[%s1 + $0x94] sm:$0xf]
  %v253 = vld [vmem:[%s1 + $0x98] sm:$0xf]
  %v254 = vld [vmem:[%s1 + $0x9c] sm:$0xf]
  %v255 = vld [vmem:[%s1 + $0xa0] sm:$0xf]
  %v256 = vld [vmem:[%s1 + $0xa4] sm:$0xf]
  %v257 = vld [vmem:[%s1 + $0xa8] sm:$0xf]
  %v258 = vld [vmem:[%s1 + $0xac] sm:$0xf]
  %v259 = vld [vmem:[%s1 + $0xb0] sm:$0xf]
  %v260 = vld [vmem:[%s1 + $0xb4] sm:$0xf]
  %v261 = vld [vmem:[%s1 + $0xb8] sm:$0xf]
  %v262 = vld [vmem:[%s1 + $0xbc] sm:$0xf]
  %v263 = vld [vmem:[%s1 + $0xc0] sm:$0xf]
  %v264 = vld [vmem:[%s1 + $0xc4] sm:$0xf]
  %v265 = vld [vmem:[%s2] sm:$0x1]
  %v267 = vlaneseq
  %v268 = vshrl.u32 %v267, 7
  %v269 = vsub.s32 0, %v268
  %v270 = vrot.slane %v265, %v269
  %v472 = vunpack.c.l.b16 %v15
  %v473 = vunpack.c.h.b16 %v15
  %v474 = vunpack.c.l.b16 %v16
  %v475 = vunpack.c.h.b16 %v16
  %v476 = vunpack.c.l.b16 %v17
  %v477 = vunpack.c.h.b16 %v17
  %v478 = vunpack.c.l.b16 %v18
  %v479 = vunpack.c.h.b16 %v18
  %v480 = vunpack.c.l.b16 %v19
  %v481 = vunpack.c.h.b16 %v19
  %v482 = vunpack.c.l.b16 %v20
  %v483 = vunpack.c.h.b16 %v20
  %v484 = vunpack.c.l.b16 %v21
  %v485 = vunpack.c.h.b16 %v21
  %v486 = vunpack.c.l.b16 %v22
  %v487 = vunpack.c.h.b16 %v22
  %v488 = vunpack.c.l.b16 %v23
  %v489 = vunpack.c.h.b16 %v23
  %v490 = vunpack.c.l.b16 %v24
  %v491 = vunpack.c.h.b16 %v24
  %v492 = vunpack.c.l.b16 %v25
  %v493 = vunpack.c.h.b16 %v25
  %v494 = vunpack.c.l.b16 %v26
  %v495 = vunpack.c.h.b16 %v26
  %v496 = vunpack.c.l.b16 %v27
  %v497 = vunpack.c.h.b16 %v27
  %v498 = vunpack.c.l.b16 %v28
  %v499 = vunpack.c.h.b16 %v28
  %v500 = vunpack.c.l.b16 %v29
  %v501 = vunpack.c.h.b16 %v29
  %v502 = vunpack.c.l.b16 %v30
  %v503 = vunpack.c.h.b16 %v30
  %v504 = vunpack.c.l.b16 %v31
  %v505 = vunpack.c.h.b16 %v31
  %v506 = vunpack.c.l.b16 %v32
  %v507 = vunpack.c.h.b16 %v32
  %v508 = vunpack.c.l.b16 %v33
  %v509 = vunpack.c.h.b16 %v33
  %v510 = vunpack.c.l.b16 %v34
  %v511 = vunpack.c.h.b16 %v34
  %v512 = vunpack.c.l.b16 %v35
  %v513 = vunpack.c.h.b16 %v35
  %v514 = vunpack.c.l.b16 %v36
  %v515 = vunpack.c.h.b16 %v36
  %v516 = vunpack.c.l.b16 %v37
  %v517 = vunpack.c.h.b16 %v37
  %v518 = vunpack.c.l.b16 %v38
  %v519 = vunpack.c.h.b16 %v38
  %v520 = vunpack.c.l.b16 %v39
  %v521 = vunpack.c.h.b16 %v39
  %v522 = vunpack.c.l.b16 %v40
  %v523 = vunpack.c.h.b16 %v40
  %v524 = vunpack.c.l.b16 %v41
  %v525 = vunpack.c.h.b16 %v41
  %v526 = vunpack.c.l.b16 %v42
  %v527 = vunpack.c.h.b16 %v42
  %v528 = vunpack.c.l.b16 %v43
  %v529 = vunpack.c.h.b16 %v43
  %v530 = vunpack.c.l.b16 %v44
  %v531 = vunpack.c.h.b16 %v44
  %v532 = vunpack.c.l.b16 %v45
  %v533 = vunpack.c.h.b16 %v45
  %v534 = vunpack.c.l.b16 %v46
  %v535 = vunpack.c.h.b16 %v46
  %v536 = vunpack.c.l.b16 %v47
  %v537 = vunpack.c.h.b16 %v47
  %v538 = vunpack.c.l.b16 %v48
  %v539 = vunpack.c.h.b16 %v48
  %v540 = vunpack.c.l.b16 %v49
  %v541 = vunpack.c.h.b16 %v49
  %v542 = vunpack.c.l.b16 %v50
  %v543 = vunpack.c.h.b16 %v50
  %v544 = vunpack.c.l.b16 %v51
  %v545 = vunpack.c.h.b16 %v51
  %v546 = vunpack.c.l.b16 %v52
  %v547 = vunpack.c.h.b16 %v52
  %v548 = vunpack.c.l.b16 %v53
  %v549 = vunpack.c.h.b16 %v53
  %v550 = vunpack.c.l.b16 %v54
  %v551 = vunpack.c.h.b16 %v54
  %v552 = vunpack.c.l.b16 %v55
  %v553 = vunpack.c.h.b16 %v55
  %v554 = vunpack.c.l.b16 %v56
  %v555 = vunpack.c.h.b16 %v56
  %v556 = vunpack.c.l.b16 %v57
  %v557 = vunpack.c.h.b16 %v57
  %v558 = vunpack.c.l.b16 %v58
  %v559 = vunpack.c.h.b16 %v58
  %v560 = vunpack.c.l.b16 %v59
  %v561 = vunpack.c.h.b16 %v59
  %v562 = vunpack.c.l.b16 %v60
  %v563 = vunpack.c.h.b16 %v60
  %v564 = vunpack.c.l.b16 %v61
  %v565 = vunpack.c.h.b16 %v61
  %v566 = vunpack.c.l.b16 %v62
  %v567 = vunpack.c.h.b16 %v62
  %v568 = vunpack.c.l.b16 %v63
  %v569 = vunpack.c.h.b16 %v63
  %v570 = vunpack.c.l.b16 %v64
  %v571 = vunpack.c.h.b16 %v64
  %v572 = vunpack.c.l.b16 %v65
  %v573 = vunpack.c.h.b16 %v65
  %v574 = vunpack.c.l.b16 %v66
  %v575 = vunpack.c.h.b16 %v66
  %v576 = vunpack.c.l.b16 %v67
  %v577 = vunpack.c.h.b16 %v67
  %v578 = vunpack.c.l.b16 %v68
  %v579 = vunpack.c.h.b16 %v68
  %v580 = vunpack.c.l.b16 %v69
  %v581 = vunpack.c.h.b16 %v69
  %v582 = vunpack.c.l.b16 %v70
  %v583 = vunpack.c.h.b16 %v70
  %v584 = vunpack.c.l.b16 %v71
  %v585 = vunpack.c.h.b16 %v71
  %v586 = vunpack.c.l.b16 %v72
  %v587 = vunpack.c.h.b16 %v72
  %v588 = vunpack.c.l.b16 %v73
  %v589 = vunpack.c.h.b16 %v73
  %v590 = vunpack.c.l.b16 %v74
  %v591 = vunpack.c.h.b16 %v74
  %v592 = vunpack.c.l.b16 %v75
  %v593 = vunpack.c.h.b16 %v75
  %v594 = vunpack.c.l.b16 %v76
  %v595 = vunpack.c.h.b16 %v76
  %v596 = vunpack.c.l.b16 %v77
  %v597 = vunpack.c.h.b16 %v77
  %v598 = vunpack.c.l.b16 %v78
  %v599 = vunpack.c.h.b16 %v78
  %v600 = vunpack.c.l.b16 %v79
  %v601 = vunpack.c.h.b16 %v79
  %v602 = vunpack.c.l.b16 %v80
  %v603 = vunpack.c.h.b16 %v80
  %v604 = vunpack.c.l.b16 %v81
  %v605 = vunpack.c.h.b16 %v81
  %v606 = vunpack.c.l.b16 %v82
  %v607 = vunpack.c.h.b16 %v82
  %v608 = vunpack.c.l.b16 %v83
  %v609 = vunpack.c.h.b16 %v83
  %v610 = vunpack.c.l.b16 %v84
  %v611 = vunpack.c.h.b16 %v84
  %v612 = vunpack.c.l.b16 %v85
  %v613 = vunpack.c.h.b16 %v85
  %v614 = vunpack.c.l.b16 %v86
  %v615 = vunpack.c.h.b16 %v86
  %v616 = vunpack.c.l.b16 %v87
  %v617 = vunpack.c.h.b16 %v87
  %v618 = vunpack.c.l.b16 %v88
  %v619 = vunpack.c.h.b16 %v88
  %v620 = vunpack.c.l.b16 %v89
  %v621 = vunpack.c.h.b16 %v89
  %v622 = vunpack.c.l.b16 %v90
  %v623 = vunpack.c.h.b16 %v90
  %v624 = vunpack.c.l.b16 %v91
  %v625 = vunpack.c.h.b16 %v91
  %v626 = vunpack.c.l.b16 %v92
  %v627 = vunpack.c.h.b16 %v92
  %v628 = vunpack.c.l.b16 %v93
  %v629 = vunpack.c.h.b16 %v93
  %v630 = vunpack.c.l.b16 %v94
  %v631 = vunpack.c.h.b16 %v94
  %v632 = vunpack.c.l.b16 %v95
  %v633 = vunpack.c.h.b16 %v95
  %v634 = vunpack.c.l.b16 %v96
  %v635 = vunpack.c.h.b16 %v96
  %v636 = vunpack.c.l.b16 %v97
  %v637 = vunpack.c.h.b16 %v97
  %v638 = vunpack.c.l.b16 %v98
  %v639 = vunpack.c.h.b16 %v98
  %v640 = vunpack.c.l.b16 %v99
  %v641 = vunpack.c.h.b16 %v99
  %v642 = vunpack.c.l.b16 %v100
  %v643 = vunpack.c.h.b16 %v100
  %v644 = vunpack.c.l.b16 %v101
  %v645 = vunpack.c.h.b16 %v101
  %v646 = vunpack.c.l.b16 %v102
  %v647 = vunpack.c.h.b16 %v102
  %v648 = vunpack.c.l.b16 %v103
  %v649 = vunpack.c.h.b16 %v103
  %v650 = vunpack.c.l.b16 %v104
  %v651 = vunpack.c.h.b16 %v104
  %v652 = vunpack.c.l.b16 %v105
  %v653 = vunpack.c.h.b16 %v105
  %v654 = vunpack.c.l.b16 %v106
  %v655 = vunpack.c.h.b16 %v106
  %v656 = vunpack.c.l.b16 %v107
  %v657 = vunpack.c.h.b16 %v107
  %v658 = vunpack.c.l.b16 %v108
  %v659 = vunpack.c.h.b16 %v108
  %v660 = vunpack.c.l.b16 %v109
  %v661 = vunpack.c.h.b16 %v109
  %v662 = vunpack.c.l.b16 %v110
  %v663 = vunpack.c.h.b16 %v110
  %v664 = vunpack.c.l.b16 %v111
  %v665 = vunpack.c.h.b16 %v111
  %v666 = vunpack.c.l.b16 %v112
  %v667 = vunpack.c.h.b16 %v112
  %v668 = vunpack.c.l.b16 %v113
  %v669 = vunpack.c.h.b16 %v113
  %v670 = vunpack.c.l.b16 %v114
  %v671 = vunpack.c.h.b16 %v114
  %v672 = vunpack.c.l.b16 %v115
  %v673 = vunpack.c.h.b16 %v115
  %v674 = vunpack.c.l.b16 %v116
  %v675 = vunpack.c.h.b16 %v116
  %v676 = vunpack.c.l.b16 %v117
  %v677 = vunpack.c.h.b16 %v117
  %v678 = vunpack.c.l.b16 %v118
  %v679 = vunpack.c.h.b16 %v118
  %v680 = vunpack.c.l.b16 %v119
  %v681 = vunpack.c.h.b16 %v119
  %v682 = vunpack.c.l.b16 %v120
  %v683 = vunpack.c.h.b16 %v120
  %v684 = vunpack.c.l.b16 %v121
  %v685 = vunpack.c.h.b16 %v121
  %v686 = vunpack.c.l.b16 %v122
  %v687 = vunpack.c.h.b16 %v122
  %v688 = vunpack.c.l.b16 %v123
  %v689 = vunpack.c.h.b16 %v123
  %v690 = vunpack.c.l.b16 %v124
  %v691 = vunpack.c.h.b16 %v124
  %v692 = vunpack.c.l.b16 %v125
  %v693 = vunpack.c.h.b16 %v125
  %v694 = vunpack.c.l.b16 %v126
  %v695 = vunpack.c.h.b16 %v126
  %v696 = vunpack.c.l.b16 %v127
  %v697 = vunpack.c.h.b16 %v127
  %v698 = vunpack.c.l.b16 %v128
  %v699 = vunpack.c.h.b16 %v128
  %v700 = vunpack.c.l.b16 %v129
  %v701 = vunpack.c.h.b16 %v129
  %v702 = vunpack.c.l.b16 %v130
  %v703 = vunpack.c.h.b16 %v130
  %v704 = vunpack.c.l.b16 %v131
  %v705 = vunpack.c.h.b16 %v131
  %v706 = vunpack.c.l.b16 %v132
  %v707 = vunpack.c.h.b16 %v132
  %v708 = vunpack.c.l.b16 %v133
  %v709 = vunpack.c.h.b16 %v133
  %v710 = vunpack.c.l.b16 %v134
  %v711 = vunpack.c.h.b16 %v134
  %v712 = vunpack.c.l.b16 %v135
  %v713 = vunpack.c.h.b16 %v135
  %v714 = vunpack.c.l.b16 %v136
  %v715 = vunpack.c.h.b16 %v136
  %v716 = vunpack.c.l.b16 %v137
  %v717 = vunpack.c.h.b16 %v137
  %v718 = vunpack.c.l.b16 %v138
  %v719 = vunpack.c.h.b16 %v138
  %v720 = vunpack.c.l.b16 %v139
  %v721 = vunpack.c.h.b16 %v139
  %v722 = vunpack.c.l.b16 %v140
  %v723 = vunpack.c.h.b16 %v140
  %v724 = vunpack.c.l.b16 %v141
  %v725 = vunpack.c.h.b16 %v141
  %v726 = vunpack.c.l.b16 %v142
  %v727 = vunpack.c.h.b16 %v142
  %v728 = vunpack.c.l.b16 %v143
  %v729 = vunpack.c.h.b16 %v143
  %v730 = vunpack.c.l.b16 %v144
  %v731 = vunpack.c.h.b16 %v144
  %v732 = vunpack.c.l.b16 %v145
  %v733 = vunpack.c.h.b16 %v145
  %v734 = vunpack.c.l.b16 %v146
  %v735 = vunpack.c.h.b16 %v146
  %v736 = vunpack.c.l.b16 %v147
  %v737 = vunpack.c.h.b16 %v147
  %v738 = vunpack.c.l.b16 %v148
  %v739 = vunpack.c.h.b16 %v148
  %v740 = vunpack.c.l.b16 %v149
  %v741 = vunpack.c.h.b16 %v149
  %v742 = vunpack.c.l.b16 %v150
  %v743 = vunpack.c.h.b16 %v150
  %v744 = vunpack.c.l.b16 %v151
  %v745 = vunpack.c.h.b16 %v151
  %v746 = vunpack.c.l.b16 %v152
  %v747 = vunpack.c.h.b16 %v152
  %v748 = vunpack.c.l.b16 %v153
  %v749 = vunpack.c.h.b16 %v153
  %v750 = vunpack.c.l.b16 %v154
  %v751 = vunpack.c.h.b16 %v154
  %v752 = vunpack.c.l.b16 %v155
  %v753 = vunpack.c.h.b16 %v155
  %v754 = vunpack.c.l.b16 %v156
  %v755 = vunpack.c.h.b16 %v156
  %v756 = vunpack.c.l.b16 %v157
  %v757 = vunpack.c.h.b16 %v157
  %v758 = vunpack.c.l.b16 %v158
  %v759 = vunpack.c.h.b16 %v158
  %v760 = vunpack.c.l.b16 %v159
  %v761 = vunpack.c.h.b16 %v159
  %v762 = vunpack.c.l.b16 %v160
  %v763 = vunpack.c.h.b16 %v160
  %v764 = vunpack.c.l.b16 %v161
  %v765 = vunpack.c.h.b16 %v161
  %v766 = vunpack.c.l.b16 %v162
  %v767 = vunpack.c.h.b16 %v162
  %v768 = vunpack.c.l.b16 %v163
  %v769 = vunpack.c.h.b16 %v163
  %v770 = vunpack.c.l.b16 %v164
  %v771 = vunpack.c.h.b16 %v164
  %v772 = vunpack.c.l.b16 %v165
  %v773 = vunpack.c.h.b16 %v165
  %v774 = vunpack.c.l.b16 %v166
  %v775 = vunpack.c.h.b16 %v166
  %v776 = vunpack.c.l.b16 %v167
  %v777 = vunpack.c.h.b16 %v167
  %v778 = vunpack.c.l.b16 %v168
  %v779 = vunpack.c.h.b16 %v168
  %v780 = vunpack.c.l.b16 %v169
  %v781 = vunpack.c.h.b16 %v169
  %v782 = vunpack.c.l.b16 %v170
  %v783 = vunpack.c.h.b16 %v170
  %v784 = vunpack.c.l.b16 %v171
  %v785 = vunpack.c.h.b16 %v171
  %v786 = vunpack.c.l.b16 %v172
  %v787 = vunpack.c.h.b16 %v172
  %v788 = vunpack.c.l.b16 %v173
  %v789 = vunpack.c.h.b16 %v173
  %v790 = vunpack.c.l.b16 %v174
  %v791 = vunpack.c.h.b16 %v174
  %v792 = vunpack.c.l.b16 %v175
  %v793 = vunpack.c.h.b16 %v175
  %v794 = vunpack.c.l.b16 %v176
  %v795 = vunpack.c.h.b16 %v176
  %v796 = vunpack.c.l.b16 %v177
  %v797 = vunpack.c.h.b16 %v177
  %v798 = vunpack.c.l.b16 %v178
  %v799 = vunpack.c.h.b16 %v178
  %v800 = vunpack.c.l.b16 %v179
  %v801 = vunpack.c.h.b16 %v179
  %v802 = vunpack.c.l.b16 %v180
  %v803 = vunpack.c.h.b16 %v180
  %v804 = vunpack.c.l.b16 %v181
  %v805 = vunpack.c.h.b16 %v181
  %v806 = vunpack.c.l.b16 %v182
  %v807 = vunpack.c.h.b16 %v182
  %v808 = vunpack.c.l.b16 %v183
  %v809 = vunpack.c.h.b16 %v183
  %v810 = vunpack.c.l.b16 %v184
  %v811 = vunpack.c.h.b16 %v184
  %v812 = vunpack.c.l.b16 %v185
  %v813 = vunpack.c.h.b16 %v185
  %v814 = vunpack.c.l.b16 %v186
  %v815 = vunpack.c.h.b16 %v186
  %v816 = vunpack.c.l.b16 %v187
  %v817 = vunpack.c.h.b16 %v187
  %v818 = vunpack.c.l.b16 %v188
  %v819 = vunpack.c.h.b16 %v188
  %v820 = vunpack.c.l.b16 %v189
  %v821 = vunpack.c.h.b16 %v189
  %v822 = vunpack.c.l.b16 %v190
  %v823 = vunpack.c.h.b16 %v190
  %v824 = vunpack.c.l.b16 %v191
  %v825 = vunpack.c.h.b16 %v191
  %v826 = vunpack.c.l.b16 %v192
  %v827 = vunpack.c.h.b16 %v192
  %v828 = vunpack.c.l.b16 %v193
  %v829 = vunpack.c.h.b16 %v193
  %v830 = vunpack.c.l.b16 %v194
  %v831 = vunpack.c.h.b16 %v194
  %v832 = vunpack.c.l.b16 %v195
  %v833 = vunpack.c.h.b16 %v195
  %v834 = vunpack.c.l.b16 %v196
  %v835 = vunpack.c.h.b16 %v196
  %v836 = vunpack.c.l.b16 %v197
  %v837 = vunpack.c.h.b16 %v197
  %v838 = vunpack.c.l.b16 %v198
  %v839 = vunpack.c.h.b16 %v198
  %v840 = vunpack.c.l.b16 %v199
  %v841 = vunpack.c.h.b16 %v199
  %v842 = vunpack.c.l.b16 %v200
  %v843 = vunpack.c.h.b16 %v200
  %v844 = vunpack.c.l.b16 %v201
  %v845 = vunpack.c.h.b16 %v201
  %v846 = vunpack.c.l.b16 %v202
  %v847 = vunpack.c.h.b16 %v202
  %v848 = vunpack.c.l.b16 %v203
  %v849 = vunpack.c.h.b16 %v203
  %v850 = vunpack.c.l.b16 %v204
  %v851 = vunpack.c.h.b16 %v204
  %v852 = vunpack.c.l.b16 %v205
  %v853 = vunpack.c.h.b16 %v205
  %v854 = vunpack.c.l.b16 %v206
  %v855 = vunpack.c.h.b16 %v206
  %v856 = vunpack.c.l.b16 %v207
  %v857 = vunpack.c.h.b16 %v207
  %v858 = vunpack.c.l.b16 %v208
  %v859 = vunpack.c.h.b16 %v208
  %v860 = vunpack.c.l.b16 %v209
  %v861 = vunpack.c.h.b16 %v209
  %v862 = vunpack.c.l.b16 %v210
  %v863 = vunpack.c.h.b16 %v210
  %v864 = vunpack.c.l.b16 %v211
  %v865 = vunpack.c.h.b16 %v211
  %v866 = vunpack.c.l.b16 %v212
  %v867 = vunpack.c.h.b16 %v212
  %v868 = vunpack.c.l.b16 %v213
  %v869 = vunpack.c.h.b16 %v213
  %v870 = vunpack.c.l.b16 %v214
  %v871 = vunpack.c.h.b16 %v214
  %v872 = vpack.c.b16 %v476, %v472
  %v873 = vpack.c.b16 %v477, %v473
  %v874 = vpack.c.b16 %v478, %v474
  %v875 = vpack.c.b16 %v479, %v475
  %v876 = vpack.c.b16 %v484, %v480
  %v877 = vpack.c.b16 %v485, %v481
  %v878 = vpack.c.b16 %v486, %v482
  %v879 = vpack.c.b16 %v487, %v483
  %v880 = vpack.c.b16 %v492, %v488
  %v881 = vpack.c.b16 %v493, %v489
  %v882 = vpack.c.b16 %v494, %v490
  %v883 = vpack.c.b16 %v495, %v491
  %v884 = vpack.c.b16 %v500, %v496
  %v885 = vpack.c.b16 %v501, %v497
  %v886 = vpack.c.b16 %v502, %v498
  %v887 = vpack.c.b16 %v503, %v499
  %v888 = vpack.c.b16 %v508, %v504
  %v889 = vpack.c.b16 %v509, %v505
  %v890 = vpack.c.b16 %v510, %v506
  %v891 = vpack.c.b16 %v511, %v507
  %v892 = vpack.c.b16 %v516, %v512
  %v893 = vpack.c.b16 %v517, %v513
  %v894 = vpack.c.b16 %v518, %v514
  %v895 = vpack.c.b16 %v519, %v515
  %v896 = vpack.c.b16 %v524, %v520
  %v897 = vpack.c.b16 %v525, %v521
  %v898 = vpack.c.b16 %v526, %v522
  %v899 = vpack.c.b16 %v527, %v523
  %v900 = vpack.c.b16 %v532, %v528
  %v901 = vpack.c.b16 %v533, %v529
  %v902 = vpack.c.b16 %v534, %v530
  %v903 = vpack.c.b16 %v535, %v531
  %v904 = vpack.c.b16 %v540, %v536
  %v905 = vpack.c.b16 %v541, %v537
  %v906 = vpack.c.b16 %v542, %v538
  %v907 = vpack.c.b16 %v543, %v539
  %v908 = vpack.c.b16 %v548, %v544
  %v909 = vpack.c.b16 %v549, %v545
  %v910 = vpack.c.b16 %v550, %v546
  %v911 = vpack.c.b16 %v551, %v547
  %v912 = vpack.c.b16 %v556, %v552
  %v913 = vpack.c.b16 %v557, %v553
  %v914 = vpack.c.b16 %v558, %v554
  %v915 = vpack.c.b16 %v559, %v555
  %v916 = vpack.c.b16 %v564, %v560
  %v917 = vpack.c.b16 %v565, %v561
  %v918 = vpack.c.b16 %v566, %v562
  %v919 = vpack.c.b16 %v567, %v563
  %v920 = vpack.c.b16 %v572, %v568
  %v921 = vpack.c.b16 %v573, %v569
  %v922 = vpack.c.b16 %v574, %v570
  %v923 = vpack.c.b16 %v575, %v571
  %v924 = vpack.c.b16 %v580, %v576
  %v925 = vpack.c.b16 %v581, %v577
  %v926 = vpack.c.b16 %v582, %v578
  %v927 = vpack.c.b16 %v583, %v579
  %v928 = vpack.c.b16 %v588, %v584
  %v929 = vpack.c.b16 %v589, %v585
  %v930 = vpack.c.b16 %v590, %v586
  %v931 = vpack.c.b16 %v591, %v587
  %v932 = vpack.c.b16 %v596, %v592
  %v933 = vpack.c.b16 %v597, %v593
  %v934 = vpack.c.b16 %v598, %v594
  %v935 = vpack.c.b16 %v599, %v595
  %v936 = vpack.c.b16 %v604, %v600
  %v937 = vpack.c.b16 %v605, %v601
  %v938 = vpack.c.b16 %v606, %v602
  %v939 = vpack.c.b16 %v607, %v603
  %v940 = vpack.c.b16 %v612, %v608
  %v941 = vpack.c.b16 %v613, %v609
  %v942 = vpack.c.b16 %v614, %v610
  %v943 = vpack.c.b16 %v615, %v611
  %v944 = vpack.c.b16 %v620, %v616
  %v945 = vpack.c.b16 %v621, %v617
  %v946 = vpack.c.b16 %v622, %v618
  %v947 = vpack.c.b16 %v623, %v619
  %v948 = vpack.c.b16 %v628, %v624
  %v949 = vpack.c.b16 %v629, %v625
  %v950 = vpack.c.b16 %v630, %v626
  %v951 = vpack.c.b16 %v631, %v627
  %v952 = vpack.c.b16 %v636, %v632
  %v953 = vpack.c.b16 %v637, %v633
  %v954 = vpack.c.b16 %v638, %v634
  %v955 = vpack.c.b16 %v639, %v635
  %v956 = vpack.c.b16 %v644, %v640
  %v957 = vpack.c.b16 %v645, %v641
  %v958 = vpack.c.b16 %v646, %v642
  %v959 = vpack.c.b16 %v647, %v643
  %v960 = vpack.c.b16 %v652, %v648
  %v961 = vpack.c.b16 %v653, %v649
  %v962 = vpack.c.b16 %v654, %v650
  %v963 = vpack.c.b16 %v655, %v651
  %v964 = vpack.c.b16 %v660, %v656
  %v965 = vpack.c.b16 %v661, %v657
  %v966 = vpack.c.b16 %v662, %v658
  %v967 = vpack.c.b16 %v663, %v659
  %v968 = vpack.c.b16 %v668, %v664
  %v969 = vpack.c.b16 %v669, %v665
  %v970 = vpack.c.b16 %v670, %v666
  %v971 = vpack.c.b16 %v671, %v667
  %v972 = vpack.c.b16 %v676, %v672
  %v973 = vpack.c.b16 %v677, %v673
  %v974 = vpack.c.b16 %v678, %v674
  %v975 = vpack.c.b16 %v679, %v675
  %v976 = vpack.c.b16 %v684, %v680
  %v977 = vpack.c.b16 %v685, %v681
  %v978 = vpack.c.b16 %v686, %v682
  %v979 = vpack.c.b16 %v687, %v683
  %v980 = vpack.c.b16 %v692, %v688
  %v981 = vpack.c.b16 %v693, %v689
  %v982 = vpack.c.b16 %v694, %v690
  %v983 = vpack.c.b16 %v695, %v691
  %v984 = vpack.c.b16 %v700, %v696
  %v985 = vpack.c.b16 %v701, %v697
  %v986 = vpack.c.b16 %v702, %v698
  %v987 = vpack.c.b16 %v703, %v699
  %v988 = vpack.c.b16 %v708, %v704
  %v989 = vpack.c.b16 %v709, %v705
  %v990 = vpack.c.b16 %v710, %v706
  %v991 = vpack.c.b16 %v711, %v707
  %v992 = vpack.c.b16 %v716, %v712
  %v993 = vpack.c.b16 %v717, %v713
  %v994 = vpack.c.b16 %v718, %v714
  %v995 = vpack.c.b16 %v719, %v715
  %v996 = vpack.c.b16 %v724, %v720
  %v997 = vpack.c.b16 %v725, %v721
  %v998 = vpack.c.b16 %v726, %v722
  %v999 = vpack.c.b16 %v727, %v723
  %v1000 = vpack.c.b16 %v732, %v728
  %v1001 = vpack.c.b16 %v733, %v729
  %v1002 = vpack.c.b16 %v734, %v730
  %v1003 = vpack.c.b16 %v735, %v731
  %v1004 = vpack.c.b16 %v740, %v736
  %v1005 = vpack.c.b16 %v741, %v737
  %v1006 = vpack.c.b16 %v742, %v738
  %v1007 = vpack.c.b16 %v743, %v739
  %v1008 = vpack.c.b16 %v748, %v744
  %v1009 = vpack.c.b16 %v749, %v745
  %v1010 = vpack.c.b16 %v750, %v746
  %v1011 = vpack.c.b16 %v751, %v747
  %v1012 = vpack.c.b16 %v756, %v752
  %v1013 = vpack.c.b16 %v757, %v753
  %v1014 = vpack.c.b16 %v758, %v754
  %v1015 = vpack.c.b16 %v759, %v755
  %v1016 = vpack.c.b16 %v764, %v760
  %v1017 = vpack.c.b16 %v765, %v761
  %v1018 = vpack.c.b16 %v766, %v762
  %v1019 = vpack.c.b16 %v767, %v763
  %v1020 = vpack.c.b16 %v772, %v768
  %v1021 = vpack.c.b16 %v773, %v769
  %v1022 = vpack.c.b16 %v774, %v770
  %v1023 = vpack.c.b16 %v775, %v771
  %v1024 = vpack.c.b16 %v780, %v776
  %v1025 = vpack.c.b16 %v781, %v777
  %v1026 = vpack.c.b16 %v782, %v778
  %v1027 = vpack.c.b16 %v783, %v779
  %v1028 = vpack.c.b16 %v788, %v784
  %v1029 = vpack.c.b16 %v789, %v785
  %v1030 = vpack.c.b16 %v790, %v786
  %v1031 = vpack.c.b16 %v791, %v787
  %v1032 = vpack.c.b16 %v796, %v792
  %v1033 = vpack.c.b16 %v797, %v793
  %v1034 = vpack.c.b16 %v798, %v794
  %v1035 = vpack.c.b16 %v799, %v795
  %v1036 = vpack.c.b16 %v804, %v800
  %v1037 = vpack.c.b16 %v805, %v801
  %v1038 = vpack.c.b16 %v806, %v802
  %v1039 = vpack.c.b16 %v807, %v803
  %v1040 = vpack.c.b16 %v812, %v808
  %v1041 = vpack.c.b16 %v813, %v809
  %v1042 = vpack.c.b16 %v814, %v810
  %v1043 = vpack.c.b16 %v815, %v811
  %v1044 = vpack.c.b16 %v820, %v816
  %v1045 = vpack.c.b16 %v821, %v817
  %v1046 = vpack.c.b16 %v822, %v818
  %v1047 = vpack.c.b16 %v823, %v819
  %v1048 = vpack.c.b16 %v828, %v824
  %v1049 = vpack.c.b16 %v829, %v825
  %v1050 = vpack.c.b16 %v830, %v826
  %v1051 = vpack.c.b16 %v831, %v827
  %v1052 = vpack.c.b16 %v836, %v832
  %v1053 = vpack.c.b16 %v837, %v833
  %v1054 = vpack.c.b16 %v838, %v834
  %v1055 = vpack.c.b16 %v839, %v835
  %v1056 = vpack.c.b16 %v844, %v840
  %v1057 = vpack.c.b16 %v845, %v841
  %v1058 = vpack.c.b16 %v846, %v842
  %v1059 = vpack.c.b16 %v847, %v843
  %v1060 = vpack.c.b16 %v852, %v848
  %v1061 = vpack.c.b16 %v853, %v849
  %v1062 = vpack.c.b16 %v854, %v850
  %v1063 = vpack.c.b16 %v855, %v851
  %v1064 = vpack.c.b16 %v860, %v856
  %v1065 = vpack.c.b16 %v861, %v857
  %v1066 = vpack.c.b16 %v862, %v858
  %v1067 = vpack.c.b16 %v863, %v859
  %v1068 = vpack.c.b16 %v868, %v864
  %v1069 = vpack.c.b16 %v869, %v865
  %v1070 = vpack.c.b16 %v870, %v866
  %v1071 = vpack.c.b16 %v871, %v867
  %v1272 = vunpack.c.l.b16 %v215
  %v1273 = vunpack.c.l.b16 %v216
  %v1274 = vunpack.c.l.b16 %v217
  %v1275 = vunpack.c.l.b16 %v218
  %v1276 = vunpack.c.l.b16 %v219
  %v1277 = vunpack.c.l.b16 %v220
  %v1278 = vunpack.c.l.b16 %v221
  %v1279 = vunpack.c.l.b16 %v222
  %v1280 = vunpack.c.l.b16 %v223
  %v1281 = vunpack.c.l.b16 %v224
  %v1282 = vunpack.c.l.b16 %v225
  %v1283 = vunpack.c.l.b16 %v226
  %v1284 = vunpack.c.l.b16 %v227
  %v1285 = vunpack.c.l.b16 %v228
  %v1286 = vunpack.c.l.b16 %v229
  %v1287 = vunpack.c.l.b16 %v230
  %v1288 = vunpack.c.l.b16 %v231
  %v1289 = vunpack.c.l.b16 %v232
  %v1290 = vunpack.c.l.b16 %v233
  %v1291 = vunpack.c.l.b16 %v234
  %v1292 = vunpack.c.l.b16 %v235
  %v1293 = vunpack.c.l.b16 %v236
  %v1294 = vunpack.c.l.b16 %v237
  %v1295 = vunpack.c.l.b16 %v238
  %v1296 = vunpack.c.l.b16 %v239
  %v1297 = vunpack.c.l.b16 %v240
  %v1298 = vunpack.c.l.b16 %v241
  %v1299 = vunpack.c.l.b16 %v242
  %v1300 = vunpack.c.l.b16 %v243
  %v1301 = vunpack.c.l.b16 %v244
  %v1302 = vunpack.c.l.b16 %v245
  %v1303 = vunpack.c.l.b16 %v246
  %v1304 = vunpack.c.l.b16 %v247
  %v1305 = vunpack.c.l.b16 %v248
  %v1306 = vunpack.c.l.b16 %v249
  %v1307 = vunpack.c.l.b16 %v250
  %v1308 = vunpack.c.l.b16 %v251
  %v1309 = vunpack.c.l.b16 %v252
  %v1310 = vunpack.c.l.b16 %v253
  %v1311 = vunpack.c.l.b16 %v254
  %v1312 = vunpack.c.l.b16 %v255
  %v1313 = vunpack.c.l.b16 %v256
  %v1314 = vunpack.c.l.b16 %v257
  %v1315 = vunpack.c.l.b16 %v258
  %v1316 = vunpack.c.l.b16 %v259
  %v1317 = vunpack.c.l.b16 %v260
  %v1318 = vunpack.c.l.b16 %v261
  %v1319 = vunpack.c.l.b16 %v262
  %v1320 = vunpack.c.l.b16 %v263
  %v1321 = vunpack.c.l.b16 %v264
  %v1322 = vpack.c.b16 %v1273, %v1272
  %v1323 = vpack.c.b16 %v1275, %v1274
  %v1324 = vpack.c.b16 %v1277, %v1276
  %v1325 = vpack.c.b16 %v1279, %v1278
  %v1326 = vpack.c.b16 %v1281, %v1280
  %v1327 = vpack.c.b16 %v1283, %v1282
  %v1328 = vpack.c.b16 %v1285, %v1284
  %v1329 = vpack.c.b16 %v1287, %v1286
  %v1330 = vpack.c.b16 %v1289, %v1288
  %v1331 = vpack.c.b16 %v1291, %v1290
  %v1332 = vpack.c.b16 %v1293, %v1292
  %v1333 = vpack.c.b16 %v1295, %v1294
  %v1334 = vpack.c.b16 %v1297, %v1296
  %v1335 = vpack.c.b16 %v1299, %v1298
  %v1336 = vpack.c.b16 %v1301, %v1300
  %v1337 = vpack.c.b16 %v1303, %v1302
  %v1338 = vpack.c.b16 %v1305, %v1304
  %v1339 = vpack.c.b16 %v1307, %v1306
  %v1340 = vpack.c.b16 %v1309, %v1308
  %v1341 = vpack.c.b16 %v1311, %v1310
  %v1342 = vpack.c.b16 %v1313, %v1312
  %v1343 = vpack.c.b16 %v1315, %v1314
  %v1344 = vpack.c.b16 %v1317, %v1316
  %v1345 = vpack.c.b16 %v1319, %v1318
  %v1346 = vpack.c.b16 %v1321, %v1320
  %vm1372 = vcmask 130048
  %v1374 = vsel %vm1372, %v875, 0
  %v1377 = vsel %vm1372, %v879, 0
  %v1380 = vsel %vm1372, %v883, 0
  %v1383 = vsel %vm1372, %v887, 0
  %v1386 = vsel %vm1372, %v891, 0
  %v1389 = vsel %vm1372, %v895, 0
  %v1392 = vsel %vm1372, %v899, 0
  %v1395 = vsel %vm1372, %v903, 0
  %v1398 = vsel %vm1372, %v907, 0
  %v1401 = vsel %vm1372, %v911, 0
  %v1404 = vsel %vm1372, %v915, 0
  %v1407 = vsel %vm1372, %v919, 0
  %v1410 = vsel %vm1372, %v923, 0
  %v1413 = vsel %vm1372, %v927, 0
  %v1416 = vsel %vm1372, %v931, 0
  %v1419 = vsel %vm1372, %v935, 0
  %v1422 = vsel %vm1372, %v939, 0
  %v1425 = vsel %vm1372, %v943, 0
  %v1428 = vsel %vm1372, %v947, 0
  %v1431 = vsel %vm1372, %v951, 0
  %v1434 = vsel %vm1372, %v955, 0
  %v1437 = vsel %vm1372, %v959, 0
  %v1440 = vsel %vm1372, %v963, 0
  %v1443 = vsel %vm1372, %v967, 0
  %v1446 = vsel %vm1372, %v971, 0
  %v1449 = vsel %vm1372, %v975, 0
  %v1452 = vsel %vm1372, %v979, 0
  %v1455 = vsel %vm1372, %v983, 0
  %v1458 = vsel %vm1372, %v987, 0
  %v1461 = vsel %vm1372, %v991, 0
  %v1464 = vsel %vm1372, %v995, 0
  %v1467 = vsel %vm1372, %v999, 0
  %v1470 = vsel %vm1372, %v1003, 0
  %v1473 = vsel %vm1372, %v1007, 0
  %v1476 = vsel %vm1372, %v1011, 0
  %v1479 = vsel %vm1372, %v1015, 0
  %v1482 = vsel %vm1372, %v1019, 0
  %v1485 = vsel %vm1372, %v1023, 0
  %v1488 = vsel %vm1372, %v1027, 0
  %v1491 = vsel %vm1372, %v1031, 0
  %v1494 = vsel %vm1372, %v1035, 0
  %v1497 = vsel %vm1372, %v1039, 0
  %v1500 = vsel %vm1372, %v1043, 0
  %v1503 = vsel %vm1372, %v1047, 0
  %v1506 = vsel %vm1372, %v1051, 0
  %v1509 = vsel %vm1372, %v1055, 0
  %v1512 = vsel %vm1372, %v1059, 0
  %v1515 = vsel %vm1372, %v1063, 0
  %v1518 = vsel %vm1372, %v1067, 0
  %v1521 = vsel %vm1372, %v1071, 0
  %1523 = vmatprep.subr.bf16.mxu0 0
  %1524 = vmatpush1.bf16.msra.mxu0 %v1322
  %1525 = vmatprep.subr.bf16.mxu0 0
  %1526 = vmatpush1.bf16.msra.mxu0 %v1323
  %1527 = vmatprep.subr.bf16.mxu0 0
  %1528 = vmatpush1.bf16.msra.mxu0 %v1324
  %1529 = vmatprep.subr.bf16.mxu0 0
  %1530 = vmatpush1.bf16.msra.mxu0 %v1325
  %1531 = vmatprep.subr.bf16.mxu0 0
  %1532 = vmatpush1.bf16.msra.mxu0 %v1326
  %1533 = vmatprep.subr.bf16.mxu0 0
  %1534 = vmatpush1.bf16.msra.mxu0 %v1327
  %1535 = vmatprep.subr.bf16.mxu0 0
  %1536 = vmatpush1.bf16.msra.mxu0 %v1328
  %1537 = vmatprep.subr.bf16.mxu0 0
  %1538 = vmatpush1.bf16.msra.mxu0 %v1329
  %1539 = vmatprep.subr.bf16.mxu0 0
  %1540 = vmatpush1.bf16.msra.mxu0 %v1330
  %1541 = vmatprep.subr.bf16.mxu0 0
  %1542 = vmatpush1.bf16.msra.mxu0 %v1331
  %1543 = vmatprep.subr.bf16.mxu0 0
  %1544 = vmatpush1.bf16.msra.mxu0 %v1332
  %1545 = vmatprep.subr.bf16.mxu0 0
  %1546 = vmatpush1.bf16.msra.mxu0 %v1333
  %1547 = vmatprep.subr.bf16.mxu0 0
  %1548 = vmatpush1.bf16.msra.mxu0 %v1334
  %1549 = vmatprep.subr.bf16.mxu0 0
  %1550 = vmatpush1.bf16.msra.mxu0 %v1335
  %1551 = vmatprep.subr.bf16.mxu0 0
  %1552 = vmatpush1.bf16.msra.mxu0 %v1336
  %1553 = vmatprep.subr.bf16.mxu0 0
  %1554 = vmatpush1.bf16.msra.mxu0 %v1337
  %1555 = vmatprep.mubr.bf16.mxu0 %v873
  %1556 = vmatmul.mubr.bf16.gmra.mrb[0].mxu0 %v872
  %v1557 = vpop.f32.mrb[0].mxu0
  %v1558 = vadd.f32 %v270, %v1557
  %v1559 = vpop.f32.mrb[0].mxu0
  %v1560 = vpop.f32.mrb[0].mxu0
  %v1561 = vadd.f32 %v270, %v1560
  %v1562 = vpop.f32.mrb[0].mxu0
  %1563 = vmatprep.mubr.bf16.mxu0 %v877
  %1564 = vmatmul.mubr.bf16.gmra.mrb[0].mxu0 %v876
  %v1565 = vpop.f32.mrb[0].mxu0
  %v1566 = vadd.f32 %v270, %v1565
  %v1567 = vpop.f32.mrb[0].mxu0
  %v1568 = vpop.f32.mrb[0].mxu0
  %v1569 = vadd.f32 %v270, %v1568
  %v1570 = vpop.f32.mrb[0].mxu0
  %1571 = vmatprep.mubr.bf16.mxu0 %v881
  %1572 = vmatmul.mubr.bf16.gmra.mrb[0].mxu0 %v880
  %v1573 = vpop.f32.mrb[0].mxu0
  %v1574 = vadd.f32 %v270, %v1573
  %v1575 = vpop.f32.mrb[0].mxu0
  %v1576 = vpop.f32.mrb[0].mxu0
  %v1577 = vadd.f32 %v270, %v1576
  %v1578 = vpop.f32.mrb[0].mxu0
  %1579 = vmatprep.mubr.bf16.mxu0 %v885
  %1580 = vmatmul.mubr.bf16.gmra.mrb[0].mxu0 %v884
  %v1581 = vpop.f32.mrb[0].mxu0
  %v1582 = vadd.f32 %v270, %v1581
  %v1583 = vpop.f32.mrb[0].mxu0
  %v1584 = vpop.f32.mrb[0].mxu0
  %v1585 = vadd.f32 %v270, %v1584
  %v1586 = vpop.f32.mrb[0].mxu0
  %1587 = vmatprep.mubr.bf16.mxu0 %v889
  %1588 = vmatmul.mubr.bf16.gmra.mrb[0].mxu0 %v888
  %v1589 = vpop.f32.mrb[0].mxu0
  %v1590 = vadd.f32 %v270, %v1589
  %v1591 = vpop.f32.mrb[0].mxu0
  %v1592 = vpop.f32.mrb[0].mxu0
  %v1593 = vadd.f32 %v270, %v1592
  %v1594 = vpop.f32.mrb[0].mxu0
  %1595 = vmatprep.mubr.bf16.mxu0 %v893
  %1596 = vmatmul.mubr.bf16.gmra.mrb[0].mxu0 %v892
  %v1597 = vpop.f32.mrb[0].mxu0
  %v1598 = vadd.f32 %v270, %v1597
  %v1599 = vpop.f32.mrb[0].mxu0
  %v1600 = vpop.f32.mrb[0].mxu0
  %v1601 = vadd.f32 %v270, %v1600
  %v1602 = vpop.f32.mrb[0].mxu0
  %1603 = vmatprep.mubr.bf16.mxu0 %v897
  %1604 = vmatmul.mubr.bf16.gmra.mrb[0].mxu0 %v896
  %v1605 = vpop.f32.mrb[0].mxu0
  %v1606 = vadd.f32 %v270, %v1605
  %v1607 = vpop.f32.mrb[0].mxu0
  %v1608 = vpop.f32.mrb[0].mxu0
  %v1609 = vadd.f32 %v270, %v1608
  %v1610 = vpop.f32.mrb[0].mxu0
  %1611 = vmatprep.mubr.bf16.mxu0 %v901
  %1612 = vmatmul.mubr.bf16.gmra.mrb[0].mxu0 %v900
  %v1613 = vpop.f32.mrb[0].mxu0
  %v1614 = vadd.f32 %v270, %v1613
  %v1615 = vpop.f32.mrb[0].mxu0
  %v1616 = vpop.f32.mrb[0].mxu0
  %v1617 = vadd.f32 %v270, %v1616
  %v1618 = vpop.f32.mrb[0].mxu0
  %1619 = vmatprep.mubr.bf16.mxu0 %v905
  %1620 = vmatmul.mubr.bf16.gmra.mrb[0].mxu0 %v904
  %v1621 = vpop.f32.mrb[0].mxu0
  %v1622 = vadd.f32 %v270, %v1621
  %v1623 = vpop.f32.mrb[0].mxu0
  %v1624 = vpop.f32.mrb[0].mxu0
  %v1625 = vadd.f32 %v270, %v1624
  %v1626 = vpop.f32.mrb[0].mxu0
  %1627 = vmatprep.mubr.bf16.mxu0 %v909
  %1628 = vmatmul.mubr.bf16.gmra.mrb[0].mxu0 %v908
  %v1629 = vpop.f32.mrb[0].mxu0
  %v1630 = vadd.f32 %v270, %v1629
  %v1631 = vpop.f32.mrb[0].mxu0
  %v1632 = vpop.f32.mrb[0].mxu0
  %v1633 = vadd.f32 %v270, %v1632
  %v1634 = vpop.f32.mrb[0].mxu0
  %1635 = vmatprep.mubr.bf16.mxu0 %v913
  %1636 = vmatmul.mubr.bf16.gmra.mrb[0].mxu0 %v912
  %v1637 = vpop.f32.mrb[0].mxu0
  %v1638 = vadd.f32 %v270, %v1637
  %v1639 = vpop.f32.mrb[0].mxu0
  %v1640 = vpop.f32.mrb[0].mxu0
  %v1641 = vadd.f32 %v270, %v1640
  %v1642 = vpop.f32.mrb[0].mxu0
  %1643 = vmatprep.mubr.bf16.mxu0 %v917
  %1644 = vmatmul.mubr.bf16.gmra.mrb[0].mxu0 %v916
  %v1645 = vpop.f32.mrb[0].mxu0
  %v1646 = vadd.f32 %v270, %v1645
  %v1647 = vpop.f32.mrb[0].mxu0
  %v1648 = vpop.f32.mrb[0].mxu0
  %v1649 = vadd.f32 %v270, %v1648
  %v1650 = vpop.f32.mrb[0].mxu0
  %1651 = vmatprep.mubr.bf16.mxu0 %v921
  %1652 = vmatmul.mubr.bf16.gmra.mrb[0].mxu0 %v920
  %v1653 = vpop.f32.mrb[0].mxu0
  %v1654 = vadd.f32 %v270, %v1653
  %v1655 = vpop.f32.mrb[0].mxu0
  %v1656 = vpop.f32.mrb[0].mxu0
  %v1657 = vadd.f32 %v270, %v1656
  %v1658 = vpop.f32.mrb[0].mxu0
  %1659 = vmatprep.mubr.bf16.mxu0 %v925
  %1660 = vmatmul.mubr.bf16.gmra.mrb[0].mxu0 %v924
  %v1661 = vpop.f32.mrb[0].mxu0
  %v1662 = vadd.f32 %v270, %v1661
  %v1663 = vpop.f32.mrb[0].mxu0
  %v1664 = vpop.f32.mrb[0].mxu0
  %v1665 = vadd.f32 %v270, %v1664
  %v1666 = vpop.f32.mrb[0].mxu0
  %1667 = vmatprep.mubr.bf16.mxu0 %v929
  %1668 = vmatmul.mubr.bf16.gmra.mrb[0].mxu0 %v928
  %v1669 = vpop.f32.mrb[0].mxu0
  %v1670 = vadd.f32 %v270, %v1669
  %v1671 = vpop.f32.mrb[0].mxu0
  %v1672 = vpop.f32.mrb[0].mxu0
  %v1673 = vadd.f32 %v270, %v1672
  %v1674 = vpop.f32.mrb[0].mxu0
  %1675 = vmatprep.mubr.bf16.mxu0 %v933
  %1676 = vmatmul.mubr.bf16.gmra.mrb[0].mxu0 %v932
  %v1677 = vpop.f32.mrb[0].mxu0
  %v1678 = vadd.f32 %v270, %v1677
  %v1679 = vpop.f32.mrb[0].mxu0
  %v1680 = vpop.f32.mrb[0].mxu0
  %v1681 = vadd.f32 %v270, %v1680
  %v1682 = vpop.f32.mrb[0].mxu0
  %1683 = vmatprep.mubr.bf16.mxu0 %v937
  %1684 = vmatmul.mubr.bf16.gmra.mrb[0].mxu0 %v936
  %v1685 = vpop.f32.mrb[0].mxu0
  %v1686 = vadd.f32 %v270, %v1685
  %v1687 = vpop.f32.mrb[0].mxu0
  %v1688 = vpop.f32.mrb[0].mxu0
  %v1689 = vadd.f32 %v270, %v1688
  %v1690 = vpop.f32.mrb[0].mxu0
  %1691 = vmatprep.mubr.bf16.mxu0 %v941
  %1692 = vmatmul.mubr.bf16.gmra.mrb[0].mxu0 %v940
  %v1693 = vpop.f32.mrb[0].mxu0
  %v1694 = vadd.f32 %v270, %v1693
  %v1695 = vpop.f32.mrb[0].mxu0
  %v1696 = vpop.f32.mrb[0].mxu0
  %v1697 = vadd.f32 %v270, %v1696
  %v1698 = vpop.f32.mrb[0].mxu0
  %1699 = vmatprep.mubr.bf16.mxu0 %v945
  %1700 = vmatmul.mubr.bf16.gmra.mrb[0].mxu0 %v944
  %v1701 = vpop.f32.mrb[0].mxu0
  %v1702 = vadd.f32 %v270, %v1701
  %v1703 = vpop.f32.mrb[0].mxu0
  %v1704 = vpop.f32.mrb[0].mxu0
  %v1705 = vadd.f32 %v270, %v1704
  %v1706 = vpop.f32.mrb[0].mxu0
  %1707 = vmatprep.mubr.bf16.mxu0 %v949
  %1708 = vmatmul.mubr.bf16.gmra.mrb[0].mxu0 %v948
  %v1709 = vpop.f32.mrb[0].mxu0
  %v1710 = vadd.f32 %v270, %v1709
  %v1711 = vpop.f32.mrb[0].mxu0
  %v1712 = vpop.f32.mrb[0].mxu0
  %v1713 = vadd.f32 %v270, %v1712
  %v1714 = vpop.f32.mrb[0].mxu0
  %1715 = vmatprep.mubr.bf16.mxu0 %v953
  %1716 = vmatmul.mubr.bf16.gmra.mrb[0].mxu0 %v952
  %v1717 = vpop.f32.mrb[0].mxu0
  %v1718 = vadd.f32 %v270, %v1717
  %v1719 = vpop.f32.mrb[0].mxu0
  %v1720 = vpop.f32.mrb[0].mxu0
  %v1721 = vadd.f32 %v270, %v1720
  %v1722 = vpop.f32.mrb[0].mxu0
  %1723 = vmatprep.mubr.bf16.mxu0 %v957
  %1724 = vmatmul.mubr.bf16.gmra.mrb[0].mxu0 %v956
  %v1725 = vpop.f32.mrb[0].mxu0
  %v1726 = vadd.f32 %v270, %v1725
  %v1727 = vpop.f32.mrb[0].mxu0
  %v1728 = vpop.f32.mrb[0].mxu0
  %v1729 = vadd.f32 %v270, %v1728
  %v1730 = vpop.f32.mrb[0].mxu0
  %1731 = vmatprep.mubr.bf16.mxu0 %v961
  %1732 = vmatmul.mubr.bf16.gmra.mrb[0].mxu0 %v960
  %v1733 = vpop.f32.mrb[0].mxu0
  %v1734 = vadd.f32 %v270, %v1733
  %v1735 = vpop.f32.mrb[0].mxu0
  %v1736 = vpop.f32.mrb[0].mxu0
  %v1737 = vadd.f32 %v270, %v1736
  %v1738 = vpop.f32.mrb[0].mxu0
  %1739 = vmatprep.mubr.bf16.mxu0 %v965
  %1740 = vmatmul.mubr.bf16.gmra.mrb[0].mxu0 %v964
  %v1741 = vpop.f32.mrb[0].mxu0
  %v1742 = vadd.f32 %v270, %v1741
  %v1743 = vpop.f32.mrb[0].mxu0
  %v1744 = vpop.f32.mrb[0].mxu0
  %v1745 = vadd.f32 %v270, %v1744
  %v1746 = vpop.f32.mrb[0].mxu0
  %1747 = vmatprep.mubr.bf16.mxu0 %v969
  %1748 = vmatmul.mubr.bf16.gmra.mrb[0].mxu0 %v968
  %v1749 = vpop.f32.mrb[0].mxu0
  %v1750 = vadd.f32 %v270, %v1749
  %v1751 = vpop.f32.mrb[0].mxu0
  %v1752 = vpop.f32.mrb[0].mxu0
  %v1753 = vadd.f32 %v270, %v1752
  %v1754 = vpop.f32.mrb[0].mxu0
  %1755 = vmatprep.mubr.bf16.mxu0 %v973
  %1756 = vmatmul.mubr.bf16.gmra.mrb[0].mxu0 %v972
  %v1757 = vpop.f32.mrb[0].mxu0
  %v1758 = vadd.f32 %v270, %v1757
  %v1759 = vpop.f32.mrb[0].mxu0
  %v1760 = vpop.f32.mrb[0].mxu0
  %v1761 = vadd.f32 %v270, %v1760
  %v1762 = vpop.f32.mrb[0].mxu0
  %1763 = vmatprep.mubr.bf16.mxu0 %v977
  %1764 = vmatmul.mubr.bf16.gmra.mrb[0].mxu0 %v976
  %v1765 = vpop.f32.mrb[0].mxu0
  %v1766 = vadd.f32 %v270, %v1765
  %v1767 = vpop.f32.mrb[0].mxu0
  %v1768 = vpop.f32.mrb[0].mxu0
  %v1769 = vadd.f32 %v270, %v1768
  %v1770 = vpop.f32.mrb[0].mxu0
  %1771 = vmatprep.mubr.bf16.mxu0 %v981
  %1772 = vmatmul.mubr.bf16.gmra.mrb[0].mxu0 %v980
  %v1773 = vpop.f32.mrb[0].mxu0
  %v1774 = vadd.f32 %v270, %v1773
  %v1775 = vpop.f32.mrb[0].mxu0
  %v1776 = vpop.f32.mrb[0].mxu0
  %v1777 = vadd.f32 %v270, %v1776
  %v1778 = vpop.f32.mrb[0].mxu0
  %1779 = vmatprep.mubr.bf16.mxu0 %v985
  %1780 = vmatmul.mubr.bf16.gmra.mrb[0].mxu0 %v984
  %v1781 = vpop.f32.mrb[0].mxu0
  %v1782 = vadd.f32 %v270, %v1781
  %v1783 = vpop.f32.mrb[0].mxu0
  %v1784 = vpop.f32.mrb[0].mxu0
  %v1785 = vadd.f32 %v270, %v1784
  %v1786 = vpop.f32.mrb[0].mxu0
  %1787 = vmatprep.mubr.bf16.mxu0 %v989
  %1788 = vmatmul.mubr.bf16.gmra.mrb[0].mxu0 %v988
  %v1789 = vpop.f32.mrb[0].mxu0
  %v1790 = vadd.f32 %v270, %v1789
  %v1791 = vpop.f32.mrb[0].mxu0
  %v1792 = vpop.f32.mrb[0].mxu0
  %v1793 = vadd.f32 %v270, %v1792
  %v1794 = vpop.f32.mrb[0].mxu0
  %1795 = vmatprep.mubr.bf16.mxu0 %v993
  %1796 = vmatmul.mubr.bf16.gmra.mrb[0].mxu0 %v992
  %v1797 = vpop.f32.mrb[0].mxu0
  %v1798 = vadd.f32 %v270, %v1797
  %v1799 = vpop.f32.mrb[0].mxu0
  %v1800 = vpop.f32.mrb[0].mxu0
  %v1801 = vadd.f32 %v270, %v1800
  %v1802 = vpop.f32.mrb[0].mxu0
  %1803 = vmatprep.mubr.bf16.mxu0 %v997
  %1804 = vmatmul.mubr.bf16.gmra.mrb[0].mxu0 %v996
  %v1805 = vpop.f32.mrb[0].mxu0
  %v1806 = vadd.f32 %v270, %v1805
  %v1807 = vpop.f32.mrb[0].mxu0
  %v1808 = vpop.f32.mrb[0].mxu0
  %v1809 = vadd.f32 %v270, %v1808
  %v1810 = vpop.f32.mrb[0].mxu0
  %1811 = vmatprep.mubr.bf16.mxu0 %v1001
  %1812 = vmatmul.mubr.bf16.gmra.mrb[0].mxu0 %v1000
  %v1813 = vpop.f32.mrb[0].mxu0
  %v1814 = vadd.f32 %v270, %v1813
  %v1815 = vpop.f32.mrb[0].mxu0
  %v1816 = vpop.f32.mrb[0].mxu0
  %v1817 = vadd.f32 %v270, %v1816
  %v1818 = vpop.f32.mrb[0].mxu0
  %1819 = vmatprep.mubr.bf16.mxu0 %v1005
  %1820 = vmatmul.mubr.bf16.gmra.mrb[0].mxu0 %v1004
  %v1821 = vpop.f32.mrb[0].mxu0
  %v1822 = vadd.f32 %v270, %v1821
  %v1823 = vpop.f32.mrb[0].mxu0
  %v1824 = vpop.f32.mrb[0].mxu0
  %v1825 = vadd.f32 %v270, %v1824
  %v1826 = vpop.f32.mrb[0].mxu0
  %1827 = vmatprep.mubr.bf16.mxu0 %v1009
  %1828 = vmatmul.mubr.bf16.gmra.mrb[0].mxu0 %v1008
  %v1829 = vpop.f32.mrb[0].mxu0
  %v1830 = vadd.f32 %v270, %v1829
  %v1831 = vpop.f32.mrb[0].mxu0
  %v1832 = vpop.f32.mrb[0].mxu0
  %v1833 = vadd.f32 %v270, %v1832
  %v1834 = vpop.f32.mrb[0].mxu0
  %1835 = vmatprep.mubr.bf16.mxu0 %v1013
  %1836 = vmatmul.mubr.bf16.gmra.mrb[0].mxu0 %v1012
  %v1837 = vpop.f32.mrb[0].mxu0
  %v1838 = vadd.f32 %v270, %v1837
  %v1839 = vpop.f32.mrb[0].mxu0
  %v1840 = vpop.f32.mrb[0].mxu0
  %v1841 = vadd.f32 %v270, %v1840
  %v1842 = vpop.f32.mrb[0].mxu0
  %1843 = vmatprep.mubr.bf16.mxu0 %v1017
  %1844 = vmatmul.mubr.bf16.gmra.mrb[0].mxu0 %v1016
  %v1845 = vpop.f32.mrb[0].mxu0
  %v1846 = vadd.f32 %v270, %v1845
  %v1847 = vpop.f32.mrb[0].mxu0
  %v1848 = vpop.f32.mrb[0].mxu0
  %v1849 = vadd.f32 %v270, %v1848
  %v1850 = vpop.f32.mrb[0].mxu0
  %1851 = vmatprep.mubr.bf16.mxu0 %v1021
  %1852 = vmatmul.mubr.bf16.gmra.mrb[0].mxu0 %v1020
  %v1853 = vpop.f32.mrb[0].mxu0
  %v1854 = vadd.f32 %v270, %v1853
  %v1855 = vpop.f32.mrb[0].mxu0
  %v1856 = vpop.f32.mrb[0].mxu0
  %v1857 = vadd.f32 %v270, %v1856
  %v1858 = vpop.f32.mrb[0].mxu0
  %1859 = vmatprep.mubr.bf16.mxu0 %v1025
  %1860 = vmatmul.mubr.bf16.gmra.mrb[0].mxu0 %v1024
  %v1861 = vpop.f32.mrb[0].mxu0
  %v1862 = vadd.f32 %v270, %v1861
  %v1863 = vpop.f32.mrb[0].mxu0
  %v1864 = vpop.f32.mrb[0].mxu0
  %v1865 = vadd.f32 %v270, %v1864
  %v1866 = vpop.f32.mrb[0].mxu0
  %1867 = vmatprep.mubr.bf16.mxu0 %v1029
  %1868 = vmatmul.mubr.bf16.gmra.mrb[0].mxu0 %v1028
  %v1869 = vpop.f32.mrb[0].mxu0
  %v1870 = vadd.f32 %v270, %v1869
  %v1871 = vpop.f32.mrb[0].mxu0
  %v1872 = vpop.f32.mrb[0].mxu0
  %v1873 = vadd.f32 %v270, %v1872
  %v1874 = vpop.f32.mrb[0].mxu0
  %1875 = vmatprep.mubr.bf16.mxu0 %v1033
  %1876 = vmatmul.mubr.bf16.gmra.mrb[0].mxu0 %v1032
  %v1877 = vpop.f32.mrb[0].mxu0
  %v1878 = vadd.f32 %v270, %v1877
  %v1879 = vpop.f32.mrb[0].mxu0
  %v1880 = vpop.f32.mrb[0].mxu0
  %v1881 = vadd.f32 %v270, %v1880
  %v1882 = vpop.f32.mrb[0].mxu0
  %1883 = vmatprep.mubr.bf16.mxu0 %v1037
  %1884 = vmatmul.mubr.bf16.gmra.mrb[0].mxu0 %v1036
  %v1885 = vpop.f32.mrb[0].mxu0
  %v1886 = vadd.f32 %v270, %v1885
  %v1887 = vpop.f32.mrb[0].mxu0
  %v1888 = vpop.f32.mrb[0].mxu0
  %v1889 = vadd.f32 %v270, %v1888
  %v1890 = vpop.f32.mrb[0].mxu0
  %1891 = vmatprep.mubr.bf16.mxu0 %v1041
  %1892 = vmatmul.mubr.bf16.gmra.mrb[0].mxu0 %v1040
  %v1893 = vpop.f32.mrb[0].mxu0
  %v1894 = vadd.f32 %v270, %v1893
  %v1895 = vpop.f32.mrb[0].mxu0
  %v1896 = vpop.f32.mrb[0].mxu0
  %v1897 = vadd.f32 %v270, %v1896
  %v1898 = vpop.f32.mrb[0].mxu0
  %1899 = vmatprep.mubr.bf16.mxu0 %v1045
  %1900 = vmatmul.mubr.bf16.gmra.mrb[0].mxu0 %v1044
  %v1901 = vpop.f32.mrb[0].mxu0
  %v1902 = vadd.f32 %v270, %v1901
  %v1903 = vpop.f32.mrb[0].mxu0
  %v1904 = vpop.f32.mrb[0].mxu0
  %v1905 = vadd.f32 %v270, %v1904
  %v1906 = vpop.f32.mrb[0].mxu0
  %1907 = vmatprep.mubr.bf16.mxu0 %v1049
  %1908 = vmatmul.mubr.bf16.gmra.mrb[0].mxu0 %v1048
  %v1909 = vpop.f32.mrb[0].mxu0
  %v1910 = vadd.f32 %v270, %v1909
  %v1911 = vpop.f32.mrb[0].mxu0
  %v1912 = vpop.f32.mrb[0].mxu0
  %v1913 = vadd.f32 %v270, %v1912
  %v1914 = vpop.f32.mrb[0].mxu0
  %1915 = vmatprep.mubr.bf16.mxu0 %v1053
  %1916 = vmatmul.mubr.bf16.gmra.mrb[0].mxu0 %v1052
  %v1917 = vpop.f32.mrb[0].mxu0
  %v1918 = vadd.f32 %v270, %v1917
  %v1919 = vpop.f32.mrb[0].mxu0
  %v1920 = vpop.f32.mrb[0].mxu0
  %v1921 = vadd.f32 %v270, %v1920
  %v1922 = vpop.f32.mrb[0].mxu0
  %1923 = vmatprep.mubr.bf16.mxu0 %v1057
  %1924 = vmatmul.mubr.bf16.gmra.mrb[0].mxu0 %v1056
  %v1925 = vpop.f32.mrb[0].mxu0
  %v1926 = vadd.f32 %v270, %v1925
  %v1927 = vpop.f32.mrb[0].mxu0
  %v1928 = vpop.f32.mrb[0].mxu0
  %v1929 = vadd.f32 %v270, %v1928
  %v1930 = vpop.f32.mrb[0].mxu0
  %1931 = vmatprep.mubr.bf16.mxu0 %v1061
  %1932 = vmatmul.mubr.bf16.gmra.mrb[0].mxu0 %v1060
  %v1933 = vpop.f32.mrb[0].mxu0
  %v1934 = vadd.f32 %v270, %v1933
  %v1935 = vpop.f32.mrb[0].mxu0
  %v1936 = vpop.f32.mrb[0].mxu0
  %v1937 = vadd.f32 %v270, %v1936
  %v1938 = vpop.f32.mrb[0].mxu0
  %1939 = vmatprep.mubr.bf16.mxu0 %v1065
  %1940 = vmatmul.mubr.bf16.gmra.mrb[0].mxu0 %v1064
  %v1941 = vpop.f32.mrb[0].mxu0
  %v1942 = vadd.f32 %v270, %v1941
  %v1943 = vpop.f32.mrb[0].mxu0
  %v1944 = vpop.f32.mrb[0].mxu0
  %v1945 = vadd.f32 %v270, %v1944
  %v1946 = vpop.f32.mrb[0].mxu0
  %1947 = vmatprep.mubr.bf16.mxu0 %v1069
  %1948 = vmatmul.mubr.bf16.gmra.mrb[0].mxu0 %v1068
  %v1949 = vpop.f32.mrb[0].mxu0
  %v1950 = vadd.f32 %v270, %v1949
  %v1951 = vpop.f32.mrb[0].mxu0
  %v1952 = vpop.f32.mrb[0].mxu0
  %v1953 = vadd.f32 %v270, %v1952
  %v1954 = vpop.f32.mrb[0].mxu0
  %1955 = vdwg.mxu0
  %1956 = vmatprep.subr.bf16.mxu0 0
  %1957 = vmatpush1.bf16.msra.mxu0 %v1338
  %1958 = vmatprep.subr.bf16.mxu0 0
  %1959 = vmatpush1.bf16.msra.mxu0 %v1339
  %1960 = vmatprep.subr.bf16.mxu0 0
  %1961 = vmatpush1.bf16.msra.mxu0 %v1340
  %1962 = vmatprep.subr.bf16.mxu0 0
  %1963 = vmatpush1.bf16.msra.mxu0 %v1341
  %1964 = vmatprep.subr.bf16.mxu0 0
  %1965 = vmatpush1.bf16.msra.mxu0 %v1342
  %1966 = vmatprep.subr.bf16.mxu0 0
  %1967 = vmatpush1.bf16.msra.mxu0 %v1343
  %1968 = vmatprep.subr.bf16.mxu0 0
  %1969 = vmatpush1.bf16.msra.mxu0 %v1344
  %1970 = vmatprep.subr.bf16.mxu0 0
  %1971 = vmatpush1.bf16.msra.mxu0 %v1345
  %1972 = vmatprep.subr.bf16.mxu0 0
  %1973 = vmatpush1.bf16.msra.mxu0 %v1346
  %1974 = vmatprep.subr.bf16.mxu0 0
  %1975 = vmatpush1.bf16.msra.mxu0 0
  %1976 = vmatprep.subr.bf16.mxu0 0
  %1977 = vmatpush1.bf16.msra.mxu0 0
  %1978 = vmatprep.subr.bf16.mxu0 0
  %1979 = vmatpush1.bf16.msra.mxu0 0
  %1980 = vmatprep.subr.bf16.mxu0 0
  %1981 = vmatpush1.bf16.msra.mxu0 0
  %1982 = vmatprep.subr.bf16.mxu0 0
  %1983 = vmatpush1.bf16.msra.mxu0 0
  %1984 = vmatprep.subr.bf16.mxu0 0
  %1985 = vmatpush1.bf16.msra.mxu0 0
  %1986 = vmatprep.subr.bf16.mxu0 0
  %1987 = vmatpush1.bf16.msra.mxu0 0
  %1988 = vmatprep.mubr.bf16.mxu0 %v1374
  %1989 = vmatmul.mubr.bf16.gmra.mrb[0].mxu0 %v874
  %v1990 = vpop.f32.mrb[0].mxu0
  %v1991 = vadd.f32 %v1558, %v1990
  %v1992 = vpop.f32.mrb[0].mxu0
  %v1993 = vpop.f32.mrb[0].mxu0
  %v1994 = vadd.f32 %v1561, %v1993
  %v1995 = vpop.f32.mrb[0].mxu0
  %1996 = vmatprep.mubr.bf16.mxu0 %v1377
  %1997 = vmatmul.mubr.bf16.gmra.mrb[0].mxu0 %v878
  %v1998 = vpop.f32.mrb[0].mxu0
  %v1999 = vadd.f32 %v1566, %v1998
  %v2000 = vpop.f32.mrb[0].mxu0
  %v2001 = vpop.f32.mrb[0].mxu0
  %v2002 = vadd.f32 %v1569, %v2001
  %v2003 = vpop.f32.mrb[0].mxu0
  %2004 = vmatprep.mubr.bf16.mxu0 %v1380
  %2005 = vmatmul.mubr.bf16.gmra.mrb[0].mxu0 %v882
  %v2006 = vpop.f32.mrb[0].mxu0
  %v2007 = vadd.f32 %v1574, %v2006
  %v2008 = vpop.f32.mrb[0].mxu0
  %v2009 = vpop.f32.mrb[0].mxu0
  %v2010 = vadd.f32 %v1577, %v2009
  %v2011 = vpop.f32.mrb[0].mxu0
  %2012 = vmatprep.mubr.bf16.mxu0 %v1383
  %2013 = vmatmul.mubr.bf16.gmra.mrb[0].mxu0 %v886
  %v2014 = vpop.f32.mrb[0].mxu0
  %v2015 = vadd.f32 %v1582, %v2014
  %v2016 = vpop.f32.mrb[0].mxu0
  %v2017 = vpop.f32.mrb[0].mxu0
  %v2018 = vadd.f32 %v1585, %v2017
  %v2019 = vpop.f32.mrb[0].mxu0
  %2020 = vmatprep.mubr.bf16.mxu0 %v1386
  %2021 = vmatmul.mubr.bf16.gmra.mrb[0].mxu0 %v890
  %v2022 = vpop.f32.mrb[0].mxu0
  %v2023 = vadd.f32 %v1590, %v2022
  %v2024 = vpop.f32.mrb[0].mxu0
  %v2025 = vpop.f32.mrb[0].mxu0
  %v2026 = vadd.f32 %v1593, %v2025
  %v2027 = vpop.f32.mrb[0].mxu0
  %2028 = vmatprep.mubr.bf16.mxu0 %v1389
  %2029 = vmatmul.mubr.bf16.gmra.mrb[0].mxu0 %v894
  %v2030 = vpop.f32.mrb[0].mxu0
  %v2031 = vadd.f32 %v1598, %v2030
  %v2032 = vpop.f32.mrb[0].mxu0
  %v2033 = vpop.f32.mrb[0].mxu0
  %v2034 = vadd.f32 %v1601, %v2033
  %v2035 = vpop.f32.mrb[0].mxu0
  %2036 = vmatprep.mubr.bf16.mxu0 %v1392
  %2037 = vmatmul.mubr.bf16.gmra.mrb[0].mxu0 %v898
  %v2038 = vpop.f32.mrb[0].mxu0
  %v2039 = vadd.f32 %v1606, %v2038
  %v2040 = vpop.f32.mrb[0].mxu0
  %v2041 = vpop.f32.mrb[0].mxu0
  %v2042 = vadd.f32 %v1609, %v2041
  %v2043 = vpop.f32.mrb[0].mxu0
  %2044 = vmatprep.mubr.bf16.mxu0 %v1395
  %2045 = vmatmul.mubr.bf16.gmra.mrb[0].mxu0 %v902
  %v2046 = vpop.f32.mrb[0].mxu0
  %v2047 = vadd.f32 %v1614, %v2046
  %v2048 = vpop.f32.mrb[0].mxu0
  %v2049 = vpop.f32.mrb[0].mxu0
  %v2050 = vadd.f32 %v1617, %v2049
  %v2051 = vpop.f32.mrb[0].mxu0
  %2052 = vmatprep.mubr.bf16.mxu0 %v1398
  %2053 = vmatmul.mubr.bf16.gmra.mrb[0].mxu0 %v906
  %v2054 = vpop.f32.mrb[0].mxu0
  %v2055 = vadd.f32 %v1622, %v2054
  %v2056 = vpop.f32.mrb[0].mxu0
  %v2057 = vpop.f32.mrb[0].mxu0
  %v2058 = vadd.f32 %v1625, %v2057
  %v2059 = vpop.f32.mrb[0].mxu0
  %2060 = vmatprep.mubr.bf16.mxu0 %v1401
  %2061 = vmatmul.mubr.bf16.gmra.mrb[0].mxu0 %v910
  %v2062 = vpop.f32.mrb[0].mxu0
  %v2063 = vadd.f32 %v1630, %v2062
  %v2064 = vpop.f32.mrb[0].mxu0
  %v2065 = vpop.f32.mrb[0].mxu0
  %v2066 = vadd.f32 %v1633, %v2065
  %v2067 = vpop.f32.mrb[0].mxu0
  %2068 = vmatprep.mubr.bf16.mxu0 %v1404
  %2069 = vmatmul.mubr.bf16.gmra.mrb[0].mxu0 %v914
  %v2070 = vpop.f32.mrb[0].mxu0
  %v2071 = vadd.f32 %v1638, %v2070
  %v2072 = vpop.f32.mrb[0].mxu0
  %v2073 = vpop.f32.mrb[0].mxu0
  %v2074 = vadd.f32 %v1641, %v2073
  %v2075 = vpop.f32.mrb[0].mxu0
  %2076 = vmatprep.mubr.bf16.mxu0 %v1407
  %2077 = vmatmul.mubr.bf16.gmra.mrb[0].mxu0 %v918
  %v2078 = vpop.f32.mrb[0].mxu0
  %v2079 = vadd.f32 %v1646, %v2078
  %v2080 = vpop.f32.mrb[0].mxu0
  %v2081 = vpop.f32.mrb[0].mxu0
  %v2082 = vadd.f32 %v1649, %v2081
  %v2083 = vpop.f32.mrb[0].mxu0
  %2084 = vmatprep.mubr.bf16.mxu0 %v1410
  %2085 = vmatmul.mubr.bf16.gmra.mrb[0].mxu0 %v922
  %v2086 = vpop.f32.mrb[0].mxu0
  %v2087 = vadd.f32 %v1654, %v2086
  %v2088 = vpop.f32.mrb[0].mxu0
  %v2089 = vpop.f32.mrb[0].mxu0
  %v2090 = vadd.f32 %v1657, %v2089
  %v2091 = vpop.f32.mrb[0].mxu0
  %2092 = vmatprep.mubr.bf16.mxu0 %v1413
  %2093 = vmatmul.mubr.bf16.gmra.mrb[0].mxu0 %v926
  %v2094 = vpop.f32.mrb[0].mxu0
  %v2095 = vadd.f32 %v1662, %v2094
  %v2096 = vpop.f32.mrb[0].mxu0
  %v2097 = vpop.f32.mrb[0].mxu0
  %v2098 = vadd.f32 %v1665, %v2097
  %v2099 = vpop.f32.mrb[0].mxu0
  %2100 = vmatprep.mubr.bf16.mxu0 %v1416
  %2101 = vmatmul.mubr.bf16.gmra.mrb[0].mxu0 %v930
  %v2102 = vpop.f32.mrb[0].mxu0
  %v2103 = vadd.f32 %v1670, %v2102
  %v2104 = vpop.f32.mrb[0].mxu0
  %v2105 = vpop.f32.mrb[0].mxu0
  %v2106 = vadd.f32 %v1673, %v2105
  %v2107 = vpop.f32.mrb[0].mxu0
  %2108 = vmatprep.mubr.bf16.mxu0 %v1419
  %2109 = vmatmul.mubr.bf16.gmra.mrb[0].mxu0 %v934
  %v2110 = vpop.f32.mrb[0].mxu0
  %v2111 = vadd.f32 %v1678, %v2110
  %v2112 = vpop.f32.mrb[0].mxu0
  %v2113 = vpop.f32.mrb[0].mxu0
  %v2114 = vadd.f32 %v1681, %v2113
  %v2115 = vpop.f32.mrb[0].mxu0
  %2116 = vmatprep.mubr.bf16.mxu0 %v1422
  %2117 = vmatmul.mubr.bf16.gmra.mrb[0].mxu0 %v938
  %v2118 = vpop.f32.mrb[0].mxu0
  %v2119 = vadd.f32 %v1686, %v2118
  %v2120 = vpop.f32.mrb[0].mxu0
  %v2121 = vpop.f32.mrb[0].mxu0
  %v2122 = vadd.f32 %v1689, %v2121
  %v2123 = vpop.f32.mrb[0].mxu0
  %2124 = vmatprep.mubr.bf16.mxu0 %v1425
  %2125 = vmatmul.mubr.bf16.gmra.mrb[0].mxu0 %v942
  %v2126 = vpop.f32.mrb[0].mxu0
  %v2127 = vadd.f32 %v1694, %v2126
  %v2128 = vpop.f32.mrb[0].mxu0
  %v2129 = vpop.f32.mrb[0].mxu0
  %v2130 = vadd.f32 %v1697, %v2129
  %v2131 = vpop.f32.mrb[0].mxu0
  %2132 = vmatprep.mubr.bf16.mxu0 %v1428
  %2133 = vmatmul.mubr.bf16.gmra.mrb[0].mxu0 %v946
  %v2134 = vpop.f32.mrb[0].mxu0
  %v2135 = vadd.f32 %v1702, %v2134
  %v2136 = vpop.f32.mrb[0].mxu0
  %v2137 = vpop.f32.mrb[0].mxu0
  %v2138 = vadd.f32 %v1705, %v2137
  %v2139 = vpop.f32.mrb[0].mxu0
  %2140 = vmatprep.mubr.bf16.mxu0 %v1431
  %2141 = vmatmul.mubr.bf16.gmra.mrb[0].mxu0 %v950
  %v2142 = vpop.f32.mrb[0].mxu0
  %v2143 = vadd.f32 %v1710, %v2142
  %v2144 = vpop.f32.mrb[0].mxu0
  %v2145 = vpop.f32.mrb[0].mxu0
  %v2146 = vadd.f32 %v1713, %v2145
  %v2147 = vpop.f32.mrb[0].mxu0
  %2148 = vmatprep.mubr.bf16.mxu0 %v1434
  %2149 = vmatmul.mubr.bf16.gmra.mrb[0].mxu0 %v954
  %v2150 = vpop.f32.mrb[0].mxu0
  %v2151 = vadd.f32 %v1718, %v2150
  %v2152 = vpop.f32.mrb[0].mxu0
  %v2153 = vpop.f32.mrb[0].mxu0
  %v2154 = vadd.f32 %v1721, %v2153
  %v2155 = vpop.f32.mrb[0].mxu0
  %2156 = vmatprep.mubr.bf16.mxu0 %v1437
  %2157 = vmatmul.mubr.bf16.gmra.mrb[0].mxu0 %v958
  %v2158 = vpop.f32.mrb[0].mxu0
  %v2159 = vadd.f32 %v1726, %v2158
  %v2160 = vpop.f32.mrb[0].mxu0
  %v2161 = vpop.f32.mrb[0].mxu0
  %v2162 = vadd.f32 %v1729, %v2161
  %v2163 = vpop.f32.mrb[0].mxu0
  %2164 = vmatprep.mubr.bf16.mxu0 %v1440
  %2165 = vmatmul.mubr.bf16.gmra.mrb[0].mxu0 %v962
  %v2166 = vpop.f32.mrb[0].mxu0
  %v2167 = vadd.f32 %v1734, %v2166
  %v2168 = vpop.f32.mrb[0].mxu0
  %v2169 = vpop.f32.mrb[0].mxu0
  %v2170 = vadd.f32 %v1737, %v2169
  %v2171 = vpop.f32.mrb[0].mxu0
  %2172 = vmatprep.mubr.bf16.mxu0 %v1443
  %2173 = vmatmul.mubr.bf16.gmra.mrb[0].mxu0 %v966
  %v2174 = vpop.f32.mrb[0].mxu0
  %v2175 = vadd.f32 %v1742, %v2174
  %v2176 = vpop.f32.mrb[0].mxu0
  %v2177 = vpop.f32.mrb[0].mxu0
  %v2178 = vadd.f32 %v1745, %v2177
  %v2179 = vpop.f32.mrb[0].mxu0
  %2180 = vmatprep.mubr.bf16.mxu0 %v1446
  %2181 = vmatmul.mubr.bf16.gmra.mrb[0].mxu0 %v970
  %v2182 = vpop.f32.mrb[0].mxu0
  %v2183 = vadd.f32 %v1750, %v2182
  %v2184 = vpop.f32.mrb[0].mxu0
  %v2185 = vpop.f32.mrb[0].mxu0
  %v2186 = vadd.f32 %v1753, %v2185
  %v2187 = vpop.f32.mrb[0].mxu0
  %2188 = vmatprep.mubr.bf16.mxu0 %v1449
  %2189 = vmatmul.mubr.bf16.gmra.mrb[0].mxu0 %v974
  %v2190 = vpop.f32.mrb[0].mxu0
  %v2191 = vadd.f32 %v1758, %v2190
  %v2192 = vpop.f32.mrb[0].mxu0
  %v2193 = vpop.f32.mrb[0].mxu0
  %v2194 = vadd.f32 %v1761, %v2193
  %v2195 = vpop.f32.mrb[0].mxu0
  %2196 = vmatprep.mubr.bf16.mxu0 %v1452
  %2197 = vmatmul.mubr.bf16.gmra.mrb[0].mxu0 %v978
  %v2198 = vpop.f32.mrb[0].mxu0
  %v2199 = vadd.f32 %v1766, %v2198
  %v2200 = vpop.f32.mrb[0].mxu0
  %v2201 = vpop.f32.mrb[0].mxu0
  %v2202 = vadd.f32 %v1769, %v2201
  %v2203 = vpop.f32.mrb[0].mxu0
  %2204 = vmatprep.mubr.bf16.mxu0 %v1455
  %2205 = vmatmul.mubr.bf16.gmra.mrb[0].mxu0 %v982
  %v2206 = vpop.f32.mrb[0].mxu0
  %v2207 = vadd.f32 %v1774, %v2206
  %v2208 = vpop.f32.mrb[0].mxu0
  %v2209 = vpop.f32.mrb[0].mxu0
  %v2210 = vadd.f32 %v1777, %v2209
  %v2211 = vpop.f32.mrb[0].mxu0
  %2212 = vmatprep.mubr.bf16.mxu0 %v1458
  %2213 = vmatmul.mubr.bf16.gmra.mrb[0].mxu0 %v986
  %v2214 = vpop.f32.mrb[0].mxu0
  %v2215 = vadd.f32 %v1782, %v2214
  %v2216 = vpop.f32.mrb[0].mxu0
  %v2217 = vpop.f32.mrb[0].mxu0
  %v2218 = vadd.f32 %v1785, %v2217
  %v2219 = vpop.f32.mrb[0].mxu0
  %2220 = vmatprep.mubr.bf16.mxu0 %v1461
  %2221 = vmatmul.mubr.bf16.gmra.mrb[0].mxu0 %v990
  %v2222 = vpop.f32.mrb[0].mxu0
  %v2223 = vadd.f32 %v1790, %v2222
  %v2224 = vpop.f32.mrb[0].mxu0
  %v2225 = vpop.f32.mrb[0].mxu0
  %v2226 = vadd.f32 %v1793, %v2225
  %v2227 = vpop.f32.mrb[0].mxu0
  %2228 = vmatprep.mubr.bf16.mxu0 %v1464
  %2229 = vmatmul.mubr.bf16.gmra.mrb[0].mxu0 %v994
  %v2230 = vpop.f32.mrb[0].mxu0
  %v2231 = vadd.f32 %v1798, %v2230
  %v2232 = vpop.f32.mrb[0].mxu0
  %v2233 = vpop.f32.mrb[0].mxu0
  %v2234 = vadd.f32 %v1801, %v2233
  %v2235 = vpop.f32.mrb[0].mxu0
  %2236 = vmatprep.mubr.bf16.mxu0 %v1467
  %2237 = vmatmul.mubr.bf16.gmra.mrb[0].mxu0 %v998
  %v2238 = vpop.f32.mrb[0].mxu0
  %v2239 = vadd.f32 %v1806, %v2238
  %v2240 = vpop.f32.mrb[0].mxu0
  %v2241 = vpop.f32.mrb[0].mxu0
  %v2242 = vadd.f32 %v1809, %v2241
  %v2243 = vpop.f32.mrb[0].mxu0
  %2244 = vmatprep.mubr.bf16.mxu0 %v1470
  %2245 = vmatmul.mubr.bf16.gmra.mrb[0].mxu0 %v1002
  %v2246 = vpop.f32.mrb[0].mxu0
  %v2247 = vadd.f32 %v1814, %v2246
  %v2248 = vpop.f32.mrb[0].mxu0
  %v2249 = vpop.f32.mrb[0].mxu0
  %v2250 = vadd.f32 %v1817, %v2249
  %v2251 = vpop.f32.mrb[0].mxu0
  %2252 = vmatprep.mubr.bf16.mxu0 %v1473
  %2253 = vmatmul.mubr.bf16.gmra.mrb[0].mxu0 %v1006
  %v2254 = vpop.f32.mrb[0].mxu0
  %v2255 = vadd.f32 %v1822, %v2254
  %v2256 = vpop.f32.mrb[0].mxu0
  %v2257 = vpop.f32.mrb[0].mxu0
  %v2258 = vadd.f32 %v1825, %v2257
  %v2259 = vpop.f32.mrb[0].mxu0
  %2260 = vmatprep.mubr.bf16.mxu0 %v1476
  %2261 = vmatmul.mubr.bf16.gmra.mrb[0].mxu0 %v1010
  %v2262 = vpop.f32.mrb[0].mxu0
  %v2263 = vadd.f32 %v1830, %v2262
  %v2264 = vpop.f32.mrb[0].mxu0
  %v2265 = vpop.f32.mrb[0].mxu0
  %v2266 = vadd.f32 %v1833, %v2265
  %v2267 = vpop.f32.mrb[0].mxu0
  %2268 = vmatprep.mubr.bf16.mxu0 %v1479
  %2269 = vmatmul.mubr.bf16.gmra.mrb[0].mxu0 %v1014
  %v2270 = vpop.f32.mrb[0].mxu0
  %v2271 = vadd.f32 %v1838, %v2270
  %v2272 = vpop.f32.mrb[0].mxu0
  %v2273 = vpop.f32.mrb[0].mxu0
  %v2274 = vadd.f32 %v1841, %v2273
  %v2275 = vpop.f32.mrb[0].mxu0
  %2276 = vmatprep.mubr.bf16.mxu0 %v1482
  %2277 = vmatmul.mubr.bf16.gmra.mrb[0].mxu0 %v1018
  %v2278 = vpop.f32.mrb[0].mxu0
  %v2279 = vadd.f32 %v1846, %v2278
  %v2280 = vpop.f32.mrb[0].mxu0
  %v2281 = vpop.f32.mrb[0].mxu0
  %v2282 = vadd.f32 %v1849, %v2281
  %v2283 = vpop.f32.mrb[0].mxu0
  %2284 = vmatprep.mubr.bf16.mxu0 %v1485
  %2285 = vmatmul.mubr.bf16.gmra.mrb[0].mxu0 %v1022
  %v2286 = vpop.f32.mrb[0].mxu0
  %v2287 = vadd.f32 %v1854, %v2286
  %v2288 = vpop.f32.mrb[0].mxu0
  %v2289 = vpop.f32.mrb[0].mxu0
  %v2290 = vadd.f32 %v1857, %v2289
  %v2291 = vpop.f32.mrb[0].mxu0
  %2292 = vmatprep.mubr.bf16.mxu0 %v1488
  %2293 = vmatmul.mubr.bf16.gmra.mrb[0].mxu0 %v1026
  %v2294 = vpop.f32.mrb[0].mxu0
  %v2295 = vadd.f32 %v1862, %v2294
  %v2296 = vpop.f32.mrb[0].mxu0
  %v2297 = vpop.f32.mrb[0].mxu0
  %v2298 = vadd.f32 %v1865, %v2297
  %v2299 = vpop.f32.mrb[0].mxu0
  %2300 = vmatprep.mubr.bf16.mxu0 %v1491
  %2301 = vmatmul.mubr.bf16.gmra.mrb[0].mxu0 %v1030
  %v2302 = vpop.f32.mrb[0].mxu0
  %v2303 = vadd.f32 %v1870, %v2302
  %v2304 = vpop.f32.mrb[0].mxu0
  %v2305 = vpop.f32.mrb[0].mxu0
  %v2306 = vadd.f32 %v1873, %v2305
  %v2307 = vpop.f32.mrb[0].mxu0
  %2308 = vmatprep.mubr.bf16.mxu0 %v1494
  %2309 = vmatmul.mubr.bf16.gmra.mrb[0].mxu0 %v1034
  %v2310 = vpop.f32.mrb[0].mxu0
  %v2311 = vadd.f32 %v1878, %v2310
  %v2312 = vpop.f32.mrb[0].mxu0
  %v2313 = vpop.f32.mrb[0].mxu0
  %v2314 = vadd.f32 %v1881, %v2313
  %v2315 = vpop.f32.mrb[0].mxu0
  %2316 = vmatprep.mubr.bf16.mxu0 %v1497
  %2317 = vmatmul.mubr.bf16.gmra.mrb[0].mxu0 %v1038
  %v2318 = vpop.f32.mrb[0].mxu0
  %v2319 = vadd.f32 %v1886, %v2318
  %v2320 = vpop.f32.mrb[0].mxu0
  %v2321 = vpop.f32.mrb[0].mxu0
  %v2322 = vadd.f32 %v1889, %v2321
  %v2323 = vpop.f32.mrb[0].mxu0
  %2324 = vmatprep.mubr.bf16.mxu0 %v1500
  %2325 = vmatmul.mubr.bf16.gmra.mrb[0].mxu0 %v1042
  %v2326 = vpop.f32.mrb[0].mxu0
  %v2327 = vadd.f32 %v1894, %v2326
  %v2328 = vpop.f32.mrb[0].mxu0
  %v2329 = vpop.f32.mrb[0].mxu0
  %v2330 = vadd.f32 %v1897, %v2329
  %v2331 = vpop.f32.mrb[0].mxu0
  %2332 = vmatprep.mubr.bf16.mxu0 %v1503
  %2333 = vmatmul.mubr.bf16.gmra.mrb[0].mxu0 %v1046
  %v2334 = vpop.f32.mrb[0].mxu0
  %v2335 = vadd.f32 %v1902, %v2334
  %v2336 = vpop.f32.mrb[0].mxu0
  %v2337 = vpop.f32.mrb[0].mxu0
  %v2338 = vadd.f32 %v1905, %v2337
  %v2339 = vpop.f32.mrb[0].mxu0
  %2340 = vmatprep.mubr.bf16.mxu0 %v1506
  %2341 = vmatmul.mubr.bf16.gmra.mrb[0].mxu0 %v1050
  %v2342 = vpop.f32.mrb[0].mxu0
  %v2343 = vadd.f32 %v1910, %v2342
  %v2344 = vpop.f32.mrb[0].mxu0
  %v2345 = vpop.f32.mrb[0].mxu0
  %v2346 = vadd.f32 %v1913, %v2345
  %v2347 = vpop.f32.mrb[0].mxu0
  %2348 = vmatprep.mubr.bf16.mxu0 %v1509
  %2349 = vmatmul.mubr.bf16.gmra.mrb[0].mxu0 %v1054
  %v2350 = vpop.f32.mrb[0].mxu0
  %v2351 = vadd.f32 %v1918, %v2350
  %v2352 = vpop.f32.mrb[0].mxu0
  %v2353 = vpop.f32.mrb[0].mxu0
  %v2354 = vadd.f32 %v1921, %v2353
  %v2355 = vpop.f32.mrb[0].mxu0
  %2356 = vmatprep.mubr.bf16.mxu0 %v1512
  %2357 = vmatmul.mubr.bf16.gmra.mrb[0].mxu0 %v1058
  %v2358 = vpop.f32.mrb[0].mxu0
  %v2359 = vadd.f32 %v1926, %v2358
  %v2360 = vpop.f32.mrb[0].mxu0
  %v2361 = vpop.f32.mrb[0].mxu0
  %v2362 = vadd.f32 %v1929, %v2361
  %v2363 = vpop.f32.mrb[0].mxu0
  %2364 = vmatprep.mubr.bf16.mxu0 %v1515
  %2365 = vmatmul.mubr.bf16.gmra.mrb[0].mxu0 %v1062
  %v2366 = vpop.f32.mrb[0].mxu0
  %v2367 = vadd.f32 %v1934, %v2366
  %v2368 = vpop.f32.mrb[0].mxu0
  %v2369 = vpop.f32.mrb[0].mxu0
  %v2370 = vadd.f32 %v1937, %v2369
  %v2371 = vpop.f32.mrb[0].mxu0
  %2372 = vmatprep.mubr.bf16.mxu0 %v1518
  %2373 = vmatmul.mubr.bf16.gmra.mrb[0].mxu0 %v1066
  %v2374 = vpop.f32.mrb[0].mxu0
  %v2375 = vadd.f32 %v1942, %v2374
  %v2376 = vpop.f32.mrb[0].mxu0
  %v2377 = vpop.f32.mrb[0].mxu0
  %v2378 = vadd.f32 %v1945, %v2377
  %v2379 = vpop.f32.mrb[0].mxu0
  %2380 = vmatprep.mubr.bf16.mxu0 %v1521
  %2381 = vmatmul.mubr.bf16.gmra.mrb[0].mxu0 %v1070
  %v2382 = vpop.f32.mrb[0].mxu0
  %v2383 = vadd.f32 %v1950, %v2382
  %v2384 = vpop.f32.mrb[0].mxu0
  %v2385 = vpop.f32.mrb[0].mxu0
  %v2386 = vadd.f32 %v1953, %v2385
  %v2387 = vpop.f32.mrb[0].mxu0
  %2388 = vdwg.mxu0
  %v2389 = vmax.f32 %v1991, 0.0
  %v2390 = vmax.f32 %v1994, 0.0
  %v2391 = vmax.f32 %v1999, 0.0
  %v2392 = vmax.f32 %v2002, 0.0
  %v2393 = vmax.f32 %v2007, 0.0
  %v2394 = vmax.f32 %v2010, 0.0
  %v2395 = vmax.f32 %v2015, 0.0
  %v2396 = vmax.f32 %v2018, 0.0
  %v2397 = vmax.f32 %v2023, 0.0
  %v2398 = vmax.f32 %v2026, 0.0
  %v2399 = vmax.f32 %v2031, 0.0
  %v2400 = vmax.f32 %v2034, 0.0
  %v2401 = vmax.f32 %v2039, 0.0
  %v2402 = vmax.f32 %v2042, 0.0
  %v2403 = vmax.f32 %v2047, 0.0
  %v2404 = vmax.f32 %v2050, 0.0
  %v2405 = vmax.f32 %v2055, 0.0
  %v2406 = vmax.f32 %v2058, 0.0
  %v2407 = vmax.f32 %v2063, 0.0
  %v2408 = vmax.f32 %v2066, 0.0
  %v2409 = vmax.f32 %v2071, 0.0
  %v2410 = vmax.f32 %v2074, 0.0
  %v2411 = vmax.f32 %v2079, 0.0
  %v2412 = vmax.f32 %v2082, 0.0
  %v2413 = vmax.f32 %v2087, 0.0
  %v2414 = vmax.f32 %v2090, 0.0
  %v2415 = vmax.f32 %v2095, 0.0
  %v2416 = vmax.f32 %v2098, 0.0
  %v2417 = vmax.f32 %v2103, 0.0
  %v2418 = vmax.f32 %v2106, 0.0
  %v2419 = vmax.f32 %v2111, 0.0
  %v2420 = vmax.f32 %v2114, 0.0
  %v2421 = vmax.f32 %v2119, 0.0
  %v2422 = vmax.f32 %v2122, 0.0
  %v2423 = vmax.f32 %v2127, 0.0
  %v2424 = vmax.f32 %v2130, 0.0
  %v2425 = vmax.f32 %v2135, 0.0
  %v2426 = vmax.f32 %v2138, 0.0
  %v2427 = vmax.f32 %v2143, 0.0
  %v2428 = vmax.f32 %v2146, 0.0
  %v2429 = vmax.f32 %v2151, 0.0
  %v2430 = vmax.f32 %v2154, 0.0
  %v2431 = vmax.f32 %v2159, 0.0
  %v2432 = vmax.f32 %v2162, 0.0
  %v2433 = vmax.f32 %v2167, 0.0
  %v2434 = vmax.f32 %v2170, 0.0
  %v2435 = vmax.f32 %v2175, 0.0
  %v2436 = vmax.f32 %v2178, 0.0
  %v2437 = vmax.f32 %v2183, 0.0
  %v2438 = vmax.f32 %v2186, 0.0
  %v2439 = vmax.f32 %v2191, 0.0
  %v2440 = vmax.f32 %v2194, 0.0
  %v2441 = vmax.f32 %v2199, 0.0
  %v2442 = vmax.f32 %v2202, 0.0
  %v2443 = vmax.f32 %v2207, 0.0
  %v2444 = vmax.f32 %v2210, 0.0
  %v2445 = vmax.f32 %v2215, 0.0
  %v2446 = vmax.f32 %v2218, 0.0
  %v2447 = vmax.f32 %v2223, 0.0
  %v2448 = vmax.f32 %v2226, 0.0
  %v2449 = vmax.f32 %v2231, 0.0
  %v2450 = vmax.f32 %v2234, 0.0
  %v2451 = vmax.f32 %v2239, 0.0
  %v2452 = vmax.f32 %v2242, 0.0
  %v2453 = vmax.f32 %v2247, 0.0
  %v2454 = vmax.f32 %v2250, 0.0
  %v2455 = vmax.f32 %v2255, 0.0
  %v2456 = vmax.f32 %v2258, 0.0
  %v2457 = vmax.f32 %v2263, 0.0
  %v2458 = vmax.f32 %v2266, 0.0
  %v2459 = vmax.f32 %v2271, 0.0
  %v2460 = vmax.f32 %v2274, 0.0
  %v2461 = vmax.f32 %v2279, 0.0
  %v2462 = vmax.f32 %v2282, 0.0
  %v2463 = vmax.f32 %v2287, 0.0
  %v2464 = vmax.f32 %v2290, 0.0
  %v2465 = vmax.f32 %v2295, 0.0
  %v2466 = vmax.f32 %v2298, 0.0
  %v2467 = vmax.f32 %v2303, 0.0
  %v2468 = vmax.f32 %v2306, 0.0
  %v2469 = vmax.f32 %v2311, 0.0
  %v2470 = vmax.f32 %v2314, 0.0
  %v2471 = vmax.f32 %v2319, 0.0
  %v2472 = vmax.f32 %v2322, 0.0
  %v2473 = vmax.f32 %v2327, 0.0
  %v2474 = vmax.f32 %v2330, 0.0
  %v2475 = vmax.f32 %v2335, 0.0
  %v2476 = vmax.f32 %v2338, 0.0
  %v2477 = vmax.f32 %v2343, 0.0
  %v2478 = vmax.f32 %v2346, 0.0
  %v2479 = vmax.f32 %v2351, 0.0
  %v2480 = vmax.f32 %v2354, 0.0
  %v2481 = vmax.f32 %v2359, 0.0
  %v2482 = vmax.f32 %v2362, 0.0
  %v2483 = vmax.f32 %v2367, 0.0
  %v2484 = vmax.f32 %v2370, 0.0
  %v2485 = vmax.f32 %v2375, 0.0
  %v2486 = vmax.f32 %v2378, 0.0
  %v2487 = vmax.f32 %v2383, 0.0
  %v2488 = vmax.f32 %v2386, 0.0
  %v2489 = vpack.c.bf16 %v2390, %v2389
  %v2490 = vpack.c.bf16 %v2392, %v2391
  %v2491 = vpack.c.bf16 %v2394, %v2393
  %v2492 = vpack.c.bf16 %v2396, %v2395
  %v2493 = vpack.c.bf16 %v2398, %v2397
  %v2494 = vpack.c.bf16 %v2400, %v2399
  %v2495 = vpack.c.bf16 %v2402, %v2401
  %v2496 = vpack.c.bf16 %v2404, %v2403
  %v2497 = vpack.c.bf16 %v2406, %v2405
  %v2498 = vpack.c.bf16 %v2408, %v2407
  %v2499 = vpack.c.bf16 %v2410, %v2409
  %v2500 = vpack.c.bf16 %v2412, %v2411
  %v2501 = vpack.c.bf16 %v2414, %v2413
  %v2502 = vpack.c.bf16 %v2416, %v2415
  %v2503 = vpack.c.bf16 %v2418, %v2417
  %v2504 = vpack.c.bf16 %v2420, %v2419
  %v2505 = vpack.c.bf16 %v2422, %v2421
  %v2506 = vpack.c.bf16 %v2424, %v2423
  %v2507 = vpack.c.bf16 %v2426, %v2425
  %v2508 = vpack.c.bf16 %v2428, %v2427
  %v2509 = vpack.c.bf16 %v2430, %v2429
  %v2510 = vpack.c.bf16 %v2432, %v2431
  %v2511 = vpack.c.bf16 %v2434, %v2433
  %v2512 = vpack.c.bf16 %v2436, %v2435
  %v2513 = vpack.c.bf16 %v2438, %v2437
  %v2514 = vpack.c.bf16 %v2440, %v2439
  %v2515 = vpack.c.bf16 %v2442, %v2441
  %v2516 = vpack.c.bf16 %v2444, %v2443
  %v2517 = vpack.c.bf16 %v2446, %v2445
  %v2518 = vpack.c.bf16 %v2448, %v2447
  %v2519 = vpack.c.bf16 %v2450, %v2449
  %v2520 = vpack.c.bf16 %v2452, %v2451
  %v2521 = vpack.c.bf16 %v2454, %v2453
  %v2522 = vpack.c.bf16 %v2456, %v2455
  %v2523 = vpack.c.bf16 %v2458, %v2457
  %v2524 = vpack.c.bf16 %v2460, %v2459
  %v2525 = vpack.c.bf16 %v2462, %v2461
  %v2526 = vpack.c.bf16 %v2464, %v2463
  %v2527 = vpack.c.bf16 %v2466, %v2465
  %v2528 = vpack.c.bf16 %v2468, %v2467
  %v2529 = vpack.c.bf16 %v2470, %v2469
  %v2530 = vpack.c.bf16 %v2472, %v2471
  %v2531 = vpack.c.bf16 %v2474, %v2473
  %v2532 = vpack.c.bf16 %v2476, %v2475
  %v2533 = vpack.c.bf16 %v2478, %v2477
  %v2534 = vpack.c.bf16 %v2480, %v2479
  %v2535 = vpack.c.bf16 %v2482, %v2481
  %v2536 = vpack.c.bf16 %v2484, %v2483
  %v2537 = vpack.c.bf16 %v2486, %v2485
  %v2538 = vpack.c.bf16 %v2488, %v2487
  %v2589 = vunpack.c.l.b16 %v2489
  %v2590 = vunpack.c.h.b16 %v2489
  %v2591 = vunpack.c.l.b16 %v2490
  %v2592 = vunpack.c.h.b16 %v2490
  %v2593 = vunpack.c.l.b16 %v2491
  %v2594 = vunpack.c.h.b16 %v2491
  %v2595 = vunpack.c.l.b16 %v2492
  %v2596 = vunpack.c.h.b16 %v2492
  %v2597 = vunpack.c.l.b16 %v2493
  %v2598 = vunpack.c.h.b16 %v2493
  %v2599 = vunpack.c.l.b16 %v2494
  %v2600 = vunpack.c.h.b16 %v2494
  %v2601 = vunpack.c.l.b16 %v2495
  %v2602 = vunpack.c.h.b16 %v2495
  %v2603 = vunpack.c.l.b16 %v2496
  %v2604 = vunpack.c.h.b16 %v2496
  %v2605 = vunpack.c.l.b16 %v2497
  %v2606 = vunpack.c.h.b16 %v2497
  %v2607 = vunpack.c.l.b16 %v2498
  %v2608 = vunpack.c.h.b16 %v2498
  %v2609 = vunpack.c.l.b16 %v2499
  %v2610 = vunpack.c.h.b16 %v2499
  %v2611 = vunpack.c.l.b16 %v2500
  %v2612 = vunpack.c.h.b16 %v2500
  %v2613 = vunpack.c.l.b16 %v2501
  %v2614 = vunpack.c.h.b16 %v2501
  %v2615 = vunpack.c.l.b16 %v2502
  %v2616 = vunpack.c.h.b16 %v2502
  %v2617 = vunpack.c.l.b16 %v2503
  %v2618 = vunpack.c.h.b16 %v2503
  %v2619 = vunpack.c.l.b16 %v2504
  %v2620 = vunpack.c.h.b16 %v2504
  %v2621 = vunpack.c.l.b16 %v2505
  %v2622 = vunpack.c.h.b16 %v2505
  %v2623 = vunpack.c.l.b16 %v2506
  %v2624 = vunpack.c.h.b16 %v2506
  %v2625 = vunpack.c.l.b16 %v2507
  %v2626 = vunpack.c.h.b16 %v2507
  %v2627 = vunpack.c.l.b16 %v2508
  %v2628 = vunpack.c.h.b16 %v2508
  %v2629 = vunpack.c.l.b16 %v2509
  %v2630 = vunpack.c.h.b16 %v2509
  %v2631 = vunpack.c.l.b16 %v2510
  %v2632 = vunpack.c.h.b16 %v2510
  %v2633 = vunpack.c.l.b16 %v2511
  %v2634 = vunpack.c.h.b16 %v2511
  %v2635 = vunpack.c.l.b16 %v2512
  %v2636 = vunpack.c.h.b16 %v2512
  %v2637 = vunpack.c.l.b16 %v2513
  %v2638 = vunpack.c.h.b16 %v2513
  %v2639 = vunpack.c.l.b16 %v2514
  %v2640 = vunpack.c.h.b16 %v2514
  %v2641 = vunpack.c.l.b16 %v2515
  %v2642 = vunpack.c.h.b16 %v2515
  %v2643 = vunpack.c.l.b16 %v2516
  %v2644 = vunpack.c.h.b16 %v2516
  %v2645 = vunpack.c.l.b16 %v2517
  %v2646 = vunpack.c.h.b16 %v2517
  %v2647 = vunpack.c.l.b16 %v2518
  %v2648 = vunpack.c.h.b16 %v2518
  %v2649 = vunpack.c.l.b16 %v2519
  %v2650 = vunpack.c.h.b16 %v2519
  %v2651 = vunpack.c.l.b16 %v2520
  %v2652 = vunpack.c.h.b16 %v2520
  %v2653 = vunpack.c.l.b16 %v2521
  %v2654 = vunpack.c.h.b16 %v2521
  %v2655 = vunpack.c.l.b16 %v2522
  %v2656 = vunpack.c.h.b16 %v2522
  %v2657 = vunpack.c.l.b16 %v2523
  %v2658 = vunpack.c.h.b16 %v2523
  %v2659 = vunpack.c.l.b16 %v2524
  %v2660 = vunpack.c.h.b16 %v2524
  %v2661 = vunpack.c.l.b16 %v2525
  %v2662 = vunpack.c.h.b16 %v2525
  %v2663 = vunpack.c.l.b16 %v2526
  %v2664 = vunpack.c.h.b16 %v2526
  %v2665 = vunpack.c.l.b16 %v2527
  %v2666 = vunpack.c.h.b16 %v2527
  %v2667 = vunpack.c.l.b16 %v2528
  %v2668 = vunpack.c.h.b16 %v2528
  %v2669 = vunpack.c.l.b16 %v2529
  %v2670 = vunpack.c.h.b16 %v2529
  %v2671 = vunpack.c.l.b16 %v2530
  %v2672 = vunpack.c.h.b16 %v2530
  %v2673 = vunpack.c.l.b16 %v2531
  %v2674 = vunpack.c.h.b16 %v2531
  %v2675 = vunpack.c.l.b16 %v2532
  %v2676 = vunpack.c.h.b16 %v2532
  %v2677 = vunpack.c.l.b16 %v2533
  %v2678 = vunpack.c.h.b16 %v2533
  %v2679 = vunpack.c.l.b16 %v2534
  %v2680 = vunpack.c.h.b16 %v2534
  %v2681 = vunpack.c.l.b16 %v2535
  %v2682 = vunpack.c.h.b16 %v2535
  %v2683 = vunpack.c.l.b16 %v2536
  %v2684 = vunpack.c.h.b16 %v2536
  %v2685 = vunpack.c.l.b16 %v2537
  %v2686 = vunpack.c.h.b16 %v2537
  %v2687 = vunpack.c.l.b16 %v2538
  %v2688 = vunpack.c.h.b16 %v2538
  %v2689 = vpack.c.b16 %v2589, %v2589
  %v2690 = vpack.c.b16 %v2590, %v2590
  %v2691 = vpack.c.b16 %v2591, %v2591
  %v2692 = vpack.c.b16 %v2592, %v2592
  %v2693 = vpack.c.b16 %v2593, %v2593
  %v2694 = vpack.c.b16 %v2594, %v2594
  %v2695 = vpack.c.b16 %v2595, %v2595
  %v2696 = vpack.c.b16 %v2596, %v2596
  %v2697 = vpack.c.b16 %v2597, %v2597
  %v2698 = vpack.c.b16 %v2598, %v2598
  %v2699 = vpack.c.b16 %v2599, %v2599
  %v2700 = vpack.c.b16 %v2600, %v2600
  %v2701 = vpack.c.b16 %v2601, %v2601
  %v2702 = vpack.c.b16 %v2602, %v2602
  %v2703 = vpack.c.b16 %v2603, %v2603
  %v2704 = vpack.c.b16 %v2604, %v2604
  %v2705 = vpack.c.b16 %v2605, %v2605
  %v2706 = vpack.c.b16 %v2606, %v2606
  %v2707 = vpack.c.b16 %v2607, %v2607
  %v2708 = vpack.c.b16 %v2608, %v2608
  %v2709 = vpack.c.b16 %v2609, %v2609
  %v2710 = vpack.c.b16 %v2610, %v2610
  %v2711 = vpack.c.b16 %v2611, %v2611
  %v2712 = vpack.c.b16 %v2612, %v2612
  %v2713 = vpack.c.b16 %v2613, %v2613
  %v2714 = vpack.c.b16 %v2614, %v2614
  %v2715 = vpack.c.b16 %v2615, %v2615
  %v2716 = vpack.c.b16 %v2616, %v2616
  %v2717 = vpack.c.b16 %v2617, %v2617
  %v2718 = vpack.c.b16 %v2618, %v2618
  %v2719 = vpack.c.b16 %v2619, %v2619
  %v2720 = vpack.c.b16 %v2620, %v2620
  %v2721 = vpack.c.b16 %v2621, %v2621
  %v2722 = vpack.c.b16 %v2622, %v2622
  %v2723 = vpack.c.b16 %v2623, %v2623
  %v2724 = vpack.c.b16 %v2624, %v2624
  %v2725 = vpack.c.b16 %v2625, %v2625
  %v2726 = vpack.c.b16 %v2626, %v2626
  %v2727 = vpack.c.b16 %v2627, %v2627
  %v2728 = vpack.c.b16 %v2628, %v2628
  %v2729 = vpack.c.b16 %v2629, %v2629
  %v2730 = vpack.c.b16 %v2630, %v2630
  %v2731 = vpack.c.b16 %v2631, %v2631
  %v2732 = vpack.c.b16 %v2632, %v2632
  %v2733 = vpack.c.b16 %v2633, %v2633
  %v2734 = vpack.c.b16 %v2634, %v2634
  %v2735 = vpack.c.b16 %v2635, %v2635
  %v2736 = vpack.c.b16 %v2636, %v2636
  %v2737 = vpack.c.b16 %v2637, %v2637
  %v2738 = vpack.c.b16 %v2638, %v2638
  %v2739 = vpack.c.b16 %v2639, %v2639
  %v2740 = vpack.c.b16 %v2640, %v2640
  %v2741 = vpack.c.b16 %v2641, %v2641
  %v2742 = vpack.c.b16 %v2642, %v2642
  %v2743 = vpack.c.b16 %v2643, %v2643
  %v2744 = vpack.c.b16 %v2644, %v2644
  %v2745 = vpack.c.b16 %v2645, %v2645
  %v2746 = vpack.c.b16 %v2646, %v2646
  %v2747 = vpack.c.b16 %v2647, %v2647
  %v2748 = vpack.c.b16 %v2648, %v2648
  %v2749 = vpack.c.b16 %v2649, %v2649
  %v2750 = vpack.c.b16 %v2650, %v2650
  %v2751 = vpack.c.b16 %v2651, %v2651
  %v2752 = vpack.c.b16 %v2652, %v2652
  %v2753 = vpack.c.b16 %v2653, %v2653
  %v2754 = vpack.c.b16 %v2654, %v2654
  %v2755 = vpack.c.b16 %v2655, %v2655
  %v2756 = vpack.c.b16 %v2656, %v2656
  %v2757 = vpack.c.b16 %v2657, %v2657
  %v2758 = vpack.c.b16 %v2658, %v2658
  %v2759 = vpack.c.b16 %v2659, %v2659
  %v2760 = vpack.c.b16 %v2660, %v2660
  %v2761 = vpack.c.b16 %v2661, %v2661
  %v2762 = vpack.c.b16 %v2662, %v2662
  %v2763 = vpack.c.b16 %v2663, %v2663
  %v2764 = vpack.c.b16 %v2664, %v2664
  %v2765 = vpack.c.b16 %v2665, %v2665
  %v2766 = vpack.c.b16 %v2666, %v2666
  %v2767 = vpack.c.b16 %v2667, %v2667
  %v2768 = vpack.c.b16 %v2668, %v2668
  %v2769 = vpack.c.b16 %v2669, %v2669
  %v2770 = vpack.c.b16 %v2670, %v2670
  %v2771 = vpack.c.b16 %v2671, %v2671
  %v2772 = vpack.c.b16 %v2672, %v2672
  %v2773 = vpack.c.b16 %v2673, %v2673
  %v2774 = vpack.c.b16 %v2674, %v2674
  %v2775 = vpack.c.b16 %v2675, %v2675
  %v2776 = vpack.c.b16 %v2676, %v2676
  %v2777 = vpack.c.b16 %v2677, %v2677
  %v2778 = vpack.c.b16 %v2678, %v2678
  %v2779 = vpack.c.b16 %v2679, %v2679
  %v2780 = vpack.c.b16 %v2680, %v2680
  %v2781 = vpack.c.b16 %v2681, %v2681
  %v2782 = vpack.c.b16 %v2682, %v2682
  %v2783 = vpack.c.b16 %v2683, %v2683
  %v2784 = vpack.c.b16 %v2684, %v2684
  %v2785 = vpack.c.b16 %v2685, %v2685
  %v2786 = vpack.c.b16 %v2686, %v2686
  %v2787 = vpack.c.b16 %v2687, %v2687
  %v2788 = vpack.c.b16 %v2688, %v2688
  %vm2889 = vcmask 257024
  %2890 = vst.msk [vmem:[%s3] sm:$0xf] %vm2889, %v2689
  %2891 = vst.msk [vmem:[%s3 + $0x4] sm:$0xf] %vm2889, %v2690
  %2892 = vst.msk [vmem:[%s3 + $0x8] sm:$0xf] %vm2889, %v2691
  %2893 = vst.msk [vmem:[%s3 + $0xc] sm:$0xf] %vm2889, %v2692
  %2894 = vst.msk [vmem:[%s3 + $0x10] sm:$0xf] %vm2889, %v2693
  %2895 = vst.msk [vmem:[%s3 + $0x14] sm:$0xf] %vm2889, %v2694
  %2896 = vst.msk [vmem:[%s3 + $0x18] sm:$0xf] %vm2889, %v2695
  %2897 = vst.msk [vmem:[%s3 + $0x1c] sm:$0xf] %vm2889, %v2696
  %2898 = vst.msk [vmem:[%s3 + $0x20] sm:$0xf] %vm2889, %v2697
  %2899 = vst.msk [vmem:[%s3 + $0x24] sm:$0xf] %vm2889, %v2698
  %2900 = vst.msk [vmem:[%s3 + $0x28] sm:$0xf] %vm2889, %v2699
  %2901 = vst.msk [vmem:[%s3 + $0x2c] sm:$0xf] %vm2889, %v2700
  %2902 = vst.msk [vmem:[%s3 + $0x30] sm:$0xf] %vm2889, %v2701
  %2903 = vst.msk [vmem:[%s3 + $0x34] sm:$0xf] %vm2889, %v2702
  %2904 = vst.msk [vmem:[%s3 + $0x38] sm:$0xf] %vm2889, %v2703
  %2905 = vst.msk [vmem:[%s3 + $0x3c] sm:$0xf] %vm2889, %v2704
  %2906 = vst.msk [vmem:[%s3 + $0x40] sm:$0xf] %vm2889, %v2705
  %2907 = vst.msk [vmem:[%s3 + $0x44] sm:$0xf] %vm2889, %v2706
  %2908 = vst.msk [vmem:[%s3 + $0x48] sm:$0xf] %vm2889, %v2707
  %2909 = vst.msk [vmem:[%s3 + $0x4c] sm:$0xf] %vm2889, %v2708
  %2910 = vst.msk [vmem:[%s3 + $0x50] sm:$0xf] %vm2889, %v2709
  %2911 = vst.msk [vmem:[%s3 + $0x54] sm:$0xf] %vm2889, %v2710
  %2912 = vst.msk [vmem:[%s3 + $0x58] sm:$0xf] %vm2889, %v2711
  %2913 = vst.msk [vmem:[%s3 + $0x5c] sm:$0xf] %vm2889, %v2712
  %2914 = vst.msk [vmem:[%s3 + $0x60] sm:$0xf] %vm2889, %v2713
  %2915 = vst.msk [vmem:[%s3 + $0x64] sm:$0xf] %vm2889, %v2714
  %2916 = vst.msk [vmem:[%s3 + $0x68] sm:$0xf] %vm2889, %v2715
  %2917 = vst.msk [vmem:[%s3 + $0x6c] sm:$0xf] %vm2889, %v2716
  %2918 = vst.msk [vmem:[%s3 + $0x70] sm:$0xf] %vm2889, %v2717
  %2919 = vst.msk [vmem:[%s3 + $0x74] sm:$0xf] %vm2889, %v2718
  %2920 = vst.msk [vmem:[%s3 + $0x78] sm:$0xf] %vm2889, %v2719
  %2921 = vst.msk [vmem:[%s3 + $0x7c] sm:$0xf] %vm2889, %v2720
  %2922 = vst.msk [vmem:[%s3 + $0x80] sm:$0xf] %vm2889, %v2721
  %2923 = vst.msk [vmem:[%s3 + $0x84] sm:$0xf] %vm2889, %v2722
  %2924 = vst.msk [vmem:[%s3 + $0x88] sm:$0xf] %vm2889, %v2723
  %2925 = vst.msk [vmem:[%s3 + $0x8c] sm:$0xf] %vm2889, %v2724
  %2926 = vst.msk [vmem:[%s3 + $0x90] sm:$0xf] %vm2889, %v2725
  %2927 = vst.msk [vmem:[%s3 + $0x94] sm:$0xf] %vm2889, %v2726
  %2928 = vst.msk [vmem:[%s3 + $0x98] sm:$0xf] %vm2889, %v2727
  %2929 = vst.msk [vmem:[%s3 + $0x9c] sm:$0xf] %vm2889, %v2728
  %2930 = vst.msk [vmem:[%s3 + $0xa0] sm:$0xf] %vm2889, %v2729
  %2931 = vst.msk [vmem:[%s3 + $0xa4] sm:$0xf] %vm2889, %v2730
  %2932 = vst.msk [vmem:[%s3 + $0xa8] sm:$0xf] %vm2889, %v2731
  %2933 = vst.msk [vmem:[%s3 + $0xac] sm:$0xf] %vm2889, %v2732
  %2934 = vst.msk [vmem:[%s3 + $0xb0] sm:$0xf] %vm2889, %v2733
  %2935 = vst.msk [vmem:[%s3 + $0xb4] sm:$0xf] %vm2889, %v2734
  %2936 = vst.msk [vmem:[%s3 + $0xb8] sm:$0xf] %vm2889, %v2735
  %2937 = vst.msk [vmem:[%s3 + $0xbc] sm:$0xf] %vm2889, %v2736
  %2938 = vst.msk [vmem:[%s3 + $0xc0] sm:$0xf] %vm2889, %v2737
  %2939 = vst.msk [vmem:[%s3 + $0xc4] sm:$0xf] %vm2889, %v2738
  %2940 = vst.msk [vmem:[%s3 + $0xc8] sm:$0xf] %vm2889, %v2739
  %2941 = vst.msk [vmem:[%s3 + $0xcc] sm:$0xf] %vm2889, %v2740
  %2942 = vst.msk [vmem:[%s3 + $0xd0] sm:$0xf] %vm2889, %v2741
  %2943 = vst.msk [vmem:[%s3 + $0xd4] sm:$0xf] %vm2889, %v2742
  %2944 = vst.msk [vmem:[%s3 + $0xd8] sm:$0xf] %vm2889, %v2743
  %2945 = vst.msk [vmem:[%s3 + $0xdc] sm:$0xf] %vm2889, %v2744
  %2946 = vst.msk [vmem:[%s3 + $0xe0] sm:$0xf] %vm2889, %v2745
  %2947 = vst.msk [vmem:[%s3 + $0xe4] sm:$0xf] %vm2889, %v2746
  %2948 = vst.msk [vmem:[%s3 + $0xe8] sm:$0xf] %vm2889, %v2747
  %2949 = vst.msk [vmem:[%s3 + $0xec] sm:$0xf] %vm2889, %v2748
  %2950 = vst.msk [vmem:[%s3 + $0xf0] sm:$0xf] %vm2889, %v2749
  %2951 = vst.msk [vmem:[%s3 + $0xf4] sm:$0xf] %vm2889, %v2750
  %2952 = vst.msk [vmem:[%s3 + $0xf8] sm:$0xf] %vm2889, %v2751
  %2953 = vst.msk [vmem:[%s3 + $0xfc] sm:$0xf] %vm2889, %v2752
  %2954 = vst.msk [vmem:[%s3 + $0x100] sm:$0xf] %vm2889, %v2753
  %2955 = vst.msk [vmem:[%s3 + $0x104] sm:$0xf] %vm2889, %v2754
  %2956 = vst.msk [vmem:[%s3 + $0x108] sm:$0xf] %vm2889, %v2755
  %2957 = vst.msk [vmem:[%s3 + $0x10c] sm:$0xf] %vm2889, %v2756
  %2958 = vst.msk [vmem:[%s3 + $0x110] sm:$0xf] %vm2889, %v2757
  %2959 = vst.msk [vmem:[%s3 + $0x114] sm:$0xf] %vm2889, %v2758
  %2960 = vst.msk [vmem:[%s3 + $0x118] sm:$0xf] %vm2889, %v2759
  %2961 = vst.msk [vmem:[%s3 + $0x11c] sm:$0xf] %vm2889, %v2760
  %2962 = vst.msk [vmem:[%s3 + $0x120] sm:$0xf] %vm2889, %v2761
  %2963 = vst.msk [vmem:[%s3 + $0x124] sm:$0xf] %vm2889, %v2762
  %2964 = vst.msk [vmem:[%s3 + $0x128] sm:$0xf] %vm2889, %v2763
  %2965 = vst.msk [vmem:[%s3 + $0x12c] sm:$0xf] %vm2889, %v2764
  %2966 = vst.msk [vmem:[%s3 + $0x130] sm:$0xf] %vm2889, %v2765
  %2967 = vst.msk [vmem:[%s3 + $0x134] sm:$0xf] %vm2889, %v2766
  %2968 = vst.msk [vmem:[%s3 + $0x138] sm:$0xf] %vm2889, %v2767
  %2969 = vst.msk [vmem:[%s3 + $0x13c] sm:$0xf] %vm2889, %v2768
  %2970 = vst.msk [vmem:[%s3 + $0x140] sm:$0xf] %vm2889, %v2769
  %2971 = vst.msk [vmem:[%s3 + $0x144] sm:$0xf] %vm2889, %v2770
  %2972 = vst.msk [vmem:[%s3 + $0x148] sm:$0xf] %vm2889, %v2771
  %2973 = vst.msk [vmem:[%s3 + $0x14c] sm:$0xf] %vm2889, %v2772
  %2974 = vst.msk [vmem:[%s3 + $0x150] sm:$0xf] %vm2889, %v2773
  %2975 = vst.msk [vmem:[%s3 + $0x154] sm:$0xf] %vm2889, %v2774
  %2976 = vst.msk [vmem:[%s3 + $0x158] sm:$0xf] %vm2889, %v2775
  %2977 = vst.msk [vmem:[%s3 + $0x15c] sm:$0xf] %vm2889, %v2776
  %2978 = vst.msk [vmem:[%s3 + $0x160] sm:$0xf] %vm2889, %v2777
  %2979 = vst.msk [vmem:[%s3 + $0x164] sm:$0xf] %vm2889, %v2778
  %2980 = vst.msk [vmem:[%s3 + $0x168] sm:$0xf] %vm2889, %v2779
  %2981 = vst.msk [vmem:[%s3 + $0x16c] sm:$0xf] %vm2889, %v2780
  %2982 = vst.msk [vmem:[%s3 + $0x170] sm:$0xf] %vm2889, %v2781
  %2983 = vst.msk [vmem:[%s3 + $0x174] sm:$0xf] %vm2889, %v2782
  %2984 = vst.msk [vmem:[%s3 + $0x178] sm:$0xf] %vm2889, %v2783
  %2985 = vst.msk [vmem:[%s3 + $0x17c] sm:$0xf] %vm2889, %v2784
  %2986 = vst.msk [vmem:[%s3 + $0x180] sm:$0xf] %vm2889, %v2785
  %2987 = vst.msk [vmem:[%s3 + $0x184] sm:$0xf] %vm2889, %v2786
  %2988 = vst.msk [vmem:[%s3 + $0x188] sm:$0xf] %vm2889, %v2787
  %2989 = vst.msk [vmem:[%s3 + $0x18c] sm:$0xf] %vm2889, %v2788
  // Predicated region
  $region14: #{cnn_critic_forward.5} parent=0 // pred_check
    _
  $region15: #{cnn_critic_forward.5} parent=0 // pred_check_branch
    %2991 = sbr.rel (0) target = $region17
  $region16: #{cnn_critic_forward.5} parent=0 // pred_region
    _
  $region17: #{cnn_critic_forward.5} parent=0 // pred_fallthru
    _
  // Predicated region
  $region18: #{cnn_critic_forward.5} parent=0 // pred_check
    _
  $region19: #{cnn_critic_forward.5} parent=0 // pred_check_branch
    %2993 = sbr.rel (0) target = $region21
  $region20: #{cnn_critic_forward.5} parent=0 // pred_region
    _
  $region21: #{cnn_critic_forward.5} parent=0 // pred_fallthru
    _

// kernel: cnn_critic_forward.6
$region0: #{cnn_critic_forward.6}
  #allocation0 [shape = 'u32[]', space=smem, size = 0x4, offset = 0x4, fixed_abs, tag = 'smem constant byte address 0x4 - core index']
  #allocation1 [shape = 'u32[144,128]{1,0:T(1,128)}', space=vmem, size = 0x12000, scoped, tag = 'internal scratch']
  %s0 = inlined_call_operand.vmem [shape: bf16[200,800], index: 0, kind: input, shape index: {}]
  %s1 = inlined_call_operand.vmem [shape: bf16[800,64], index: 1, kind: input, shape index: {}]
  %s2 = inlined_call_operand.vmem [shape: f32[1,64], index: 2, kind: input, shape index: {}]
  %s3 = inlined_call_operand.vmem [shape: bf16[200,64], index: 3, kind: output, shape index: {}]
  %s4 = sld [smem:[#allocation0]]
  $region22: #{cnn_critic_forward.6} parent=0
    _
  %s6 = ssub.s32 1, %s4
  %s7 = scalar_select 0, %s6, %s4
  // Predicated region
  $region2: #{cnn_critic_forward.6} parent=0 // pred_check
    _
  $region3: #{cnn_critic_forward.6} parent=0 // pred_check_branch
    %9 = sbr.rel (0) target = $region5
  $region4: #{cnn_critic_forward.6} parent=0 // pred_region
    _
  $region5: #{cnn_critic_forward.6} parent=0 // pred_fallthru
    _
  // Predicated region
  $region6: #{cnn_critic_forward.6} parent=0 // pred_check
    _
  $region7: #{cnn_critic_forward.6} parent=0 // pred_check_branch
    %11 = sbr.rel (0) target = $region9
  $region8: #{cnn_critic_forward.6} parent=0 // pred_region
    _
  $region9: #{cnn_critic_forward.6} parent=0 // pred_fallthru
    _
  // Predicated region
  $region10: #{cnn_critic_forward.6} parent=0 // pred_check
    _
  $region11: #{cnn_critic_forward.6} parent=0 // pred_check_branch
    %13 = sbr.rel (0) target = $region13
  $region12: #{cnn_critic_forward.6} parent=0 // pred_region
    _
  $region13: #{cnn_critic_forward.6} parent=0 // pred_fallthru
    _
  %v15 = vld [vmem:[%s0] sm:$0xff]
  %v16 = vld [vmem:[%s0 + $0x8] sm:$0xff]
  %v17 = vld [vmem:[%s0 + $0x10] sm:$0xff]
  %v18 = vld [vmem:[%s0 + $0x18] sm:$0xf]
  %v19 = vld [vmem:[%s0 + $0x1c] sm:$0xff]
  %v20 = vld [vmem:[%s0 + $0x24] sm:$0xff]
  %v21 = vld [vmem:[%s0 + $0x2c] sm:$0xff]
  %v22 = vld [vmem:[%s0 + $0x34] sm:$0xf]
  %v23 = vld [vmem:[%s0 + $0x38] sm:$0xff]
  %v24 = vld [vmem:[%s0 + $0x40] sm:$0xff]
  %v25 = vld [vmem:[%s0 + $0x48] sm:$0xff]
  %v26 = vld [vmem:[%s0 + $0x50] sm:$0xf]
  %v27 = vld [vmem:[%s0 + $0x54] sm:$0xff]
  %v28 = vld [vmem:[%s0 + $0x5c] sm:$0xff]
  %v29 = vld [vmem:[%s0 + $0x64] sm:$0xff]
  %v30 = vld [vmem:[%s0 + $0x6c] sm:$0xf]
  %v31 = vld [vmem:[%s0 + $0x70] sm:$0xff]
  %v32 = vld [vmem:[%s0 + $0x78] sm:$0xff]
  %v33 = vld [vmem:[%s0 + $0x80] sm:$0xff]
  %v34 = vld [vmem:[%s0 + $0x88] sm:$0xf]
  %v35 = vld [vmem:[%s0 + $0x8c] sm:$0xff]
  %v36 = vld [vmem:[%s0 + $0x94] sm:$0xff]
  %v37 = vld [vmem:[%s0 + $0x9c] sm:$0xff]
  %v38 = vld [vmem:[%s0 + $0xa4] sm:$0xf]
  %v39 = vld [vmem:[%s0 + $0xa8] sm:$0xff]
  %v40 = vld [vmem:[%s0 + $0xb0] sm:$0xff]
  %v41 = vld [vmem:[%s0 + $0xb8] sm:$0xff]
  %v42 = vld [vmem:[%s0 + $0xc0] sm:$0xf]
  %v43 = vld [vmem:[%s0 + $0xc4] sm:$0xff]
  %v44 = vld [vmem:[%s0 + $0xcc] sm:$0xff]
  %v45 = vld [vmem:[%s0 + $0xd4] sm:$0xff]
  %v46 = vld [vmem:[%s0 + $0xdc] sm:$0xf]
  %v47 = vld [vmem:[%s0 + $0xe0] sm:$0xff]
  %v48 = vld [vmem:[%s0 + $0xe8] sm:$0xff]
  %v49 = vld [vmem:[%s0 + $0xf0] sm:$0xff]
  %v50 = vld [vmem:[%s0 + $0xf8] sm:$0xf]
  %v51 = vld [vmem:[%s0 + $0xfc] sm:$0xff]
  %v52 = vld [vmem:[%s0 + $0x104] sm:$0xff]
  %v53 = vld [vmem:[%s0 + $0x10c] sm:$0xff]
  %v54 = vld [vmem:[%s0 + $0x114] sm:$0xf]
  %v55 = vld [vmem:[%s0 + $0x118] sm:$0xff]
  %v56 = vld [vmem:[%s0 + $0x120] sm:$0xff]
  %v57 = vld [vmem:[%s0 + $0x128] sm:$0xff]
  %v58 = vld [vmem:[%s0 + $0x130] sm:$0xf]
  %v59 = vld [vmem:[%s0 + $0x134] sm:$0xff]
  %v60 = vld [vmem:[%s0 + $0x13c] sm:$0xff]
  %v61 = vld [vmem:[%s0 + $0x144] sm:$0xff]
  %v62 = vld [vmem:[%s0 + $0x14c] sm:$0xf]
  %v63 = vld [vmem:[%s0 + $0x150] sm:$0xff]
  %v64 = vld [vmem:[%s0 + $0x158] sm:$0xff]
  %v65 = vld [vmem:[%s0 + $0x160] sm:$0xff]
  %v66 = vld [vmem:[%s0 + $0x168] sm:$0xf]
  %v67 = vld [vmem:[%s0 + $0x16c] sm:$0xff]
  %v68 = vld [vmem:[%s0 + $0x174] sm:$0xff]
  %v69 = vld [vmem:[%s0 + $0x17c] sm:$0xff]
  %v70 = vld [vmem:[%s0 + $0x184] sm:$0xf]
  %v71 = vld [vmem:[%s0 + $0x188] sm:$0xff]
  %v72 = vld [vmem:[%s0 + $0x190] sm:$0xff]
  %v73 = vld [vmem:[%s0 + $0x198] sm:$0xff]
  %v74 = vld [vmem:[%s0 + $0x1a0] sm:$0xf]
  %v75 = vld [vmem:[%s0 + $0x1a4] sm:$0xff]
  %v76 = vld [vmem:[%s0 + $0x1ac] sm:$0xff]
  %v77 = vld [vmem:[%s0 + $0x1b4] sm:$0xff]
  %v78 = vld [vmem:[%s0 + $0x1bc] sm:$0xf]
  %v79 = vld [vmem:[%s0 + $0x1c0] sm:$0xff]
  %v80 = vld [vmem:[%s0 + $0x1c8] sm:$0xff]
  %v81 = vld [vmem:[%s0 + $0x1d0] sm:$0xff]
  %v82 = vld [vmem:[%s0 + $0x1d8] sm:$0xf]
  %v83 = vld [vmem:[%s0 + $0x1dc] sm:$0xff]
  %v84 = vld [vmem:[%s0 + $0x1e4] sm:$0xff]
  %v85 = vld [vmem:[%s0 + $0x1ec] sm:$0xff]
  %v86 = vld [vmem:[%s0 + $0x1f4] sm:$0xf]
  %v87 = vld [vmem:[%s0 + $0x1f8] sm:$0xff]
  %v88 = vld [vmem:[%s0 + $0x200] sm:$0xff]
  %v89 = vld [vmem:[%s0 + $0x208] sm:$0xff]
  %v90 = vld [vmem:[%s0 + $0x210] sm:$0xf]
  %v91 = vld [vmem:[%s0 + $0x214] sm:$0xff]
  %v92 = vld [vmem:[%s0 + $0x21c] sm:$0xff]
  %v93 = vld [vmem:[%s0 + $0x224] sm:$0xff]
  %v94 = vld [vmem:[%s0 + $0x22c] sm:$0xf]
  %v95 = vld [vmem:[%s0 + $0x230] sm:$0xff]
  %v96 = vld [vmem:[%s0 + $0x238] sm:$0xff]
  %v97 = vld [vmem:[%s0 + $0x240] sm:$0xff]
  %v98 = vld [vmem:[%s0 + $0x248] sm:$0xf]
  %v99 = vld [vmem:[%s0 + $0x24c] sm:$0xff]
  %v100 = vld [vmem:[%s0 + $0x254] sm:$0xff]
  %v101 = vld [vmem:[%s0 + $0x25c] sm:$0xff]
  %v102 = vld [vmem:[%s0 + $0x264] sm:$0xf]
  %v103 = vld [vmem:[%s0 + $0x268] sm:$0xff]
  %v104 = vld [vmem:[%s0 + $0x270] sm:$0xff]
  %v105 = vld [vmem:[%s0 + $0x278] sm:$0xff]
  %v106 = vld [vmem:[%s0 + $0x280] sm:$0xf]
  %v107 = vld [vmem:[%s0 + $0x284] sm:$0xff]
  %v108 = vld [vmem:[%s0 + $0x28c] sm:$0xff]
  %v109 = vld [vmem:[%s0 + $0x294] sm:$0xff]
  %v110 = vld [vmem:[%s0 + $0x29c] sm:$0xf]
  %v111 = vld [vmem:[%s0 + $0x2a0] sm:$0xff]
  %v112 = vld [vmem:[%s0 + $0x2a8] sm:$0xff]
  %v113 = vld [vmem:[%s0 + $0x2b0] sm:$0xff]
  %v114 = vld [vmem:[%s0 + $0x2b8] sm:$0xf]
  %v115 = vld [vmem:[%s1] sm:$0xf]
  %v116 = vld [vmem:[%s1 + $0x4] sm:$0xf]
  %v117 = vld [vmem:[%s1 + $0x8] sm:$0xf]
  %v118 = vld [vmem:[%s1 + $0xc] sm:$0xf]
  %v119 = vld [vmem:[%s1 + $0x10] sm:$0xf]
  %v120 = vld [vmem:[%s1 + $0x14] sm:$0xf]
  %v121 = vld [vmem:[%s1 + $0x18] sm:$0xf]
  %v122 = vld [vmem:[%s1 + $0x1c] sm:$0xf]
  %v123 = vld [vmem:[%s1 + $0x20] sm:$0xf]
  %v124 = vld [vmem:[%s1 + $0x24] sm:$0xf]
  %v125 = vld [vmem:[%s1 + $0x28] sm:$0xf]
  %v126 = vld [vmem:[%s1 + $0x2c] sm:$0xf]
  %v127 = vld [vmem:[%s1 + $0x30] sm:$0xf]
  %v128 = vld [vmem:[%s1 + $0x34] sm:$0xf]
  %v129 = vld [vmem:[%s1 + $0x38] sm:$0xf]
  %v130 = vld [vmem:[%s1 + $0x3c] sm:$0xf]
  %v131 = vld [vmem:[%s1 + $0x40] sm:$0xf]
  %v132 = vld [vmem:[%s1 + $0x44] sm:$0xf]
  %v133 = vld [vmem:[%s1 + $0x48] sm:$0xf]
  %v134 = vld [vmem:[%s1 + $0x4c] sm:$0xf]
  %v135 = vld [vmem:[%s1 + $0x50] sm:$0xf]
  %v136 = vld [vmem:[%s1 + $0x54] sm:$0xf]
  %v137 = vld [vmem:[%s1 + $0x58] sm:$0xf]
  %v138 = vld [vmem:[%s1 + $0x5c] sm:$0xf]
  %v139 = vld [vmem:[%s1 + $0x60] sm:$0xf]
  %v140 = vld [vmem:[%s1 + $0x64] sm:$0xf]
  %v141 = vld [vmem:[%s1 + $0x68] sm:$0xf]
  %v142 = vld [vmem:[%s1 + $0x6c] sm:$0xf]
  %v143 = vld [vmem:[%s1 + $0x70] sm:$0xf]
  %v144 = vld [vmem:[%s1 + $0x74] sm:$0xf]
  %v145 = vld [vmem:[%s1 + $0x78] sm:$0xf]
  %v146 = vld [vmem:[%s1 + $0x7c] sm:$0xf]
  %v147 = vld [vmem:[%s1 + $0x80] sm:$0xf]
  %v148 = vld [vmem:[%s1 + $0x84] sm:$0xf]
  %v149 = vld [vmem:[%s1 + $0x88] sm:$0xf]
  %v150 = vld [vmem:[%s1 + $0x8c] sm:$0xf]
  %v151 = vld [vmem:[%s1 + $0x90] sm:$0xf]
  %v152 = vld [vmem:[%s1 + $0x94] sm:$0xf]
  %v153 = vld [vmem:[%s1 + $0x98] sm:$0xf]
  %v154 = vld [vmem:[%s1 + $0x9c] sm:$0xf]
  %v155 = vld [vmem:[%s1 + $0xa0] sm:$0xf]
  %v156 = vld [vmem:[%s1 + $0xa4] sm:$0xf]
  %v157 = vld [vmem:[%s1 + $0xa8] sm:$0xf]
  %v158 = vld [vmem:[%s1 + $0xac] sm:$0xf]
  %v159 = vld [vmem:[%s1 + $0xb0] sm:$0xf]
  %v160 = vld [vmem:[%s1 + $0xb4] sm:$0xf]
  %v161 = vld [vmem:[%s1 + $0xb8] sm:$0xf]
  %v162 = vld [vmem:[%s1 + $0xbc] sm:$0xf]
  %v163 = vld [vmem:[%s1 + $0xc0] sm:$0xf]
  %v164 = vld [vmem:[%s1 + $0xc4] sm:$0xf]
  %v165 = vld [vmem:[%s1 + $0xc8] sm:$0xf]
  %v166 = vld [vmem:[%s1 + $0xcc] sm:$0xf]
  %v167 = vld [vmem:[%s1 + $0xd0] sm:$0xf]
  %v168 = vld [vmem:[%s1 + $0xd4] sm:$0xf]
  %v169 = vld [vmem:[%s1 + $0xd8] sm:$0xf]
  %v170 = vld [vmem:[%s1 + $0xdc] sm:$0xf]
  %v171 = vld [vmem:[%s1 + $0xe0] sm:$0xf]
  %v172 = vld [vmem:[%s1 + $0xe4] sm:$0xf]
  %v173 = vld [vmem:[%s1 + $0xe8] sm:$0xf]
  %v174 = vld [vmem:[%s1 + $0xec] sm:$0xf]
  %v175 = vld [vmem:[%s1 + $0xf0] sm:$0xf]
  %v176 = vld [vmem:[%s1 + $0xf4] sm:$0xf]
  %v177 = vld [vmem:[%s1 + $0xf8] sm:$0xf]
  %v178 = vld [vmem:[%s1 + $0xfc] sm:$0xf]
  %v179 = vld [vmem:[%s1 + $0x100] sm:$0xf]
  %v180 = vld [vmem:[%s1 + $0x104] sm:$0xf]
  %v181 = vld [vmem:[%s1 + $0x108] sm:$0xf]
  %v182 = vld [vmem:[%s1 + $0x10c] sm:$0xf]
  %v183 = vld [vmem:[%s1 + $0x110] sm:$0xf]
  %v184 = vld [vmem:[%s1 + $0x114] sm:$0xf]
  %v185 = vld [vmem:[%s1 + $0x118] sm:$0xf]
  %v186 = vld [vmem:[%s1 + $0x11c] sm:$0xf]
  %v187 = vld [vmem:[%s1 + $0x120] sm:$0xf]
  %v188 = vld [vmem:[%s1 + $0x124] sm:$0xf]
  %v189 = vld [vmem:[%s1 + $0x128] sm:$0xf]
  %v190 = vld [vmem:[%s1 + $0x12c] sm:$0xf]
  %v191 = vld [vmem:[%s1 + $0x130] sm:$0xf]
  %v192 = vld [vmem:[%s1 + $0x134] sm:$0xf]
  %v193 = vld [vmem:[%s1 + $0x138] sm:$0xf]
  %v194 = vld [vmem:[%s1 + $0x13c] sm:$0xf]
  %v195 = vld [vmem:[%s1 + $0x140] sm:$0xf]
  %v196 = vld [vmem:[%s1 + $0x144] sm:$0xf]
  %v197 = vld [vmem:[%s1 + $0x148] sm:$0xf]
  %v198 = vld [vmem:[%s1 + $0x14c] sm:$0xf]
  %v199 = vld [vmem:[%s1 + $0x150] sm:$0xf]
  %v200 = vld [vmem:[%s1 + $0x154] sm:$0xf]
  %v201 = vld [vmem:[%s1 + $0x158] sm:$0xf]
  %v202 = vld [vmem:[%s1 + $0x15c] sm:$0xf]
  %v203 = vld [vmem:[%s1 + $0x160] sm:$0xf]
  %v204 = vld [vmem:[%s1 + $0x164] sm:$0xf]
  %v205 = vld [vmem:[%s1 + $0x168] sm:$0xf]
  %v206 = vld [vmem:[%s1 + $0x16c] sm:$0xf]
  %v207 = vld [vmem:[%s1 + $0x170] sm:$0xf]
  %v208 = vld [vmem:[%s1 + $0x174] sm:$0xf]
  %v209 = vld [vmem:[%s1 + $0x178] sm:$0xf]
  %v210 = vld [vmem:[%s1 + $0x17c] sm:$0xf]
  %v211 = vld [vmem:[%s1 + $0x180] sm:$0xf]
  %v212 = vld [vmem:[%s1 + $0x184] sm:$0xf]
  %v213 = vld [vmem:[%s1 + $0x188] sm:$0xf]
  %v214 = vld [vmem:[%s1 + $0x18c] sm:$0xf]
  %v215 = vld [vmem:[%s2] sm:$0x1]
  %v217 = vlaneseq
  %v218 = vshrl.u32 %v217, 7
  %v219 = vsub.s32 0, %v218
  %v220 = vrot.slane %v215, %v219
  %v322 = vunpack.c.l.b16 %v15
  %v323 = vunpack.c.h.b16 %v15
  %v324 = vunpack.c.l.b16 %v16
  %v325 = vunpack.c.h.b16 %v16
  %v326 = vunpack.c.l.b16 %v17
  %v327 = vunpack.c.h.b16 %v17
  %v328 = vunpack.c.l.b16 %v18
  %v329 = vunpack.c.l.b16 %v19
  %v330 = vunpack.c.h.b16 %v19
  %v331 = vunpack.c.l.b16 %v20
  %v332 = vunpack.c.h.b16 %v20
  %v333 = vunpack.c.l.b16 %v21
  %v334 = vunpack.c.h.b16 %v21
  %v335 = vunpack.c.l.b16 %v22
  %v336 = vunpack.c.l.b16 %v23
  %v337 = vunpack.c.h.b16 %v23
  %v338 = vunpack.c.l.b16 %v24
  %v339 = vunpack.c.h.b16 %v24
  %v340 = vunpack.c.l.b16 %v25
  %v341 = vunpack.c.h.b16 %v25
  %v342 = vunpack.c.l.b16 %v26
  %v343 = vunpack.c.l.b16 %v27
  %v344 = vunpack.c.h.b16 %v27
  %v345 = vunpack.c.l.b16 %v28
  %v346 = vunpack.c.h.b16 %v28
  %v347 = vunpack.c.l.b16 %v29
  %v348 = vunpack.c.h.b16 %v29
  %v349 = vunpack.c.l.b16 %v30
  %v350 = vunpack.c.l.b16 %v31
  %v351 = vunpack.c.h.b16 %v31
  %v352 = vunpack.c.l.b16 %v32
  %v353 = vunpack.c.h.b16 %v32
  %v354 = vunpack.c.l.b16 %v33
  %v355 = vunpack.c.h.b16 %v33
  %v356 = vunpack.c.l.b16 %v34
  %v357 = vunpack.c.l.b16 %v35
  %v358 = vunpack.c.h.b16 %v35
  %v359 = vunpack.c.l.b16 %v36
  %v360 = vunpack.c.h.b16 %v36
  %v361 = vunpack.c.l.b16 %v37
  %v362 = vunpack.c.h.b16 %v37
  %v363 = vunpack.c.l.b16 %v38
  %v364 = vunpack.c.l.b16 %v39
  %v365 = vunpack.c.h.b16 %v39
  %v366 = vunpack.c.l.b16 %v40
  %v367 = vunpack.c.h.b16 %v40
  %v368 = vunpack.c.l.b16 %v41
  %v369 = vunpack.c.h.b16 %v41
  %v370 = vunpack.c.l.b16 %v42
  %v371 = vunpack.c.l.b16 %v43
  %v372 = vunpack.c.h.b16 %v43
  %v373 = vunpack.c.l.b16 %v44
  %v374 = vunpack.c.h.b16 %v44
  %v375 = vunpack.c.l.b16 %v45
  %v376 = vunpack.c.h.b16 %v45
  %v377 = vunpack.c.l.b16 %v46
  %v378 = vunpack.c.l.b16 %v47
  %v379 = vunpack.c.h.b16 %v47
  %v380 = vunpack.c.l.b16 %v48
  %v381 = vunpack.c.h.b16 %v48
  %v382 = vunpack.c.l.b16 %v49
  %v383 = vunpack.c.h.b16 %v49
  %v384 = vunpack.c.l.b16 %v50
  %v385 = vunpack.c.l.b16 %v51
  %v386 = vunpack.c.h.b16 %v51
  %v387 = vunpack.c.l.b16 %v52
  %v388 = vunpack.c.h.b16 %v52
  %v389 = vunpack.c.l.b16 %v53
  %v390 = vunpack.c.h.b16 %v53
  %v391 = vunpack.c.l.b16 %v54
  %v392 = vunpack.c.l.b16 %v55
  %v393 = vunpack.c.h.b16 %v55
  %v394 = vunpack.c.l.b16 %v56
  %v395 = vunpack.c.h.b16 %v56
  %v396 = vunpack.c.l.b16 %v57
  %v397 = vunpack.c.h.b16 %v57
  %v398 = vunpack.c.l.b16 %v58
  %v399 = vunpack.c.l.b16 %v59
  %v400 = vunpack.c.h.b16 %v59
  %v401 = vunpack.c.l.b16 %v60
  %v402 = vunpack.c.h.b16 %v60
  %v403 = vunpack.c.l.b16 %v61
  %v404 = vunpack.c.h.b16 %v61
  %v405 = vunpack.c.l.b16 %v62
  %v406 = vunpack.c.l.b16 %v63
  %v407 = vunpack.c.h.b16 %v63
  %v408 = vunpack.c.l.b16 %v64
  %v409 = vunpack.c.h.b16 %v64
  %v410 = vunpack.c.l.b16 %v65
  %v411 = vunpack.c.h.b16 %v65
  %v412 = vunpack.c.l.b16 %v66
  %v413 = vunpack.c.l.b16 %v67
  %v414 = vunpack.c.h.b16 %v67
  %v415 = vunpack.c.l.b16 %v68
  %v416 = vunpack.c.h.b16 %v68
  %v417 = vunpack.c.l.b16 %v69
  %v418 = vunpack.c.h.b16 %v69
  %v419 = vunpack.c.l.b16 %v70
  %v420 = vunpack.c.l.b16 %v71
  %v421 = vunpack.c.h.b16 %v71
  %v422 = vunpack.c.l.b16 %v72
  %v423 = vunpack.c.h.b16 %v72
  %v424 = vunpack.c.l.b16 %v73
  %v425 = vunpack.c.h.b16 %v73
  %v426 = vunpack.c.l.b16 %v74
  %v427 = vunpack.c.l.b16 %v75
  %v428 = vunpack.c.h.b16 %v75
  %v429 = vunpack.c.l.b16 %v76
  %v430 = vunpack.c.h.b16 %v76
  %v431 = vunpack.c.l.b16 %v77
  %v432 = vunpack.c.h.b16 %v77
  %v433 = vunpack.c.l.b16 %v78
  %v434 = vunpack.c.l.b16 %v79
  %v435 = vunpack.c.h.b16 %v79
  %v436 = vunpack.c.l.b16 %v80
  %v437 = vunpack.c.h.b16 %v80
  %v438 = vunpack.c.l.b16 %v81
  %v439 = vunpack.c.h.b16 %v81
  %v440 = vunpack.c.l.b16 %v82
  %v441 = vunpack.c.l.b16 %v83
  %v442 = vunpack.c.h.b16 %v83
  %v443 = vunpack.c.l.b16 %v84
  %v444 = vunpack.c.h.b16 %v84
  %v445 = vunpack.c.l.b16 %v85
  %v446 = vunpack.c.h.b16 %v85
  %v447 = vunpack.c.l.b16 %v86
  %v448 = vunpack.c.l.b16 %v87
  %v449 = vunpack.c.h.b16 %v87
  %v450 = vunpack.c.l.b16 %v88
  %v451 = vunpack.c.h.b16 %v88
  %v452 = vunpack.c.l.b16 %v89
  %v453 = vunpack.c.h.b16 %v89
  %v454 = vunpack.c.l.b16 %v90
  %v455 = vunpack.c.l.b16 %v91
  %v456 = vunpack.c.h.b16 %v91
  %v457 = vunpack.c.l.b16 %v92
  %v458 = vunpack.c.h.b16 %v92
  %v459 = vunpack.c.l.b16 %v93
  %v460 = vunpack.c.h.b16 %v93
  %v461 = vunpack.c.l.b16 %v94
  %v462 = vunpack.c.l.b16 %v95
  %v463 = vunpack.c.h.b16 %v95
  %v464 = vunpack.c.l.b16 %v96
  %v465 = vunpack.c.h.b16 %v96
  %v466 = vunpack.c.l.b16 %v97
  %v467 = vunpack.c.h.b16 %v97
  %v468 = vunpack.c.l.b16 %v98
  %v469 = vunpack.c.l.b16 %v99
  %v470 = vunpack.c.h.b16 %v99
  %v471 = vunpack.c.l.b16 %v100
  %v472 = vunpack.c.h.b16 %v100
  %v473 = vunpack.c.l.b16 %v101
  %v474 = vunpack.c.h.b16 %v101
  %v475 = vunpack.c.l.b16 %v102
  %v476 = vunpack.c.l.b16 %v103
  %v477 = vunpack.c.h.b16 %v103
  %v478 = vunpack.c.l.b16 %v104
  %v479 = vunpack.c.h.b16 %v104
  %v480 = vunpack.c.l.b16 %v105
  %v481 = vunpack.c.h.b16 %v105
  %v482 = vunpack.c.l.b16 %v106
  %v483 = vunpack.c.l.b16 %v107
  %v484 = vunpack.c.h.b16 %v107
  %v485 = vunpack.c.l.b16 %v108
  %v486 = vunpack.c.h.b16 %v108
  %v487 = vunpack.c.l.b16 %v109
  %v488 = vunpack.c.h.b16 %v109
  %v489 = vunpack.c.l.b16 %v110
  %v490 = vunpack.c.l.b16 %v111
  %v491 = vunpack.c.h.b16 %v111
  %v492 = vunpack.c.l.b16 %v112
  %v493 = vunpack.c.h.b16 %v112
  %v494 = vunpack.c.l.b16 %v113
  %v495 = vunpack.c.h.b16 %v113
  %v496 = vunpack.c.l.b16 %v114
  %v497 = vpack.c.b16 %v329, %v322
  %v498 = vpack.c.b16 %v330, %v323
  %v499 = vpack.c.b16 %v331, %v324
  %v500 = vpack.c.b16 %v332, %v325
  %v501 = vpack.c.b16 %v333, %v326
  %v502 = vpack.c.b16 %v334, %v327
  %v503 = vpack.c.b16 %v335, %v328
  %v504 = vpack.c.b16 %v343, %v336
  %v505 = vpack.c.b16 %v344, %v337
  %v506 = vpack.c.b16 %v345, %v338
  %v507 = vpack.c.b16 %v346, %v339
  %v508 = vpack.c.b16 %v347, %v340
  %v509 = vpack.c.b16 %v348, %v341
  %v510 = vpack.c.b16 %v349, %v342
  %v511 = vpack.c.b16 %v357, %v350
  %v512 = vpack.c.b16 %v358, %v351
  %v513 = vpack.c.b16 %v359, %v352
  %v514 = vpack.c.b16 %v360, %v353
  %v515 = vpack.c.b16 %v361, %v354
  %v516 = vpack.c.b16 %v362, %v355
  %v517 = vpack.c.b16 %v363, %v356
  %v518 = vpack.c.b16 %v371, %v364
  %v519 = vpack.c.b16 %v372, %v365
  %v520 = vpack.c.b16 %v373, %v366
  %v521 = vpack.c.b16 %v374, %v367
  %v522 = vpack.c.b16 %v375, %v368
  %v523 = vpack.c.b16 %v376, %v369
  %v524 = vpack.c.b16 %v377, %v370
  %v525 = vpack.c.b16 %v385, %v378
  %v526 = vpack.c.b16 %v386, %v379
  %v527 = vpack.c.b16 %v387, %v380
  %v528 = vpack.c.b16 %v388, %v381
  %v529 = vpack.c.b16 %v389, %v382
  %v530 = vpack.c.b16 %v390, %v383
  %v531 = vpack.c.b16 %v391, %v384
  %v532 = vpack.c.b16 %v399, %v392
  %v533 = vpack.c.b16 %v400, %v393
  %v534 = vpack.c.b16 %v401, %v394
  %v535 = vpack.c.b16 %v402, %v395
  %v536 = vpack.c.b16 %v403, %v396
  %v537 = vpack.c.b16 %v404, %v397
  %v538 = vpack.c.b16 %v405, %v398
  %v539 = vpack.c.b16 %v413, %v406
  %v540 = vpack.c.b16 %v414, %v407
  %v541 = vpack.c.b16 %v415, %v408
  %v542 = vpack.c.b16 %v416, %v409
  %v543 = vpack.c.b16 %v417, %v410
  %v544 = vpack.c.b16 %v418, %v411
  %v545 = vpack.c.b16 %v419, %v412
  %v546 = vpack.c.b16 %v427, %v420
  %v547 = vpack.c.b16 %v428, %v421
  %v548 = vpack.c.b16 %v429, %v422
  %v549 = vpack.c.b16 %v430, %v423
  %v550 = vpack.c.b16 %v431, %v424
  %v551 = vpack.c.b16 %v432, %v425
  %v552 = vpack.c.b16 %v433, %v426
  %v553 = vpack.c.b16 %v441, %v434
  %v554 = vpack.c.b16 %v442, %v435
  %v555 = vpack.c.b16 %v443, %v436
  %v556 = vpack.c.b16 %v444, %v437
  %v557 = vpack.c.b16 %v445, %v438
  %v558 = vpack.c.b16 %v446, %v439
  %v559 = vpack.c.b16 %v447, %v440
  %v560 = vpack.c.b16 %v455, %v448
  %v561 = vpack.c.b16 %v456, %v449
  %v562 = vpack.c.b16 %v457, %v450
  %v563 = vpack.c.b16 %v458, %v451
  %v564 = vpack.c.b16 %v459, %v452
  %v565 = vpack.c.b16 %v460, %v453
  %v566 = vpack.c.b16 %v461, %v454
  %v567 = vpack.c.b16 %v469, %v462
  %v568 = vpack.c.b16 %v470, %v463
  %v569 = vpack.c.b16 %v471, %v464
  %v570 = vpack.c.b16 %v472, %v465
  %v571 = vpack.c.b16 %v473, %v466
  %v572 = vpack.c.b16 %v474, %v467
  %v573 = vpack.c.b16 %v475, %v468
  %v574 = vpack.c.b16 %v483, %v476
  %v575 = vpack.c.b16 %v484, %v477
  %v576 = vpack.c.b16 %v485, %v478
  %v577 = vpack.c.b16 %v486, %v479
  %v578 = vpack.c.b16 %v487, %v480
  %v579 = vpack.c.b16 %v488, %v481
  %v580 = vpack.c.b16 %v489, %v482
  %v581 = vpack.c.b16 %v490, %v490
  %v582 = vpack.c.b16 %v491, %v491
  %v583 = vpack.c.b16 %v492, %v492
  %v584 = vpack.c.b16 %v493, %v493
  %v585 = vpack.c.b16 %v494, %v494
  %v586 = vpack.c.b16 %v495, %v495
  %v587 = vpack.c.b16 %v496, %v496
  %v766 = vunpack.c.l.b16 %v115
  %v767 = vunpack.c.l.b16 %v116
  %v768 = vunpack.c.l.b16 %v117
  %v769 = vunpack.c.l.b16 %v118
  %v770 = vunpack.c.l.b16 %v119
  %v771 = vunpack.c.l.b16 %v120
  %v772 = vunpack.c.l.b16 %v121
  %v773 = vunpack.c.l.b16 %v122
  %v774 = vunpack.c.l.b16 %v123
  %v775 = vunpack.c.l.b16 %v124
  %v776 = vunpack.c.l.b16 %v125
  %v777 = vunpack.c.l.b16 %v126
  %v778 = vunpack.c.l.b16 %v127
  %v779 = vunpack.c.l.b16 %v128
  %v780 = vunpack.c.l.b16 %v129
  %v781 = vunpack.c.l.b16 %v130
  %v782 = vunpack.c.l.b16 %v131
  %v783 = vunpack.c.l.b16 %v132
  %v784 = vunpack.c.l.b16 %v133
  %v785 = vunpack.c.l.b16 %v134
  %v786 = vunpack.c.l.b16 %v135
  %v787 = vunpack.c.l.b16 %v136
  %v788 = vunpack.c.l.b16 %v137
  %v789 = vunpack.c.l.b16 %v138
  %v790 = vunpack.c.l.b16 %v139
  %v791 = vunpack.c.l.b16 %v140
  %v792 = vunpack.c.l.b16 %v141
  %v793 = vunpack.c.l.b16 %v142
  %v794 = vunpack.c.l.b16 %v143
  %v795 = vunpack.c.l.b16 %v144
  %v796 = vunpack.c.l.b16 %v145
  %v797 = vunpack.c.l.b16 %v146
  %v798 = vunpack.c.l.b16 %v147
  %v799 = vunpack.c.l.b16 %v148
  %v800 = vunpack.c.l.b16 %v149
  %v801 = vunpack.c.l.b16 %v150
  %v802 = vunpack.c.l.b16 %v151
  %v803 = vunpack.c.l.b16 %v152
  %v804 = vunpack.c.l.b16 %v153
  %v805 = vunpack.c.l.b16 %v154
  %v806 = vunpack.c.l.b16 %v155
  %v807 = vunpack.c.l.b16 %v156
  %v808 = vunpack.c.l.b16 %v157
  %v809 = vunpack.c.l.b16 %v158
  %v810 = vunpack.c.l.b16 %v159
  %v811 = vunpack.c.l.b16 %v160
  %v812 = vunpack.c.l.b16 %v161
  %v813 = vunpack.c.l.b16 %v162
  %v814 = vunpack.c.l.b16 %v163
  %v815 = vunpack.c.l.b16 %v164
  %v816 = vunpack.c.l.b16 %v165
  %v817 = vunpack.c.l.b16 %v166
  %v818 = vunpack.c.l.b16 %v167
  %v819 = vunpack.c.l.b16 %v168
  %v820 = vunpack.c.l.b16 %v169
  %v821 = vunpack.c.l.b16 %v170
  %v822 = vunpack.c.l.b16 %v171
  %v823 = vunpack.c.l.b16 %v172
  %v824 = vunpack.c.l.b16 %v173
  %v825 = vunpack.c.l.b16 %v174
  %v826 = vunpack.c.l.b16 %v175
  %v827 = vunpack.c.l.b16 %v176
  %v828 = vunpack.c.l.b16 %v177
  %v829 = vunpack.c.l.b16 %v178
  %v830 = vunpack.c.l.b16 %v179
  %v831 = vunpack.c.l.b16 %v180
  %v832 = vunpack.c.l.b16 %v181
  %v833 = vunpack.c.l.b16 %v182
  %v834 = vunpack.c.l.b16 %v183
  %v835 = vunpack.c.l.b16 %v184
  %v836 = vunpack.c.l.b16 %v185
  %v837 = vunpack.c.l.b16 %v186
  %v838 = vunpack.c.l.b16 %v187
  %v839 = vunpack.c.l.b16 %v188
  %v840 = vunpack.c.l.b16 %v189
  %v841 = vunpack.c.l.b16 %v190
  %v842 = vunpack.c.l.b16 %v191
  %v843 = vunpack.c.l.b16 %v192
  %v844 = vunpack.c.l.b16 %v193
  %v845 = vunpack.c.l.b16 %v194
  %v846 = vunpack.c.l.b16 %v195
  %v847 = vunpack.c.l.b16 %v196
  %v848 = vunpack.c.l.b16 %v197
  %v849 = vunpack.c.l.b16 %v198
  %v850 = vunpack.c.l.b16 %v199
  %v851 = vunpack.c.l.b16 %v200
  %v852 = vunpack.c.l.b16 %v201
  %v853 = vunpack.c.l.b16 %v202
  %v854 = vunpack.c.l.b16 %v203
  %v855 = vunpack.c.l.b16 %v204
  %v856 = vunpack.c.l.b16 %v205
  %v857 = vunpack.c.l.b16 %v206
  %v858 = vunpack.c.l.b16 %v207
  %v859 = vunpack.c.l.b16 %v208
  %v860 = vunpack.c.l.b16 %v209
  %v861 = vunpack.c.l.b16 %v210
  %v862 = vunpack.c.l.b16 %v211
  %v863 = vunpack.c.l.b16 %v212
  %v864 = vunpack.c.l.b16 %v213
  %v865 = vunpack.c.l.b16 %v214
  %v866 = vpack.c.b16 %v767, %v766
  %v867 = vpack.c.b16 %v769, %v768
  %v868 = vpack.c.b16 %v771, %v770
  %v869 = vpack.c.b16 %v773, %v772
  %v870 = vpack.c.b16 %v775, %v774
  %v871 = vpack.c.b16 %v777, %v776
  %v872 = vpack.c.b16 %v779, %v778
  %v873 = vpack.c.b16 %v781, %v780
  %v874 = vpack.c.b16 %v783, %v782
  %v875 = vpack.c.b16 %v785, %v784
  %v876 = vpack.c.b16 %v787, %v786
  %v877 = vpack.c.b16 %v789, %v788
  %v878 = vpack.c.b16 %v791, %v790
  %v879 = vpack.c.b16 %v793, %v792
  %v880 = vpack.c.b16 %v795, %v794
  %v881 = vpack.c.b16 %v797, %v796
  %v882 = vpack.c.b16 %v799, %v798
  %v883 = vpack.c.b16 %v801, %v800
  %v884 = vpack.c.b16 %v803, %v802
  %v885 = vpack.c.b16 %v805, %v804
  %v886 = vpack.c.b16 %v807, %v806
  %v887 = vpack.c.b16 %v809, %v808
  %v888 = vpack.c.b16 %v811, %v810
  %v889 = vpack.c.b16 %v813, %v812
  %v890 = vpack.c.b16 %v815, %v814
  %v891 = vpack.c.b16 %v817, %v816
  %v892 = vpack.c.b16 %v819, %v818
  %v893 = vpack.c.b16 %v821, %v820
  %v894 = vpack.c.b16 %v823, %v822
  %v895 = vpack.c.b16 %v825, %v824
  %v896 = vpack.c.b16 %v827, %v826
  %v897 = vpack.c.b16 %v829, %v828
  %v898 = vpack.c.b16 %v831, %v830
  %v899 = vpack.c.b16 %v833, %v832
  %v900 = vpack.c.b16 %v835, %v834
  %v901 = vpack.c.b16 %v837, %v836
  %v902 = vpack.c.b16 %v839, %v838
  %v903 = vpack.c.b16 %v841, %v840
  %v904 = vpack.c.b16 %v843, %v842
  %v905 = vpack.c.b16 %v845, %v844
  %v906 = vpack.c.b16 %v847, %v846
  %v907 = vpack.c.b16 %v849, %v848
  %v908 = vpack.c.b16 %v851, %v850
  %v909 = vpack.c.b16 %v853, %v852
  %v910 = vpack.c.b16 %v855, %v854
  %v911 = vpack.c.b16 %v857, %v856
  %v912 = vpack.c.b16 %v859, %v858
  %v913 = vpack.c.b16 %v861, %v860
  %v914 = vpack.c.b16 %v863, %v862
  %v915 = vpack.c.b16 %v865, %v864
  %vm966 = vcmask 261120
  %v968 = vsel %vm966, %v503, 0
  %v971 = vsel %vm966, %v510, 0
  %v974 = vsel %vm966, %v517, 0
  %v977 = vsel %vm966, %v524, 0
  %v980 = vsel %vm966, %v531, 0
  %v983 = vsel %vm966, %v538, 0
  %v986 = vsel %vm966, %v545, 0
  %v989 = vsel %vm966, %v552, 0
  %v992 = vsel %vm966, %v559, 0
  %v995 = vsel %vm966, %v566, 0
  %v998 = vsel %vm966, %v573, 0
  %v1001 = vsel %vm966, %v580, 0
  %v1004 = vsel %vm966, %v587, 0
  %1006 = vmatprep.subr.bf16.mxu0 0
  %1007 = vmatpush1.bf16.msra.mxu0 %v866
  %1008 = vmatprep.subr.bf16.mxu0 0
  %1009 = vmatpush1.bf16.msra.mxu0 %v867
  %1010 = vmatprep.subr.bf16.mxu0 0
  %1011 = vmatpush1.bf16.msra.mxu0 %v868
  %1012 = vmatprep.subr.bf16.mxu0 0
  %1013 = vmatpush1.bf16.msra.mxu0 %v869
  %1014 = vmatprep.subr.bf16.mxu0 0
  %1015 = vmatpush1.bf16.msra.mxu0 %v870
  %1016 = vmatprep.subr.bf16.mxu0 0
  %1017 = vmatpush1.bf16.msra.mxu0 %v871
  %1018 = vmatprep.subr.bf16.mxu0 0
  %1019 = vmatpush1.bf16.msra.mxu0 %v872
  %1020 = vmatprep.subr.bf16.mxu0 0
  %1021 = vmatpush1.bf16.msra.mxu0 %v873
  %1022 = vmatprep.subr.bf16.mxu0 0
  %1023 = vmatpush1.bf16.msra.mxu0 %v874
  %1024 = vmatprep.subr.bf16.mxu0 0
  %1025 = vmatpush1.bf16.msra.mxu0 %v875
  %1026 = vmatprep.subr.bf16.mxu0 0
  %1027 = vmatpush1.bf16.msra.mxu0 %v876
  %1028 = vmatprep.subr.bf16.mxu0 0
  %1029 = vmatpush1.bf16.msra.mxu0 %v877
  %1030 = vmatprep.subr.bf16.mxu0 0
  %1031 = vmatpush1.bf16.msra.mxu0 %v878
  %1032 = vmatprep.subr.bf16.mxu0 0
  %1033 = vmatpush1.bf16.msra.mxu0 %v879
  %1034 = vmatprep.subr.bf16.mxu0 0
  %1035 = vmatpush1.bf16.msra.mxu0 %v880
  %1036 = vmatprep.subr.bf16.mxu0 0
  %1037 = vmatpush1.bf16.msra.mxu0 %v881
  %1038 = vmatprep.mubr.bf16.mxu0 %v498
  %1039 = vmatmul.mubr.bf16.gmra.mrb[0].mxu0 %v497
  %v1040 = vpop.f32.mrb[0].mxu0
  %v1041 = vadd.f32 %v220, %v1040
  %v1042 = vpop.f32.mrb[0].mxu0
  %v1043 = vpop.f32.mrb[0].mxu0
  %v1044 = vadd.f32 %v220, %v1043
  %v1045 = vpop.f32.mrb[0].mxu0
  %1046 = vmatprep.mubr.bf16.mxu0 %v505
  %1047 = vmatmul.mubr.bf16.gmra.mrb[0].mxu0 %v504
  %v1048 = vpop.f32.mrb[0].mxu0
  %v1049 = vadd.f32 %v220, %v1048
  %v1050 = vpop.f32.mrb[0].mxu0
  %v1051 = vpop.f32.mrb[0].mxu0
  %v1052 = vadd.f32 %v220, %v1051
  %v1053 = vpop.f32.mrb[0].mxu0
  %1054 = vmatprep.mubr.bf16.mxu0 %v512
  %1055 = vmatmul.mubr.bf16.gmra.mrb[0].mxu0 %v511
  %v1056 = vpop.f32.mrb[0].mxu0
  %v1057 = vadd.f32 %v220, %v1056
  %v1058 = vpop.f32.mrb[0].mxu0
  %v1059 = vpop.f32.mrb[0].mxu0
  %v1060 = vadd.f32 %v220, %v1059
  %v1061 = vpop.f32.mrb[0].mxu0
  %1062 = vmatprep.mubr.bf16.mxu0 %v519
  %1063 = vmatmul.mubr.bf16.gmra.mrb[0].mxu0 %v518
  %v1064 = vpop.f32.mrb[0].mxu0
  %v1065 = vadd.f32 %v220, %v1064
  %v1066 = vpop.f32.mrb[0].mxu0
  %v1067 = vpop.f32.mrb[0].mxu0
  %v1068 = vadd.f32 %v220, %v1067
  %v1069 = vpop.f32.mrb[0].mxu0
  %1070 = vmatprep.mubr.bf16.mxu0 %v526
  %1071 = vmatmul.mubr.bf16.gmra.mrb[0].mxu0 %v525
  %v1072 = vpop.f32.mrb[0].mxu0
  %v1073 = vadd.f32 %v220, %v1072
  %v1074 = vpop.f32.mrb[0].mxu0
  %v1075 = vpop.f32.mrb[0].mxu0
  %v1076 = vadd.f32 %v220, %v1075
  %v1077 = vpop.f32.mrb[0].mxu0
  %1078 = vmatprep.mubr.bf16.mxu0 %v533
  %1079 = vmatmul.mubr.bf16.gmra.mrb[0].mxu0 %v532
  %v1080 = vpop.f32.mrb[0].mxu0
  %v1081 = vadd.f32 %v220, %v1080
  %v1082 = vpop.f32.mrb[0].mxu0
  %v1083 = vpop.f32.mrb[0].mxu0
  %v1084 = vadd.f32 %v220, %v1083
  %v1085 = vpop.f32.mrb[0].mxu0
  %1086 = vmatprep.mubr.bf16.mxu0 %v540
  %1087 = vmatmul.mubr.bf16.gmra.mrb[0].mxu0 %v539
  %v1088 = vpop.f32.mrb[0].mxu0
  %v1089 = vadd.f32 %v220, %v1088
  %v1090 = vpop.f32.mrb[0].mxu0
  %v1091 = vpop.f32.mrb[0].mxu0
  %v1092 = vadd.f32 %v220, %v1091
  %v1093 = vpop.f32.mrb[0].mxu0
  %1094 = vmatprep.mubr.bf16.mxu0 %v547
  %1095 = vmatmul.mubr.bf16.gmra.mrb[0].mxu0 %v546
  %v1096 = vpop.f32.mrb[0].mxu0
  %v1097 = vadd.f32 %v220, %v1096
  %v1098 = vpop.f32.mrb[0].mxu0
  %v1099 = vpop.f32.mrb[0].mxu0
  %v1100 = vadd.f32 %v220, %v1099
  %v1101 = vpop.f32.mrb[0].mxu0
  %1102 = vmatprep.mubr.bf16.mxu0 %v554
  %1103 = vmatmul.mubr.bf16.gmra.mrb[0].mxu0 %v553
  %v1104 = vpop.f32.mrb[0].mxu0
  %v1105 = vadd.f32 %v220, %v1104
  %v1106 = vpop.f32.mrb[0].mxu0
  %v1107 = vpop.f32.mrb[0].mxu0
  %v1108 = vadd.f32 %v220, %v1107
  %v1109 = vpop.f32.mrb[0].mxu0
  %1110 = vmatprep.mubr.bf16.mxu0 %v561
  %1111 = vmatmul.mubr.bf16.gmra.mrb[0].mxu0 %v560
  %v1112 = vpop.f32.mrb[0].mxu0
  %v1113 = vadd.f32 %v220, %v1112
  %v1114 = vpop.f32.mrb[0].mxu0
  %v1115 = vpop.f32.mrb[0].mxu0
  %v1116 = vadd.f32 %v220, %v1115
  %v1117 = vpop.f32.mrb[0].mxu0
  %1118 = vmatprep.mubr.bf16.mxu0 %v568
  %1119 = vmatmul.mubr.bf16.gmra.mrb[0].mxu0 %v567
  %v1120 = vpop.f32.mrb[0].mxu0
  %v1121 = vadd.f32 %v220, %v1120
  %v1122 = vpop.f32.mrb[0].mxu0
  %v1123 = vpop.f32.mrb[0].mxu0
  %v1124 = vadd.f32 %v220, %v1123
  %v1125 = vpop.f32.mrb[0].mxu0
  %1126 = vmatprep.mubr.bf16.mxu0 %v575
  %1127 = vmatmul.mubr.bf16.gmra.mrb[0].mxu0 %v574
  %v1128 = vpop.f32.mrb[0].mxu0
  %v1129 = vadd.f32 %v220, %v1128
  %v1130 = vpop.f32.mrb[0].mxu0
  %v1131 = vpop.f32.mrb[0].mxu0
  %v1132 = vadd.f32 %v220, %v1131
  %v1133 = vpop.f32.mrb[0].mxu0
  %1134 = vmatprep.mubr.bf16.mxu0 %v582
  %1135 = vmatmul.mubr.bf16.gmra.mrb[0].mxu0 %v581
  %v1136 = vpop.f32.mrb[0].mxu0
  %v1137 = vadd.f32 %v220, %v1136
  %v1138 = vpop.f32.mrb[0].mxu0
  %v1139 = vpop.f32.mrb[0].mxu0
  %v1140 = vpop.f32.mrb[0].mxu0
  %1141 = vdwg.mxu0
  %1142 = vmatprep.subr.bf16.mxu0 0
  %1143 = vmatpush1.bf16.msra.mxu0 %v882
  %1144 = vmatprep.subr.bf16.mxu0 0
  %1145 = vmatpush1.bf16.msra.mxu0 %v883
  %1146 = vmatprep.subr.bf16.mxu0 0
  %1147 = vmatpush1.bf16.msra.mxu0 %v884
  %1148 = vmatprep.subr.bf16.mxu0 0
  %1149 = vmatpush1.bf16.msra.mxu0 %v885
  %1150 = vmatprep.subr.bf16.mxu0 0
  %1151 = vmatpush1.bf16.msra.mxu0 %v886
  %1152 = vmatprep.subr.bf16.mxu0 0
  %1153 = vmatpush1.bf16.msra.mxu0 %v887
  %1154 = vmatprep.subr.bf16.mxu0 0
  %1155 = vmatpush1.bf16.msra.mxu0 %v888
  %1156 = vmatprep.subr.bf16.mxu0 0
  %1157 = vmatpush1.bf16.msra.mxu0 %v889
  %1158 = vmatprep.subr.bf16.mxu0 0
  %1159 = vmatpush1.bf16.msra.mxu0 %v890
  %1160 = vmatprep.subr.bf16.mxu0 0
  %1161 = vmatpush1.bf16.msra.mxu0 %v891
  %1162 = vmatprep.subr.bf16.mxu0 0
  %1163 = vmatpush1.bf16.msra.mxu0 %v892
  %1164 = vmatprep.subr.bf16.mxu0 0
  %1165 = vmatpush1.bf16.msra.mxu0 %v893
  %1166 = vmatprep.subr.bf16.mxu0 0
  %1167 = vmatpush1.bf16.msra.mxu0 %v894
  %1168 = vmatprep.subr.bf16.mxu0 0
  %1169 = vmatpush1.bf16.msra.mxu0 %v895
  %1170 = vmatprep.subr.bf16.mxu0 0
  %1171 = vmatpush1.bf16.msra.mxu0 %v896
  %1172 = vmatprep.subr.bf16.mxu0 0
  %1173 = vmatpush1.bf16.msra.mxu0 %v897
  %1174 = vmatprep.mubr.bf16.mxu0 %v500
  %1175 = vmatmul.mubr.bf16.gmra.mrb[0].mxu0 %v499
  %v1176 = vpop.f32.mrb[0].mxu0
  %v1177 = vadd.f32 %v1041, %v1176
  %v1178 = vpop.f32.mrb[0].mxu0
  %v1179 = vpop.f32.mrb[0].mxu0
  %v1180 = vadd.f32 %v1044, %v1179
  %v1181 = vpop.f32.mrb[0].mxu0
  %1182 = vmatprep.mubr.bf16.mxu0 %v507
  %1183 = vmatmul.mubr.bf16.gmra.mrb[0].mxu0 %v506
  %v1184 = vpop.f32.mrb[0].mxu0
  %v1185 = vadd.f32 %v1049, %v1184
  %v1186 = vpop.f32.mrb[0].mxu0
  %v1187 = vpop.f32.mrb[0].mxu0
  %v1188 = vadd.f32 %v1052, %v1187
  %v1189 = vpop.f32.mrb[0].mxu0
  %1190 = vmatprep.mubr.bf16.mxu0 %v514
  %1191 = vmatmul.mubr.bf16.gmra.mrb[0].mxu0 %v513
  %v1192 = vpop.f32.mrb[0].mxu0
  %v1193 = vadd.f32 %v1057, %v1192
  %v1194 = vpop.f32.mrb[0].mxu0
  %v1195 = vpop.f32.mrb[0].mxu0
  %v1196 = vadd.f32 %v1060, %v1195
  %v1197 = vpop.f32.mrb[0].mxu0
  %1198 = vmatprep.mubr.bf16.mxu0 %v521
  %1199 = vmatmul.mubr.bf16.gmra.mrb[0].mxu0 %v520
  %v1200 = vpop.f32.mrb[0].mxu0
  %v1201 = vadd.f32 %v1065, %v1200
  %v1202 = vpop.f32.mrb[0].mxu0
  %v1203 = vpop.f32.mrb[0].mxu0
  %v1204 = vadd.f32 %v1068, %v1203
  %v1205 = vpop.f32.mrb[0].mxu0
  %1206 = vmatprep.mubr.bf16.mxu0 %v528
  %1207 = vmatmul.mubr.bf16.gmra.mrb[0].mxu0 %v527
  %v1208 = vpop.f32.mrb[0].mxu0
  %v1209 = vadd.f32 %v1073, %v1208
  %v1210 = vpop.f32.mrb[0].mxu0
  %v1211 = vpop.f32.mrb[0].mxu0
  %v1212 = vadd.f32 %v1076, %v1211
  %v1213 = vpop.f32.mrb[0].mxu0
  %1214 = vmatprep.mubr.bf16.mxu0 %v535
  %1215 = vmatmul.mubr.bf16.gmra.mrb[0].mxu0 %v534
  %v1216 = vpop.f32.mrb[0].mxu0
  %v1217 = vadd.f32 %v1081, %v1216
  %v1218 = vpop.f32.mrb[0].mxu0
  %v1219 = vpop.f32.mrb[0].mxu0
  %v1220 = vadd.f32 %v1084, %v1219
  %v1221 = vpop.f32.mrb[0].mxu0
  %1222 = vmatprep.mubr.bf16.mxu0 %v542
  %1223 = vmatmul.mubr.bf16.gmra.mrb[0].mxu0 %v541
  %v1224 = vpop.f32.mrb[0].mxu0
  %v1225 = vadd.f32 %v1089, %v1224
  %v1226 = vpop.f32.mrb[0].mxu0
  %v1227 = vpop.f32.mrb[0].mxu0
  %v1228 = vadd.f32 %v1092, %v1227
  %v1229 = vpop.f32.mrb[0].mxu0
  %1230 = vmatprep.mubr.bf16.mxu0 %v549
  %1231 = vmatmul.mubr.bf16.gmra.mrb[0].mxu0 %v548
  %v1232 = vpop.f32.mrb[0].mxu0
  %v1233 = vadd.f32 %v1097, %v1232
  %v1234 = vpop.f32.mrb[0].mxu0
  %v1235 = vpop.f32.mrb[0].mxu0
  %v1236 = vadd.f32 %v1100, %v1235
  %v1237 = vpop.f32.mrb[0].mxu0
  %1238 = vmatprep.mubr.bf16.mxu0 %v556
  %1239 = vmatmul.mubr.bf16.gmra.mrb[0].mxu0 %v555
  %v1240 = vpop.f32.mrb[0].mxu0
  %v1241 = vadd.f32 %v1105, %v1240
  %v1242 = vpop.f32.mrb[0].mxu0
  %v1243 = vpop.f32.mrb[0].mxu0
  %v1244 = vadd.f32 %v1108, %v1243
  %v1245 = vpop.f32.mrb[0].mxu0
  %1246 = vmatprep.mubr.bf16.mxu0 %v563
  %1247 = vmatmul.mubr.bf16.gmra.mrb[0].mxu0 %v562
  %v1248 = vpop.f32.mrb[0].mxu0
  %v1249 = vadd.f32 %v1113, %v1248
  %v1250 = vpop.f32.mrb[0].mxu0
  %v1251 = vpop.f32.mrb[0].mxu0
  %v1252 = vadd.f32 %v1116, %v1251
  %v1253 = vpop.f32.mrb[0].mxu0
  %1254 = vmatprep.mubr.bf16.mxu0 %v570
  %1255 = vmatmul.mubr.bf16.gmra.mrb[0].mxu0 %v569
  %v1256 = vpop.f32.mrb[0].mxu0
  %v1257 = vadd.f32 %v1121, %v1256
  %v1258 = vpop.f32.mrb[0].mxu0
  %v1259 = vpop.f32.mrb[0].mxu0
  %v1260 = vadd.f32 %v1124, %v1259
  %v1261 = vpop.f32.mrb[0].mxu0
  %1262 = vmatprep.mubr.bf16.mxu0 %v577
  %1263 = vmatmul.mubr.bf16.gmra.mrb[0].mxu0 %v576
  %v1264 = vpop.f32.mrb[0].mxu0
  %v1265 = vadd.f32 %v1129, %v1264
  %v1266 = vpop.f32.mrb[0].mxu0
  %v1267 = vpop.f32.mrb[0].mxu0
  %v1268 = vadd.f32 %v1132, %v1267
  %v1269 = vpop.f32.mrb[0].mxu0
  %1270 = vmatprep.mubr.bf16.mxu0 %v584
  %1271 = vmatmul.mubr.bf16.gmra.mrb[0].mxu0 %v583
  %v1272 = vpop.f32.mrb[0].mxu0
  %v1273 = vadd.f32 %v1137, %v1272
  %v1274 = vpop.f32.mrb[0].mxu0
  %v1275 = vpop.f32.mrb[0].mxu0
  %v1276 = vpop.f32.mrb[0].mxu0
  %1277 = vdwg.mxu0
  %1278 = vmatprep.subr.bf16.mxu0 0
  %1279 = vmatpush1.bf16.msra.mxu0 %v898
  %1280 = vmatprep.subr.bf16.mxu0 0
  %1281 = vmatpush1.bf16.msra.mxu0 %v899
  %1282 = vmatprep.subr.bf16.mxu0 0
  %1283 = vmatpush1.bf16.msra.mxu0 %v900
  %1284 = vmatprep.subr.bf16.mxu0 0
  %1285 = vmatpush1.bf16.msra.mxu0 %v901
  %1286 = vmatprep.subr.bf16.mxu0 0
  %1287 = vmatpush1.bf16.msra.mxu0 %v902
  %1288 = vmatprep.subr.bf16.mxu0 0
  %1289 = vmatpush1.bf16.msra.mxu0 %v903
  %1290 = vmatprep.subr.bf16.mxu0 0
  %1291 = vmatpush1.bf16.msra.mxu0 %v904
  %1292 = vmatprep.subr.bf16.mxu0 0
  %1293 = vmatpush1.bf16.msra.mxu0 %v905
  %1294 = vmatprep.subr.bf16.mxu0 0
  %1295 = vmatpush1.bf16.msra.mxu0 %v906
  %1296 = vmatprep.subr.bf16.mxu0 0
  %1297 = vmatpush1.bf16.msra.mxu0 %v907
  %1298 = vmatprep.subr.bf16.mxu0 0
  %1299 = vmatpush1.bf16.msra.mxu0 %v908
  %1300 = vmatprep.subr.bf16.mxu0 0
  %1301 = vmatpush1.bf16.msra.mxu0 %v909
  %1302 = vmatprep.subr.bf16.mxu0 0
  %1303 = vmatpush1.bf16.msra.mxu0 %v910
  %1304 = vmatprep.subr.bf16.mxu0 0
  %1305 = vmatpush1.bf16.msra.mxu0 %v911
  %1306 = vmatprep.subr.bf16.mxu0 0
  %1307 = vmatpush1.bf16.msra.mxu0 %v912
  %1308 = vmatprep.subr.bf16.mxu0 0
  %1309 = vmatpush1.bf16.msra.mxu0 %v913
  %1310 = vmatprep.mubr.bf16.mxu0 %v502
  %1311 = vmatmul.mubr.bf16.gmra.mrb[0].mxu0 %v501
  %v1312 = vpop.f32.mrb[0].mxu0
  %v1313 = vadd.f32 %v1177, %v1312
  %v1314 = vpop.f32.mrb[0].mxu0
  %v1315 = vpop.f32.mrb[0].mxu0
  %v1316 = vadd.f32 %v1180, %v1315
  %v1317 = vpop.f32.mrb[0].mxu0
  %1318 = vmatprep.mubr.bf16.mxu0 %v509
  %1319 = vmatmul.mubr.bf16.gmra.mrb[0].mxu0 %v508
  %v1320 = vpop.f32.mrb[0].mxu0
  %v1321 = vadd.f32 %v1185, %v1320
  %v1322 = vpop.f32.mrb[0].mxu0
  %v1323 = vpop.f32.mrb[0].mxu0
  %v1324 = vadd.f32 %v1188, %v1323
  %v1325 = vpop.f32.mrb[0].mxu0
  %1326 = vmatprep.mubr.bf16.mxu0 %v516
  %1327 = vmatmul.mubr.bf16.gmra.mrb[0].mxu0 %v515
  %v1328 = vpop.f32.mrb[0].mxu0
  %v1329 = vadd.f32 %v1193, %v1328
  %v1330 = vpop.f32.mrb[0].mxu0
  %v1331 = vpop.f32.mrb[0].mxu0
  %v1332 = vadd.f32 %v1196, %v1331
  %v1333 = vpop.f32.mrb[0].mxu0
  %1334 = vmatprep.mubr.bf16.mxu0 %v523
  %1335 = vmatmul.mubr.bf16.gmra.mrb[0].mxu0 %v522
  %v1336 = vpop.f32.mrb[0].mxu0
  %v1337 = vadd.f32 %v1201, %v1336
  %v1338 = vpop.f32.mrb[0].mxu0
  %v1339 = vpop.f32.mrb[0].mxu0
  %v1340 = vadd.f32 %v1204, %v1339
  %v1341 = vpop.f32.mrb[0].mxu0
  %1342 = vmatprep.mubr.bf16.mxu0 %v530
  %1343 = vmatmul.mubr.bf16.gmra.mrb[0].mxu0 %v529
  %v1344 = vpop.f32.mrb[0].mxu0
  %v1345 = vadd.f32 %v1209, %v1344
  %v1346 = vpop.f32.mrb[0].mxu0
  %v1347 = vpop.f32.mrb[0].mxu0
  %v1348 = vadd.f32 %v1212, %v1347
  %v1349 = vpop.f32.mrb[0].mxu0
  %1350 = vmatprep.mubr.bf16.mxu0 %v537
  %1351 = vmatmul.mubr.bf16.gmra.mrb[0].mxu0 %v536
  %v1352 = vpop.f32.mrb[0].mxu0
  %v1353 = vadd.f32 %v1217, %v1352
  %v1354 = vpop.f32.mrb[0].mxu0
  %v1355 = vpop.f32.mrb[0].mxu0
  %v1356 = vadd.f32 %v1220, %v1355
  %v1357 = vpop.f32.mrb[0].mxu0
  %1358 = vmatprep.mubr.bf16.mxu0 %v544
  %1359 = vmatmul.mubr.bf16.gmra.mrb[0].mxu0 %v543
  %v1360 = vpop.f32.mrb[0].mxu0
  %v1361 = vadd.f32 %v1225, %v1360
  %v1362 = vpop.f32.mrb[0].mxu0
  %v1363 = vpop.f32.mrb[0].mxu0
  %v1364 = vadd.f32 %v1228, %v1363
  %v1365 = vpop.f32.mrb[0].mxu0
  %1366 = vmatprep.mubr.bf16.mxu0 %v551
  %1367 = vmatmul.mubr.bf16.gmra.mrb[0].mxu0 %v550
  %v1368 = vpop.f32.mrb[0].mxu0
  %v1369 = vadd.f32 %v1233, %v1368
  %v1370 = vpop.f32.mrb[0].mxu0
  %v1371 = vpop.f32.mrb[0].mxu0
  %v1372 = vadd.f32 %v1236, %v1371
  %v1373 = vpop.f32.mrb[0].mxu0
  %1374 = vmatprep.mubr.bf16.mxu0 %v558
  %1375 = vmatmul.mubr.bf16.gmra.mrb[0].mxu0 %v557
  %v1376 = vpop.f32.mrb[0].mxu0
  %v1377 = vadd.f32 %v1241, %v1376
  %v1378 = vpop.f32.mrb[0].mxu0
  %v1379 = vpop.f32.mrb[0].mxu0
  %v1380 = vadd.f32 %v1244, %v1379
  %v1381 = vpop.f32.mrb[0].mxu0
  %1382 = vmatprep.mubr.bf16.mxu0 %v565
  %1383 = vmatmul.mubr.bf16.gmra.mrb[0].mxu0 %v564
  %v1384 = vpop.f32.mrb[0].mxu0
  %v1385 = vadd.f32 %v1249, %v1384
  %v1386 = vpop.f32.mrb[0].mxu0
  %v1387 = vpop.f32.mrb[0].mxu0
  %v1388 = vadd.f32 %v1252, %v1387
  %v1389 = vpop.f32.mrb[0].mxu0
  %1390 = vmatprep.mubr.bf16.mxu0 %v572
  %1391 = vmatmul.mubr.bf16.gmra.mrb[0].mxu0 %v571
  %v1392 = vpop.f32.mrb[0].mxu0
  %v1393 = vadd.f32 %v1257, %v1392
  %v1394 = vpop.f32.mrb[0].mxu0
  %v1395 = vpop.f32.mrb[0].mxu0
  %v1396 = vadd.f32 %v1260, %v1395
  %v1397 = vpop.f32.mrb[0].mxu0
  %1398 = vmatprep.mubr.bf16.mxu0 %v579
  %1399 = vmatmul.mubr.bf16.gmra.mrb[0].mxu0 %v578
  %v1400 = vpop.f32.mrb[0].mxu0
  %v1401 = vadd.f32 %v1265, %v1400
  %v1402 = vpop.f32.mrb[0].mxu0
  %v1403 = vpop.f32.mrb[0].mxu0
  %v1404 = vadd.f32 %v1268, %v1403
  %v1405 = vpop.f32.mrb[0].mxu0
  %1406 = vmatprep.mubr.bf16.mxu0 %v586
  %1407 = vmatmul.mubr.bf16.gmra.mrb[0].mxu0 %v585
  %v1408 = vpop.f32.mrb[0].mxu0
  %v1409 = vadd.f32 %v1273, %v1408
  %v1410 = vpop.f32.mrb[0].mxu0
  %v1411 = vpop.f32.mrb[0].mxu0
  %v1412 = vpop.f32.mrb[0].mxu0
  %1413 = vdwg.mxu0
  %1414 = vmatprep.subr.bf16.mxu0 0
  %1415 = vmatpush1.bf16.msra.mxu0 %v914
  %1416 = vmatprep.subr.bf16.mxu0 0
  %1417 = vmatpush1.bf16.msra.mxu0 %v915
  %1418 = vmatprep.subr.bf16.mxu0 0
  %1419 = vmatpush1.bf16.msra.mxu0 0
  %1420 = vmatprep.subr.bf16.mxu0 0
  %1421 = vmatpush1.bf16.msra.mxu0 0
  %1422 = vmatprep.subr.bf16.mxu0 0
  %1423 = vmatpush1.bf16.msra.mxu0 0
  %1424 = vmatprep.subr.bf16.mxu0 0
  %1425 = vmatpush1.bf16.msra.mxu0 0
  %1426 = vmatprep.subr.bf16.mxu0 0
  %1427 = vmatpush1.bf16.msra.mxu0 0
  %1428 = vmatprep.subr.bf16.mxu0 0
  %1429 = vmatpush1.bf16.msra.mxu0 0
  %1430 = vmatprep.subr.bf16.mxu0 0
  %1431 = vmatpush1.bf16.msra.mxu0 0
  %1432 = vmatprep.subr.bf16.mxu0 0
  %1433 = vmatpush1.bf16.msra.mxu0 0
  %1434 = vmatprep.subr.bf16.mxu0 0
  %1435 = vmatpush1.bf16.msra.mxu0 0
  %1436 = vmatprep.subr.bf16.mxu0 0
  %1437 = vmatpush1.bf16.msra.mxu0 0
  %1438 = vmatprep.subr.bf16.mxu0 0
  %1439 = vmatpush1.bf16.msra.mxu0 0
  %1440 = vmatprep.subr.bf16.mxu0 0
  %1441 = vmatpush1.bf16.msra.mxu0 0
  %1442 = vmatprep.subr.bf16.mxu0 0
  %1443 = vmatpush1.bf16.msra.mxu0 0
  %1444 = vmatprep.subr.bf16.mxu0 0
  %1445 = vmatpush1.bf16.msra.mxu0 0
  %1446 = vmatprep.mubr.bf16.mxu0 0
  %1447 = vmatmul.mubr.bf16.gmra.mrb[0].mxu0 %v968
  %v1448 = vpop.f32.mrb[0].mxu0
  %v1449 = vadd.f32 %v1313, %v1448
  %v1450 = vpop.f32.mrb[0].mxu0
  %v1451 = vpop.f32.mrb[0].mxu0
  %v1452 = vadd.f32 %v1316, %v1451
  %v1453 = vpop.f32.mrb[0].mxu0
  %1454 = vmatprep.mubr.bf16.mxu0 0
  %1455 = vmatmul.mubr.bf16.gmra.mrb[0].mxu0 %v971
  %v1456 = vpop.f32.mrb[0].mxu0
  %v1457 = vadd.f32 %v1321, %v1456
  %v1458 = vpop.f32.mrb[0].mxu0
  %v1459 = vpop.f32.mrb[0].mxu0
  %v1460 = vadd.f32 %v1324, %v1459
  %v1461 = vpop.f32.mrb[0].mxu0
  %1462 = vmatprep.mubr.bf16.mxu0 0
  %1463 = vmatmul.mubr.bf16.gmra.mrb[0].mxu0 %v974
  %v1464 = vpop.f32.mrb[0].mxu0
  %v1465 = vadd.f32 %v1329, %v1464
  %v1466 = vpop.f32.mrb[0].mxu0
  %v1467 = vpop.f32.mrb[0].mxu0
  %v1468 = vadd.f32 %v1332, %v1467
  %v1469 = vpop.f32.mrb[0].mxu0
  %1470 = vmatprep.mubr.bf16.mxu0 0
  %1471 = vmatmul.mubr.bf16.gmra.mrb[0].mxu0 %v977
  %v1472 = vpop.f32.mrb[0].mxu0
  %v1473 = vadd.f32 %v1337, %v1472
  %v1474 = vpop.f32.mrb[0].mxu0
  %v1475 = vpop.f32.mrb[0].mxu0
  %v1476 = vadd.f32 %v1340, %v1475
  %v1477 = vpop.f32.mrb[0].mxu0
  %1478 = vmatprep.mubr.bf16.mxu0 0
  %1479 = vmatmul.mubr.bf16.gmra.mrb[0].mxu0 %v980
  %v1480 = vpop.f32.mrb[0].mxu0
  %v1481 = vadd.f32 %v1345, %v1480
  %v1482 = vpop.f32.mrb[0].mxu0
  %v1483 = vpop.f32.mrb[0].mxu0
  %v1484 = vadd.f32 %v1348, %v1483
  %v1485 = vpop.f32.mrb[0].mxu0
  %1486 = vmatprep.mubr.bf16.mxu0 0
  %1487 = vmatmul.mubr.bf16.gmra.mrb[0].mxu0 %v983
  %v1488 = vpop.f32.mrb[0].mxu0
  %v1489 = vadd.f32 %v1353, %v1488
  %v1490 = vpop.f32.mrb[0].mxu0
  %v1491 = vpop.f32.mrb[0].mxu0
  %v1492 = vadd.f32 %v1356, %v1491
  %v1493 = vpop.f32.mrb[0].mxu0
  %1494 = vmatprep.mubr.bf16.mxu0 0
  %1495 = vmatmul.mubr.bf16.gmra.mrb[0].mxu0 %v986
  %v1496 = vpop.f32.mrb[0].mxu0
  %v1497 = vadd.f32 %v1361, %v1496
  %v1498 = vpop.f32.mrb[0].mxu0
  %v1499 = vpop.f32.mrb[0].mxu0
  %v1500 = vadd.f32 %v1364, %v1499
  %v1501 = vpop.f32.mrb[0].mxu0
  %1502 = vmatprep.mubr.bf16.mxu0 0
  %1503 = vmatmul.mubr.bf16.gmra.mrb[0].mxu0 %v989
  %v1504 = vpop.f32.mrb[0].mxu0
  %v1505 = vadd.f32 %v1369, %v1504
  %v1506 = vpop.f32.mrb[0].mxu0
  %v1507 = vpop.f32.mrb[0].mxu0
  %v1508 = vadd.f32 %v1372, %v1507
  %v1509 = vpop.f32.mrb[0].mxu0
  %1510 = vmatprep.mubr.bf16.mxu0 0
  %1511 = vmatmul.mubr.bf16.gmra.mrb[0].mxu0 %v992
  %v1512 = vpop.f32.mrb[0].mxu0
  %v1513 = vadd.f32 %v1377, %v1512
  %v1514 = vpop.f32.mrb[0].mxu0
  %v1515 = vpop.f32.mrb[0].mxu0
  %v1516 = vadd.f32 %v1380, %v1515
  %v1517 = vpop.f32.mrb[0].mxu0
  %1518 = vmatprep.mubr.bf16.mxu0 0
  %1519 = vmatmul.mubr.bf16.gmra.mrb[0].mxu0 %v995
  %v1520 = vpop.f32.mrb[0].mxu0
  %v1521 = vadd.f32 %v1385, %v1520
  %v1522 = vpop.f32.mrb[0].mxu0
  %v1523 = vpop.f32.mrb[0].mxu0
  %v1524 = vadd.f32 %v1388, %v1523
  %v1525 = vpop.f32.mrb[0].mxu0
  %1526 = vmatprep.mubr.bf16.mxu0 0
  %1527 = vmatmul.mubr.bf16.gmra.mrb[0].mxu0 %v998
  %v1528 = vpop.f32.mrb[0].mxu0
  %v1529 = vadd.f32 %v1393, %v1528
  %v1530 = vpop.f32.mrb[0].mxu0
  %v1531 = vpop.f32.mrb[0].mxu0
  %v1532 = vadd.f32 %v1396, %v1531
  %v1533 = vpop.f32.mrb[0].mxu0
  %1534 = vmatprep.mubr.bf16.mxu0 0
  %1535 = vmatmul.mubr.bf16.gmra.mrb[0].mxu0 %v1001
  %v1536 = vpop.f32.mrb[0].mxu0
  %v1537 = vadd.f32 %v1401, %v1536
  %v1538 = vpop.f32.mrb[0].mxu0
  %v1539 = vpop.f32.mrb[0].mxu0
  %v1540 = vadd.f32 %v1404, %v1539
  %v1541 = vpop.f32.mrb[0].mxu0
  %1542 = vmatprep.mubr.bf16.mxu0 0
  %1543 = vmatmul.mubr.bf16.gmra.mrb[0].mxu0 %v1004
  %v1544 = vpop.f32.mrb[0].mxu0
  %v1545 = vadd.f32 %v1409, %v1544
  %v1546 = vpop.f32.mrb[0].mxu0
  %v1547 = vpop.f32.mrb[0].mxu0
  %v1548 = vpop.f32.mrb[0].mxu0
  %1549 = vdwg.mxu0
  %v1550 = vmax.f32 %v1449, 0.0
  %v1551 = vmax.f32 %v1452, 0.0
  %v1552 = vmax.f32 %v1457, 0.0
  %v1553 = vmax.f32 %v1460, 0.0
  %v1554 = vmax.f32 %v1465, 0.0
  %v1555 = vmax.f32 %v1468, 0.0
  %v1556 = vmax.f32 %v1473, 0.0
  %v1557 = vmax.f32 %v1476, 0.0
  %v1558 = vmax.f32 %v1481, 0.0
  %v1559 = vmax.f32 %v1484, 0.0
  %v1560 = vmax.f32 %v1489, 0.0
  %v1561 = vmax.f32 %v1492, 0.0
  %v1562 = vmax.f32 %v1497, 0.0
  %v1563 = vmax.f32 %v1500, 0.0
  %v1564 = vmax.f32 %v1505, 0.0
  %v1565 = vmax.f32 %v1508, 0.0
  %v1566 = vmax.f32 %v1513, 0.0
  %v1567 = vmax.f32 %v1516, 0.0
  %v1568 = vmax.f32 %v1521, 0.0
  %v1569 = vmax.f32 %v1524, 0.0
  %v1570 = vmax.f32 %v1529, 0.0
  %v1571 = vmax.f32 %v1532, 0.0
  %v1572 = vmax.f32 %v1537, 0.0
  %v1573 = vmax.f32 %v1540, 0.0
  %v1574 = vmax.f32 %v1545, 0.0
  %v1575 = vpack.c.bf16 %v1551, %v1550
  %v1576 = vpack.c.bf16 %v1553, %v1552
  %v1577 = vpack.c.bf16 %v1555, %v1554
  %v1578 = vpack.c.bf16 %v1557, %v1556
  %v1579 = vpack.c.bf16 %v1559, %v1558
  %v1580 = vpack.c.bf16 %v1561, %v1560
  %v1581 = vpack.c.bf16 %v1563, %v1562
  %v1582 = vpack.c.bf16 %v1565, %v1564
  %v1583 = vpack.c.bf16 %v1567, %v1566
  %v1584 = vpack.c.bf16 %v1569, %v1568
  %v1585 = vpack.c.bf16 %v1571, %v1570
  %v1586 = vpack.c.bf16 %v1573, %v1572
  %v1587 = vpack.c.bf16 %v1574, %v1574
  %v1601 = vunpack.c.l.b16 %v1575
  %v1602 = vunpack.c.h.b16 %v1575
  %v1603 = vunpack.c.l.b16 %v1576
  %v1604 = vunpack.c.h.b16 %v1576
  %v1605 = vunpack.c.l.b16 %v1577
  %v1606 = vunpack.c.h.b16 %v1577
  %v1607 = vunpack.c.l.b16 %v1578
  %v1608 = vunpack.c.h.b16 %v1578
  %v1609 = vunpack.c.l.b16 %v1579
  %v1610 = vunpack.c.h.b16 %v1579
  %v1611 = vunpack.c.l.b16 %v1580
  %v1612 = vunpack.c.h.b16 %v1580
  %v1613 = vunpack.c.l.b16 %v1581
  %v1614 = vunpack.c.h.b16 %v1581
  %v1615 = vunpack.c.l.b16 %v1582
  %v1616 = vunpack.c.h.b16 %v1582
  %v1617 = vunpack.c.l.b16 %v1583
  %v1618 = vunpack.c.h.b16 %v1583
  %v1619 = vunpack.c.l.b16 %v1584
  %v1620 = vunpack.c.h.b16 %v1584
  %v1621 = vunpack.c.l.b16 %v1585
  %v1622 = vunpack.c.h.b16 %v1585
  %v1623 = vunpack.c.l.b16 %v1586
  %v1624 = vunpack.c.h.b16 %v1586
  %v1625 = vunpack.c.l.b16 %v1587
  %v1626 = vpack.c.b16 %v1601, %v1601
  %v1627 = vpack.c.b16 %v1602, %v1602
  %v1628 = vpack.c.b16 %v1603, %v1603
  %v1629 = vpack.c.b16 %v1604, %v1604
  %v1630 = vpack.c.b16 %v1605, %v1605
  %v1631 = vpack.c.b16 %v1606, %v1606
  %v1632 = vpack.c.b16 %v1607, %v1607
  %v1633 = vpack.c.b16 %v1608, %v1608
  %v1634 = vpack.c.b16 %v1609, %v1609
  %v1635 = vpack.c.b16 %v1610, %v1610
  %v1636 = vpack.c.b16 %v1611, %v1611
  %v1637 = vpack.c.b16 %v1612, %v1612
  %v1638 = vpack.c.b16 %v1613, %v1613
  %v1639 = vpack.c.b16 %v1614, %v1614
  %v1640 = vpack.c.b16 %v1615, %v1615
  %v1641 = vpack.c.b16 %v1616, %v1616
  %v1642 = vpack.c.b16 %v1617, %v1617
  %v1643 = vpack.c.b16 %v1618, %v1618
  %v1644 = vpack.c.b16 %v1619, %v1619
  %v1645 = vpack.c.b16 %v1620, %v1620
  %v1646 = vpack.c.b16 %v1621, %v1621
  %v1647 = vpack.c.b16 %v1622, %v1622
  %v1648 = vpack.c.b16 %v1623, %v1623
  %v1649 = vpack.c.b16 %v1624, %v1624
  %v1650 = vpack.c.b16 %v1625, %v1625
  %vm1676 = vcmask 519168
  %1677 = vst.msk [vmem:[%s3] sm:$0xf] %vm1676, %v1626
  %1678 = vst.msk [vmem:[%s3 + $0x4] sm:$0xf] %vm1676, %v1627
  %1679 = vst.msk [vmem:[%s3 + $0x8] sm:$0xf] %vm1676, %v1628
  %1680 = vst.msk [vmem:[%s3 + $0xc] sm:$0xf] %vm1676, %v1629
  %1681 = vst.msk [vmem:[%s3 + $0x10] sm:$0xf] %vm1676, %v1630
  %1682 = vst.msk [vmem:[%s3 + $0x14] sm:$0xf] %vm1676, %v1631
  %1683 = vst.msk [vmem:[%s3 + $0x18] sm:$0xf] %vm1676, %v1632
  %1684 = vst.msk [vmem:[%s3 + $0x1c] sm:$0xf] %vm1676, %v1633
  %1685 = vst.msk [vmem:[%s3 + $0x20] sm:$0xf] %vm1676, %v1634
  %1686 = vst.msk [vmem:[%s3 + $0x24] sm:$0xf] %vm1676, %v1635
  %1687 = vst.msk [vmem:[%s3 + $0x28] sm:$0xf] %vm1676, %v1636
  %1688 = vst.msk [vmem:[%s3 + $0x2c] sm:$0xf] %vm1676, %v1637
  %1689 = vst.msk [vmem:[%s3 + $0x30] sm:$0xf] %vm1676, %v1638
  %1690 = vst.msk [vmem:[%s3 + $0x34] sm:$0xf] %vm1676, %v1639
  %1691 = vst.msk [vmem:[%s3 + $0x38] sm:$0xf] %vm1676, %v1640
  %1692 = vst.msk [vmem:[%s3 + $0x3c] sm:$0xf] %vm1676, %v1641
  %1693 = vst.msk [vmem:[%s3 + $0x40] sm:$0xf] %vm1676, %v1642
  %1694 = vst.msk [vmem:[%s3 + $0x44] sm:$0xf] %vm1676, %v1643
  %1695 = vst.msk [vmem:[%s3 + $0x48] sm:$0xf] %vm1676, %v1644
  %1696 = vst.msk [vmem:[%s3 + $0x4c] sm:$0xf] %vm1676, %v1645
  %1697 = vst.msk [vmem:[%s3 + $0x50] sm:$0xf] %vm1676, %v1646
  %1698 = vst.msk [vmem:[%s3 + $0x54] sm:$0xf] %vm1676, %v1647
  %1699 = vst.msk [vmem:[%s3 + $0x58] sm:$0xf] %vm1676, %v1648
  %1700 = vst.msk [vmem:[%s3 + $0x5c] sm:$0xf] %vm1676, %v1649
  %1701 = vst.msk [vmem:[%s3 + $0x60] sm:$0xf] %vm1676, %v1650
  // Predicated region
  $region14: #{cnn_critic_forward.6} parent=0 // pred_check
    _
  $region15: #{cnn_critic_forward.6} parent=0 // pred_check_branch
    %1703 = sbr.rel (0) target = $region17
  $region16: #{cnn_critic_forward.6} parent=0 // pred_region
    _
  $region17: #{cnn_critic_forward.6} parent=0 // pred_fallthru
    _
  // Predicated region
  $region18: #{cnn_critic_forward.6} parent=0 // pred_check
    _
  $region19: #{cnn_critic_forward.6} parent=0 // pred_check_branch
    %1705 = sbr.rel (0) target = $region21
  $region20: #{cnn_critic_forward.6} parent=0 // pred_region
    _
  $region21: #{cnn_critic_forward.6} parent=0 // pred_fallthru
    _

// kernel: cnn_critic_forward.7
$region0: #{cnn_critic_forward.7}
  #allocation0 [shape = 'u32[]', space=smem, size = 0x4, offset = 0x4, fixed_abs, tag = 'smem constant byte address 0x4 - core index']
  #allocation1 [shape = 'u32[144,128]{1,0:T(1,128)}', space=vmem, size = 0x12000, scoped, tag = 'internal scratch']
  #allocation2 [shape = 'f32[1,1]{1,0:T(1,128)S(1)}', space=vmem, size = 0x200, scoped, tag = 'scoped memory for cnn_critic_forward.7']
  %s0 = inlined_call_operand.vmem [shape: bf16[2,6400], index: 0, kind: input, shape index: {}]
  %s1 = inlined_call_operand.vmem [shape: f32[2,3], index: 1, kind: input, shape index: {}]
  %s2 = inlined_call_operand.vmem [shape: bf16[6400,128], index: 2, kind: input, shape index: {}]
  %s3 = inlined_call_operand.vmem [shape: f32[3,128], index: 3, kind: input, shape index: {}]
  %s4 = inlined_call_operand.vmem [shape: f32[1,128], index: 4, kind: input, shape index: {}]
  %s5 = inlined_call_operand.vmem [shape: f32[1,128], index: 5, kind: input, shape index: {}]
  %s6 = inlined_call_operand.<no memory space> [shape: f32[1,1], index: 6, kind: input, shape index: {}]
  %s7 = inlined_call_operand.vmem [shape: f32[2,1], index: 7, kind: output, shape index: {}]
  %s8 = sld [smem:[#allocation0]]
  $region38: #{cnn_critic_forward.7} parent=0
    _
  %s10 = ssub.s32 1, %s8
  %s11 = scalar_select 0, %s10, %s8
  %v12 = vstv %s6
  %13 = vst [vmem:[#allocation2] sm:$0x1] %v12
  // Predicated region
  $region2: #{cnn_critic_forward.7} parent=0 // pred_check
    _
  $region3: #{cnn_critic_forward.7} parent=0 // pred_check_branch
    %15 = sbr.rel (0) target = $region5
  $region4: #{cnn_critic_forward.7} parent=0 // pred_region
    _
  $region5: #{cnn_critic_forward.7} parent=0 // pred_fallthru
    _
  // Predicated region
  $region6: #{cnn_critic_forward.7} parent=0 // pred_check
    _
  $region7: #{cnn_critic_forward.7} parent=0 // pred_check_branch
    %17 = sbr.rel (0) target = $region9
  $region8: #{cnn_critic_forward.7} parent=0 // pred_region
    _
  $region9: #{cnn_critic_forward.7} parent=0 // pred_fallthru
    _
  // Predicated region
  $region10: #{cnn_critic_forward.7} parent=0 // pred_check
    _
  $region11: #{cnn_critic_forward.7} parent=0 // pred_check_branch
    %19 = sbr.rel (0) target = $region13
  $region12: #{cnn_critic_forward.7} parent=0 // pred_region
    _
  $region13: #{cnn_critic_forward.7} parent=0 // pred_fallthru
    _
  // Predicated region
  $region14: #{cnn_critic_forward.7} parent=0 // pred_check
    _
  $region15: #{cnn_critic_forward.7} parent=0 // pred_check_branch
    %21 = sbr.rel (0) target = $region17
  $region16: #{cnn_critic_forward.7} parent=0 // pred_region
    _
  $region17: #{cnn_critic_forward.7} parent=0 // pred_fallthru
    _
  // Predicated region
  $region18: #{cnn_critic_forward.7} parent=0 // pred_check
    _
  $region19: #{cnn_critic_forward.7} parent=0 // pred_check_branch
    %23 = sbr.rel (0) target = $region21
  $region20: #{cnn_critic_forward.7} parent=0 // pred_region
    _
  $region21: #{cnn_critic_forward.7} parent=0 // pred_fallthru
    _
  // Predicated region
  $region22: #{cnn_critic_forward.7} parent=0 // pred_check
    _
  $region23: #{cnn_critic_forward.7} parent=0 // pred_check_branch
    %25 = sbr.rel (0) target = $region25
  $region24: #{cnn_critic_forward.7} parent=0 // pred_region
    _
  $region25: #{cnn_critic_forward.7} parent=0 // pred_fallthru
    _
  // Predicated region
  $region26: #{cnn_critic_forward.7} parent=0 // pred_check
    _
  $region27: #{cnn_critic_forward.7} parent=0 // pred_check_branch
    %27 = sbr.rel (0) target = $region29
  $region28: #{cnn_critic_forward.7} parent=0 // pred_region
    _
  $region29: #{cnn_critic_forward.7} parent=0 // pred_fallthru
    _
  %v29 = vld [vmem:[%s0] sm:$0xff]
  %v30 = vld [vmem:[%s0 + $0x8] sm:$0xff]
  %v31 = vld [vmem:[%s0 + $0x10] sm:$0xff]
  %v32 = vld [vmem:[%s0 + $0x18] sm:$0xff]
  %v33 = vld [vmem:[%s0 + $0x20] sm:$0xff]
  %v34 = vld [vmem:[%s0 + $0x28] sm:$0xff]
  %v35 = vld [vmem:[%s0 + $0x30] sm:$0x3]
  %v36 = vld [vmem:[%s2] sm:$0xf]
  %v37 = vld [vmem:[%s2 + $0x4] sm:$0xf]
  %v38 = vld [vmem:[%s2 + $0x8] sm:$0xf]
  %v39 = vld [vmem:[%s2 + $0xc] sm:$0xf]
  %v40 = vld [vmem:[%s2 + $0x10] sm:$0xf]
  %v41 = vld [vmem:[%s2 + $0x14] sm:$0xf]
  %v42 = vld [vmem:[%s2 + $0x18] sm:$0xf]
  %v43 = vld [vmem:[%s2 + $0x1c] sm:$0xf]
  %v44 = vld [vmem:[%s2 + $0x20] sm:$0xf]
  %v45 = vld [vmem:[%s2 + $0x24] sm:$0xf]
  %v46 = vld [vmem:[%s2 + $0x28] sm:$0xf]
  %v47 = vld [vmem:[%s2 + $0x2c] sm:$0xf]
  %v48 = vld [vmem:[%s2 + $0x30] sm:$0xf]
  %v49 = vld [vmem:[%s2 + $0x34] sm:$0xf]
  %v50 = vld [vmem:[%s2 + $0x38] sm:$0xf]
  %v51 = vld [vmem:[%s2 + $0x3c] sm:$0xf]
  %v52 = vld [vmem:[%s2 + $0x40] sm:$0xf]
  %v53 = vld [vmem:[%s2 + $0x44] sm:$0xf]
  %v54 = vld [vmem:[%s2 + $0x48] sm:$0xf]
  %v55 = vld [vmem:[%s2 + $0x4c] sm:$0xf]
  %v56 = vld [vmem:[%s2 + $0x50] sm:$0xf]
  %v57 = vld [vmem:[%s2 + $0x54] sm:$0xf]
  %v58 = vld [vmem:[%s2 + $0x58] sm:$0xf]
  %v59 = vld [vmem:[%s2 + $0x5c] sm:$0xf]
  %v60 = vld [vmem:[%s2 + $0x60] sm:$0xf]
  %v61 = vld [vmem:[%s2 + $0x64] sm:$0xf]
  %v62 = vld [vmem:[%s2 + $0x68] sm:$0xf]
  %v63 = vld [vmem:[%s2 + $0x6c] sm:$0xf]
  %v64 = vld [vmem:[%s2 + $0x70] sm:$0xf]
  %v65 = vld [vmem:[%s2 + $0x74] sm:$0xf]
  %v66 = vld [vmem:[%s2 + $0x78] sm:$0xf]
  %v67 = vld [vmem:[%s2 + $0x7c] sm:$0xf]
  %v68 = vld [vmem:[%s2 + $0x80] sm:$0xf]
  %v69 = vld [vmem:[%s2 + $0x84] sm:$0xf]
  %v70 = vld [vmem:[%s2 + $0x88] sm:$0xf]
  %v71 = vld [vmem:[%s2 + $0x8c] sm:$0xf]
  %v72 = vld [vmem:[%s2 + $0x90] sm:$0xf]
  %v73 = vld [vmem:[%s2 + $0x94] sm:$0xf]
  %v74 = vld [vmem:[%s2 + $0x98] sm:$0xf]
  %v75 = vld [vmem:[%s2 + $0x9c] sm:$0xf]
  %v76 = vld [vmem:[%s2 + $0xa0] sm:$0xf]
  %v77 = vld [vmem:[%s2 + $0xa4] sm:$0xf]
  %v78 = vld [vmem:[%s2 + $0xa8] sm:$0xf]
  %v79 = vld [vmem:[%s2 + $0xac] sm:$0xf]
  %v80 = vld [vmem:[%s2 + $0xb0] sm:$0xf]
  %v81 = vld [vmem:[%s2 + $0xb4] sm:$0xf]
  %v82 = vld [vmem:[%s2 + $0xb8] sm:$0xf]
  %v83 = vld [vmem:[%s2 + $0xbc] sm:$0xf]
  %v84 = vld [vmem:[%s2 + $0xc0] sm:$0xf]
  %v85 = vld [vmem:[%s2 + $0xc4] sm:$0xf]
  %v86 = vld [vmem:[%s2 + $0xc8] sm:$0xf]
  %v87 = vld [vmem:[%s2 + $0xcc] sm:$0xf]
  %v88 = vld [vmem:[%s2 + $0xd0] sm:$0xf]
  %v89 = vld [vmem:[%s2 + $0xd4] sm:$0xf]
  %v90 = vld [vmem:[%s2 + $0xd8] sm:$0xf]
  %v91 = vld [vmem:[%s2 + $0xdc] sm:$0xf]
  %v92 = vld [vmem:[%s2 + $0xe0] sm:$0xf]
  %v93 = vld [vmem:[%s2 + $0xe4] sm:$0xf]
  %v94 = vld [vmem:[%s2 + $0xe8] sm:$0xf]
  %v95 = vld [vmem:[%s2 + $0xec] sm:$0xf]
  %v96 = vld [vmem:[%s2 + $0xf0] sm:$0xf]
  %v97 = vld [vmem:[%s2 + $0xf4] sm:$0xf]
  %v98 = vld [vmem:[%s2 + $0xf8] sm:$0xf]
  %v99 = vld [vmem:[%s2 + $0xfc] sm:$0xf]
  %v100 = vld [vmem:[%s2 + $0x100] sm:$0xf]
  %v101 = vld [vmem:[%s2 + $0x104] sm:$0xf]
  %v102 = vld [vmem:[%s2 + $0x108] sm:$0xf]
  %v103 = vld [vmem:[%s2 + $0x10c] sm:$0xf]
  %v104 = vld [vmem:[%s2 + $0x110] sm:$0xf]
  %v105 = vld [vmem:[%s2 + $0x114] sm:$0xf]
  %v106 = vld [vmem:[%s2 + $0x118] sm:$0xf]
  %v107 = vld [vmem:[%s2 + $0x11c] sm:$0xf]
  %v108 = vld [vmem:[%s2 + $0x120] sm:$0xf]
  %v109 = vld [vmem:[%s2 + $0x124] sm:$0xf]
  %v110 = vld [vmem:[%s2 + $0x128] sm:$0xf]
  %v111 = vld [vmem:[%s2 + $0x12c] sm:$0xf]
  %v112 = vld [vmem:[%s2 + $0x130] sm:$0xf]
  %v113 = vld [vmem:[%s2 + $0x134] sm:$0xf]
  %v114 = vld [vmem:[%s2 + $0x138] sm:$0xf]
  %v115 = vld [vmem:[%s2 + $0x13c] sm:$0xf]
  %v116 = vld [vmem:[%s2 + $0x140] sm:$0xf]
  %v117 = vld [vmem:[%s2 + $0x144] sm:$0xf]
  %v118 = vld [vmem:[%s2 + $0x148] sm:$0xf]
  %v119 = vld [vmem:[%s2 + $0x14c] sm:$0xf]
  %v120 = vld [vmem:[%s2 + $0x150] sm:$0xf]
  %v121 = vld [vmem:[%s2 + $0x154] sm:$0xf]
  %v122 = vld [vmem:[%s2 + $0x158] sm:$0xf]
  %v123 = vld [vmem:[%s2 + $0x15c] sm:$0xf]
  %v124 = vld [vmem:[%s2 + $0x160] sm:$0xf]
  %v125 = vld [vmem:[%s2 + $0x164] sm:$0xf]
  %v126 = vld [vmem:[%s2 + $0x168] sm:$0xf]
  %v127 = vld [vmem:[%s2 + $0x16c] sm:$0xf]
  %v128 = vld [vmem:[%s2 + $0x170] sm:$0xf]
  %v129 = vld [vmem:[%s2 + $0x174] sm:$0xf]
  %v130 = vld [vmem:[%s2 + $0x178] sm:$0xf]
  %v131 = vld [vmem:[%s2 + $0x17c] sm:$0xf]
  %v132 = vld [vmem:[%s2 + $0x180] sm:$0xf]
  %v133 = vld [vmem:[%s2 + $0x184] sm:$0xf]
  %v134 = vld [vmem:[%s2 + $0x188] sm:$0xf]
  %v135 = vld [vmem:[%s2 + $0x18c] sm:$0xf]
  %v136 = vld [vmem:[%s2 + $0x190] sm:$0xf]
  %v137 = vld [vmem:[%s2 + $0x194] sm:$0xf]
  %v138 = vld [vmem:[%s2 + $0x198] sm:$0xf]
  %v139 = vld [vmem:[%s2 + $0x19c] sm:$0xf]
  %v140 = vld [vmem:[%s2 + $0x1a0] sm:$0xf]
  %v141 = vld [vmem:[%s2 + $0x1a4] sm:$0xf]
  %v142 = vld [vmem:[%s2 + $0x1a8] sm:$0xf]
  %v143 = vld [vmem:[%s2 + $0x1ac] sm:$0xf]
  %v144 = vld [vmem:[%s2 + $0x1b0] sm:$0xf]
  %v145 = vld [vmem:[%s2 + $0x1b4] sm:$0xf]
  %v146 = vld [vmem:[%s2 + $0x1b8] sm:$0xf]
  %v147 = vld [vmem:[%s2 + $0x1bc] sm:$0xf]
  %v148 = vld [vmem:[%s2 + $0x1c0] sm:$0xf]
  %v149 = vld [vmem:[%s2 + $0x1c4] sm:$0xf]
  %v150 = vld [vmem:[%s2 + $0x1c8] sm:$0xf]
  %v151 = vld [vmem:[%s2 + $0x1cc] sm:$0xf]
  %v152 = vld [vmem:[%s2 + $0x1d0] sm:$0xf]
  %v153 = vld [vmem:[%s2 + $0x1d4] sm:$0xf]
  %v154 = vld [vmem:[%s2 + $0x1d8] sm:$0xf]
  %v155 = vld [vmem:[%s2 + $0x1dc] sm:$0xf]
  %v156 = vld [vmem:[%s2 + $0x1e0] sm:$0xf]
  %v157 = vld [vmem:[%s2 + $0x1e4] sm:$0xf]
  %v158 = vld [vmem:[%s2 + $0x1e8] sm:$0xf]
  %v159 = vld [vmem:[%s2 + $0x1ec] sm:$0xf]
  %v160 = vld [vmem:[%s2 + $0x1f0] sm:$0xf]
  %v161 = vld [vmem:[%s2 + $0x1f4] sm:$0xf]
  %v162 = vld [vmem:[%s2 + $0x1f8] sm:$0xf]
  %v163 = vld [vmem:[%s2 + $0x1fc] sm:$0xf]
  %v164 = vld [vmem:[%s2 + $0x200] sm:$0xf]
  %v165 = vld [vmem:[%s2 + $0x204] sm:$0xf]
  %v166 = vld [vmem:[%s2 + $0x208] sm:$0xf]
  %v167 = vld [vmem:[%s2 + $0x20c] sm:$0xf]
  %v168 = vld [vmem:[%s2 + $0x210] sm:$0xf]
  %v169 = vld [vmem:[%s2 + $0x214] sm:$0xf]
  %v170 = vld [vmem:[%s2 + $0x218] sm:$0xf]
  %v171 = vld [vmem:[%s2 + $0x21c] sm:$0xf]
  %v172 = vld [vmem:[%s2 + $0x220] sm:$0xf]
  %v173 = vld [vmem:[%s2 + $0x224] sm:$0xf]
  %v174 = vld [vmem:[%s2 + $0x228] sm:$0xf]
  %v175 = vld [vmem:[%s2 + $0x22c] sm:$0xf]
  %v176 = vld [vmem:[%s2 + $0x230] sm:$0xf]
  %v177 = vld [vmem:[%s2 + $0x234] sm:$0xf]
  %v178 = vld [vmem:[%s2 + $0x238] sm:$0xf]
  %v179 = vld [vmem:[%s2 + $0x23c] sm:$0xf]
  %v180 = vld [vmem:[%s2 + $0x240] sm:$0xf]
  %v181 = vld [vmem:[%s2 + $0x244] sm:$0xf]
  %v182 = vld [vmem:[%s2 + $0x248] sm:$0xf]
  %v183 = vld [vmem:[%s2 + $0x24c] sm:$0xf]
  %v184 = vld [vmem:[%s2 + $0x250] sm:$0xf]
  %v185 = vld [vmem:[%s2 + $0x254] sm:$0xf]
  %v186 = vld [vmem:[%s2 + $0x258] sm:$0xf]
  %v187 = vld [vmem:[%s2 + $0x25c] sm:$0xf]
  %v188 = vld [vmem:[%s2 + $0x260] sm:$0xf]
  %v189 = vld [vmem:[%s2 + $0x264] sm:$0xf]
  %v190 = vld [vmem:[%s2 + $0x268] sm:$0xf]
  %v191 = vld [vmem:[%s2 + $0x26c] sm:$0xf]
  %v192 = vld [vmem:[%s2 + $0x270] sm:$0xf]
  %v193 = vld [vmem:[%s2 + $0x274] sm:$0xf]
  %v194 = vld [vmem:[%s2 + $0x278] sm:$0xf]
  %v195 = vld [vmem:[%s2 + $0x27c] sm:$0xf]
  %v196 = vld [vmem:[%s2 + $0x280] sm:$0xf]
  %v197 = vld [vmem:[%s2 + $0x284] sm:$0xf]
  %v198 = vld [vmem:[%s2 + $0x288] sm:$0xf]
  %v199 = vld [vmem:[%s2 + $0x28c] sm:$0xf]
  %v200 = vld [vmem:[%s2 + $0x290] sm:$0xf]
  %v201 = vld [vmem:[%s2 + $0x294] sm:$0xf]
  %v202 = vld [vmem:[%s2 + $0x298] sm:$0xf]
  %v203 = vld [vmem:[%s2 + $0x29c] sm:$0xf]
  %v204 = vld [vmem:[%s2 + $0x2a0] sm:$0xf]
  %v205 = vld [vmem:[%s2 + $0x2a4] sm:$0xf]
  %v206 = vld [vmem:[%s2 + $0x2a8] sm:$0xf]
  %v207 = vld [vmem:[%s2 + $0x2ac] sm:$0xf]
  %v208 = vld [vmem:[%s2 + $0x2b0] sm:$0xf]
  %v209 = vld [vmem:[%s2 + $0x2b4] sm:$0xf]
  %v210 = vld [vmem:[%s2 + $0x2b8] sm:$0xf]
  %v211 = vld [vmem:[%s2 + $0x2bc] sm:$0xf]
  %v212 = vld [vmem:[%s2 + $0x2c0] sm:$0xf]
  %v213 = vld [vmem:[%s2 + $0x2c4] sm:$0xf]
  %v214 = vld [vmem:[%s2 + $0x2c8] sm:$0xf]
  %v215 = vld [vmem:[%s2 + $0x2cc] sm:$0xf]
  %v216 = vld [vmem:[%s2 + $0x2d0] sm:$0xf]
  %v217 = vld [vmem:[%s2 + $0x2d4] sm:$0xf]
  %v218 = vld [vmem:[%s2 + $0x2d8] sm:$0xf]
  %v219 = vld [vmem:[%s2 + $0x2dc] sm:$0xf]
  %v220 = vld [vmem:[%s2 + $0x2e0] sm:$0xf]
  %v221 = vld [vmem:[%s2 + $0x2e4] sm:$0xf]
  %v222 = vld [vmem:[%s2 + $0x2e8] sm:$0xf]
  %v223 = vld [vmem:[%s2 + $0x2ec] sm:$0xf]
  %v224 = vld [vmem:[%s2 + $0x2f0] sm:$0xf]
  %v225 = vld [vmem:[%s2 + $0x2f4] sm:$0xf]
  %v226 = vld [vmem:[%s2 + $0x2f8] sm:$0xf]
  %v227 = vld [vmem:[%s2 + $0x2fc] sm:$0xf]
  %v228 = vld [vmem:[%s2 + $0x300] sm:$0xf]
  %v229 = vld [vmem:[%s2 + $0x304] sm:$0xf]
  %v230 = vld [vmem:[%s2 + $0x308] sm:$0xf]
  %v231 = vld [vmem:[%s2 + $0x30c] sm:$0xf]
  %v232 = vld [vmem:[%s2 + $0x310] sm:$0xf]
  %v233 = vld [vmem:[%s2 + $0x314] sm:$0xf]
  %v234 = vld [vmem:[%s2 + $0x318] sm:$0xf]
  %v235 = vld [vmem:[%s2 + $0x31c] sm:$0xf]
  %v236 = vld [vmem:[%s2 + $0x320] sm:$0xf]
  %v237 = vld [vmem:[%s2 + $0x324] sm:$0xf]
  %v238 = vld [vmem:[%s2 + $0x328] sm:$0xf]
  %v239 = vld [vmem:[%s2 + $0x32c] sm:$0xf]
  %v240 = vld [vmem:[%s2 + $0x330] sm:$0xf]
  %v241 = vld [vmem:[%s2 + $0x334] sm:$0xf]
  %v242 = vld [vmem:[%s2 + $0x338] sm:$0xf]
  %v243 = vld [vmem:[%s2 + $0x33c] sm:$0xf]
  %v244 = vld [vmem:[%s2 + $0x340] sm:$0xf]
  %v245 = vld [vmem:[%s2 + $0x344] sm:$0xf]
  %v246 = vld [vmem:[%s2 + $0x348] sm:$0xf]
  %v247 = vld [vmem:[%s2 + $0x34c] sm:$0xf]
  %v248 = vld [vmem:[%s2 + $0x350] sm:$0xf]
  %v249 = vld [vmem:[%s2 + $0x354] sm:$0xf]
  %v250 = vld [vmem:[%s2 + $0x358] sm:$0xf]
  %v251 = vld [vmem:[%s2 + $0x35c] sm:$0xf]
  %v252 = vld [vmem:[%s2 + $0x360] sm:$0xf]
  %v253 = vld [vmem:[%s2 + $0x364] sm:$0xf]
  %v254 = vld [vmem:[%s2 + $0x368] sm:$0xf]
  %v255 = vld [vmem:[%s2 + $0x36c] sm:$0xf]
  %v256 = vld [vmem:[%s2 + $0x370] sm:$0xf]
  %v257 = vld [vmem:[%s2 + $0x374] sm:$0xf]
  %v258 = vld [vmem:[%s2 + $0x378] sm:$0xf]
  %v259 = vld [vmem:[%s2 + $0x37c] sm:$0xf]
  %v260 = vld [vmem:[%s2 + $0x380] sm:$0xf]
  %v261 = vld [vmem:[%s2 + $0x384] sm:$0xf]
  %v262 = vld [vmem:[%s2 + $0x388] sm:$0xf]
  %v263 = vld [vmem:[%s2 + $0x38c] sm:$0xf]
  %v264 = vld [vmem:[%s2 + $0x390] sm:$0xf]
  %v265 = vld [vmem:[%s2 + $0x394] sm:$0xf]
  %v266 = vld [vmem:[%s2 + $0x398] sm:$0xf]
  %v267 = vld [vmem:[%s2 + $0x39c] sm:$0xf]
  %v268 = vld [vmem:[%s2 + $0x3a0] sm:$0xf]
  %v269 = vld [vmem:[%s2 + $0x3a4] sm:$0xf]
  %v270 = vld [vmem:[%s2 + $0x3a8] sm:$0xf]
  %v271 = vld [vmem:[%s2 + $0x3ac] sm:$0xf]
  %v272 = vld [vmem:[%s2 + $0x3b0] sm:$0xf]
  %v273 = vld [vmem:[%s2 + $0x3b4] sm:$0xf]
  %v274 = vld [vmem:[%s2 + $0x3b8] sm:$0xf]
  %v275 = vld [vmem:[%s2 + $0x3bc] sm:$0xf]
  %v276 = vld [vmem:[%s2 + $0x3c0] sm:$0xf]
  %v277 = vld [vmem:[%s2 + $0x3c4] sm:$0xf]
  %v278 = vld [vmem:[%s2 + $0x3c8] sm:$0xf]
  %v279 = vld [vmem:[%s2 + $0x3cc] sm:$0xf]
  %v280 = vld [vmem:[%s2 + $0x3d0] sm:$0xf]
  %v281 = vld [vmem:[%s2 + $0x3d4] sm:$0xf]
  %v282 = vld [vmem:[%s2 + $0x3d8] sm:$0xf]
  %v283 = vld [vmem:[%s2 + $0x3dc] sm:$0xf]
  %v284 = vld [vmem:[%s2 + $0x3e0] sm:$0xf]
  %v285 = vld [vmem:[%s2 + $0x3e4] sm:$0xf]
  %v286 = vld [vmem:[%s2 + $0x3e8] sm:$0xf]
  %v287 = vld [vmem:[%s2 + $0x3ec] sm:$0xf]
  %v288 = vld [vmem:[%s2 + $0x3f0] sm:$0xf]
  %v289 = vld [vmem:[%s2 + $0x3f4] sm:$0xf]
  %v290 = vld [vmem:[%s2 + $0x3f8] sm:$0xf]
  %v291 = vld [vmem:[%s2 + $0x3fc] sm:$0xf]
  %v292 = vld [vmem:[%s2 + $0x400] sm:$0xf]
  %v293 = vld [vmem:[%s2 + $0x404] sm:$0xf]
  %v294 = vld [vmem:[%s2 + $0x408] sm:$0xf]
  %v295 = vld [vmem:[%s2 + $0x40c] sm:$0xf]
  %v296 = vld [vmem:[%s2 + $0x410] sm:$0xf]
  %v297 = vld [vmem:[%s2 + $0x414] sm:$0xf]
  %v298 = vld [vmem:[%s2 + $0x418] sm:$0xf]
  %v299 = vld [vmem:[%s2 + $0x41c] sm:$0xf]
  %v300 = vld [vmem:[%s2 + $0x420] sm:$0xf]
  %v301 = vld [vmem:[%s2 + $0x424] sm:$0xf]
  %v302 = vld [vmem:[%s2 + $0x428] sm:$0xf]
  %v303 = vld [vmem:[%s2 + $0x42c] sm:$0xf]
  %v304 = vld [vmem:[%s2 + $0x430] sm:$0xf]
  %v305 = vld [vmem:[%s2 + $0x434] sm:$0xf]
  %v306 = vld [vmem:[%s2 + $0x438] sm:$0xf]
  %v307 = vld [vmem:[%s2 + $0x43c] sm:$0xf]
  %v308 = vld [vmem:[%s2 + $0x440] sm:$0xf]
  %v309 = vld [vmem:[%s2 + $0x444] sm:$0xf]
  %v310 = vld [vmem:[%s2 + $0x448] sm:$0xf]
  %v311 = vld [vmem:[%s2 + $0x44c] sm:$0xf]
  %v312 = vld [vmem:[%s2 + $0x450] sm:$0xf]
  %v313 = vld [vmem:[%s2 + $0x454] sm:$0xf]
  %v314 = vld [vmem:[%s2 + $0x458] sm:$0xf]
  %v315 = vld [vmem:[%s2 + $0x45c] sm:$0xf]
  %v316 = vld [vmem:[%s2 + $0x460] sm:$0xf]
  %v317 = vld [vmem:[%s2 + $0x464] sm:$0xf]
  %v318 = vld [vmem:[%s2 + $0x468] sm:$0xf]
  %v319 = vld [vmem:[%s2 + $0x46c] sm:$0xf]
  %v320 = vld [vmem:[%s2 + $0x470] sm:$0xf]
  %v321 = vld [vmem:[%s2 + $0x474] sm:$0xf]
  %v322 = vld [vmem:[%s2 + $0x478] sm:$0xf]
  %v323 = vld [vmem:[%s2 + $0x47c] sm:$0xf]
  %v324 = vld [vmem:[%s2 + $0x480] sm:$0xf]
  %v325 = vld [vmem:[%s2 + $0x484] sm:$0xf]
  %v326 = vld [vmem:[%s2 + $0x488] sm:$0xf]
  %v327 = vld [vmem:[%s2 + $0x48c] sm:$0xf]
  %v328 = vld [vmem:[%s2 + $0x490] sm:$0xf]
  %v329 = vld [vmem:[%s2 + $0x494] sm:$0xf]
  %v330 = vld [vmem:[%s2 + $0x498] sm:$0xf]
  %v331 = vld [vmem:[%s2 + $0x49c] sm:$0xf]
  %v332 = vld [vmem:[%s2 + $0x4a0] sm:$0xf]
  %v333 = vld [vmem:[%s2 + $0x4a4] sm:$0xf]
  %v334 = vld [vmem:[%s2 + $0x4a8] sm:$0xf]
  %v335 = vld [vmem:[%s2 + $0x4ac] sm:$0xf]
  %v336 = vld [vmem:[%s2 + $0x4b0] sm:$0xf]
  %v337 = vld [vmem:[%s2 + $0x4b4] sm:$0xf]
  %v338 = vld [vmem:[%s2 + $0x4b8] sm:$0xf]
  %v339 = vld [vmem:[%s2 + $0x4bc] sm:$0xf]
  %v340 = vld [vmem:[%s2 + $0x4c0] sm:$0xf]
  %v341 = vld [vmem:[%s2 + $0x4c4] sm:$0xf]
  %v342 = vld [vmem:[%s2 + $0x4c8] sm:$0xf]
  %v343 = vld [vmem:[%s2 + $0x4cc] sm:$0xf]
  %v344 = vld [vmem:[%s2 + $0x4d0] sm:$0xf]
  %v345 = vld [vmem:[%s2 + $0x4d4] sm:$0xf]
  %v346 = vld [vmem:[%s2 + $0x4d8] sm:$0xf]
  %v347 = vld [vmem:[%s2 + $0x4dc] sm:$0xf]
  %v348 = vld [vmem:[%s2 + $0x4e0] sm:$0xf]
  %v349 = vld [vmem:[%s2 + $0x4e4] sm:$0xf]
  %v350 = vld [vmem:[%s2 + $0x4e8] sm:$0xf]
  %v351 = vld [vmem:[%s2 + $0x4ec] sm:$0xf]
  %v352 = vld [vmem:[%s2 + $0x4f0] sm:$0xf]
  %v353 = vld [vmem:[%s2 + $0x4f4] sm:$0xf]
  %v354 = vld [vmem:[%s2 + $0x4f8] sm:$0xf]
  %v355 = vld [vmem:[%s2 + $0x4fc] sm:$0xf]
  %v356 = vld [vmem:[%s2 + $0x500] sm:$0xf]
  %v357 = vld [vmem:[%s2 + $0x504] sm:$0xf]
  %v358 = vld [vmem:[%s2 + $0x508] sm:$0xf]
  %v359 = vld [vmem:[%s2 + $0x50c] sm:$0xf]
  %v360 = vld [vmem:[%s2 + $0x510] sm:$0xf]
  %v361 = vld [vmem:[%s2 + $0x514] sm:$0xf]
  %v362 = vld [vmem:[%s2 + $0x518] sm:$0xf]
  %v363 = vld [vmem:[%s2 + $0x51c] sm:$0xf]
  %v364 = vld [vmem:[%s2 + $0x520] sm:$0xf]
  %v365 = vld [vmem:[%s2 + $0x524] sm:$0xf]
  %v366 = vld [vmem:[%s2 + $0x528] sm:$0xf]
  %v367 = vld [vmem:[%s2 + $0x52c] sm:$0xf]
  %v368 = vld [vmem:[%s2 + $0x530] sm:$0xf]
  %v369 = vld [vmem:[%s2 + $0x534] sm:$0xf]
  %v370 = vld [vmem:[%s2 + $0x538] sm:$0xf]
  %v371 = vld [vmem:[%s2 + $0x53c] sm:$0xf]
  %v372 = vld [vmem:[%s2 + $0x540] sm:$0xf]
  %v373 = vld [vmem:[%s2 + $0x544] sm:$0xf]
  %v374 = vld [vmem:[%s2 + $0x548] sm:$0xf]
  %v375 = vld [vmem:[%s2 + $0x54c] sm:$0xf]
  %v376 = vld [vmem:[%s2 + $0x550] sm:$0xf]
  %v377 = vld [vmem:[%s2 + $0x554] sm:$0xf]
  %v378 = vld [vmem:[%s2 + $0x558] sm:$0xf]
  %v379 = vld [vmem:[%s2 + $0x55c] sm:$0xf]
  %v380 = vld [vmem:[%s2 + $0x560] sm:$0xf]
  %v381 = vld [vmem:[%s2 + $0x564] sm:$0xf]
  %v382 = vld [vmem:[%s2 + $0x568] sm:$0xf]
  %v383 = vld [vmem:[%s2 + $0x56c] sm:$0xf]
  %v384 = vld [vmem:[%s2 + $0x570] sm:$0xf]
  %v385 = vld [vmem:[%s2 + $0x574] sm:$0xf]
  %v386 = vld [vmem:[%s2 + $0x578] sm:$0xf]
  %v387 = vld [vmem:[%s2 + $0x57c] sm:$0xf]
  %v388 = vld [vmem:[%s2 + $0x580] sm:$0xf]
  %v389 = vld [vmem:[%s2 + $0x584] sm:$0xf]
  %v390 = vld [vmem:[%s2 + $0x588] sm:$0xf]
  %v391 = vld [vmem:[%s2 + $0x58c] sm:$0xf]
  %v392 = vld [vmem:[%s2 + $0x590] sm:$0xf]
  %v393 = vld [vmem:[%s2 + $0x594] sm:$0xf]
  %v394 = vld [vmem:[%s2 + $0x598] sm:$0xf]
  %v395 = vld [vmem:[%s2 + $0x59c] sm:$0xf]
  %v396 = vld [vmem:[%s2 + $0x5a0] sm:$0xf]
  %v397 = vld [vmem:[%s2 + $0x5a4] sm:$0xf]
  %v398 = vld [vmem:[%s2 + $0x5a8] sm:$0xf]
  %v399 = vld [vmem:[%s2 + $0x5ac] sm:$0xf]
  %v400 = vld [vmem:[%s2 + $0x5b0] sm:$0xf]
  %v401 = vld [vmem:[%s2 + $0x5b4] sm:$0xf]
  %v402 = vld [vmem:[%s2 + $0x5b8] sm:$0xf]
  %v403 = vld [vmem:[%s2 + $0x5bc] sm:$0xf]
  %v404 = vld [vmem:[%s2 + $0x5c0] sm:$0xf]
  %v405 = vld [vmem:[%s2 + $0x5c4] sm:$0xf]
  %v406 = vld [vmem:[%s2 + $0x5c8] sm:$0xf]
  %v407 = vld [vmem:[%s2 + $0x5cc] sm:$0xf]
  %v408 = vld [vmem:[%s2 + $0x5d0] sm:$0xf]
  %v409 = vld [vmem:[%s2 + $0x5d4] sm:$0xf]
  %v410 = vld [vmem:[%s2 + $0x5d8] sm:$0xf]
  %v411 = vld [vmem:[%s2 + $0x5dc] sm:$0xf]
  %v412 = vld [vmem:[%s2 + $0x5e0] sm:$0xf]
  %v413 = vld [vmem:[%s2 + $0x5e4] sm:$0xf]
  %v414 = vld [vmem:[%s2 + $0x5e8] sm:$0xf]
  %v415 = vld [vmem:[%s2 + $0x5ec] sm:$0xf]
  %v416 = vld [vmem:[%s2 + $0x5f0] sm:$0xf]
  %v417 = vld [vmem:[%s2 + $0x5f4] sm:$0xf]
  %v418 = vld [vmem:[%s2 + $0x5f8] sm:$0xf]
  %v419 = vld [vmem:[%s2 + $0x5fc] sm:$0xf]
  %v420 = vld [vmem:[%s2 + $0x600] sm:$0xf]
  %v421 = vld [vmem:[%s2 + $0x604] sm:$0xf]
  %v422 = vld [vmem:[%s2 + $0x608] sm:$0xf]
  %v423 = vld [vmem:[%s2 + $0x60c] sm:$0xf]
  %v424 = vld [vmem:[%s2 + $0x610] sm:$0xf]
  %v425 = vld [vmem:[%s2 + $0x614] sm:$0xf]
  %v426 = vld [vmem:[%s2 + $0x618] sm:$0xf]
  %v427 = vld [vmem:[%s2 + $0x61c] sm:$0xf]
  %v428 = vld [vmem:[%s2 + $0x620] sm:$0xf]
  %v429 = vld [vmem:[%s2 + $0x624] sm:$0xf]
  %v430 = vld [vmem:[%s2 + $0x628] sm:$0xf]
  %v431 = vld [vmem:[%s2 + $0x62c] sm:$0xf]
  %v432 = vld [vmem:[%s2 + $0x630] sm:$0xf]
  %v433 = vld [vmem:[%s2 + $0x634] sm:$0xf]
  %v434 = vld [vmem:[%s2 + $0x638] sm:$0xf]
  %v435 = vld [vmem:[%s2 + $0x63c] sm:$0xf]
  %v436 = vld [vmem:[%s2 + $0x640] sm:$0xf]
  %v437 = vld [vmem:[%s2 + $0x644] sm:$0xf]
  %v438 = vld [vmem:[%s2 + $0x648] sm:$0xf]
  %v439 = vld [vmem:[%s2 + $0x64c] sm:$0xf]
  %v440 = vld [vmem:[%s2 + $0x650] sm:$0xf]
  %v441 = vld [vmem:[%s2 + $0x654] sm:$0xf]
  %v442 = vld [vmem:[%s2 + $0x658] sm:$0xf]
  %v443 = vld [vmem:[%s2 + $0x65c] sm:$0xf]
  %v444 = vld [vmem:[%s2 + $0x660] sm:$0xf]
  %v445 = vld [vmem:[%s2 + $0x664] sm:$0xf]
  %v446 = vld [vmem:[%s2 + $0x668] sm:$0xf]
  %v447 = vld [vmem:[%s2 + $0x66c] sm:$0xf]
  %v448 = vld [vmem:[%s2 + $0x670] sm:$0xf]
  %v449 = vld [vmem:[%s2 + $0x674] sm:$0xf]
  %v450 = vld [vmem:[%s2 + $0x678] sm:$0xf]
  %v451 = vld [vmem:[%s2 + $0x67c] sm:$0xf]
  %v452 = vld [vmem:[%s2 + $0x680] sm:$0xf]
  %v453 = vld [vmem:[%s2 + $0x684] sm:$0xf]
  %v454 = vld [vmem:[%s2 + $0x688] sm:$0xf]
  %v455 = vld [vmem:[%s2 + $0x68c] sm:$0xf]
  %v456 = vld [vmem:[%s2 + $0x690] sm:$0xf]
  %v457 = vld [vmem:[%s2 + $0x694] sm:$0xf]
  %v458 = vld [vmem:[%s2 + $0x698] sm:$0xf]
  %v459 = vld [vmem:[%s2 + $0x69c] sm:$0xf]
  %v460 = vld [vmem:[%s2 + $0x6a0] sm:$0xf]
  %v461 = vld [vmem:[%s2 + $0x6a4] sm:$0xf]
  %v462 = vld [vmem:[%s2 + $0x6a8] sm:$0xf]
  %v463 = vld [vmem:[%s2 + $0x6ac] sm:$0xf]
  %v464 = vld [vmem:[%s2 + $0x6b0] sm:$0xf]
  %v465 = vld [vmem:[%s2 + $0x6b4] sm:$0xf]
  %v466 = vld [vmem:[%s2 + $0x6b8] sm:$0xf]
  %v467 = vld [vmem:[%s2 + $0x6bc] sm:$0xf]
  %v468 = vld [vmem:[%s2 + $0x6c0] sm:$0xf]
  %v469 = vld [vmem:[%s2 + $0x6c4] sm:$0xf]
  %v470 = vld [vmem:[%s2 + $0x6c8] sm:$0xf]
  %v471 = vld [vmem:[%s2 + $0x6cc] sm:$0xf]
  %v472 = vld [vmem:[%s2 + $0x6d0] sm:$0xf]
  %v473 = vld [vmem:[%s2 + $0x6d4] sm:$0xf]
  %v474 = vld [vmem:[%s2 + $0x6d8] sm:$0xf]
  %v475 = vld [vmem:[%s2 + $0x6dc] sm:$0xf]
  %v476 = vld [vmem:[%s2 + $0x6e0] sm:$0xf]
  %v477 = vld [vmem:[%s2 + $0x6e4] sm:$0xf]
  %v478 = vld [vmem:[%s2 + $0x6e8] sm:$0xf]
  %v479 = vld [vmem:[%s2 + $0x6ec] sm:$0xf]
  %v480 = vld [vmem:[%s2 + $0x6f0] sm:$0xf]
  %v481 = vld [vmem:[%s2 + $0x6f4] sm:$0xf]
  %v482 = vld [vmem:[%s2 + $0x6f8] sm:$0xf]
  %v483 = vld [vmem:[%s2 + $0x6fc] sm:$0xf]
  %v484 = vld [vmem:[%s2 + $0x700] sm:$0xf]
  %v485 = vld [vmem:[%s2 + $0x704] sm:$0xf]
  %v486 = vld [vmem:[%s2 + $0x708] sm:$0xf]
  %v487 = vld [vmem:[%s2 + $0x70c] sm:$0xf]
  %v488 = vld [vmem:[%s2 + $0x710] sm:$0xf]
  %v489 = vld [vmem:[%s2 + $0x714] sm:$0xf]
  %v490 = vld [vmem:[%s2 + $0x718] sm:$0xf]
  %v491 = vld [vmem:[%s2 + $0x71c] sm:$0xf]
  %v492 = vld [vmem:[%s2 + $0x720] sm:$0xf]
  %v493 = vld [vmem:[%s2 + $0x724] sm:$0xf]
  %v494 = vld [vmem:[%s2 + $0x728] sm:$0xf]
  %v495 = vld [vmem:[%s2 + $0x72c] sm:$0xf]
  %v496 = vld [vmem:[%s2 + $0x730] sm:$0xf]
  %v497 = vld [vmem:[%s2 + $0x734] sm:$0xf]
  %v498 = vld [vmem:[%s2 + $0x738] sm:$0xf]
  %v499 = vld [vmem:[%s2 + $0x73c] sm:$0xf]
  %v500 = vld [vmem:[%s2 + $0x740] sm:$0xf]
  %v501 = vld [vmem:[%s2 + $0x744] sm:$0xf]
  %v502 = vld [vmem:[%s2 + $0x748] sm:$0xf]
  %v503 = vld [vmem:[%s2 + $0x74c] sm:$0xf]
  %v504 = vld [vmem:[%s2 + $0x750] sm:$0xf]
  %v505 = vld [vmem:[%s2 + $0x754] sm:$0xf]
  %v506 = vld [vmem:[%s2 + $0x758] sm:$0xf]
  %v507 = vld [vmem:[%s2 + $0x75c] sm:$0xf]
  %v508 = vld [vmem:[%s2 + $0x760] sm:$0xf]
  %v509 = vld [vmem:[%s2 + $0x764] sm:$0xf]
  %v510 = vld [vmem:[%s2 + $0x768] sm:$0xf]
  %v511 = vld [vmem:[%s2 + $0x76c] sm:$0xf]
  %v512 = vld [vmem:[%s2 + $0x770] sm:$0xf]
  %v513 = vld [vmem:[%s2 + $0x774] sm:$0xf]
  %v514 = vld [vmem:[%s2 + $0x778] sm:$0xf]
  %v515 = vld [vmem:[%s2 + $0x77c] sm:$0xf]
  %v516 = vld [vmem:[%s2 + $0x780] sm:$0xf]
  %v517 = vld [vmem:[%s2 + $0x784] sm:$0xf]
  %v518 = vld [vmem:[%s2 + $0x788] sm:$0xf]
  %v519 = vld [vmem:[%s2 + $0x78c] sm:$0xf]
  %v520 = vld [vmem:[%s2 + $0x790] sm:$0xf]
  %v521 = vld [vmem:[%s2 + $0x794] sm:$0xf]
  %v522 = vld [vmem:[%s2 + $0x798] sm:$0xf]
  %v523 = vld [vmem:[%s2 + $0x79c] sm:$0xf]
  %v524 = vld [vmem:[%s2 + $0x7a0] sm:$0xf]
  %v525 = vld [vmem:[%s2 + $0x7a4] sm:$0xf]
  %v526 = vld [vmem:[%s2 + $0x7a8] sm:$0xf]
  %v527 = vld [vmem:[%s2 + $0x7ac] sm:$0xf]
  %v528 = vld [vmem:[%s2 + $0x7b0] sm:$0xf]
  %v529 = vld [vmem:[%s2 + $0x7b4] sm:$0xf]
  %v530 = vld [vmem:[%s2 + $0x7b8] sm:$0xf]
  %v531 = vld [vmem:[%s2 + $0x7bc] sm:$0xf]
  %v532 = vld [vmem:[%s2 + $0x7c0] sm:$0xf]
  %v533 = vld [vmem:[%s2 + $0x7c4] sm:$0xf]
  %v534 = vld [vmem:[%s2 + $0x7c8] sm:$0xf]
  %v535 = vld [vmem:[%s2 + $0x7cc] sm:$0xf]
  %v536 = vld [vmem:[%s2 + $0x7d0] sm:$0xf]
  %v537 = vld [vmem:[%s2 + $0x7d4] sm:$0xf]
  %v538 = vld [vmem:[%s2 + $0x7d8] sm:$0xf]
  %v539 = vld [vmem:[%s2 + $0x7dc] sm:$0xf]
  %v540 = vld [vmem:[%s2 + $0x7e0] sm:$0xf]
  %v541 = vld [vmem:[%s2 + $0x7e4] sm:$0xf]
  %v542 = vld [vmem:[%s2 + $0x7e8] sm:$0xf]
  %v543 = vld [vmem:[%s2 + $0x7ec] sm:$0xf]
  %v544 = vld [vmem:[%s2 + $0x7f0] sm:$0xf]
  %v545 = vld [vmem:[%s2 + $0x7f4] sm:$0xf]
  %v546 = vld [vmem:[%s2 + $0x7f8] sm:$0xf]
  %v547 = vld [vmem:[%s2 + $0x7fc] sm:$0xf]
  %v548 = vld [vmem:[%s2 + $0x800] sm:$0xf]
  %v549 = vld [vmem:[%s2 + $0x804] sm:$0xf]
  %v550 = vld [vmem:[%s2 + $0x808] sm:$0xf]
  %v551 = vld [vmem:[%s2 + $0x80c] sm:$0xf]
  %v552 = vld [vmem:[%s2 + $0x810] sm:$0xf]
  %v553 = vld [vmem:[%s2 + $0x814] sm:$0xf]
  %v554 = vld [vmem:[%s2 + $0x818] sm:$0xf]
  %v555 = vld [vmem:[%s2 + $0x81c] sm:$0xf]
  %v556 = vld [vmem:[%s2 + $0x820] sm:$0xf]
  %v557 = vld [vmem:[%s2 + $0x824] sm:$0xf]
  %v558 = vld [vmem:[%s2 + $0x828] sm:$0xf]
  %v559 = vld [vmem:[%s2 + $0x82c] sm:$0xf]
  %v560 = vld [vmem:[%s2 + $0x830] sm:$0xf]
  %v561 = vld [vmem:[%s2 + $0x834] sm:$0xf]
  %v562 = vld [vmem:[%s2 + $0x838] sm:$0xf]
  %v563 = vld [vmem:[%s2 + $0x83c] sm:$0xf]
  %v564 = vld [vmem:[%s2 + $0x840] sm:$0xf]
  %v565 = vld [vmem:[%s2 + $0x844] sm:$0xf]
  %v566 = vld [vmem:[%s2 + $0x848] sm:$0xf]
  %v567 = vld [vmem:[%s2 + $0x84c] sm:$0xf]
  %v568 = vld [vmem:[%s2 + $0x850] sm:$0xf]
  %v569 = vld [vmem:[%s2 + $0x854] sm:$0xf]
  %v570 = vld [vmem:[%s2 + $0x858] sm:$0xf]
  %v571 = vld [vmem:[%s2 + $0x85c] sm:$0xf]
  %v572 = vld [vmem:[%s2 + $0x860] sm:$0xf]
  %v573 = vld [vmem:[%s2 + $0x864] sm:$0xf]
  %v574 = vld [vmem:[%s2 + $0x868] sm:$0xf]
  %v575 = vld [vmem:[%s2 + $0x86c] sm:$0xf]
  %v576 = vld [vmem:[%s2 + $0x870] sm:$0xf]
  %v577 = vld [vmem:[%s2 + $0x874] sm:$0xf]
  %v578 = vld [vmem:[%s2 + $0x878] sm:$0xf]
  %v579 = vld [vmem:[%s2 + $0x87c] sm:$0xf]
  %v580 = vld [vmem:[%s2 + $0x880] sm:$0xf]
  %v581 = vld [vmem:[%s2 + $0x884] sm:$0xf]
  %v582 = vld [vmem:[%s2 + $0x888] sm:$0xf]
  %v583 = vld [vmem:[%s2 + $0x88c] sm:$0xf]
  %v584 = vld [vmem:[%s2 + $0x890] sm:$0xf]
  %v585 = vld [vmem:[%s2 + $0x894] sm:$0xf]
  %v586 = vld [vmem:[%s2 + $0x898] sm:$0xf]
  %v587 = vld [vmem:[%s2 + $0x89c] sm:$0xf]
  %v588 = vld [vmem:[%s2 + $0x8a0] sm:$0xf]
  %v589 = vld [vmem:[%s2 + $0x8a4] sm:$0xf]
  %v590 = vld [vmem:[%s2 + $0x8a8] sm:$0xf]
  %v591 = vld [vmem:[%s2 + $0x8ac] sm:$0xf]
  %v592 = vld [vmem:[%s2 + $0x8b0] sm:$0xf]
  %v593 = vld [vmem:[%s2 + $0x8b4] sm:$0xf]
  %v594 = vld [vmem:[%s2 + $0x8b8] sm:$0xf]
  %v595 = vld [vmem:[%s2 + $0x8bc] sm:$0xf]
  %v596 = vld [vmem:[%s2 + $0x8c0] sm:$0xf]
  %v597 = vld [vmem:[%s2 + $0x8c4] sm:$0xf]
  %v598 = vld [vmem:[%s2 + $0x8c8] sm:$0xf]
  %v599 = vld [vmem:[%s2 + $0x8cc] sm:$0xf]
  %v600 = vld [vmem:[%s2 + $0x8d0] sm:$0xf]
  %v601 = vld [vmem:[%s2 + $0x8d4] sm:$0xf]
  %v602 = vld [vmem:[%s2 + $0x8d8] sm:$0xf]
  %v603 = vld [vmem:[%s2 + $0x8dc] sm:$0xf]
  %v604 = vld [vmem:[%s2 + $0x8e0] sm:$0xf]
  %v605 = vld [vmem:[%s2 + $0x8e4] sm:$0xf]
  %v606 = vld [vmem:[%s2 + $0x8e8] sm:$0xf]
  %v607 = vld [vmem:[%s2 + $0x8ec] sm:$0xf]
  %v608 = vld [vmem:[%s2 + $0x8f0] sm:$0xf]
  %v609 = vld [vmem:[%s2 + $0x8f4] sm:$0xf]
  %v610 = vld [vmem:[%s2 + $0x8f8] sm:$0xf]
  %v611 = vld [vmem:[%s2 + $0x8fc] sm:$0xf]
  %v612 = vld [vmem:[%s2 + $0x900] sm:$0xf]
  %v613 = vld [vmem:[%s2 + $0x904] sm:$0xf]
  %v614 = vld [vmem:[%s2 + $0x908] sm:$0xf]
  %v615 = vld [vmem:[%s2 + $0x90c] sm:$0xf]
  %v616 = vld [vmem:[%s2 + $0x910] sm:$0xf]
  %v617 = vld [vmem:[%s2 + $0x914] sm:$0xf]
  %v618 = vld [vmem:[%s2 + $0x918] sm:$0xf]
  %v619 = vld [vmem:[%s2 + $0x91c] sm:$0xf]
  %v620 = vld [vmem:[%s2 + $0x920] sm:$0xf]
  %v621 = vld [vmem:[%s2 + $0x924] sm:$0xf]
  %v622 = vld [vmem:[%s2 + $0x928] sm:$0xf]
  %v623 = vld [vmem:[%s2 + $0x92c] sm:$0xf]
  %v624 = vld [vmem:[%s2 + $0x930] sm:$0xf]
  %v625 = vld [vmem:[%s2 + $0x934] sm:$0xf]
  %v626 = vld [vmem:[%s2 + $0x938] sm:$0xf]
  %v627 = vld [vmem:[%s2 + $0x93c] sm:$0xf]
  %v628 = vld [vmem:[%s2 + $0x940] sm:$0xf]
  %v629 = vld [vmem:[%s2 + $0x944] sm:$0xf]
  %v630 = vld [vmem:[%s2 + $0x948] sm:$0xf]
  %v631 = vld [vmem:[%s2 + $0x94c] sm:$0xf]
  %v632 = vld [vmem:[%s2 + $0x950] sm:$0xf]
  %v633 = vld [vmem:[%s2 + $0x954] sm:$0xf]
  %v634 = vld [vmem:[%s2 + $0x958] sm:$0xf]
  %v635 = vld [vmem:[%s2 + $0x95c] sm:$0xf]
  %v636 = vld [vmem:[%s2 + $0x960] sm:$0xf]
  %v637 = vld [vmem:[%s2 + $0x964] sm:$0xf]
  %v638 = vld [vmem:[%s2 + $0x968] sm:$0xf]
  %v639 = vld [vmem:[%s2 + $0x96c] sm:$0xf]
  %v640 = vld [vmem:[%s2 + $0x970] sm:$0xf]
  %v641 = vld [vmem:[%s2 + $0x974] sm:$0xf]
  %v642 = vld [vmem:[%s2 + $0x978] sm:$0xf]
  %v643 = vld [vmem:[%s2 + $0x97c] sm:$0xf]
  %v644 = vld [vmem:[%s2 + $0x980] sm:$0xf]
  %v645 = vld [vmem:[%s2 + $0x984] sm:$0xf]
  %v646 = vld [vmem:[%s2 + $0x988] sm:$0xf]
  %v647 = vld [vmem:[%s2 + $0x98c] sm:$0xf]
  %v648 = vld [vmem:[%s2 + $0x990] sm:$0xf]
  %v649 = vld [vmem:[%s2 + $0x994] sm:$0xf]
  %v650 = vld [vmem:[%s2 + $0x998] sm:$0xf]
  %v651 = vld [vmem:[%s2 + $0x99c] sm:$0xf]
  %v652 = vld [vmem:[%s2 + $0x9a0] sm:$0xf]
  %v653 = vld [vmem:[%s2 + $0x9a4] sm:$0xf]
  %v654 = vld [vmem:[%s2 + $0x9a8] sm:$0xf]
  %v655 = vld [vmem:[%s2 + $0x9ac] sm:$0xf]
  %v656 = vld [vmem:[%s2 + $0x9b0] sm:$0xf]
  %v657 = vld [vmem:[%s2 + $0x9b4] sm:$0xf]
  %v658 = vld [vmem:[%s2 + $0x9b8] sm:$0xf]
  %v659 = vld [vmem:[%s2 + $0x9bc] sm:$0xf]
  %v660 = vld [vmem:[%s2 + $0x9c0] sm:$0xf]
  %v661 = vld [vmem:[%s2 + $0x9c4] sm:$0xf]
  %v662 = vld [vmem:[%s2 + $0x9c8] sm:$0xf]
  %v663 = vld [vmem:[%s2 + $0x9cc] sm:$0xf]
  %v664 = vld [vmem:[%s2 + $0x9d0] sm:$0xf]
  %v665 = vld [vmem:[%s2 + $0x9d4] sm:$0xf]
  %v666 = vld [vmem:[%s2 + $0x9d8] sm:$0xf]
  %v667 = vld [vmem:[%s2 + $0x9dc] sm:$0xf]
  %v668 = vld [vmem:[%s2 + $0x9e0] sm:$0xf]
  %v669 = vld [vmem:[%s2 + $0x9e4] sm:$0xf]
  %v670 = vld [vmem:[%s2 + $0x9e8] sm:$0xf]
  %v671 = vld [vmem:[%s2 + $0x9ec] sm:$0xf]
  %v672 = vld [vmem:[%s2 + $0x9f0] sm:$0xf]
  %v673 = vld [vmem:[%s2 + $0x9f4] sm:$0xf]
  %v674 = vld [vmem:[%s2 + $0x9f8] sm:$0xf]
  %v675 = vld [vmem:[%s2 + $0x9fc] sm:$0xf]
  %v676 = vld [vmem:[%s2 + $0xa00] sm:$0xf]
  %v677 = vld [vmem:[%s2 + $0xa04] sm:$0xf]
  %v678 = vld [vmem:[%s2 + $0xa08] sm:$0xf]
  %v679 = vld [vmem:[%s2 + $0xa0c] sm:$0xf]
  %v680 = vld [vmem:[%s2 + $0xa10] sm:$0xf]
  %v681 = vld [vmem:[%s2 + $0xa14] sm:$0xf]
  %v682 = vld [vmem:[%s2 + $0xa18] sm:$0xf]
  %v683 = vld [vmem:[%s2 + $0xa1c] sm:$0xf]
  %v684 = vld [vmem:[%s2 + $0xa20] sm:$0xf]
  %v685 = vld [vmem:[%s2 + $0xa24] sm:$0xf]
  %v686 = vld [vmem:[%s2 + $0xa28] sm:$0xf]
  %v687 = vld [vmem:[%s2 + $0xa2c] sm:$0xf]
  %v688 = vld [vmem:[%s2 + $0xa30] sm:$0xf]
  %v689 = vld [vmem:[%s2 + $0xa34] sm:$0xf]
  %v690 = vld [vmem:[%s2 + $0xa38] sm:$0xf]
  %v691 = vld [vmem:[%s2 + $0xa3c] sm:$0xf]
  %v692 = vld [vmem:[%s2 + $0xa40] sm:$0xf]
  %v693 = vld [vmem:[%s2 + $0xa44] sm:$0xf]
  %v694 = vld [vmem:[%s2 + $0xa48] sm:$0xf]
  %v695 = vld [vmem:[%s2 + $0xa4c] sm:$0xf]
  %v696 = vld [vmem:[%s2 + $0xa50] sm:$0xf]
  %v697 = vld [vmem:[%s2 + $0xa54] sm:$0xf]
  %v698 = vld [vmem:[%s2 + $0xa58] sm:$0xf]
  %v699 = vld [vmem:[%s2 + $0xa5c] sm:$0xf]
  %v700 = vld [vmem:[%s2 + $0xa60] sm:$0xf]
  %v701 = vld [vmem:[%s2 + $0xa64] sm:$0xf]
  %v702 = vld [vmem:[%s2 + $0xa68] sm:$0xf]
  %v703 = vld [vmem:[%s2 + $0xa6c] sm:$0xf]
  %v704 = vld [vmem:[%s2 + $0xa70] sm:$0xf]
  %v705 = vld [vmem:[%s2 + $0xa74] sm:$0xf]
  %v706 = vld [vmem:[%s2 + $0xa78] sm:$0xf]
  %v707 = vld [vmem:[%s2 + $0xa7c] sm:$0xf]
  %v708 = vld [vmem:[%s2 + $0xa80] sm:$0xf]
  %v709 = vld [vmem:[%s2 + $0xa84] sm:$0xf]
  %v710 = vld [vmem:[%s2 + $0xa88] sm:$0xf]
  %v711 = vld [vmem:[%s2 + $0xa8c] sm:$0xf]
  %v712 = vld [vmem:[%s2 + $0xa90] sm:$0xf]
  %v713 = vld [vmem:[%s2 + $0xa94] sm:$0xf]
  %v714 = vld [vmem:[%s2 + $0xa98] sm:$0xf]
  %v715 = vld [vmem:[%s2 + $0xa9c] sm:$0xf]
  %v716 = vld [vmem:[%s2 + $0xaa0] sm:$0xf]
  %v717 = vld [vmem:[%s2 + $0xaa4] sm:$0xf]
  %v718 = vld [vmem:[%s2 + $0xaa8] sm:$0xf]
  %v719 = vld [vmem:[%s2 + $0xaac] sm:$0xf]
  %v720 = vld [vmem:[%s2 + $0xab0] sm:$0xf]
  %v721 = vld [vmem:[%s2 + $0xab4] sm:$0xf]
  %v722 = vld [vmem:[%s2 + $0xab8] sm:$0xf]
  %v723 = vld [vmem:[%s2 + $0xabc] sm:$0xf]
  %v724 = vld [vmem:[%s2 + $0xac0] sm:$0xf]
  %v725 = vld [vmem:[%s2 + $0xac4] sm:$0xf]
  %v726 = vld [vmem:[%s2 + $0xac8] sm:$0xf]
  %v727 = vld [vmem:[%s2 + $0xacc] sm:$0xf]
  %v728 = vld [vmem:[%s2 + $0xad0] sm:$0xf]
  %v729 = vld [vmem:[%s2 + $0xad4] sm:$0xf]
  %v730 = vld [vmem:[%s2 + $0xad8] sm:$0xf]
  %v731 = vld [vmem:[%s2 + $0xadc] sm:$0xf]
  %v732 = vld [vmem:[%s2 + $0xae0] sm:$0xf]
  %v733 = vld [vmem:[%s2 + $0xae4] sm:$0xf]
  %v734 = vld [vmem:[%s2 + $0xae8] sm:$0xf]
  %v735 = vld [vmem:[%s2 + $0xaec] sm:$0xf]
  %v736 = vld [vmem:[%s2 + $0xaf0] sm:$0xf]
  %v737 = vld [vmem:[%s2 + $0xaf4] sm:$0xf]
  %v738 = vld [vmem:[%s2 + $0xaf8] sm:$0xf]
  %v739 = vld [vmem:[%s2 + $0xafc] sm:$0xf]
  %v740 = vld [vmem:[%s2 + $0xb00] sm:$0xf]
  %v741 = vld [vmem:[%s2 + $0xb04] sm:$0xf]
  %v742 = vld [vmem:[%s2 + $0xb08] sm:$0xf]
  %v743 = vld [vmem:[%s2 + $0xb0c] sm:$0xf]
  %v744 = vld [vmem:[%s2 + $0xb10] sm:$0xf]
  %v745 = vld [vmem:[%s2 + $0xb14] sm:$0xf]
  %v746 = vld [vmem:[%s2 + $0xb18] sm:$0xf]
  %v747 = vld [vmem:[%s2 + $0xb1c] sm:$0xf]
  %v748 = vld [vmem:[%s2 + $0xb20] sm:$0xf]
  %v749 = vld [vmem:[%s2 + $0xb24] sm:$0xf]
  %v750 = vld [vmem:[%s2 + $0xb28] sm:$0xf]
  %v751 = vld [vmem:[%s2 + $0xb2c] sm:$0xf]
  %v752 = vld [vmem:[%s2 + $0xb30] sm:$0xf]
  %v753 = vld [vmem:[%s2 + $0xb34] sm:$0xf]
  %v754 = vld [vmem:[%s2 + $0xb38] sm:$0xf]
  %v755 = vld [vmem:[%s2 + $0xb3c] sm:$0xf]
  %v756 = vld [vmem:[%s2 + $0xb40] sm:$0xf]
  %v757 = vld [vmem:[%s2 + $0xb44] sm:$0xf]
  %v758 = vld [vmem:[%s2 + $0xb48] sm:$0xf]
  %v759 = vld [vmem:[%s2 + $0xb4c] sm:$0xf]
  %v760 = vld [vmem:[%s2 + $0xb50] sm:$0xf]
  %v761 = vld [vmem:[%s2 + $0xb54] sm:$0xf]
  %v762 = vld [vmem:[%s2 + $0xb58] sm:$0xf]
  %v763 = vld [vmem:[%s2 + $0xb5c] sm:$0xf]
  %v764 = vld [vmem:[%s2 + $0xb60] sm:$0xf]
  %v765 = vld [vmem:[%s2 + $0xb64] sm:$0xf]
  %v766 = vld [vmem:[%s2 + $0xb68] sm:$0xf]
  %v767 = vld [vmem:[%s2 + $0xb6c] sm:$0xf]
  %v768 = vld [vmem:[%s2 + $0xb70] sm:$0xf]
  %v769 = vld [vmem:[%s2 + $0xb74] sm:$0xf]
  %v770 = vld [vmem:[%s2 + $0xb78] sm:$0xf]
  %v771 = vld [vmem:[%s2 + $0xb7c] sm:$0xf]
  %v772 = vld [vmem:[%s2 + $0xb80] sm:$0xf]
  %v773 = vld [vmem:[%s2 + $0xb84] sm:$0xf]
  %v774 = vld [vmem:[%s2 + $0xb88] sm:$0xf]
  %v775 = vld [vmem:[%s2 + $0xb8c] sm:$0xf]
  %v776 = vld [vmem:[%s2 + $0xb90] sm:$0xf]
  %v777 = vld [vmem:[%s2 + $0xb94] sm:$0xf]
  %v778 = vld [vmem:[%s2 + $0xb98] sm:$0xf]
  %v779 = vld [vmem:[%s2 + $0xb9c] sm:$0xf]
  %v780 = vld [vmem:[%s2 + $0xba0] sm:$0xf]
  %v781 = vld [vmem:[%s2 + $0xba4] sm:$0xf]
  %v782 = vld [vmem:[%s2 + $0xba8] sm:$0xf]
  %v783 = vld [vmem:[%s2 + $0xbac] sm:$0xf]
  %v784 = vld [vmem:[%s2 + $0xbb0] sm:$0xf]
  %v785 = vld [vmem:[%s2 + $0xbb4] sm:$0xf]
  %v786 = vld [vmem:[%s2 + $0xbb8] sm:$0xf]
  %v787 = vld [vmem:[%s2 + $0xbbc] sm:$0xf]
  %v788 = vld [vmem:[%s2 + $0xbc0] sm:$0xf]
  %v789 = vld [vmem:[%s2 + $0xbc4] sm:$0xf]
  %v790 = vld [vmem:[%s2 + $0xbc8] sm:$0xf]
  %v791 = vld [vmem:[%s2 + $0xbcc] sm:$0xf]
  %v792 = vld [vmem:[%s2 + $0xbd0] sm:$0xf]
  %v793 = vld [vmem:[%s2 + $0xbd4] sm:$0xf]
  %v794 = vld [vmem:[%s2 + $0xbd8] sm:$0xf]
  %v795 = vld [vmem:[%s2 + $0xbdc] sm:$0xf]
  %v796 = vld [vmem:[%s2 + $0xbe0] sm:$0xf]
  %v797 = vld [vmem:[%s2 + $0xbe4] sm:$0xf]
  %v798 = vld [vmem:[%s2 + $0xbe8] sm:$0xf]
  %v799 = vld [vmem:[%s2 + $0xbec] sm:$0xf]
  %v800 = vld [vmem:[%s2 + $0xbf0] sm:$0xf]
  %v801 = vld [vmem:[%s2 + $0xbf4] sm:$0xf]
  %v802 = vld [vmem:[%s2 + $0xbf8] sm:$0xf]
  %v803 = vld [vmem:[%s2 + $0xbfc] sm:$0xf]
  %v804 = vld [vmem:[%s2 + $0xc00] sm:$0xf]
  %v805 = vld [vmem:[%s2 + $0xc04] sm:$0xf]
  %v806 = vld [vmem:[%s2 + $0xc08] sm:$0xf]
  %v807 = vld [vmem:[%s2 + $0xc0c] sm:$0xf]
  %v808 = vld [vmem:[%s2 + $0xc10] sm:$0xf]
  %v809 = vld [vmem:[%s2 + $0xc14] sm:$0xf]
  %v810 = vld [vmem:[%s2 + $0xc18] sm:$0xf]
  %v811 = vld [vmem:[%s2 + $0xc1c] sm:$0xf]
  %v812 = vld [vmem:[%s2 + $0xc20] sm:$0xf]
  %v813 = vld [vmem:[%s2 + $0xc24] sm:$0xf]
  %v814 = vld [vmem:[%s2 + $0xc28] sm:$0xf]
  %v815 = vld [vmem:[%s2 + $0xc2c] sm:$0xf]
  %v816 = vld [vmem:[%s2 + $0xc30] sm:$0xf]
  %v817 = vld [vmem:[%s2 + $0xc34] sm:$0xf]
  %v818 = vld [vmem:[%s2 + $0xc38] sm:$0xf]
  %v819 = vld [vmem:[%s2 + $0xc3c] sm:$0xf]
  %v820 = vld [vmem:[%s2 + $0xc40] sm:$0xf]
  %v821 = vld [vmem:[%s2 + $0xc44] sm:$0xf]
  %v822 = vld [vmem:[%s2 + $0xc48] sm:$0xf]
  %v823 = vld [vmem:[%s2 + $0xc4c] sm:$0xf]
  %v824 = vld [vmem:[%s2 + $0xc50] sm:$0xf]
  %v825 = vld [vmem:[%s2 + $0xc54] sm:$0xf]
  %v826 = vld [vmem:[%s2 + $0xc58] sm:$0xf]
  %v827 = vld [vmem:[%s2 + $0xc5c] sm:$0xf]
  %v828 = vld [vmem:[%s2 + $0xc60] sm:$0xf]
  %v829 = vld [vmem:[%s2 + $0xc64] sm:$0xf]
  %v830 = vld [vmem:[%s2 + $0xc68] sm:$0xf]
  %v831 = vld [vmem:[%s2 + $0xc6c] sm:$0xf]
  %v832 = vld [vmem:[%s2 + $0xc70] sm:$0xf]
  %v833 = vld [vmem:[%s2 + $0xc74] sm:$0xf]
  %v834 = vld [vmem:[%s2 + $0xc78] sm:$0xf]
  %v835 = vld [vmem:[%s2 + $0xc7c] sm:$0xf]
  %v836 = vld [vmem:[%s1] sm:$0x3]
  %v837 = vld [vmem:[%s3] sm:$0x7]
  %839 = vset.pattern.permute.xlu0 0
  %840 = vperm.xlu0 %839, %v836
  %v841 = vpop.permute.xlu0 %840
  %v843 = vlaneseq
  %v844 = vshrl.u32 %v843, 7
  %v845 = vsub.s32 0, %v844
  %v846 = vrot.slane %v837, %v845
  %v847 = vmul.f32 %v841, %v846
  %v855 = vcombine.high %v29, %v29
  %v857 = vunpack.c.l.s4 1966171168
  %v858 = vunpack.c.0.s8 %v857
  %v859 = vlaneseq
  %v860 = vshrl.u32 %v859, 7
  %v861 = vsub.s32 %v858, %v860
  %v862 = vrot.slane %v29, %v861
  %v864 = vunpack.c.l.s4 1966171168
  %v865 = vunpack.c.0.s8 %v864
  %v866 = vlaneseq
  %v867 = vshrl.u32 %v866, 7
  %v868 = vsub.s32 %v865, %v867
  %v869 = vrot.slane %v855, %v868
  %v870 = vcombine.high %v862, %v862
  %v871 = vcombine.high %v869, %v869
  %v873 = vunpack.c.l.s4 1966171168
  %v874 = vunpack.c.0.s8 %v873
  %v875 = vlaneseq
  %v876 = vshrl.u32 %v875, 7
  %v877 = vsub.s32 %v874, %v876
  %v878 = vrot.slane %v862, %v877
  %v880 = vunpack.c.l.s4 1966171168
  %v881 = vunpack.c.0.s8 %v880
  %v882 = vlaneseq
  %v883 = vshrl.u32 %v882, 7
  %v884 = vsub.s32 %v881, %v883
  %v885 = vrot.slane %v869, %v884
  %v887 = vunpack.c.l.s4 1966171168
  %v888 = vunpack.c.0.s8 %v887
  %v889 = vlaneseq
  %v890 = vshrl.u32 %v889, 7
  %v891 = vsub.s32 %v888, %v890
  %v892 = vrot.slane %v870, %v891
  %v894 = vunpack.c.l.s4 1966171168
  %v895 = vunpack.c.0.s8 %v894
  %v896 = vlaneseq
  %v897 = vshrl.u32 %v896, 7
  %v898 = vsub.s32 %v895, %v897
  %v899 = vrot.slane %v871, %v898
  %v900 = vcombine.high %v878, %v878
  %v901 = vcombine.high %v885, %v885
  %v902 = vcombine.high %v892, %v892
  %v903 = vcombine.high %v899, %v899
  %v904 = vcombine.high %v30, %v30
  %v906 = vunpack.c.l.s4 1966171168
  %v907 = vunpack.c.0.s8 %v906
  %v908 = vlaneseq
  %v909 = vshrl.u32 %v908, 7
  %v910 = vsub.s32 %v907, %v909
  %v911 = vrot.slane %v30, %v910
  %v913 = vunpack.c.l.s4 1966171168
  %v914 = vunpack.c.0.s8 %v913
  %v915 = vlaneseq
  %v916 = vshrl.u32 %v915, 7
  %v917 = vsub.s32 %v914, %v916
  %v918 = vrot.slane %v904, %v917
  %v919 = vcombine.high %v911, %v911
  %v920 = vcombine.high %v918, %v918
  %v922 = vunpack.c.l.s4 1966171168
  %v923 = vunpack.c.0.s8 %v922
  %v924 = vlaneseq
  %v925 = vshrl.u32 %v924, 7
  %v926 = vsub.s32 %v923, %v925
  %v927 = vrot.slane %v911, %v926
  %v929 = vunpack.c.l.s4 1966171168
  %v930 = vunpack.c.0.s8 %v929
  %v931 = vlaneseq
  %v932 = vshrl.u32 %v931, 7
  %v933 = vsub.s32 %v930, %v932
  %v934 = vrot.slane %v918, %v933
  %v936 = vunpack.c.l.s4 1966171168
  %v937 = vunpack.c.0.s8 %v936
  %v938 = vlaneseq
  %v939 = vshrl.u32 %v938, 7
  %v940 = vsub.s32 %v937, %v939
  %v941 = vrot.slane %v919, %v940
  %v943 = vunpack.c.l.s4 1966171168
  %v944 = vunpack.c.0.s8 %v943
  %v945 = vlaneseq
  %v946 = vshrl.u32 %v945, 7
  %v947 = vsub.s32 %v944, %v946
  %v948 = vrot.slane %v920, %v947
  %v949 = vcombine.high %v927, %v927
  %v950 = vcombine.high %v934, %v934
  %v951 = vcombine.high %v941, %v941
  %v952 = vcombine.high %v948, %v948
  %v953 = vcombine.high %v31, %v31
  %v955 = vunpack.c.l.s4 1966171168
  %v956 = vunpack.c.0.s8 %v955
  %v957 = vlaneseq
  %v958 = vshrl.u32 %v957, 7
  %v959 = vsub.s32 %v956, %v958
  %v960 = vrot.slane %v31, %v959
  %v962 = vunpack.c.l.s4 1966171168
  %v963 = vunpack.c.0.s8 %v962
  %v964 = vlaneseq
  %v965 = vshrl.u32 %v964, 7
  %v966 = vsub.s32 %v963, %v965
  %v967 = vrot.slane %v953, %v966
  %v968 = vcombine.high %v960, %v960
  %v969 = vcombine.high %v967, %v967
  %v971 = vunpack.c.l.s4 1966171168
  %v972 = vunpack.c.0.s8 %v971
  %v973 = vlaneseq
  %v974 = vshrl.u32 %v973, 7
  %v975 = vsub.s32 %v972, %v974
  %v976 = vrot.slane %v960, %v975
  %v978 = vunpack.c.l.s4 1966171168
  %v979 = vunpack.c.0.s8 %v978
  %v980 = vlaneseq
  %v981 = vshrl.u32 %v980, 7
  %v982 = vsub.s32 %v979, %v981
  %v983 = vrot.slane %v967, %v982
  %v985 = vunpack.c.l.s4 1966171168
  %v986 = vunpack.c.0.s8 %v985
  %v987 = vlaneseq
  %v988 = vshrl.u32 %v987, 7
  %v989 = vsub.s32 %v986, %v988
  %v990 = vrot.slane %v968, %v989
  %v992 = vunpack.c.l.s4 1966171168
  %v993 = vunpack.c.0.s8 %v992
  %v994 = vlaneseq
  %v995 = vshrl.u32 %v994, 7
  %v996 = vsub.s32 %v993, %v995
  %v997 = vrot.slane %v969, %v996
  %v998 = vcombine.high %v976, %v976
  %v999 = vcombine.high %v983, %v983
  %v1000 = vcombine.high %v990, %v990
  %v1001 = vcombine.high %v997, %v997
  %v1002 = vcombine.high %v32, %v32
  %v1004 = vunpack.c.l.s4 1966171168
  %v1005 = vunpack.c.0.s8 %v1004
  %v1006 = vlaneseq
  %v1007 = vshrl.u32 %v1006, 7
  %v1008 = vsub.s32 %v1005, %v1007
  %v1009 = vrot.slane %v32, %v1008
  %v1011 = vunpack.c.l.s4 1966171168
  %v1012 = vunpack.c.0.s8 %v1011
  %v1013 = vlaneseq
  %v1014 = vshrl.u32 %v1013, 7
  %v1015 = vsub.s32 %v1012, %v1014
  %v1016 = vrot.slane %v1002, %v1015
  %v1017 = vcombine.high %v1009, %v1009
  %v1018 = vcombine.high %v1016, %v1016
  %v1020 = vunpack.c.l.s4 1966171168
  %v1021 = vunpack.c.0.s8 %v1020
  %v1022 = vlaneseq
  %v1023 = vshrl.u32 %v1022, 7
  %v1024 = vsub.s32 %v1021, %v1023
  %v1025 = vrot.slane %v1009, %v1024
  %v1027 = vunpack.c.l.s4 1966171168
  %v1028 = vunpack.c.0.s8 %v1027
  %v1029 = vlaneseq
  %v1030 = vshrl.u32 %v1029, 7
  %v1031 = vsub.s32 %v1028, %v1030
  %v1032 = vrot.slane %v1016, %v1031
  %v1034 = vunpack.c.l.s4 1966171168
  %v1035 = vunpack.c.0.s8 %v1034
  %v1036 = vlaneseq
  %v1037 = vshrl.u32 %v1036, 7
  %v1038 = vsub.s32 %v1035, %v1037
  %v1039 = vrot.slane %v1017, %v1038
  %v1041 = vunpack.c.l.s4 1966171168
  %v1042 = vunpack.c.0.s8 %v1041
  %v1043 = vlaneseq
  %v1044 = vshrl.u32 %v1043, 7
  %v1045 = vsub.s32 %v1042, %v1044
  %v1046 = vrot.slane %v1018, %v1045
  %v1047 = vcombine.high %v1025, %v1025
  %v1048 = vcombine.high %v1032, %v1032
  %v1049 = vcombine.high %v1039, %v1039
  %v1050 = vcombine.high %v1046, %v1046
  %v1051 = vcombine.high %v33, %v33
  %v1053 = vunpack.c.l.s4 1966171168
  %v1054 = vunpack.c.0.s8 %v1053
  %v1055 = vlaneseq
  %v1056 = vshrl.u32 %v1055, 7
  %v1057 = vsub.s32 %v1054, %v1056
  %v1058 = vrot.slane %v33, %v1057
  %v1060 = vunpack.c.l.s4 1966171168
  %v1061 = vunpack.c.0.s8 %v1060
  %v1062 = vlaneseq
  %v1063 = vshrl.u32 %v1062, 7
  %v1064 = vsub.s32 %v1061, %v1063
  %v1065 = vrot.slane %v1051, %v1064
  %v1066 = vcombine.high %v1058, %v1058
  %v1067 = vcombine.high %v1065, %v1065
  %v1069 = vunpack.c.l.s4 1966171168
  %v1070 = vunpack.c.0.s8 %v1069
  %v1071 = vlaneseq
  %v1072 = vshrl.u32 %v1071, 7
  %v1073 = vsub.s32 %v1070, %v1072
  %v1074 = vrot.slane %v1058, %v1073
  %v1076 = vunpack.c.l.s4 1966171168
  %v1077 = vunpack.c.0.s8 %v1076
  %v1078 = vlaneseq
  %v1079 = vshrl.u32 %v1078, 7
  %v1080 = vsub.s32 %v1077, %v1079
  %v1081 = vrot.slane %v1065, %v1080
  %v1083 = vunpack.c.l.s4 1966171168
  %v1084 = vunpack.c.0.s8 %v1083
  %v1085 = vlaneseq
  %v1086 = vshrl.u32 %v1085, 7
  %v1087 = vsub.s32 %v1084, %v1086
  %v1088 = vrot.slane %v1066, %v1087
  %v1090 = vunpack.c.l.s4 1966171168
  %v1091 = vunpack.c.0.s8 %v1090
  %v1092 = vlaneseq
  %v1093 = vshrl.u32 %v1092, 7
  %v1094 = vsub.s32 %v1091, %v1093
  %v1095 = vrot.slane %v1067, %v1094
  %v1096 = vcombine.high %v1074, %v1074
  %v1097 = vcombine.high %v1081, %v1081
  %v1098 = vcombine.high %v1088, %v1088
  %v1099 = vcombine.high %v1095, %v1095
  %v1100 = vcombine.high %v34, %v34
  %v1102 = vunpack.c.l.s4 1966171168
  %v1103 = vunpack.c.0.s8 %v1102
  %v1104 = vlaneseq
  %v1105 = vshrl.u32 %v1104, 7
  %v1106 = vsub.s32 %v1103, %v1105
  %v1107 = vrot.slane %v34, %v1106
  %v1109 = vunpack.c.l.s4 1966171168
  %v1110 = vunpack.c.0.s8 %v1109
  %v1111 = vlaneseq
  %v1112 = vshrl.u32 %v1111, 7
  %v1113 = vsub.s32 %v1110, %v1112
  %v1114 = vrot.slane %v1100, %v1113
  %v1115 = vcombine.high %v1107, %v1107
  %v1116 = vcombine.high %v1114, %v1114
  %v1118 = vunpack.c.l.s4 1966171168
  %v1119 = vunpack.c.0.s8 %v1118
  %v1120 = vlaneseq
  %v1121 = vshrl.u32 %v1120, 7
  %v1122 = vsub.s32 %v1119, %v1121
  %v1123 = vrot.slane %v1107, %v1122
  %v1125 = vunpack.c.l.s4 1966171168
  %v1126 = vunpack.c.0.s8 %v1125
  %v1127 = vlaneseq
  %v1128 = vshrl.u32 %v1127, 7
  %v1129 = vsub.s32 %v1126, %v1128
  %v1130 = vrot.slane %v1114, %v1129
  %v1132 = vunpack.c.l.s4 1966171168
  %v1133 = vunpack.c.0.s8 %v1132
  %v1134 = vlaneseq
  %v1135 = vshrl.u32 %v1134, 7
  %v1136 = vsub.s32 %v1133, %v1135
  %v1137 = vrot.slane %v1115, %v1136
  %v1139 = vunpack.c.l.s4 1966171168
  %v1140 = vunpack.c.0.s8 %v1139
  %v1141 = vlaneseq
  %v1142 = vshrl.u32 %v1141, 7
  %v1143 = vsub.s32 %v1140, %v1142
  %v1144 = vrot.slane %v1116, %v1143
  %v1145 = vcombine.high %v1123, %v1123
  %v1146 = vcombine.high %v1130, %v1130
  %v1147 = vcombine.high %v1137, %v1137
  %v1148 = vcombine.high %v1144, %v1144
  %v1150 = vunpack.c.l.s4 1966171168
  %v1151 = vunpack.c.0.s8 %v1150
  %v1152 = vlaneseq
  %v1153 = vshrl.u32 %v1152, 7
  %v1154 = vsub.s32 %v1151, %v1153
  %v1155 = vrot.slane %v35, %v1154
  %v1156 = vcombine.high %v1155, %v1155
  %v1158 = vunpack.c.l.s4 1966171168
  %v1159 = vunpack.c.0.s8 %v1158
  %v1160 = vlaneseq
  %v1161 = vshrl.u32 %v1160, 7
  %v1162 = vsub.s32 %v1159, %v1161
  %v1163 = vrot.slane %v1155, %v1162
  %v1165 = vunpack.c.l.s4 1966171168
  %v1166 = vunpack.c.0.s8 %v1165
  %v1167 = vlaneseq
  %v1168 = vshrl.u32 %v1167, 7
  %v1169 = vsub.s32 %v1166, %v1168
  %v1170 = vrot.slane %v1156, %v1169
  %v2021 = vunpack.c.l.b16 %v36
  %v2022 = vunpack.c.l.b16 %v37
  %v2023 = vunpack.c.l.b16 %v38
  %v2024 = vunpack.c.l.b16 %v39
  %v2025 = vunpack.c.l.b16 %v40
  %v2026 = vunpack.c.l.b16 %v41
  %v2027 = vunpack.c.l.b16 %v42
  %v2028 = vunpack.c.l.b16 %v43
  %v2029 = vunpack.c.l.b16 %v44
  %v2030 = vunpack.c.l.b16 %v45
  %v2031 = vunpack.c.l.b16 %v46
  %v2032 = vunpack.c.l.b16 %v47
  %v2033 = vunpack.c.l.b16 %v48
  %v2034 = vunpack.c.l.b16 %v49
  %v2035 = vunpack.c.l.b16 %v50
  %v2036 = vunpack.c.l.b16 %v51
  %v2037 = vunpack.c.l.b16 %v52
  %v2038 = vunpack.c.l.b16 %v53
  %v2039 = vunpack.c.l.b16 %v54
  %v2040 = vunpack.c.l.b16 %v55
  %v2041 = vunpack.c.l.b16 %v56
  %v2042 = vunpack.c.l.b16 %v57
  %v2043 = vunpack.c.l.b16 %v58
  %v2044 = vunpack.c.l.b16 %v59
  %v2045 = vunpack.c.l.b16 %v60
  %v2046 = vunpack.c.l.b16 %v61
  %v2047 = vunpack.c.l.b16 %v62
  %v2048 = vunpack.c.l.b16 %v63
  %v2049 = vunpack.c.l.b16 %v64
  %v2050 = vunpack.c.l.b16 %v65
  %v2051 = vunpack.c.l.b16 %v66
  %v2052 = vunpack.c.l.b16 %v67
  %v2053 = vunpack.c.l.b16 %v68
  %v2054 = vunpack.c.l.b16 %v69
  %v2055 = vunpack.c.l.b16 %v70
  %v2056 = vunpack.c.l.b16 %v71
  %v2057 = vunpack.c.l.b16 %v72
  %v2058 = vunpack.c.l.b16 %v73
  %v2059 = vunpack.c.l.b16 %v74
  %v2060 = vunpack.c.l.b16 %v75
  %v2061 = vunpack.c.l.b16 %v76
  %v2062 = vunpack.c.l.b16 %v77
  %v2063 = vunpack.c.l.b16 %v78
  %v2064 = vunpack.c.l.b16 %v79
  %v2065 = vunpack.c.l.b16 %v80
  %v2066 = vunpack.c.l.b16 %v81
  %v2067 = vunpack.c.l.b16 %v82
  %v2068 = vunpack.c.l.b16 %v83
  %v2069 = vunpack.c.l.b16 %v84
  %v2070 = vunpack.c.l.b16 %v85
  %v2071 = vunpack.c.l.b16 %v86
  %v2072 = vunpack.c.l.b16 %v87
  %v2073 = vunpack.c.l.b16 %v88
  %v2074 = vunpack.c.l.b16 %v89
  %v2075 = vunpack.c.l.b16 %v90
  %v2076 = vunpack.c.l.b16 %v91
  %v2077 = vunpack.c.l.b16 %v92
  %v2078 = vunpack.c.l.b16 %v93
  %v2079 = vunpack.c.l.b16 %v94
  %v2080 = vunpack.c.l.b16 %v95
  %v2081 = vunpack.c.l.b16 %v96
  %v2082 = vunpack.c.l.b16 %v97
  %v2083 = vunpack.c.l.b16 %v98
  %v2084 = vunpack.c.l.b16 %v99
  %v2085 = vunpack.c.l.b16 %v100
  %v2086 = vunpack.c.l.b16 %v101
  %v2087 = vunpack.c.l.b16 %v102
  %v2088 = vunpack.c.l.b16 %v103
  %v2089 = vunpack.c.l.b16 %v104
  %v2090 = vunpack.c.l.b16 %v105
  %v2091 = vunpack.c.l.b16 %v106
  %v2092 = vunpack.c.l.b16 %v107
  %v2093 = vunpack.c.l.b16 %v108
  %v2094 = vunpack.c.l.b16 %v109
  %v2095 = vunpack.c.l.b16 %v110
  %v2096 = vunpack.c.l.b16 %v111
  %v2097 = vunpack.c.l.b16 %v112
  %v2098 = vunpack.c.l.b16 %v113
  %v2099 = vunpack.c.l.b16 %v114
  %v2100 = vunpack.c.l.b16 %v115
  %v2101 = vunpack.c.l.b16 %v116
  %v2102 = vunpack.c.l.b16 %v117
  %v2103 = vunpack.c.l.b16 %v118
  %v2104 = vunpack.c.l.b16 %v119
  %v2105 = vunpack.c.l.b16 %v120
  %v2106 = vunpack.c.l.b16 %v121
  %v2107 = vunpack.c.l.b16 %v122
  %v2108 = vunpack.c.l.b16 %v123
  %v2109 = vunpack.c.l.b16 %v124
  %v2110 = vunpack.c.l.b16 %v125
  %v2111 = vunpack.c.l.b16 %v126
  %v2112 = vunpack.c.l.b16 %v127
  %v2113 = vunpack.c.l.b16 %v128
  %v2114 = vunpack.c.l.b16 %v129
  %v2115 = vunpack.c.l.b16 %v130
  %v2116 = vunpack.c.l.b16 %v131
  %v2117 = vunpack.c.l.b16 %v132
  %v2118 = vunpack.c.l.b16 %v133
  %v2119 = vunpack.c.l.b16 %v134
  %v2120 = vunpack.c.l.b16 %v135
  %v2121 = vunpack.c.l.b16 %v136
  %v2122 = vunpack.c.l.b16 %v137
  %v2123 = vunpack.c.l.b16 %v138
  %v2124 = vunpack.c.l.b16 %v139
  %v2125 = vunpack.c.l.b16 %v140
  %v2126 = vunpack.c.l.b16 %v141
  %v2127 = vunpack.c.l.b16 %v142
  %v2128 = vunpack.c.l.b16 %v143
  %v2129 = vunpack.c.l.b16 %v144
  %v2130 = vunpack.c.l.b16 %v145
  %v2131 = vunpack.c.l.b16 %v146
  %v2132 = vunpack.c.l.b16 %v147
  %v2133 = vunpack.c.l.b16 %v148
  %v2134 = vunpack.c.l.b16 %v149
  %v2135 = vunpack.c.l.b16 %v150
  %v2136 = vunpack.c.l.b16 %v151
  %v2137 = vunpack.c.l.b16 %v152
  %v2138 = vunpack.c.l.b16 %v153
  %v2139 = vunpack.c.l.b16 %v154
  %v2140 = vunpack.c.l.b16 %v155
  %v2141 = vunpack.c.l.b16 %v156
  %v2142 = vunpack.c.l.b16 %v157
  %v2143 = vunpack.c.l.b16 %v158
  %v2144 = vunpack.c.l.b16 %v159
  %v2145 = vunpack.c.l.b16 %v160
  %v2146 = vunpack.c.l.b16 %v161
  %v2147 = vunpack.c.l.b16 %v162
  %v2148 = vunpack.c.l.b16 %v163
  %v2149 = vunpack.c.l.b16 %v164
  %v2150 = vunpack.c.l.b16 %v165
  %v2151 = vunpack.c.l.b16 %v166
  %v2152 = vunpack.c.l.b16 %v167
  %v2153 = vunpack.c.l.b16 %v168
  %v2154 = vunpack.c.l.b16 %v169
  %v2155 = vunpack.c.l.b16 %v170
  %v2156 = vunpack.c.l.b16 %v171
  %v2157 = vunpack.c.l.b16 %v172
  %v2158 = vunpack.c.l.b16 %v173
  %v2159 = vunpack.c.l.b16 %v174
  %v2160 = vunpack.c.l.b16 %v175
  %v2161 = vunpack.c.l.b16 %v176
  %v2162 = vunpack.c.l.b16 %v177
  %v2163 = vunpack.c.l.b16 %v178
  %v2164 = vunpack.c.l.b16 %v179
  %v2165 = vunpack.c.l.b16 %v180
  %v2166 = vunpack.c.l.b16 %v181
  %v2167 = vunpack.c.l.b16 %v182
  %v2168 = vunpack.c.l.b16 %v183
  %v2169 = vunpack.c.l.b16 %v184
  %v2170 = vunpack.c.l.b16 %v185
  %v2171 = vunpack.c.l.b16 %v186
  %v2172 = vunpack.c.l.b16 %v187
  %v2173 = vunpack.c.l.b16 %v188
  %v2174 = vunpack.c.l.b16 %v189
  %v2175 = vunpack.c.l.b16 %v190
  %v2176 = vunpack.c.l.b16 %v191
  %v2177 = vunpack.c.l.b16 %v192
  %v2178 = vunpack.c.l.b16 %v193
  %v2179 = vunpack.c.l.b16 %v194
  %v2180 = vunpack.c.l.b16 %v195
  %v2181 = vunpack.c.l.b16 %v196
  %v2182 = vunpack.c.l.b16 %v197
  %v2183 = vunpack.c.l.b16 %v198
  %v2184 = vunpack.c.l.b16 %v199
  %v2185 = vunpack.c.l.b16 %v200
  %v2186 = vunpack.c.l.b16 %v201
  %v2187 = vunpack.c.l.b16 %v202
  %v2188 = vunpack.c.l.b16 %v203
  %v2189 = vunpack.c.l.b16 %v204
  %v2190 = vunpack.c.l.b16 %v205
  %v2191 = vunpack.c.l.b16 %v206
  %v2192 = vunpack.c.l.b16 %v207
  %v2193 = vunpack.c.l.b16 %v208
  %v2194 = vunpack.c.l.b16 %v209
  %v2195 = vunpack.c.l.b16 %v210
  %v2196 = vunpack.c.l.b16 %v211
  %v2197 = vunpack.c.l.b16 %v212
  %v2198 = vunpack.c.l.b16 %v213
  %v2199 = vunpack.c.l.b16 %v214
  %v2200 = vunpack.c.l.b16 %v215
  %v2201 = vunpack.c.l.b16 %v216
  %v2202 = vunpack.c.l.b16 %v217
  %v2203 = vunpack.c.l.b16 %v218
  %v2204 = vunpack.c.l.b16 %v219
  %v2205 = vunpack.c.l.b16 %v220
  %v2206 = vunpack.c.l.b16 %v221
  %v2207 = vunpack.c.l.b16 %v222
  %v2208 = vunpack.c.l.b16 %v223
  %v2209 = vunpack.c.l.b16 %v224
  %v2210 = vunpack.c.l.b16 %v225
  %v2211 = vunpack.c.l.b16 %v226
  %v2212 = vunpack.c.l.b16 %v227
  %v2213 = vunpack.c.l.b16 %v228
  %v2214 = vunpack.c.l.b16 %v229
  %v2215 = vunpack.c.l.b16 %v230
  %v2216 = vunpack.c.l.b16 %v231
  %v2217 = vunpack.c.l.b16 %v232
  %v2218 = vunpack.c.l.b16 %v233
  %v2219 = vunpack.c.l.b16 %v234
  %v2220 = vunpack.c.l.b16 %v235
  %v2221 = vunpack.c.l.b16 %v236
  %v2222 = vunpack.c.l.b16 %v237
  %v2223 = vunpack.c.l.b16 %v238
  %v2224 = vunpack.c.l.b16 %v239
  %v2225 = vunpack.c.l.b16 %v240
  %v2226 = vunpack.c.l.b16 %v241
  %v2227 = vunpack.c.l.b16 %v242
  %v2228 = vunpack.c.l.b16 %v243
  %v2229 = vunpack.c.l.b16 %v244
  %v2230 = vunpack.c.l.b16 %v245
  %v2231 = vunpack.c.l.b16 %v246
  %v2232 = vunpack.c.l.b16 %v247
  %v2233 = vunpack.c.l.b16 %v248
  %v2234 = vunpack.c.l.b16 %v249
  %v2235 = vunpack.c.l.b16 %v250
  %v2236 = vunpack.c.l.b16 %v251
  %v2237 = vunpack.c.l.b16 %v252
  %v2238 = vunpack.c.l.b16 %v253
  %v2239 = vunpack.c.l.b16 %v254
  %v2240 = vunpack.c.l.b16 %v255
  %v2241 = vunpack.c.l.b16 %v256
  %v2242 = vunpack.c.l.b16 %v257
  %v2243 = vunpack.c.l.b16 %v258
  %v2244 = vunpack.c.l.b16 %v259
  %v2245 = vunpack.c.l.b16 %v260
  %v2246 = vunpack.c.l.b16 %v261
  %v2247 = vunpack.c.l.b16 %v262
  %v2248 = vunpack.c.l.b16 %v263
  %v2249 = vunpack.c.l.b16 %v264
  %v2250 = vunpack.c.l.b16 %v265
  %v2251 = vunpack.c.l.b16 %v266
  %v2252 = vunpack.c.l.b16 %v267
  %v2253 = vunpack.c.l.b16 %v268
  %v2254 = vunpack.c.l.b16 %v269
  %v2255 = vunpack.c.l.b16 %v270
  %v2256 = vunpack.c.l.b16 %v271
  %v2257 = vunpack.c.l.b16 %v272
  %v2258 = vunpack.c.l.b16 %v273
  %v2259 = vunpack.c.l.b16 %v274
  %v2260 = vunpack.c.l.b16 %v275
  %v2261 = vunpack.c.l.b16 %v276
  %v2262 = vunpack.c.l.b16 %v277
  %v2263 = vunpack.c.l.b16 %v278
  %v2264 = vunpack.c.l.b16 %v279
  %v2265 = vunpack.c.l.b16 %v280
  %v2266 = vunpack.c.l.b16 %v281
  %v2267 = vunpack.c.l.b16 %v282
  %v2268 = vunpack.c.l.b16 %v283
  %v2269 = vunpack.c.l.b16 %v284
  %v2270 = vunpack.c.l.b16 %v285
  %v2271 = vunpack.c.l.b16 %v286
  %v2272 = vunpack.c.l.b16 %v287
  %v2273 = vunpack.c.l.b16 %v288
  %v2274 = vunpack.c.l.b16 %v289
  %v2275 = vunpack.c.l.b16 %v290
  %v2276 = vunpack.c.l.b16 %v291
  %v2277 = vunpack.c.l.b16 %v292
  %v2278 = vunpack.c.l.b16 %v293
  %v2279 = vunpack.c.l.b16 %v294
  %v2280 = vunpack.c.l.b16 %v295
  %v2281 = vunpack.c.l.b16 %v296
  %v2282 = vunpack.c.l.b16 %v297
  %v2283 = vunpack.c.l.b16 %v298
  %v2284 = vunpack.c.l.b16 %v299
  %v2285 = vunpack.c.l.b16 %v300
  %v2286 = vunpack.c.l.b16 %v301
  %v2287 = vunpack.c.l.b16 %v302
  %v2288 = vunpack.c.l.b16 %v303
  %v2289 = vunpack.c.l.b16 %v304
  %v2290 = vunpack.c.l.b16 %v305
  %v2291 = vunpack.c.l.b16 %v306
  %v2292 = vunpack.c.l.b16 %v307
  %v2293 = vunpack.c.l.b16 %v308
  %v2294 = vunpack.c.l.b16 %v309
  %v2295 = vunpack.c.l.b16 %v310
  %v2296 = vunpack.c.l.b16 %v311
  %v2297 = vunpack.c.l.b16 %v312
  %v2298 = vunpack.c.l.b16 %v313
  %v2299 = vunpack.c.l.b16 %v314
  %v2300 = vunpack.c.l.b16 %v315
  %v2301 = vunpack.c.l.b16 %v316
  %v2302 = vunpack.c.l.b16 %v317
  %v2303 = vunpack.c.l.b16 %v318
  %v2304 = vunpack.c.l.b16 %v319
  %v2305 = vunpack.c.l.b16 %v320
  %v2306 = vunpack.c.l.b16 %v321
  %v2307 = vunpack.c.l.b16 %v322
  %v2308 = vunpack.c.l.b16 %v323
  %v2309 = vunpack.c.l.b16 %v324
  %v2310 = vunpack.c.l.b16 %v325
  %v2311 = vunpack.c.l.b16 %v326
  %v2312 = vunpack.c.l.b16 %v327
  %v2313 = vunpack.c.l.b16 %v328
  %v2314 = vunpack.c.l.b16 %v329
  %v2315 = vunpack.c.l.b16 %v330
  %v2316 = vunpack.c.l.b16 %v331
  %v2317 = vunpack.c.l.b16 %v332
  %v2318 = vunpack.c.l.b16 %v333
  %v2319 = vunpack.c.l.b16 %v334
  %v2320 = vunpack.c.l.b16 %v335
  %v2321 = vunpack.c.l.b16 %v336
  %v2322 = vunpack.c.l.b16 %v337
  %v2323 = vunpack.c.l.b16 %v338
  %v2324 = vunpack.c.l.b16 %v339
  %v2325 = vunpack.c.l.b16 %v340
  %v2326 = vunpack.c.l.b16 %v341
  %v2327 = vunpack.c.l.b16 %v342
  %v2328 = vunpack.c.l.b16 %v343
  %v2329 = vunpack.c.l.b16 %v344
  %v2330 = vunpack.c.l.b16 %v345
  %v2331 = vunpack.c.l.b16 %v346
  %v2332 = vunpack.c.l.b16 %v347
  %v2333 = vunpack.c.l.b16 %v348
  %v2334 = vunpack.c.l.b16 %v349
  %v2335 = vunpack.c.l.b16 %v350
  %v2336 = vunpack.c.l.b16 %v351
  %v2337 = vunpack.c.l.b16 %v352
  %v2338 = vunpack.c.l.b16 %v353
  %v2339 = vunpack.c.l.b16 %v354
  %v2340 = vunpack.c.l.b16 %v355
  %v2341 = vunpack.c.l.b16 %v356
  %v2342 = vunpack.c.l.b16 %v357
  %v2343 = vunpack.c.l.b16 %v358
  %v2344 = vunpack.c.l.b16 %v359
  %v2345 = vunpack.c.l.b16 %v360
  %v2346 = vunpack.c.l.b16 %v361
  %v2347 = vunpack.c.l.b16 %v362
  %v2348 = vunpack.c.l.b16 %v363
  %v2349 = vunpack.c.l.b16 %v364
  %v2350 = vunpack.c.l.b16 %v365
  %v2351 = vunpack.c.l.b16 %v366
  %v2352 = vunpack.c.l.b16 %v367
  %v2353 = vunpack.c.l.b16 %v368
  %v2354 = vunpack.c.l.b16 %v369
  %v2355 = vunpack.c.l.b16 %v370
  %v2356 = vunpack.c.l.b16 %v371
  %v2357 = vunpack.c.l.b16 %v372
  %v2358 = vunpack.c.l.b16 %v373
  %v2359 = vunpack.c.l.b16 %v374
  %v2360 = vunpack.c.l.b16 %v375
  %v2361 = vunpack.c.l.b16 %v376
  %v2362 = vunpack.c.l.b16 %v377
  %v2363 = vunpack.c.l.b16 %v378
  %v2364 = vunpack.c.l.b16 %v379
  %v2365 = vunpack.c.l.b16 %v380
  %v2366 = vunpack.c.l.b16 %v381
  %v2367 = vunpack.c.l.b16 %v382
  %v2368 = vunpack.c.l.b16 %v383
  %v2369 = vunpack.c.l.b16 %v384
  %v2370 = vunpack.c.l.b16 %v385
  %v2371 = vunpack.c.l.b16 %v386
  %v2372 = vunpack.c.l.b16 %v387
  %v2373 = vunpack.c.l.b16 %v388
  %v2374 = vunpack.c.l.b16 %v389
  %v2375 = vunpack.c.l.b16 %v390
  %v2376 = vunpack.c.l.b16 %v391
  %v2377 = vunpack.c.l.b16 %v392
  %v2378 = vunpack.c.l.b16 %v393
  %v2379 = vunpack.c.l.b16 %v394
  %v2380 = vunpack.c.l.b16 %v395
  %v2381 = vunpack.c.l.b16 %v396
  %v2382 = vunpack.c.l.b16 %v397
  %v2383 = vunpack.c.l.b16 %v398
  %v2384 = vunpack.c.l.b16 %v399
  %v2385 = vunpack.c.l.b16 %v400
  %v2386 = vunpack.c.l.b16 %v401
  %v2387 = vunpack.c.l.b16 %v402
  %v2388 = vunpack.c.l.b16 %v403
  %v2389 = vunpack.c.l.b16 %v404
  %v2390 = vunpack.c.l.b16 %v405
  %v2391 = vunpack.c.l.b16 %v406
  %v2392 = vunpack.c.l.b16 %v407
  %v2393 = vunpack.c.l.b16 %v408
  %v2394 = vunpack.c.l.b16 %v409
  %v2395 = vunpack.c.l.b16 %v410
  %v2396 = vunpack.c.l.b16 %v411
  %v2397 = vunpack.c.l.b16 %v412
  %v2398 = vunpack.c.l.b16 %v413
  %v2399 = vunpack.c.l.b16 %v414
  %v2400 = vunpack.c.l.b16 %v415
  %v2401 = vunpack.c.l.b16 %v416
  %v2402 = vunpack.c.l.b16 %v417
  %v2403 = vunpack.c.l.b16 %v418
  %v2404 = vunpack.c.l.b16 %v419
  %v2405 = vunpack.c.l.b16 %v420
  %v2406 = vunpack.c.l.b16 %v421
  %v2407 = vunpack.c.l.b16 %v422
  %v2408 = vunpack.c.l.b16 %v423
  %v2409 = vunpack.c.l.b16 %v424
  %v2410 = vunpack.c.l.b16 %v425
  %v2411 = vunpack.c.l.b16 %v426
  %v2412 = vunpack.c.l.b16 %v427
  %v2413 = vunpack.c.l.b16 %v428
  %v2414 = vunpack.c.l.b16 %v429
  %v2415 = vunpack.c.l.b16 %v430
  %v2416 = vunpack.c.l.b16 %v431
  %v2417 = vunpack.c.l.b16 %v432
  %v2418 = vunpack.c.l.b16 %v433
  %v2419 = vunpack.c.l.b16 %v434
  %v2420 = vunpack.c.l.b16 %v435
  %v2421 = vunpack.c.l.b16 %v436
  %v2422 = vunpack.c.l.b16 %v437
  %v2423 = vunpack.c.l.b16 %v438
  %v2424 = vunpack.c.l.b16 %v439
  %v2425 = vunpack.c.l.b16 %v440
  %v2426 = vunpack.c.l.b16 %v441
  %v2427 = vunpack.c.l.b16 %v442
  %v2428 = vunpack.c.l.b16 %v443
  %v2429 = vunpack.c.l.b16 %v444
  %v2430 = vunpack.c.l.b16 %v445
  %v2431 = vunpack.c.l.b16 %v446
  %v2432 = vunpack.c.l.b16 %v447
  %v2433 = vunpack.c.l.b16 %v448
  %v2434 = vunpack.c.l.b16 %v449
  %v2435 = vunpack.c.l.b16 %v450
  %v2436 = vunpack.c.l.b16 %v451
  %v2437 = vunpack.c.l.b16 %v452
  %v2438 = vunpack.c.l.b16 %v453
  %v2439 = vunpack.c.l.b16 %v454
  %v2440 = vunpack.c.l.b16 %v455
  %v2441 = vunpack.c.l.b16 %v456
  %v2442 = vunpack.c.l.b16 %v457
  %v2443 = vunpack.c.l.b16 %v458
  %v2444 = vunpack.c.l.b16 %v459
  %v2445 = vunpack.c.l.b16 %v460
  %v2446 = vunpack.c.l.b16 %v461
  %v2447 = vunpack.c.l.b16 %v462
  %v2448 = vunpack.c.l.b16 %v463
  %v2449 = vunpack.c.l.b16 %v464
  %v2450 = vunpack.c.l.b16 %v465
  %v2451 = vunpack.c.l.b16 %v466
  %v2452 = vunpack.c.l.b16 %v467
  %v2453 = vunpack.c.l.b16 %v468
  %v2454 = vunpack.c.l.b16 %v469
  %v2455 = vunpack.c.l.b16 %v470
  %v2456 = vunpack.c.l.b16 %v471
  %v2457 = vunpack.c.l.b16 %v472
  %v2458 = vunpack.c.l.b16 %v473
  %v2459 = vunpack.c.l.b16 %v474
  %v2460 = vunpack.c.l.b16 %v475
  %v2461 = vunpack.c.l.b16 %v476
  %v2462 = vunpack.c.l.b16 %v477
  %v2463 = vunpack.c.l.b16 %v478
  %v2464 = vunpack.c.l.b16 %v479
  %v2465 = vunpack.c.l.b16 %v480
  %v2466 = vunpack.c.l.b16 %v481
  %v2467 = vunpack.c.l.b16 %v482
  %v2468 = vunpack.c.l.b16 %v483
  %v2469 = vunpack.c.l.b16 %v484
  %v2470 = vunpack.c.l.b16 %v485
  %v2471 = vunpack.c.l.b16 %v486
  %v2472 = vunpack.c.l.b16 %v487
  %v2473 = vunpack.c.l.b16 %v488
  %v2474 = vunpack.c.l.b16 %v489
  %v2475 = vunpack.c.l.b16 %v490
  %v2476 = vunpack.c.l.b16 %v491
  %v2477 = vunpack.c.l.b16 %v492
  %v2478 = vunpack.c.l.b16 %v493
  %v2479 = vunpack.c.l.b16 %v494
  %v2480 = vunpack.c.l.b16 %v495
  %v2481 = vunpack.c.l.b16 %v496
  %v2482 = vunpack.c.l.b16 %v497
  %v2483 = vunpack.c.l.b16 %v498
  %v2484 = vunpack.c.l.b16 %v499
  %v2485 = vunpack.c.l.b16 %v500
  %v2486 = vunpack.c.l.b16 %v501
  %v2487 = vunpack.c.l.b16 %v502
  %v2488 = vunpack.c.l.b16 %v503
  %v2489 = vunpack.c.l.b16 %v504
  %v2490 = vunpack.c.l.b16 %v505
  %v2491 = vunpack.c.l.b16 %v506
  %v2492 = vunpack.c.l.b16 %v507
  %v2493 = vunpack.c.l.b16 %v508
  %v2494 = vunpack.c.l.b16 %v509
  %v2495 = vunpack.c.l.b16 %v510
  %v2496 = vunpack.c.l.b16 %v511
  %v2497 = vunpack.c.l.b16 %v512
  %v2498 = vunpack.c.l.b16 %v513
  %v2499 = vunpack.c.l.b16 %v514
  %v2500 = vunpack.c.l.b16 %v515
  %v2501 = vunpack.c.l.b16 %v516
  %v2502 = vunpack.c.l.b16 %v517
  %v2503 = vunpack.c.l.b16 %v518
  %v2504 = vunpack.c.l.b16 %v519
  %v2505 = vunpack.c.l.b16 %v520
  %v2506 = vunpack.c.l.b16 %v521
  %v2507 = vunpack.c.l.b16 %v522
  %v2508 = vunpack.c.l.b16 %v523
  %v2509 = vunpack.c.l.b16 %v524
  %v2510 = vunpack.c.l.b16 %v525
  %v2511 = vunpack.c.l.b16 %v526
  %v2512 = vunpack.c.l.b16 %v527
  %v2513 = vunpack.c.l.b16 %v528
  %v2514 = vunpack.c.l.b16 %v529
  %v2515 = vunpack.c.l.b16 %v530
  %v2516 = vunpack.c.l.b16 %v531
  %v2517 = vunpack.c.l.b16 %v532
  %v2518 = vunpack.c.l.b16 %v533
  %v2519 = vunpack.c.l.b16 %v534
  %v2520 = vunpack.c.l.b16 %v535
  %v2521 = vunpack.c.l.b16 %v536
  %v2522 = vunpack.c.l.b16 %v537
  %v2523 = vunpack.c.l.b16 %v538
  %v2524 = vunpack.c.l.b16 %v539
  %v2525 = vunpack.c.l.b16 %v540
  %v2526 = vunpack.c.l.b16 %v541
  %v2527 = vunpack.c.l.b16 %v542
  %v2528 = vunpack.c.l.b16 %v543
  %v2529 = vunpack.c.l.b16 %v544
  %v2530 = vunpack.c.l.b16 %v545
  %v2531 = vunpack.c.l.b16 %v546
  %v2532 = vunpack.c.l.b16 %v547
  %v2533 = vunpack.c.l.b16 %v548
  %v2534 = vunpack.c.l.b16 %v549
  %v2535 = vunpack.c.l.b16 %v550
  %v2536 = vunpack.c.l.b16 %v551
  %v2537 = vunpack.c.l.b16 %v552
  %v2538 = vunpack.c.l.b16 %v553
  %v2539 = vunpack.c.l.b16 %v554
  %v2540 = vunpack.c.l.b16 %v555
  %v2541 = vunpack.c.l.b16 %v556
  %v2542 = vunpack.c.l.b16 %v557
  %v2543 = vunpack.c.l.b16 %v558
  %v2544 = vunpack.c.l.b16 %v559
  %v2545 = vunpack.c.l.b16 %v560
  %v2546 = vunpack.c.l.b16 %v561
  %v2547 = vunpack.c.l.b16 %v562
  %v2548 = vunpack.c.l.b16 %v563
  %v2549 = vunpack.c.l.b16 %v564
  %v2550 = vunpack.c.l.b16 %v565
  %v2551 = vunpack.c.l.b16 %v566
  %v2552 = vunpack.c.l.b16 %v567
  %v2553 = vunpack.c.l.b16 %v568
  %v2554 = vunpack.c.l.b16 %v569
  %v2555 = vunpack.c.l.b16 %v570
  %v2556 = vunpack.c.l.b16 %v571
  %v2557 = vunpack.c.l.b16 %v572
  %v2558 = vunpack.c.l.b16 %v573
  %v2559 = vunpack.c.l.b16 %v574
  %v2560 = vunpack.c.l.b16 %v575
  %v2561 = vunpack.c.l.b16 %v576
  %v2562 = vunpack.c.l.b16 %v577
  %v2563 = vunpack.c.l.b16 %v578
  %v2564 = vunpack.c.l.b16 %v579
  %v2565 = vunpack.c.l.b16 %v580
  %v2566 = vunpack.c.l.b16 %v581
  %v2567 = vunpack.c.l.b16 %v582
  %v2568 = vunpack.c.l.b16 %v583
  %v2569 = vunpack.c.l.b16 %v584
  %v2570 = vunpack.c.l.b16 %v585
  %v2571 = vunpack.c.l.b16 %v586
  %v2572 = vunpack.c.l.b16 %v587
  %v2573 = vunpack.c.l.b16 %v588
  %v2574 = vunpack.c.l.b16 %v589
  %v2575 = vunpack.c.l.b16 %v590
  %v2576 = vunpack.c.l.b16 %v591
  %v2577 = vunpack.c.l.b16 %v592
  %v2578 = vunpack.c.l.b16 %v593
  %v2579 = vunpack.c.l.b16 %v594
  %v2580 = vunpack.c.l.b16 %v595
  %v2581 = vunpack.c.l.b16 %v596
  %v2582 = vunpack.c.l.b16 %v597
  %v2583 = vunpack.c.l.b16 %v598
  %v2584 = vunpack.c.l.b16 %v599
  %v2585 = vunpack.c.l.b16 %v600
  %v2586 = vunpack.c.l.b16 %v601
  %v2587 = vunpack.c.l.b16 %v602
  %v2588 = vunpack.c.l.b16 %v603
  %v2589 = vunpack.c.l.b16 %v604
  %v2590 = vunpack.c.l.b16 %v605
  %v2591 = vunpack.c.l.b16 %v606
  %v2592 = vunpack.c.l.b16 %v607
  %v2593 = vunpack.c.l.b16 %v608
  %v2594 = vunpack.c.l.b16 %v609
  %v2595 = vunpack.c.l.b16 %v610
  %v2596 = vunpack.c.l.b16 %v611
  %v2597 = vunpack.c.l.b16 %v612
  %v2598 = vunpack.c.l.b16 %v613
  %v2599 = vunpack.c.l.b16 %v614
  %v2600 = vunpack.c.l.b16 %v615
  %v2601 = vunpack.c.l.b16 %v616
  %v2602 = vunpack.c.l.b16 %v617
  %v2603 = vunpack.c.l.b16 %v618
  %v2604 = vunpack.c.l.b16 %v619
  %v2605 = vunpack.c.l.b16 %v620
  %v2606 = vunpack.c.l.b16 %v621
  %v2607 = vunpack.c.l.b16 %v622
  %v2608 = vunpack.c.l.b16 %v623
  %v2609 = vunpack.c.l.b16 %v624
  %v2610 = vunpack.c.l.b16 %v625
  %v2611 = vunpack.c.l.b16 %v626
  %v2612 = vunpack.c.l.b16 %v627
  %v2613 = vunpack.c.l.b16 %v628
  %v2614 = vunpack.c.l.b16 %v629
  %v2615 = vunpack.c.l.b16 %v630
  %v2616 = vunpack.c.l.b16 %v631
  %v2617 = vunpack.c.l.b16 %v632
  %v2618 = vunpack.c.l.b16 %v633
  %v2619 = vunpack.c.l.b16 %v634
  %v2620 = vunpack.c.l.b16 %v635
  %v2621 = vunpack.c.l.b16 %v636
  %v2622 = vunpack.c.l.b16 %v637
  %v2623 = vunpack.c.l.b16 %v638
  %v2624 = vunpack.c.l.b16 %v639
  %v2625 = vunpack.c.l.b16 %v640
  %v2626 = vunpack.c.l.b16 %v641
  %v2627 = vunpack.c.l.b16 %v642
  %v2628 = vunpack.c.l.b16 %v643
  %v2629 = vunpack.c.l.b16 %v644
  %v2630 = vunpack.c.l.b16 %v645
  %v2631 = vunpack.c.l.b16 %v646
  %v2632 = vunpack.c.l.b16 %v647
  %v2633 = vunpack.c.l.b16 %v648
  %v2634 = vunpack.c.l.b16 %v649
  %v2635 = vunpack.c.l.b16 %v650
  %v2636 = vunpack.c.l.b16 %v651
  %v2637 = vunpack.c.l.b16 %v652
  %v2638 = vunpack.c.l.b16 %v653
  %v2639 = vunpack.c.l.b16 %v654
  %v2640 = vunpack.c.l.b16 %v655
  %v2641 = vunpack.c.l.b16 %v656
  %v2642 = vunpack.c.l.b16 %v657
  %v2643 = vunpack.c.l.b16 %v658
  %v2644 = vunpack.c.l.b16 %v659
  %v2645 = vunpack.c.l.b16 %v660
  %v2646 = vunpack.c.l.b16 %v661
  %v2647 = vunpack.c.l.b16 %v662
  %v2648 = vunpack.c.l.b16 %v663
  %v2649 = vunpack.c.l.b16 %v664
  %v2650 = vunpack.c.l.b16 %v665
  %v2651 = vunpack.c.l.b16 %v666
  %v2652 = vunpack.c.l.b16 %v667
  %v2653 = vunpack.c.l.b16 %v668
  %v2654 = vunpack.c.l.b16 %v669
  %v2655 = vunpack.c.l.b16 %v670
  %v2656 = vunpack.c.l.b16 %v671
  %v2657 = vunpack.c.l.b16 %v672
  %v2658 = vunpack.c.l.b16 %v673
  %v2659 = vunpack.c.l.b16 %v674
  %v2660 = vunpack.c.l.b16 %v675
  %v2661 = vunpack.c.l.b16 %v676
  %v2662 = vunpack.c.l.b16 %v677
  %v2663 = vunpack.c.l.b16 %v678
  %v2664 = vunpack.c.l.b16 %v679
  %v2665 = vunpack.c.l.b16 %v680
  %v2666 = vunpack.c.l.b16 %v681
  %v2667 = vunpack.c.l.b16 %v682
  %v2668 = vunpack.c.l.b16 %v683
  %v2669 = vunpack.c.l.b16 %v684
  %v2670 = vunpack.c.l.b16 %v685
  %v2671 = vunpack.c.l.b16 %v686
  %v2672 = vunpack.c.l.b16 %v687
  %v2673 = vunpack.c.l.b16 %v688
  %v2674 = vunpack.c.l.b16 %v689
  %v2675 = vunpack.c.l.b16 %v690
  %v2676 = vunpack.c.l.b16 %v691
  %v2677 = vunpack.c.l.b16 %v692
  %v2678 = vunpack.c.l.b16 %v693
  %v2679 = vunpack.c.l.b16 %v694
  %v2680 = vunpack.c.l.b16 %v695
  %v2681 = vunpack.c.l.b16 %v696
  %v2682 = vunpack.c.l.b16 %v697
  %v2683 = vunpack.c.l.b16 %v698
  %v2684 = vunpack.c.l.b16 %v699
  %v2685 = vunpack.c.l.b16 %v700
  %v2686 = vunpack.c.l.b16 %v701
  %v2687 = vunpack.c.l.b16 %v702
  %v2688 = vunpack.c.l.b16 %v703
  %v2689 = vunpack.c.l.b16 %v704
  %v2690 = vunpack.c.l.b16 %v705
  %v2691 = vunpack.c.l.b16 %v706
  %v2692 = vunpack.c.l.b16 %v707
  %v2693 = vunpack.c.l.b16 %v708
  %v2694 = vunpack.c.l.b16 %v709
  %v2695 = vunpack.c.l.b16 %v710
  %v2696 = vunpack.c.l.b16 %v711
  %v2697 = vunpack.c.l.b16 %v712
  %v2698 = vunpack.c.l.b16 %v713
  %v2699 = vunpack.c.l.b16 %v714
  %v2700 = vunpack.c.l.b16 %v715
  %v2701 = vunpack.c.l.b16 %v716
  %v2702 = vunpack.c.l.b16 %v717
  %v2703 = vunpack.c.l.b16 %v718
  %v2704 = vunpack.c.l.b16 %v719
  %v2705 = vunpack.c.l.b16 %v720
  %v2706 = vunpack.c.l.b16 %v721
  %v2707 = vunpack.c.l.b16 %v722
  %v2708 = vunpack.c.l.b16 %v723
  %v2709 = vunpack.c.l.b16 %v724
  %v2710 = vunpack.c.l.b16 %v725
  %v2711 = vunpack.c.l.b16 %v726
  %v2712 = vunpack.c.l.b16 %v727
  %v2713 = vunpack.c.l.b16 %v728
  %v2714 = vunpack.c.l.b16 %v729
  %v2715 = vunpack.c.l.b16 %v730
  %v2716 = vunpack.c.l.b16 %v731
  %v2717 = vunpack.c.l.b16 %v732
  %v2718 = vunpack.c.l.b16 %v733
  %v2719 = vunpack.c.l.b16 %v734
  %v2720 = vunpack.c.l.b16 %v735
  %v2721 = vunpack.c.l.b16 %v736
  %v2722 = vunpack.c.l.b16 %v737
  %v2723 = vunpack.c.l.b16 %v738
  %v2724 = vunpack.c.l.b16 %v739
  %v2725 = vunpack.c.l.b16 %v740
  %v2726 = vunpack.c.l.b16 %v741
  %v2727 = vunpack.c.l.b16 %v742
  %v2728 = vunpack.c.l.b16 %v743
  %v2729 = vunpack.c.l.b16 %v744
  %v2730 = vunpack.c.l.b16 %v745
  %v2731 = vunpack.c.l.b16 %v746
  %v2732 = vunpack.c.l.b16 %v747
  %v2733 = vunpack.c.l.b16 %v748
  %v2734 = vunpack.c.l.b16 %v749
  %v2735 = vunpack.c.l.b16 %v750
  %v2736 = vunpack.c.l.b16 %v751
  %v2737 = vunpack.c.l.b16 %v752
  %v2738 = vunpack.c.l.b16 %v753
  %v2739 = vunpack.c.l.b16 %v754
  %v2740 = vunpack.c.l.b16 %v755
  %v2741 = vunpack.c.l.b16 %v756
  %v2742 = vunpack.c.l.b16 %v757
  %v2743 = vunpack.c.l.b16 %v758
  %v2744 = vunpack.c.l.b16 %v759
  %v2745 = vunpack.c.l.b16 %v760
  %v2746 = vunpack.c.l.b16 %v761
  %v2747 = vunpack.c.l.b16 %v762
  %v2748 = vunpack.c.l.b16 %v763
  %v2749 = vunpack.c.l.b16 %v764
  %v2750 = vunpack.c.l.b16 %v765
  %v2751 = vunpack.c.l.b16 %v766
  %v2752 = vunpack.c.l.b16 %v767
  %v2753 = vunpack.c.l.b16 %v768
  %v2754 = vunpack.c.l.b16 %v769
  %v2755 = vunpack.c.l.b16 %v770
  %v2756 = vunpack.c.l.b16 %v771
  %v2757 = vunpack.c.l.b16 %v772
  %v2758 = vunpack.c.l.b16 %v773
  %v2759 = vunpack.c.l.b16 %v774
  %v2760 = vunpack.c.l.b16 %v775
  %v2761 = vunpack.c.l.b16 %v776
  %v2762 = vunpack.c.l.b16 %v777
  %v2763 = vunpack.c.l.b16 %v778
  %v2764 = vunpack.c.l.b16 %v779
  %v2765 = vunpack.c.l.b16 %v780
  %v2766 = vunpack.c.l.b16 %v781
  %v2767 = vunpack.c.l.b16 %v782
  %v2768 = vunpack.c.l.b16 %v783
  %v2769 = vunpack.c.l.b16 %v784
  %v2770 = vunpack.c.l.b16 %v785
  %v2771 = vunpack.c.l.b16 %v786
  %v2772 = vunpack.c.l.b16 %v787
  %v2773 = vunpack.c.l.b16 %v788
  %v2774 = vunpack.c.l.b16 %v789
  %v2775 = vunpack.c.l.b16 %v790
  %v2776 = vunpack.c.l.b16 %v791
  %v2777 = vunpack.c.l.b16 %v792
  %v2778 = vunpack.c.l.b16 %v793
  %v2779 = vunpack.c.l.b16 %v794
  %v2780 = vunpack.c.l.b16 %v795
  %v2781 = vunpack.c.l.b16 %v796
  %v2782 = vunpack.c.l.b16 %v797
  %v2783 = vunpack.c.l.b16 %v798
  %v2784 = vunpack.c.l.b16 %v799
  %v2785 = vunpack.c.l.b16 %v800
  %v2786 = vunpack.c.l.b16 %v801
  %v2787 = vunpack.c.l.b16 %v802
  %v2788 = vunpack.c.l.b16 %v803
  %v2789 = vunpack.c.l.b16 %v804
  %v2790 = vunpack.c.l.b16 %v805
  %v2791 = vunpack.c.l.b16 %v806
  %v2792 = vunpack.c.l.b16 %v807
  %v2793 = vunpack.c.l.b16 %v808
  %v2794 = vunpack.c.l.b16 %v809
  %v2795 = vunpack.c.l.b16 %v810
  %v2796 = vunpack.c.l.b16 %v811
  %v2797 = vunpack.c.l.b16 %v812
  %v2798 = vunpack.c.l.b16 %v813
  %v2799 = vunpack.c.l.b16 %v814
  %v2800 = vunpack.c.l.b16 %v815
  %v2801 = vunpack.c.l.b16 %v816
  %v2802 = vunpack.c.l.b16 %v817
  %v2803 = vunpack.c.l.b16 %v818
  %v2804 = vunpack.c.l.b16 %v819
  %v2805 = vunpack.c.l.b16 %v820
  %v2806 = vunpack.c.l.b16 %v821
  %v2807 = vunpack.c.l.b16 %v822
  %v2808 = vunpack.c.l.b16 %v823
  %v2809 = vunpack.c.l.b16 %v824
  %v2810 = vunpack.c.l.b16 %v825
  %v2811 = vunpack.c.l.b16 %v826
  %v2812 = vunpack.c.l.b16 %v827
  %v2813 = vunpack.c.l.b16 %v828
  %v2814 = vunpack.c.l.b16 %v829
  %v2815 = vunpack.c.l.b16 %v830
  %v2816 = vunpack.c.l.b16 %v831
  %v2817 = vunpack.c.l.b16 %v832
  %v2818 = vunpack.c.l.b16 %v833
  %v2819 = vunpack.c.l.b16 %v834
  %v2820 = vunpack.c.l.b16 %v835
  %v2821 = vpack.c.b16 %v2022, %v2021
  %v2822 = vpack.c.b16 %v2024, %v2023
  %v2823 = vpack.c.b16 %v2026, %v2025
  %v2824 = vpack.c.b16 %v2028, %v2027
  %v2825 = vpack.c.b16 %v2030, %v2029
  %v2826 = vpack.c.b16 %v2032, %v2031
  %v2827 = vpack.c.b16 %v2034, %v2033
  %v2828 = vpack.c.b16 %v2036, %v2035
  %v2829 = vpack.c.b16 %v2038, %v2037
  %v2830 = vpack.c.b16 %v2040, %v2039
  %v2831 = vpack.c.b16 %v2042, %v2041
  %v2832 = vpack.c.b16 %v2044, %v2043
  %v2833 = vpack.c.b16 %v2046, %v2045
  %v2834 = vpack.c.b16 %v2048, %v2047
  %v2835 = vpack.c.b16 %v2050, %v2049
  %v2836 = vpack.c.b16 %v2052, %v2051
  %v2837 = vpack.c.b16 %v2054, %v2053
  %v2838 = vpack.c.b16 %v2056, %v2055
  %v2839 = vpack.c.b16 %v2058, %v2057
  %v2840 = vpack.c.b16 %v2060, %v2059
  %v2841 = vpack.c.b16 %v2062, %v2061
  %v2842 = vpack.c.b16 %v2064, %v2063
  %v2843 = vpack.c.b16 %v2066, %v2065
  %v2844 = vpack.c.b16 %v2068, %v2067
  %v2845 = vpack.c.b16 %v2070, %v2069
  %v2846 = vpack.c.b16 %v2072, %v2071
  %v2847 = vpack.c.b16 %v2074, %v2073
  %v2848 = vpack.c.b16 %v2076, %v2075
  %v2849 = vpack.c.b16 %v2078, %v2077
  %v2850 = vpack.c.b16 %v2080, %v2079
  %v2851 = vpack.c.b16 %v2082, %v2081
  %v2852 = vpack.c.b16 %v2084, %v2083
  %v2853 = vpack.c.b16 %v2086, %v2085
  %v2854 = vpack.c.b16 %v2088, %v2087
  %v2855 = vpack.c.b16 %v2090, %v2089
  %v2856 = vpack.c.b16 %v2092, %v2091
  %v2857 = vpack.c.b16 %v2094, %v2093
  %v2858 = vpack.c.b16 %v2096, %v2095
  %v2859 = vpack.c.b16 %v2098, %v2097
  %v2860 = vpack.c.b16 %v2100, %v2099
  %v2861 = vpack.c.b16 %v2102, %v2101
  %v2862 = vpack.c.b16 %v2104, %v2103
  %v2863 = vpack.c.b16 %v2106, %v2105
  %v2864 = vpack.c.b16 %v2108, %v2107
  %v2865 = vpack.c.b16 %v2110, %v2109
  %v2866 = vpack.c.b16 %v2112, %v2111
  %v2867 = vpack.c.b16 %v2114, %v2113
  %v2868 = vpack.c.b16 %v2116, %v2115
  %v2869 = vpack.c.b16 %v2118, %v2117
  %v2870 = vpack.c.b16 %v2120, %v2119
  %v2871 = vpack.c.b16 %v2122, %v2121
  %v2872 = vpack.c.b16 %v2124, %v2123
  %v2873 = vpack.c.b16 %v2126, %v2125
  %v2874 = vpack.c.b16 %v2128, %v2127
  %v2875 = vpack.c.b16 %v2130, %v2129
  %v2876 = vpack.c.b16 %v2132, %v2131
  %v2877 = vpack.c.b16 %v2134, %v2133
  %v2878 = vpack.c.b16 %v2136, %v2135
  %v2879 = vpack.c.b16 %v2138, %v2137
  %v2880 = vpack.c.b16 %v2140, %v2139
  %v2881 = vpack.c.b16 %v2142, %v2141
  %v2882 = vpack.c.b16 %v2144, %v2143
  %v2883 = vpack.c.b16 %v2146, %v2145
  %v2884 = vpack.c.b16 %v2148, %v2147
  %v2885 = vpack.c.b16 %v2150, %v2149
  %v2886 = vpack.c.b16 %v2152, %v2151
  %v2887 = vpack.c.b16 %v2154, %v2153
  %v2888 = vpack.c.b16 %v2156, %v2155
  %v2889 = vpack.c.b16 %v2158, %v2157
  %v2890 = vpack.c.b16 %v2160, %v2159
  %v2891 = vpack.c.b16 %v2162, %v2161
  %v2892 = vpack.c.b16 %v2164, %v2163
  %v2893 = vpack.c.b16 %v2166, %v2165
  %v2894 = vpack.c.b16 %v2168, %v2167
  %v2895 = vpack.c.b16 %v2170, %v2169
  %v2896 = vpack.c.b16 %v2172, %v2171
  %v2897 = vpack.c.b16 %v2174, %v2173
  %v2898 = vpack.c.b16 %v2176, %v2175
  %v2899 = vpack.c.b16 %v2178, %v2177
  %v2900 = vpack.c.b16 %v2180, %v2179
  %v2901 = vpack.c.b16 %v2182, %v2181
  %v2902 = vpack.c.b16 %v2184, %v2183
  %v2903 = vpack.c.b16 %v2186, %v2185
  %v2904 = vpack.c.b16 %v2188, %v2187
  %v2905 = vpack.c.b16 %v2190, %v2189
  %v2906 = vpack.c.b16 %v2192, %v2191
  %v2907 = vpack.c.b16 %v2194, %v2193
  %v2908 = vpack.c.b16 %v2196, %v2195
  %v2909 = vpack.c.b16 %v2198, %v2197
  %v2910 = vpack.c.b16 %v2200, %v2199
  %v2911 = vpack.c.b16 %v2202, %v2201
  %v2912 = vpack.c.b16 %v2204, %v2203
  %v2913 = vpack.c.b16 %v2206, %v2205
  %v2914 = vpack.c.b16 %v2208, %v2207
  %v2915 = vpack.c.b16 %v2210, %v2209
  %v2916 = vpack.c.b16 %v2212, %v2211
  %v2917 = vpack.c.b16 %v2214, %v2213
  %v2918 = vpack.c.b16 %v2216, %v2215
  %v2919 = vpack.c.b16 %v2218, %v2217
  %v2920 = vpack.c.b16 %v2220, %v2219
  %v2921 = vpack.c.b16 %v2222, %v2221
  %v2922 = vpack.c.b16 %v2224, %v2223
  %v2923 = vpack.c.b16 %v2226, %v2225
  %v2924 = vpack.c.b16 %v2228, %v2227
  %v2925 = vpack.c.b16 %v2230, %v2229
  %v2926 = vpack.c.b16 %v2232, %v2231
  %v2927 = vpack.c.b16 %v2234, %v2233
  %v2928 = vpack.c.b16 %v2236, %v2235
  %v2929 = vpack.c.b16 %v2238, %v2237
  %v2930 = vpack.c.b16 %v2240, %v2239
  %v2931 = vpack.c.b16 %v2242, %v2241
  %v2932 = vpack.c.b16 %v2244, %v2243
  %v2933 = vpack.c.b16 %v2246, %v2245
  %v2934 = vpack.c.b16 %v2248, %v2247
  %v2935 = vpack.c.b16 %v2250, %v2249
  %v2936 = vpack.c.b16 %v2252, %v2251
  %v2937 = vpack.c.b16 %v2254, %v2253
  %v2938 = vpack.c.b16 %v2256, %v2255
  %v2939 = vpack.c.b16 %v2258, %v2257
  %v2940 = vpack.c.b16 %v2260, %v2259
  %v2941 = vpack.c.b16 %v2262, %v2261
  %v2942 = vpack.c.b16 %v2264, %v2263
  %v2943 = vpack.c.b16 %v2266, %v2265
  %v2944 = vpack.c.b16 %v2268, %v2267
  %v2945 = vpack.c.b16 %v2270, %v2269
  %v2946 = vpack.c.b16 %v2272, %v2271
  %v2947 = vpack.c.b16 %v2274, %v2273
  %v2948 = vpack.c.b16 %v2276, %v2275
  %v2949 = vpack.c.b16 %v2278, %v2277
  %v2950 = vpack.c.b16 %v2280, %v2279
  %v2951 = vpack.c.b16 %v2282, %v2281
  %v2952 = vpack.c.b16 %v2284, %v2283
  %v2953 = vpack.c.b16 %v2286, %v2285
  %v2954 = vpack.c.b16 %v2288, %v2287
  %v2955 = vpack.c.b16 %v2290, %v2289
  %v2956 = vpack.c.b16 %v2292, %v2291
  %v2957 = vpack.c.b16 %v2294, %v2293
  %v2958 = vpack.c.b16 %v2296, %v2295
  %v2959 = vpack.c.b16 %v2298, %v2297
  %v2960 = vpack.c.b16 %v2300, %v2299
  %v2961 = vpack.c.b16 %v2302, %v2301
  %v2962 = vpack.c.b16 %v2304, %v2303
  %v2963 = vpack.c.b16 %v2306, %v2305
  %v2964 = vpack.c.b16 %v2308, %v2307
  %v2965 = vpack.c.b16 %v2310, %v2309
  %v2966 = vpack.c.b16 %v2312, %v2311
  %v2967 = vpack.c.b16 %v2314, %v2313
  %v2968 = vpack.c.b16 %v2316, %v2315
  %v2969 = vpack.c.b16 %v2318, %v2317
  %v2970 = vpack.c.b16 %v2320, %v2319
  %v2971 = vpack.c.b16 %v2322, %v2321
  %v2972 = vpack.c.b16 %v2324, %v2323
  %v2973 = vpack.c.b16 %v2326, %v2325
  %v2974 = vpack.c.b16 %v2328, %v2327
  %v2975 = vpack.c.b16 %v2330, %v2329
  %v2976 = vpack.c.b16 %v2332, %v2331
  %v2977 = vpack.c.b16 %v2334, %v2333
  %v2978 = vpack.c.b16 %v2336, %v2335
  %v2979 = vpack.c.b16 %v2338, %v2337
  %v2980 = vpack.c.b16 %v2340, %v2339
  %v2981 = vpack.c.b16 %v2342, %v2341
  %v2982 = vpack.c.b16 %v2344, %v2343
  %v2983 = vpack.c.b16 %v2346, %v2345
  %v2984 = vpack.c.b16 %v2348, %v2347
  %v2985 = vpack.c.b16 %v2350, %v2349
  %v2986 = vpack.c.b16 %v2352, %v2351
  %v2987 = vpack.c.b16 %v2354, %v2353
  %v2988 = vpack.c.b16 %v2356, %v2355
  %v2989 = vpack.c.b16 %v2358, %v2357
  %v2990 = vpack.c.b16 %v2360, %v2359
  %v2991 = vpack.c.b16 %v2362, %v2361
  %v2992 = vpack.c.b16 %v2364, %v2363
  %v2993 = vpack.c.b16 %v2366, %v2365
  %v2994 = vpack.c.b16 %v2368, %v2367
  %v2995 = vpack.c.b16 %v2370, %v2369
  %v2996 = vpack.c.b16 %v2372, %v2371
  %v2997 = vpack.c.b16 %v2374, %v2373
  %v2998 = vpack.c.b16 %v2376, %v2375
  %v2999 = vpack.c.b16 %v2378, %v2377
  %v3000 = vpack.c.b16 %v2380, %v2379
  %v3001 = vpack.c.b16 %v2382, %v2381
  %v3002 = vpack.c.b16 %v2384, %v2383
  %v3003 = vpack.c.b16 %v2386, %v2385
  %v3004 = vpack.c.b16 %v2388, %v2387
  %v3005 = vpack.c.b16 %v2390, %v2389
  %v3006 = vpack.c.b16 %v2392, %v2391
  %v3007 = vpack.c.b16 %v2394, %v2393
  %v3008 = vpack.c.b16 %v2396, %v2395
  %v3009 = vpack.c.b16 %v2398, %v2397
  %v3010 = vpack.c.b16 %v2400, %v2399
  %v3011 = vpack.c.b16 %v2402, %v2401
  %v3012 = vpack.c.b16 %v2404, %v2403
  %v3013 = vpack.c.b16 %v2406, %v2405
  %v3014 = vpack.c.b16 %v2408, %v2407
  %v3015 = vpack.c.b16 %v2410, %v2409
  %v3016 = vpack.c.b16 %v2412, %v2411
  %v3017 = vpack.c.b16 %v2414, %v2413
  %v3018 = vpack.c.b16 %v2416, %v2415
  %v3019 = vpack.c.b16 %v2418, %v2417
  %v3020 = vpack.c.b16 %v2420, %v2419
  %v3021 = vpack.c.b16 %v2422, %v2421
  %v3022 = vpack.c.b16 %v2424, %v2423
  %v3023 = vpack.c.b16 %v2426, %v2425
  %v3024 = vpack.c.b16 %v2428, %v2427
  %v3025 = vpack.c.b16 %v2430, %v2429
  %v3026 = vpack.c.b16 %v2432, %v2431
  %v3027 = vpack.c.b16 %v2434, %v2433
  %v3028 = vpack.c.b16 %v2436, %v2435
  %v3029 = vpack.c.b16 %v2438, %v2437
  %v3030 = vpack.c.b16 %v2440, %v2439
  %v3031 = vpack.c.b16 %v2442, %v2441
  %v3032 = vpack.c.b16 %v2444, %v2443
  %v3033 = vpack.c.b16 %v2446, %v2445
  %v3034 = vpack.c.b16 %v2448, %v2447
  %v3035 = vpack.c.b16 %v2450, %v2449
  %v3036 = vpack.c.b16 %v2452, %v2451
  %v3037 = vpack.c.b16 %v2454, %v2453
  %v3038 = vpack.c.b16 %v2456, %v2455
  %v3039 = vpack.c.b16 %v2458, %v2457
  %v3040 = vpack.c.b16 %v2460, %v2459
  %v3041 = vpack.c.b16 %v2462, %v2461
  %v3042 = vpack.c.b16 %v2464, %v2463
  %v3043 = vpack.c.b16 %v2466, %v2465
  %v3044 = vpack.c.b16 %v2468, %v2467
  %v3045 = vpack.c.b16 %v2470, %v2469
  %v3046 = vpack.c.b16 %v2472, %v2471
  %v3047 = vpack.c.b16 %v2474, %v2473
  %v3048 = vpack.c.b16 %v2476, %v2475
  %v3049 = vpack.c.b16 %v2478, %v2477
  %v3050 = vpack.c.b16 %v2480, %v2479
  %v3051 = vpack.c.b16 %v2482, %v2481
  %v3052 = vpack.c.b16 %v2484, %v2483
  %v3053 = vpack.c.b16 %v2486, %v2485
  %v3054 = vpack.c.b16 %v2488, %v2487
  %v3055 = vpack.c.b16 %v2490, %v2489
  %v3056 = vpack.c.b16 %v2492, %v2491
  %v3057 = vpack.c.b16 %v2494, %v2493
  %v3058 = vpack.c.b16 %v2496, %v2495
  %v3059 = vpack.c.b16 %v2498, %v2497
  %v3060 = vpack.c.b16 %v2500, %v2499
  %v3061 = vpack.c.b16 %v2502, %v2501
  %v3062 = vpack.c.b16 %v2504, %v2503
  %v3063 = vpack.c.b16 %v2506, %v2505
  %v3064 = vpack.c.b16 %v2508, %v2507
  %v3065 = vpack.c.b16 %v2510, %v2509
  %v3066 = vpack.c.b16 %v2512, %v2511
  %v3067 = vpack.c.b16 %v2514, %v2513
  %v3068 = vpack.c.b16 %v2516, %v2515
  %v3069 = vpack.c.b16 %v2518, %v2517
  %v3070 = vpack.c.b16 %v2520, %v2519
  %v3071 = vpack.c.b16 %v2522, %v2521
  %v3072 = vpack.c.b16 %v2524, %v2523
  %v3073 = vpack.c.b16 %v2526, %v2525
  %v3074 = vpack.c.b16 %v2528, %v2527
  %v3075 = vpack.c.b16 %v2530, %v2529
  %v3076 = vpack.c.b16 %v2532, %v2531
  %v3077 = vpack.c.b16 %v2534, %v2533
  %v3078 = vpack.c.b16 %v2536, %v2535
  %v3079 = vpack.c.b16 %v2538, %v2537
  %v3080 = vpack.c.b16 %v2540, %v2539
  %v3081 = vpack.c.b16 %v2542, %v2541
  %v3082 = vpack.c.b16 %v2544, %v2543
  %v3083 = vpack.c.b16 %v2546, %v2545
  %v3084 = vpack.c.b16 %v2548, %v2547
  %v3085 = vpack.c.b16 %v2550, %v2549
  %v3086 = vpack.c.b16 %v2552, %v2551
  %v3087 = vpack.c.b16 %v2554, %v2553
  %v3088 = vpack.c.b16 %v2556, %v2555
  %v3089 = vpack.c.b16 %v2558, %v2557
  %v3090 = vpack.c.b16 %v2560, %v2559
  %v3091 = vpack.c.b16 %v2562, %v2561
  %v3092 = vpack.c.b16 %v2564, %v2563
  %v3093 = vpack.c.b16 %v2566, %v2565
  %v3094 = vpack.c.b16 %v2568, %v2567
  %v3095 = vpack.c.b16 %v2570, %v2569
  %v3096 = vpack.c.b16 %v2572, %v2571
  %v3097 = vpack.c.b16 %v2574, %v2573
  %v3098 = vpack.c.b16 %v2576, %v2575
  %v3099 = vpack.c.b16 %v2578, %v2577
  %v3100 = vpack.c.b16 %v2580, %v2579
  %v3101 = vpack.c.b16 %v2582, %v2581
  %v3102 = vpack.c.b16 %v2584, %v2583
  %v3103 = vpack.c.b16 %v2586, %v2585
  %v3104 = vpack.c.b16 %v2588, %v2587
  %v3105 = vpack.c.b16 %v2590, %v2589
  %v3106 = vpack.c.b16 %v2592, %v2591
  %v3107 = vpack.c.b16 %v2594, %v2593
  %v3108 = vpack.c.b16 %v2596, %v2595
  %v3109 = vpack.c.b16 %v2598, %v2597
  %v3110 = vpack.c.b16 %v2600, %v2599
  %v3111 = vpack.c.b16 %v2602, %v2601
  %v3112 = vpack.c.b16 %v2604, %v2603
  %v3113 = vpack.c.b16 %v2606, %v2605
  %v3114 = vpack.c.b16 %v2608, %v2607
  %v3115 = vpack.c.b16 %v2610, %v2609
  %v3116 = vpack.c.b16 %v2612, %v2611
  %v3117 = vpack.c.b16 %v2614, %v2613
  %v3118 = vpack.c.b16 %v2616, %v2615
  %v3119 = vpack.c.b16 %v2618, %v2617
  %v3120 = vpack.c.b16 %v2620, %v2619
  %v3121 = vpack.c.b16 %v2622, %v2621
  %v3122 = vpack.c.b16 %v2624, %v2623
  %v3123 = vpack.c.b16 %v2626, %v2625
  %v3124 = vpack.c.b16 %v2628, %v2627
  %v3125 = vpack.c.b16 %v2630, %v2629
  %v3126 = vpack.c.b16 %v2632, %v2631
  %v3127 = vpack.c.b16 %v2634, %v2633
  %v3128 = vpack.c.b16 %v2636, %v2635
  %v3129 = vpack.c.b16 %v2638, %v2637
  %v3130 = vpack.c.b16 %v2640, %v2639
  %v3131 = vpack.c.b16 %v2642, %v2641
  %v3132 = vpack.c.b16 %v2644, %v2643
  %v3133 = vpack.c.b16 %v2646, %v2645
  %v3134 = vpack.c.b16 %v2648, %v2647
  %v3135 = vpack.c.b16 %v2650, %v2649
  %v3136 = vpack.c.b16 %v2652, %v2651
  %v3137 = vpack.c.b16 %v2654, %v2653
  %v3138 = vpack.c.b16 %v2656, %v2655
  %v3139 = vpack.c.b16 %v2658, %v2657
  %v3140 = vpack.c.b16 %v2660, %v2659
  %v3141 = vpack.c.b16 %v2662, %v2661
  %v3142 = vpack.c.b16 %v2664, %v2663
  %v3143 = vpack.c.b16 %v2666, %v2665
  %v3144 = vpack.c.b16 %v2668, %v2667
  %v3145 = vpack.c.b16 %v2670, %v2669
  %v3146 = vpack.c.b16 %v2672, %v2671
  %v3147 = vpack.c.b16 %v2674, %v2673
  %v3148 = vpack.c.b16 %v2676, %v2675
  %v3149 = vpack.c.b16 %v2678, %v2677
  %v3150 = vpack.c.b16 %v2680, %v2679
  %v3151 = vpack.c.b16 %v2682, %v2681
  %v3152 = vpack.c.b16 %v2684, %v2683
  %v3153 = vpack.c.b16 %v2686, %v2685
  %v3154 = vpack.c.b16 %v2688, %v2687
  %v3155 = vpack.c.b16 %v2690, %v2689
  %v3156 = vpack.c.b16 %v2692, %v2691
  %v3157 = vpack.c.b16 %v2694, %v2693
  %v3158 = vpack.c.b16 %v2696, %v2695
  %v3159 = vpack.c.b16 %v2698, %v2697
  %v3160 = vpack.c.b16 %v2700, %v2699
  %v3161 = vpack.c.b16 %v2702, %v2701
  %v3162 = vpack.c.b16 %v2704, %v2703
  %v3163 = vpack.c.b16 %v2706, %v2705
  %v3164 = vpack.c.b16 %v2708, %v2707
  %v3165 = vpack.c.b16 %v2710, %v2709
  %v3166 = vpack.c.b16 %v2712, %v2711
  %v3167 = vpack.c.b16 %v2714, %v2713
  %v3168 = vpack.c.b16 %v2716, %v2715
  %v3169 = vpack.c.b16 %v2718, %v2717
  %v3170 = vpack.c.b16 %v2720, %v2719
  %v3171 = vpack.c.b16 %v2722, %v2721
  %v3172 = vpack.c.b16 %v2724, %v2723
  %v3173 = vpack.c.b16 %v2726, %v2725
  %v3174 = vpack.c.b16 %v2728, %v2727
  %v3175 = vpack.c.b16 %v2730, %v2729
  %v3176 = vpack.c.b16 %v2732, %v2731
  %v3177 = vpack.c.b16 %v2734, %v2733
  %v3178 = vpack.c.b16 %v2736, %v2735
  %v3179 = vpack.c.b16 %v2738, %v2737
  %v3180 = vpack.c.b16 %v2740, %v2739
  %v3181 = vpack.c.b16 %v2742, %v2741
  %v3182 = vpack.c.b16 %v2744, %v2743
  %v3183 = vpack.c.b16 %v2746, %v2745
  %v3184 = vpack.c.b16 %v2748, %v2747
  %v3185 = vpack.c.b16 %v2750, %v2749
  %v3186 = vpack.c.b16 %v2752, %v2751
  %v3187 = vpack.c.b16 %v2754, %v2753
  %v3188 = vpack.c.b16 %v2756, %v2755
  %v3189 = vpack.c.b16 %v2758, %v2757
  %v3190 = vpack.c.b16 %v2760, %v2759
  %v3191 = vpack.c.b16 %v2762, %v2761
  %v3192 = vpack.c.b16 %v2764, %v2763
  %v3193 = vpack.c.b16 %v2766, %v2765
  %v3194 = vpack.c.b16 %v2768, %v2767
  %v3195 = vpack.c.b16 %v2770, %v2769
  %v3196 = vpack.c.b16 %v2772, %v2771
  %v3197 = vpack.c.b16 %v2774, %v2773
  %v3198 = vpack.c.b16 %v2776, %v2775
  %v3199 = vpack.c.b16 %v2778, %v2777
  %v3200 = vpack.c.b16 %v2780, %v2779
  %v3201 = vpack.c.b16 %v2782, %v2781
  %v3202 = vpack.c.b16 %v2784, %v2783
  %v3203 = vpack.c.b16 %v2786, %v2785
  %v3204 = vpack.c.b16 %v2788, %v2787
  %v3205 = vpack.c.b16 %v2790, %v2789
  %v3206 = vpack.c.b16 %v2792, %v2791
  %v3207 = vpack.c.b16 %v2794, %v2793
  %v3208 = vpack.c.b16 %v2796, %v2795
  %v3209 = vpack.c.b16 %v2798, %v2797
  %v3210 = vpack.c.b16 %v2800, %v2799
  %v3211 = vpack.c.b16 %v2802, %v2801
  %v3212 = vpack.c.b16 %v2804, %v2803
  %v3213 = vpack.c.b16 %v2806, %v2805
  %v3214 = vpack.c.b16 %v2808, %v2807
  %v3215 = vpack.c.b16 %v2810, %v2809
  %v3216 = vpack.c.b16 %v2812, %v2811
  %v3217 = vpack.c.b16 %v2814, %v2813
  %v3218 = vpack.c.b16 %v2816, %v2815
  %v3219 = vpack.c.b16 %v2818, %v2817
  %v3220 = vpack.c.b16 %v2820, %v2819
  %3621 = vmatprep.subr.bf16.mxu0 0
  %3622 = vmatpush1.bf16.msra.mxu0 %v2821
  %3623 = vmatprep.subr.bf16.mxu0 0
  %3624 = vmatpush1.bf16.msra.mxu0 %v2822
  %3625 = vmatprep.subr.bf16.mxu0 0
  %3626 = vmatpush1.bf16.msra.mxu0 %v2823
  %3627 = vmatprep.subr.bf16.mxu0 0
  %3628 = vmatpush1.bf16.msra.mxu0 %v2824
  %3629 = vmatprep.subr.bf16.mxu0 0
  %3630 = vmatpush1.bf16.msra.mxu0 %v2825
  %3631 = vmatprep.subr.bf16.mxu0 0
  %3632 = vmatpush1.bf16.msra.mxu0 %v2826
  %3633 = vmatprep.subr.bf16.mxu0 0
  %3634 = vmatpush1.bf16.msra.mxu0 %v2827
  %3635 = vmatprep.subr.bf16.mxu0 0
  %3636 = vmatpush1.bf16.msra.mxu0 %v2828
  %3637 = vmatprep.subr.bf16.mxu0 0
  %3638 = vmatpush1.bf16.msra.mxu0 %v2829
  %3639 = vmatprep.subr.bf16.mxu0 0
  %3640 = vmatpush1.bf16.msra.mxu0 %v2830
  %3641 = vmatprep.subr.bf16.mxu0 0
  %3642 = vmatpush1.bf16.msra.mxu0 %v2831
  %3643 = vmatprep.subr.bf16.mxu0 0
  %3644 = vmatpush1.bf16.msra.mxu0 %v2832
  %3645 = vmatprep.subr.bf16.mxu0 0
  %3646 = vmatpush1.bf16.msra.mxu0 %v2833
  %3647 = vmatprep.subr.bf16.mxu0 0
  %3648 = vmatpush1.bf16.msra.mxu0 %v2834
  %3649 = vmatprep.subr.bf16.mxu0 0
  %3650 = vmatpush1.bf16.msra.mxu0 %v2835
  %3651 = vmatprep.subr.bf16.mxu0 0
  %3652 = vmatpush1.bf16.msra.mxu0 %v2836
  %3653 = vmatprep.mubr.bf16.mxu0 %v892
  %3654 = vmatmul.mubr.bf16.gmra.mrb[0].mxu0 %v878
  %v3655 = vpop.f32.mrb[0].mxu0
  %v3656 = vadd.f32 %v847, %v3655
  %v3657 = vpop.f32.mrb[0].mxu0
  %v3658 = vpop.f32.mrb[0].mxu0
  %v3659 = vpop.f32.mrb[0].mxu0
  %3660 = vdwg.mxu0
  %3661 = vmatprep.subr.bf16.mxu0 0
  %3662 = vmatpush1.bf16.msra.mxu0 %v2837
  %3663 = vmatprep.subr.bf16.mxu0 0
  %3664 = vmatpush1.bf16.msra.mxu0 %v2838
  %3665 = vmatprep.subr.bf16.mxu0 0
  %3666 = vmatpush1.bf16.msra.mxu0 %v2839
  %3667 = vmatprep.subr.bf16.mxu0 0
  %3668 = vmatpush1.bf16.msra.mxu0 %v2840
  %3669 = vmatprep.subr.bf16.mxu0 0
  %3670 = vmatpush1.bf16.msra.mxu0 %v2841
  %3671 = vmatprep.subr.bf16.mxu0 0
  %3672 = vmatpush1.bf16.msra.mxu0 %v2842
  %3673 = vmatprep.subr.bf16.mxu0 0
  %3674 = vmatpush1.bf16.msra.mxu0 %v2843
  %3675 = vmatprep.subr.bf16.mxu0 0
  %3676 = vmatpush1.bf16.msra.mxu0 %v2844
  %3677 = vmatprep.subr.bf16.mxu0 0
  %3678 = vmatpush1.bf16.msra.mxu0 %v2845
  %3679 = vmatprep.subr.bf16.mxu0 0
  %3680 = vmatpush1.bf16.msra.mxu0 %v2846
  %3681 = vmatprep.subr.bf16.mxu0 0
  %3682 = vmatpush1.bf16.msra.mxu0 %v2847
  %3683 = vmatprep.subr.bf16.mxu0 0
  %3684 = vmatpush1.bf16.msra.mxu0 %v2848
  %3685 = vmatprep.subr.bf16.mxu0 0
  %3686 = vmatpush1.bf16.msra.mxu0 %v2849
  %3687 = vmatprep.subr.bf16.mxu0 0
  %3688 = vmatpush1.bf16.msra.mxu0 %v2850
  %3689 = vmatprep.subr.bf16.mxu0 0
  %3690 = vmatpush1.bf16.msra.mxu0 %v2851
  %3691 = vmatprep.subr.bf16.mxu0 0
  %3692 = vmatpush1.bf16.msra.mxu0 %v2852
  %3693 = vmatprep.mubr.bf16.mxu0 %v902
  %3694 = vmatmul.mubr.bf16.gmra.mrb[0].mxu0 %v900
  %v3695 = vpop.f32.mrb[0].mxu0
  %v3696 = vadd.f32 %v3656, %v3695
  %v3697 = vpop.f32.mrb[0].mxu0
  %v3698 = vpop.f32.mrb[0].mxu0
  %v3699 = vpop.f32.mrb[0].mxu0
  %3700 = vdwg.mxu0
  %3701 = vmatprep.subr.bf16.mxu0 0
  %3702 = vmatpush1.bf16.msra.mxu0 %v2853
  %3703 = vmatprep.subr.bf16.mxu0 0
  %3704 = vmatpush1.bf16.msra.mxu0 %v2854
  %3705 = vmatprep.subr.bf16.mxu0 0
  %3706 = vmatpush1.bf16.msra.mxu0 %v2855
  %3707 = vmatprep.subr.bf16.mxu0 0
  %3708 = vmatpush1.bf16.msra.mxu0 %v2856
  %3709 = vmatprep.subr.bf16.mxu0 0
  %3710 = vmatpush1.bf16.msra.mxu0 %v2857
  %3711 = vmatprep.subr.bf16.mxu0 0
  %3712 = vmatpush1.bf16.msra.mxu0 %v2858
  %3713 = vmatprep.subr.bf16.mxu0 0
  %3714 = vmatpush1.bf16.msra.mxu0 %v2859
  %3715 = vmatprep.subr.bf16.mxu0 0
  %3716 = vmatpush1.bf16.msra.mxu0 %v2860
  %3717 = vmatprep.subr.bf16.mxu0 0
  %3718 = vmatpush1.bf16.msra.mxu0 %v2861
  %3719 = vmatprep.subr.bf16.mxu0 0
  %3720 = vmatpush1.bf16.msra.mxu0 %v2862
  %3721 = vmatprep.subr.bf16.mxu0 0
  %3722 = vmatpush1.bf16.msra.mxu0 %v2863
  %3723 = vmatprep.subr.bf16.mxu0 0
  %3724 = vmatpush1.bf16.msra.mxu0 %v2864
  %3725 = vmatprep.subr.bf16.mxu0 0
  %3726 = vmatpush1.bf16.msra.mxu0 %v2865
  %3727 = vmatprep.subr.bf16.mxu0 0
  %3728 = vmatpush1.bf16.msra.mxu0 %v2866
  %3729 = vmatprep.subr.bf16.mxu0 0
  %3730 = vmatpush1.bf16.msra.mxu0 %v2867
  %3731 = vmatprep.subr.bf16.mxu0 0
  %3732 = vmatpush1.bf16.msra.mxu0 %v2868
  %3733 = vmatprep.mubr.bf16.mxu0 %v899
  %3734 = vmatmul.mubr.bf16.gmra.mrb[0].mxu0 %v885
  %v3735 = vpop.f32.mrb[0].mxu0
  %v3736 = vadd.f32 %v3696, %v3735
  %v3737 = vpop.f32.mrb[0].mxu0
  %v3738 = vpop.f32.mrb[0].mxu0
  %v3739 = vpop.f32.mrb[0].mxu0
  %3740 = vdwg.mxu0
  %3741 = vmatprep.subr.bf16.mxu0 0
  %3742 = vmatpush1.bf16.msra.mxu0 %v2869
  %3743 = vmatprep.subr.bf16.mxu0 0
  %3744 = vmatpush1.bf16.msra.mxu0 %v2870
  %3745 = vmatprep.subr.bf16.mxu0 0
  %3746 = vmatpush1.bf16.msra.mxu0 %v2871
  %3747 = vmatprep.subr.bf16.mxu0 0
  %3748 = vmatpush1.bf16.msra.mxu0 %v2872
  %3749 = vmatprep.subr.bf16.mxu0 0
  %3750 = vmatpush1.bf16.msra.mxu0 %v2873
  %3751 = vmatprep.subr.bf16.mxu0 0
  %3752 = vmatpush1.bf16.msra.mxu0 %v2874
  %3753 = vmatprep.subr.bf16.mxu0 0
  %3754 = vmatpush1.bf16.msra.mxu0 %v2875
  %3755 = vmatprep.subr.bf16.mxu0 0
  %3756 = vmatpush1.bf16.msra.mxu0 %v2876
  %3757 = vmatprep.subr.bf16.mxu0 0
  %3758 = vmatpush1.bf16.msra.mxu0 %v2877
  %3759 = vmatprep.subr.bf16.mxu0 0
  %3760 = vmatpush1.bf16.msra.mxu0 %v2878
  %3761 = vmatprep.subr.bf16.mxu0 0
  %3762 = vmatpush1.bf16.msra.mxu0 %v2879
  %3763 = vmatprep.subr.bf16.mxu0 0
  %3764 = vmatpush1.bf16.msra.mxu0 %v2880
  %3765 = vmatprep.subr.bf16.mxu0 0
  %3766 = vmatpush1.bf16.msra.mxu0 %v2881
  %3767 = vmatprep.subr.bf16.mxu0 0
  %3768 = vmatpush1.bf16.msra.mxu0 %v2882
  %3769 = vmatprep.subr.bf16.mxu0 0
  %3770 = vmatpush1.bf16.msra.mxu0 %v2883
  %3771 = vmatprep.subr.bf16.mxu0 0
  %3772 = vmatpush1.bf16.msra.mxu0 %v2884
  %3773 = vmatprep.mubr.bf16.mxu0 %v903
  %3774 = vmatmul.mubr.bf16.gmra.mrb[0].mxu0 %v901
  %v3775 = vpop.f32.mrb[0].mxu0
  %v3776 = vadd.f32 %v3736, %v3775
  %v3777 = vpop.f32.mrb[0].mxu0
  %v3778 = vpop.f32.mrb[0].mxu0
  %v3779 = vpop.f32.mrb[0].mxu0
  %3780 = vdwg.mxu0
  %3781 = vmatprep.subr.bf16.mxu0 0
  %3782 = vmatpush1.bf16.msra.mxu0 %v2885
  %3783 = vmatprep.subr.bf16.mxu0 0
  %3784 = vmatpush1.bf16.msra.mxu0 %v2886
  %3785 = vmatprep.subr.bf16.mxu0 0
  %3786 = vmatpush1.bf16.msra.mxu0 %v2887
  %3787 = vmatprep.subr.bf16.mxu0 0
  %3788 = vmatpush1.bf16.msra.mxu0 %v2888
  %3789 = vmatprep.subr.bf16.mxu0 0
  %3790 = vmatpush1.bf16.msra.mxu0 %v2889
  %3791 = vmatprep.subr.bf16.mxu0 0
  %3792 = vmatpush1.bf16.msra.mxu0 %v2890
  %3793 = vmatprep.subr.bf16.mxu0 0
  %3794 = vmatpush1.bf16.msra.mxu0 %v2891
  %3795 = vmatprep.subr.bf16.mxu0 0
  %3796 = vmatpush1.bf16.msra.mxu0 %v2892
  %3797 = vmatprep.subr.bf16.mxu0 0
  %3798 = vmatpush1.bf16.msra.mxu0 %v2893
  %3799 = vmatprep.subr.bf16.mxu0 0
  %3800 = vmatpush1.bf16.msra.mxu0 %v2894
  %3801 = vmatprep.subr.bf16.mxu0 0
  %3802 = vmatpush1.bf16.msra.mxu0 %v2895
  %3803 = vmatprep.subr.bf16.mxu0 0
  %3804 = vmatpush1.bf16.msra.mxu0 %v2896
  %3805 = vmatprep.subr.bf16.mxu0 0
  %3806 = vmatpush1.bf16.msra.mxu0 %v2897
  %3807 = vmatprep.subr.bf16.mxu0 0
  %3808 = vmatpush1.bf16.msra.mxu0 %v2898
  %3809 = vmatprep.subr.bf16.mxu0 0
  %3810 = vmatpush1.bf16.msra.mxu0 %v2899
  %3811 = vmatprep.subr.bf16.mxu0 0
  %3812 = vmatpush1.bf16.msra.mxu0 %v2900
  %3813 = vmatprep.mubr.bf16.mxu0 %v941
  %3814 = vmatmul.mubr.bf16.gmra.mrb[0].mxu0 %v927
  %v3815 = vpop.f32.mrb[0].mxu0
  %v3816 = vadd.f32 %v3776, %v3815
  %v3817 = vpop.f32.mrb[0].mxu0
  %v3818 = vpop.f32.mrb[0].mxu0
  %v3819 = vpop.f32.mrb[0].mxu0
  %3820 = vdwg.mxu0
  %3821 = vmatprep.subr.bf16.mxu0 0
  %3822 = vmatpush1.bf16.msra.mxu0 %v2901
  %3823 = vmatprep.subr.bf16.mxu0 0
  %3824 = vmatpush1.bf16.msra.mxu0 %v2902
  %3825 = vmatprep.subr.bf16.mxu0 0
  %3826 = vmatpush1.bf16.msra.mxu0 %v2903
  %3827 = vmatprep.subr.bf16.mxu0 0
  %3828 = vmatpush1.bf16.msra.mxu0 %v2904
  %3829 = vmatprep.subr.bf16.mxu0 0
  %3830 = vmatpush1.bf16.msra.mxu0 %v2905
  %3831 = vmatprep.subr.bf16.mxu0 0
  %3832 = vmatpush1.bf16.msra.mxu0 %v2906
  %3833 = vmatprep.subr.bf16.mxu0 0
  %3834 = vmatpush1.bf16.msra.mxu0 %v2907
  %3835 = vmatprep.subr.bf16.mxu0 0
  %3836 = vmatpush1.bf16.msra.mxu0 %v2908
  %3837 = vmatprep.subr.bf16.mxu0 0
  %3838 = vmatpush1.bf16.msra.mxu0 %v2909
  %3839 = vmatprep.subr.bf16.mxu0 0
  %3840 = vmatpush1.bf16.msra.mxu0 %v2910
  %3841 = vmatprep.subr.bf16.mxu0 0
  %3842 = vmatpush1.bf16.msra.mxu0 %v2911
  %3843 = vmatprep.subr.bf16.mxu0 0
  %3844 = vmatpush1.bf16.msra.mxu0 %v2912
  %3845 = vmatprep.subr.bf16.mxu0 0
  %3846 = vmatpush1.bf16.msra.mxu0 %v2913
  %3847 = vmatprep.subr.bf16.mxu0 0
  %3848 = vmatpush1.bf16.msra.mxu0 %v2914
  %3849 = vmatprep.subr.bf16.mxu0 0
  %3850 = vmatpush1.bf16.msra.mxu0 %v2915
  %3851 = vmatprep.subr.bf16.mxu0 0
  %3852 = vmatpush1.bf16.msra.mxu0 %v2916
  %3853 = vmatprep.mubr.bf16.mxu0 %v951
  %3854 = vmatmul.mubr.bf16.gmra.mrb[0].mxu0 %v949
  %v3855 = vpop.f32.mrb[0].mxu0
  %v3856 = vadd.f32 %v3816, %v3855
  %v3857 = vpop.f32.mrb[0].mxu0
  %v3858 = vpop.f32.mrb[0].mxu0
  %v3859 = vpop.f32.mrb[0].mxu0
  %3860 = vdwg.mxu0
  %3861 = vmatprep.subr.bf16.mxu0 0
  %3862 = vmatpush1.bf16.msra.mxu0 %v2917
  %3863 = vmatprep.subr.bf16.mxu0 0
  %3864 = vmatpush1.bf16.msra.mxu0 %v2918
  %3865 = vmatprep.subr.bf16.mxu0 0
  %3866 = vmatpush1.bf16.msra.mxu0 %v2919
  %3867 = vmatprep.subr.bf16.mxu0 0
  %3868 = vmatpush1.bf16.msra.mxu0 %v2920
  %3869 = vmatprep.subr.bf16.mxu0 0
  %3870 = vmatpush1.bf16.msra.mxu0 %v2921
  %3871 = vmatprep.subr.bf16.mxu0 0
  %3872 = vmatpush1.bf16.msra.mxu0 %v2922
  %3873 = vmatprep.subr.bf16.mxu0 0
  %3874 = vmatpush1.bf16.msra.mxu0 %v2923
  %3875 = vmatprep.subr.bf16.mxu0 0
  %3876 = vmatpush1.bf16.msra.mxu0 %v2924
  %3877 = vmatprep.subr.bf16.mxu0 0
  %3878 = vmatpush1.bf16.msra.mxu0 %v2925
  %3879 = vmatprep.subr.bf16.mxu0 0
  %3880 = vmatpush1.bf16.msra.mxu0 %v2926
  %3881 = vmatprep.subr.bf16.mxu0 0
  %3882 = vmatpush1.bf16.msra.mxu0 %v2927
  %3883 = vmatprep.subr.bf16.mxu0 0
  %3884 = vmatpush1.bf16.msra.mxu0 %v2928
  %3885 = vmatprep.subr.bf16.mxu0 0
  %3886 = vmatpush1.bf16.msra.mxu0 %v2929
  %3887 = vmatprep.subr.bf16.mxu0 0
  %3888 = vmatpush1.bf16.msra.mxu0 %v2930
  %3889 = vmatprep.subr.bf16.mxu0 0
  %3890 = vmatpush1.bf16.msra.mxu0 %v2931
  %3891 = vmatprep.subr.bf16.mxu0 0
  %3892 = vmatpush1.bf16.msra.mxu0 %v2932
  %3893 = vmatprep.mubr.bf16.mxu0 %v948
  %3894 = vmatmul.mubr.bf16.gmra.mrb[0].mxu0 %v934
  %v3895 = vpop.f32.mrb[0].mxu0
  %v3896 = vadd.f32 %v3856, %v3895
  %v3897 = vpop.f32.mrb[0].mxu0
  %v3898 = vpop.f32.mrb[0].mxu0
  %v3899 = vpop.f32.mrb[0].mxu0
  %3900 = vdwg.mxu0
  %3901 = vmatprep.subr.bf16.mxu0 0
  %3902 = vmatpush1.bf16.msra.mxu0 %v2933
  %3903 = vmatprep.subr.bf16.mxu0 0
  %3904 = vmatpush1.bf16.msra.mxu0 %v2934
  %3905 = vmatprep.subr.bf16.mxu0 0
  %3906 = vmatpush1.bf16.msra.mxu0 %v2935
  %3907 = vmatprep.subr.bf16.mxu0 0
  %3908 = vmatpush1.bf16.msra.mxu0 %v2936
  %3909 = vmatprep.subr.bf16.mxu0 0
  %3910 = vmatpush1.bf16.msra.mxu0 %v2937
  %3911 = vmatprep.subr.bf16.mxu0 0
  %3912 = vmatpush1.bf16.msra.mxu0 %v2938
  %3913 = vmatprep.subr.bf16.mxu0 0
  %3914 = vmatpush1.bf16.msra.mxu0 %v2939
  %3915 = vmatprep.subr.bf16.mxu0 0
  %3916 = vmatpush1.bf16.msra.mxu0 %v2940
  %3917 = vmatprep.subr.bf16.mxu0 0
  %3918 = vmatpush1.bf16.msra.mxu0 %v2941
  %3919 = vmatprep.subr.bf16.mxu0 0
  %3920 = vmatpush1.bf16.msra.mxu0 %v2942
  %3921 = vmatprep.subr.bf16.mxu0 0
  %3922 = vmatpush1.bf16.msra.mxu0 %v2943
  %3923 = vmatprep.subr.bf16.mxu0 0
  %3924 = vmatpush1.bf16.msra.mxu0 %v2944
  %3925 = vmatprep.subr.bf16.mxu0 0
  %3926 = vmatpush1.bf16.msra.mxu0 %v2945
  %3927 = vmatprep.subr.bf16.mxu0 0
  %3928 = vmatpush1.bf16.msra.mxu0 %v2946
  %3929 = vmatprep.subr.bf16.mxu0 0
  %3930 = vmatpush1.bf16.msra.mxu0 %v2947
  %3931 = vmatprep.subr.bf16.mxu0 0
  %3932 = vmatpush1.bf16.msra.mxu0 %v2948
  %3933 = vmatprep.mubr.bf16.mxu0 %v952
  %3934 = vmatmul.mubr.bf16.gmra.mrb[0].mxu0 %v950
  %v3935 = vpop.f32.mrb[0].mxu0
  %v3936 = vadd.f32 %v3896, %v3935
  %v3937 = vpop.f32.mrb[0].mxu0
  %v3938 = vpop.f32.mrb[0].mxu0
  %v3939 = vpop.f32.mrb[0].mxu0
  %3940 = vdwg.mxu0
  %3941 = vmatprep.subr.bf16.mxu0 0
  %3942 = vmatpush1.bf16.msra.mxu0 %v2949
  %3943 = vmatprep.subr.bf16.mxu0 0
  %3944 = vmatpush1.bf16.msra.mxu0 %v2950
  %3945 = vmatprep.subr.bf16.mxu0 0
  %3946 = vmatpush1.bf16.msra.mxu0 %v2951
  %3947 = vmatprep.subr.bf16.mxu0 0
  %3948 = vmatpush1.bf16.msra.mxu0 %v2952
  %3949 = vmatprep.subr.bf16.mxu0 0
  %3950 = vmatpush1.bf16.msra.mxu0 %v2953
  %3951 = vmatprep.subr.bf16.mxu0 0
  %3952 = vmatpush1.bf16.msra.mxu0 %v2954
  %3953 = vmatprep.subr.bf16.mxu0 0
  %3954 = vmatpush1.bf16.msra.mxu0 %v2955
  %3955 = vmatprep.subr.bf16.mxu0 0
  %3956 = vmatpush1.bf16.msra.mxu0 %v2956
  %3957 = vmatprep.subr.bf16.mxu0 0
  %3958 = vmatpush1.bf16.msra.mxu0 %v2957
  %3959 = vmatprep.subr.bf16.mxu0 0
  %3960 = vmatpush1.bf16.msra.mxu0 %v2958
  %3961 = vmatprep.subr.bf16.mxu0 0
  %3962 = vmatpush1.bf16.msra.mxu0 %v2959
  %3963 = vmatprep.subr.bf16.mxu0 0
  %3964 = vmatpush1.bf16.msra.mxu0 %v2960
  %3965 = vmatprep.subr.bf16.mxu0 0
  %3966 = vmatpush1.bf16.msra.mxu0 %v2961
  %3967 = vmatprep.subr.bf16.mxu0 0
  %3968 = vmatpush1.bf16.msra.mxu0 %v2962
  %3969 = vmatprep.subr.bf16.mxu0 0
  %3970 = vmatpush1.bf16.msra.mxu0 %v2963
  %3971 = vmatprep.subr.bf16.mxu0 0
  %3972 = vmatpush1.bf16.msra.mxu0 %v2964
  %3973 = vmatprep.mubr.bf16.mxu0 %v990
  %3974 = vmatmul.mubr.bf16.gmra.mrb[0].mxu0 %v976
  %v3975 = vpop.f32.mrb[0].mxu0
  %v3976 = vadd.f32 %v3936, %v3975
  %v3977 = vpop.f32.mrb[0].mxu0
  %v3978 = vpop.f32.mrb[0].mxu0
  %v3979 = vpop.f32.mrb[0].mxu0
  %3980 = vdwg.mxu0
  %3981 = vmatprep.subr.bf16.mxu0 0
  %3982 = vmatpush1.bf16.msra.mxu0 %v2965
  %3983 = vmatprep.subr.bf16.mxu0 0
  %3984 = vmatpush1.bf16.msra.mxu0 %v2966
  %3985 = vmatprep.subr.bf16.mxu0 0
  %3986 = vmatpush1.bf16.msra.mxu0 %v2967
  %3987 = vmatprep.subr.bf16.mxu0 0
  %3988 = vmatpush1.bf16.msra.mxu0 %v2968
  %3989 = vmatprep.subr.bf16.mxu0 0
  %3990 = vmatpush1.bf16.msra.mxu0 %v2969
  %3991 = vmatprep.subr.bf16.mxu0 0
  %3992 = vmatpush1.bf16.msra.mxu0 %v2970
  %3993 = vmatprep.subr.bf16.mxu0 0
  %3994 = vmatpush1.bf16.msra.mxu0 %v2971
  %3995 = vmatprep.subr.bf16.mxu0 0
  %3996 = vmatpush1.bf16.msra.mxu0 %v2972
  %3997 = vmatprep.subr.bf16.mxu0 0
  %3998 = vmatpush1.bf16.msra.mxu0 %v2973
  %3999 = vmatprep.subr.bf16.mxu0 0
  %4000 = vmatpush1.bf16.msra.mxu0 %v2974
  %4001 = vmatprep.subr.bf16.mxu0 0
  %4002 = vmatpush1.bf16.msra.mxu0 %v2975
  %4003 = vmatprep.subr.bf16.mxu0 0
  %4004 = vmatpush1.bf16.msra.mxu0 %v2976
  %4005 = vmatprep.subr.bf16.mxu0 0
  %4006 = vmatpush1.bf16.msra.mxu0 %v2977
  %4007 = vmatprep.subr.bf16.mxu0 0
  %4008 = vmatpush1.bf16.msra.mxu0 %v2978
  %4009 = vmatprep.subr.bf16.mxu0 0
  %4010 = vmatpush1.bf16.msra.mxu0 %v2979
  %4011 = vmatprep.subr.bf16.mxu0 0
  %4012 = vmatpush1.bf16.msra.mxu0 %v2980
  %4013 = vmatprep.mubr.bf16.mxu0 %v1000
  %4014 = vmatmul.mubr.bf16.gmra.mrb[0].mxu0 %v998
  %v4015 = vpop.f32.mrb[0].mxu0
  %v4016 = vadd.f32 %v3976, %v4015
  %v4017 = vpop.f32.mrb[0].mxu0
  %v4018 = vpop.f32.mrb[0].mxu0
  %v4019 = vpop.f32.mrb[0].mxu0
  %4020 = vdwg.mxu0
  %4021 = vmatprep.subr.bf16.mxu0 0
  %4022 = vmatpush1.bf16.msra.mxu0 %v2981
  %4023 = vmatprep.subr.bf16.mxu0 0
  %4024 = vmatpush1.bf16.msra.mxu0 %v2982
  %4025 = vmatprep.subr.bf16.mxu0 0
  %4026 = vmatpush1.bf16.msra.mxu0 %v2983
  %4027 = vmatprep.subr.bf16.mxu0 0
  %4028 = vmatpush1.bf16.msra.mxu0 %v2984
  %4029 = vmatprep.subr.bf16.mxu0 0
  %4030 = vmatpush1.bf16.msra.mxu0 %v2985
  %4031 = vmatprep.subr.bf16.mxu0 0
  %4032 = vmatpush1.bf16.msra.mxu0 %v2986
  %4033 = vmatprep.subr.bf16.mxu0 0
  %4034 = vmatpush1.bf16.msra.mxu0 %v2987
  %4035 = vmatprep.subr.bf16.mxu0 0
  %4036 = vmatpush1.bf16.msra.mxu0 %v2988
  %4037 = vmatprep.subr.bf16.mxu0 0
  %4038 = vmatpush1.bf16.msra.mxu0 %v2989
  %4039 = vmatprep.subr.bf16.mxu0 0
  %4040 = vmatpush1.bf16.msra.mxu0 %v2990
  %4041 = vmatprep.subr.bf16.mxu0 0
  %4042 = vmatpush1.bf16.msra.mxu0 %v2991
  %4043 = vmatprep.subr.bf16.mxu0 0
  %4044 = vmatpush1.bf16.msra.mxu0 %v2992
  %4045 = vmatprep.subr.bf16.mxu0 0
  %4046 = vmatpush1.bf16.msra.mxu0 %v2993
  %4047 = vmatprep.subr.bf16.mxu0 0
  %4048 = vmatpush1.bf16.msra.mxu0 %v2994
  %4049 = vmatprep.subr.bf16.mxu0 0
  %4050 = vmatpush1.bf16.msra.mxu0 %v2995
  %4051 = vmatprep.subr.bf16.mxu0 0
  %4052 = vmatpush1.bf16.msra.mxu0 %v2996
  %4053 = vmatprep.mubr.bf16.mxu0 %v997
  %4054 = vmatmul.mubr.bf16.gmra.mrb[0].mxu0 %v983
  %v4055 = vpop.f32.mrb[0].mxu0
  %v4056 = vadd.f32 %v4016, %v4055
  %v4057 = vpop.f32.mrb[0].mxu0
  %v4058 = vpop.f32.mrb[0].mxu0
  %v4059 = vpop.f32.mrb[0].mxu0
  %4060 = vdwg.mxu0
  %4061 = vmatprep.subr.bf16.mxu0 0
  %4062 = vmatpush1.bf16.msra.mxu0 %v2997
  %4063 = vmatprep.subr.bf16.mxu0 0
  %4064 = vmatpush1.bf16.msra.mxu0 %v2998
  %4065 = vmatprep.subr.bf16.mxu0 0
  %4066 = vmatpush1.bf16.msra.mxu0 %v2999
  %4067 = vmatprep.subr.bf16.mxu0 0
  %4068 = vmatpush1.bf16.msra.mxu0 %v3000
  %4069 = vmatprep.subr.bf16.mxu0 0
  %4070 = vmatpush1.bf16.msra.mxu0 %v3001
  %4071 = vmatprep.subr.bf16.mxu0 0
  %4072 = vmatpush1.bf16.msra.mxu0 %v3002
  %4073 = vmatprep.subr.bf16.mxu0 0
  %4074 = vmatpush1.bf16.msra.mxu0 %v3003
  %4075 = vmatprep.subr.bf16.mxu0 0
  %4076 = vmatpush1.bf16.msra.mxu0 %v3004
  %4077 = vmatprep.subr.bf16.mxu0 0
  %4078 = vmatpush1.bf16.msra.mxu0 %v3005
  %4079 = vmatprep.subr.bf16.mxu0 0
  %4080 = vmatpush1.bf16.msra.mxu0 %v3006
  %4081 = vmatprep.subr.bf16.mxu0 0
  %4082 = vmatpush1.bf16.msra.mxu0 %v3007
  %4083 = vmatprep.subr.bf16.mxu0 0
  %4084 = vmatpush1.bf16.msra.mxu0 %v3008
  %4085 = vmatprep.subr.bf16.mxu0 0
  %4086 = vmatpush1.bf16.msra.mxu0 %v3009
  %4087 = vmatprep.subr.bf16.mxu0 0
  %4088 = vmatpush1.bf16.msra.mxu0 %v3010
  %4089 = vmatprep.subr.bf16.mxu0 0
  %4090 = vmatpush1.bf16.msra.mxu0 %v3011
  %4091 = vmatprep.subr.bf16.mxu0 0
  %4092 = vmatpush1.bf16.msra.mxu0 %v3012
  %4093 = vmatprep.mubr.bf16.mxu0 %v1001
  %4094 = vmatmul.mubr.bf16.gmra.mrb[0].mxu0 %v999
  %v4095 = vpop.f32.mrb[0].mxu0
  %v4096 = vadd.f32 %v4056, %v4095
  %v4097 = vpop.f32.mrb[0].mxu0
  %v4098 = vpop.f32.mrb[0].mxu0
  %v4099 = vpop.f32.mrb[0].mxu0
  %4100 = vdwg.mxu0
  %4101 = vmatprep.subr.bf16.mxu0 0
  %4102 = vmatpush1.bf16.msra.mxu0 %v3013
  %4103 = vmatprep.subr.bf16.mxu0 0
  %4104 = vmatpush1.bf16.msra.mxu0 %v3014
  %4105 = vmatprep.subr.bf16.mxu0 0
  %4106 = vmatpush1.bf16.msra.mxu0 %v3015
  %4107 = vmatprep.subr.bf16.mxu0 0
  %4108 = vmatpush1.bf16.msra.mxu0 %v3016
  %4109 = vmatprep.subr.bf16.mxu0 0
  %4110 = vmatpush1.bf16.msra.mxu0 %v3017
  %4111 = vmatprep.subr.bf16.mxu0 0
  %4112 = vmatpush1.bf16.msra.mxu0 %v3018
  %4113 = vmatprep.subr.bf16.mxu0 0
  %4114 = vmatpush1.bf16.msra.mxu0 %v3019
  %4115 = vmatprep.subr.bf16.mxu0 0
  %4116 = vmatpush1.bf16.msra.mxu0 %v3020
  %4117 = vmatprep.subr.bf16.mxu0 0
  %4118 = vmatpush1.bf16.msra.mxu0 %v3021
  %4119 = vmatprep.subr.bf16.mxu0 0
  %4120 = vmatpush1.bf16.msra.mxu0 %v3022
  %4121 = vmatprep.subr.bf16.mxu0 0
  %4122 = vmatpush1.bf16.msra.mxu0 %v3023
  %4123 = vmatprep.subr.bf16.mxu0 0
  %4124 = vmatpush1.bf16.msra.mxu0 %v3024
  %4125 = vmatprep.subr.bf16.mxu0 0
  %4126 = vmatpush1.bf16.msra.mxu0 %v3025
  %4127 = vmatprep.subr.bf16.mxu0 0
  %4128 = vmatpush1.bf16.msra.mxu0 %v3026
  %4129 = vmatprep.subr.bf16.mxu0 0
  %4130 = vmatpush1.bf16.msra.mxu0 %v3027
  %4131 = vmatprep.subr.bf16.mxu0 0
  %4132 = vmatpush1.bf16.msra.mxu0 %v3028
  %4133 = vmatprep.mubr.bf16.mxu0 %v1039
  %4134 = vmatmul.mubr.bf16.gmra.mrb[0].mxu0 %v1025
  %v4135 = vpop.f32.mrb[0].mxu0
  %v4136 = vadd.f32 %v4096, %v4135
  %v4137 = vpop.f32.mrb[0].mxu0
  %v4138 = vpop.f32.mrb[0].mxu0
  %v4139 = vpop.f32.mrb[0].mxu0
  %4140 = vdwg.mxu0
  %4141 = vmatprep.subr.bf16.mxu0 0
  %4142 = vmatpush1.bf16.msra.mxu0 %v3029
  %4143 = vmatprep.subr.bf16.mxu0 0
  %4144 = vmatpush1.bf16.msra.mxu0 %v3030
  %4145 = vmatprep.subr.bf16.mxu0 0
  %4146 = vmatpush1.bf16.msra.mxu0 %v3031
  %4147 = vmatprep.subr.bf16.mxu0 0
  %4148 = vmatpush1.bf16.msra.mxu0 %v3032
  %4149 = vmatprep.subr.bf16.mxu0 0
  %4150 = vmatpush1.bf16.msra.mxu0 %v3033
  %4151 = vmatprep.subr.bf16.mxu0 0
  %4152 = vmatpush1.bf16.msra.mxu0 %v3034
  %4153 = vmatprep.subr.bf16.mxu0 0
  %4154 = vmatpush1.bf16.msra.mxu0 %v3035
  %4155 = vmatprep.subr.bf16.mxu0 0
  %4156 = vmatpush1.bf16.msra.mxu0 %v3036
  %4157 = vmatprep.subr.bf16.mxu0 0
  %4158 = vmatpush1.bf16.msra.mxu0 %v3037
  %4159 = vmatprep.subr.bf16.mxu0 0
  %4160 = vmatpush1.bf16.msra.mxu0 %v3038
  %4161 = vmatprep.subr.bf16.mxu0 0
  %4162 = vmatpush1.bf16.msra.mxu0 %v3039
  %4163 = vmatprep.subr.bf16.mxu0 0
  %4164 = vmatpush1.bf16.msra.mxu0 %v3040
  %4165 = vmatprep.subr.bf16.mxu0 0
  %4166 = vmatpush1.bf16.msra.mxu0 %v3041
  %4167 = vmatprep.subr.bf16.mxu0 0
  %4168 = vmatpush1.bf16.msra.mxu0 %v3042
  %4169 = vmatprep.subr.bf16.mxu0 0
  %4170 = vmatpush1.bf16.msra.mxu0 %v3043
  %4171 = vmatprep.subr.bf16.mxu0 0
  %4172 = vmatpush1.bf16.msra.mxu0 %v3044
  %4173 = vmatprep.mubr.bf16.mxu0 %v1049
  %4174 = vmatmul.mubr.bf16.gmra.mrb[0].mxu0 %v1047
  %v4175 = vpop.f32.mrb[0].mxu0
  %v4176 = vadd.f32 %v4136, %v4175
  %v4177 = vpop.f32.mrb[0].mxu0
  %v4178 = vpop.f32.mrb[0].mxu0
  %v4179 = vpop.f32.mrb[0].mxu0
  %4180 = vdwg.mxu0
  %4181 = vmatprep.subr.bf16.mxu0 0
  %4182 = vmatpush1.bf16.msra.mxu0 %v3045
  %4183 = vmatprep.subr.bf16.mxu0 0
  %4184 = vmatpush1.bf16.msra.mxu0 %v3046
  %4185 = vmatprep.subr.bf16.mxu0 0
  %4186 = vmatpush1.bf16.msra.mxu0 %v3047
  %4187 = vmatprep.subr.bf16.mxu0 0
  %4188 = vmatpush1.bf16.msra.mxu0 %v3048
  %4189 = vmatprep.subr.bf16.mxu0 0
  %4190 = vmatpush1.bf16.msra.mxu0 %v3049
  %4191 = vmatprep.subr.bf16.mxu0 0
  %4192 = vmatpush1.bf16.msra.mxu0 %v3050
  %4193 = vmatprep.subr.bf16.mxu0 0
  %4194 = vmatpush1.bf16.msra.mxu0 %v3051
  %4195 = vmatprep.subr.bf16.mxu0 0
  %4196 = vmatpush1.bf16.msra.mxu0 %v3052
  %4197 = vmatprep.subr.bf16.mxu0 0
  %4198 = vmatpush1.bf16.msra.mxu0 %v3053
  %4199 = vmatprep.subr.bf16.mxu0 0
  %4200 = vmatpush1.bf16.msra.mxu0 %v3054
  %4201 = vmatprep.subr.bf16.mxu0 0
  %4202 = vmatpush1.bf16.msra.mxu0 %v3055
  %4203 = vmatprep.subr.bf16.mxu0 0
  %4204 = vmatpush1.bf16.msra.mxu0 %v3056
  %4205 = vmatprep.subr.bf16.mxu0 0
  %4206 = vmatpush1.bf16.msra.mxu0 %v3057
  %4207 = vmatprep.subr.bf16.mxu0 0
  %4208 = vmatpush1.bf16.msra.mxu0 %v3058
  %4209 = vmatprep.subr.bf16.mxu0 0
  %4210 = vmatpush1.bf16.msra.mxu0 %v3059
  %4211 = vmatprep.subr.bf16.mxu0 0
  %4212 = vmatpush1.bf16.msra.mxu0 %v3060
  %4213 = vmatprep.mubr.bf16.mxu0 %v1046
  %4214 = vmatmul.mubr.bf16.gmra.mrb[0].mxu0 %v1032
  %v4215 = vpop.f32.mrb[0].mxu0
  %v4216 = vadd.f32 %v4176, %v4215
  %v4217 = vpop.f32.mrb[0].mxu0
  %v4218 = vpop.f32.mrb[0].mxu0
  %v4219 = vpop.f32.mrb[0].mxu0
  %4220 = vdwg.mxu0
  %4221 = vmatprep.subr.bf16.mxu0 0
  %4222 = vmatpush1.bf16.msra.mxu0 %v3061
  %4223 = vmatprep.subr.bf16.mxu0 0
  %4224 = vmatpush1.bf16.msra.mxu0 %v3062
  %4225 = vmatprep.subr.bf16.mxu0 0
  %4226 = vmatpush1.bf16.msra.mxu0 %v3063
  %4227 = vmatprep.subr.bf16.mxu0 0
  %4228 = vmatpush1.bf16.msra.mxu0 %v3064
  %4229 = vmatprep.subr.bf16.mxu0 0
  %4230 = vmatpush1.bf16.msra.mxu0 %v3065
  %4231 = vmatprep.subr.bf16.mxu0 0
  %4232 = vmatpush1.bf16.msra.mxu0 %v3066
  %4233 = vmatprep.subr.bf16.mxu0 0
  %4234 = vmatpush1.bf16.msra.mxu0 %v3067
  %4235 = vmatprep.subr.bf16.mxu0 0
  %4236 = vmatpush1.bf16.msra.mxu0 %v3068
  %4237 = vmatprep.subr.bf16.mxu0 0
  %4238 = vmatpush1.bf16.msra.mxu0 %v3069
  %4239 = vmatprep.subr.bf16.mxu0 0
  %4240 = vmatpush1.bf16.msra.mxu0 %v3070
  %4241 = vmatprep.subr.bf16.mxu0 0
  %4242 = vmatpush1.bf16.msra.mxu0 %v3071
  %4243 = vmatprep.subr.bf16.mxu0 0
  %4244 = vmatpush1.bf16.msra.mxu0 %v3072
  %4245 = vmatprep.subr.bf16.mxu0 0
  %4246 = vmatpush1.bf16.msra.mxu0 %v3073
  %4247 = vmatprep.subr.bf16.mxu0 0
  %4248 = vmatpush1.bf16.msra.mxu0 %v3074
  %4249 = vmatprep.subr.bf16.mxu0 0
  %4250 = vmatpush1.bf16.msra.mxu0 %v3075
  %4251 = vmatprep.subr.bf16.mxu0 0
  %4252 = vmatpush1.bf16.msra.mxu0 %v3076
  %4253 = vmatprep.mubr.bf16.mxu0 %v1050
  %4254 = vmatmul.mubr.bf16.gmra.mrb[0].mxu0 %v1048
  %v4255 = vpop.f32.mrb[0].mxu0
  %v4256 = vadd.f32 %v4216, %v4255
  %v4257 = vpop.f32.mrb[0].mxu0
  %v4258 = vpop.f32.mrb[0].mxu0
  %v4259 = vpop.f32.mrb[0].mxu0
  %4260 = vdwg.mxu0
  %4261 = vmatprep.subr.bf16.mxu0 0
  %4262 = vmatpush1.bf16.msra.mxu0 %v3077
  %4263 = vmatprep.subr.bf16.mxu0 0
  %4264 = vmatpush1.bf16.msra.mxu0 %v3078
  %4265 = vmatprep.subr.bf16.mxu0 0
  %4266 = vmatpush1.bf16.msra.mxu0 %v3079
  %4267 = vmatprep.subr.bf16.mxu0 0
  %4268 = vmatpush1.bf16.msra.mxu0 %v3080
  %4269 = vmatprep.subr.bf16.mxu0 0
  %4270 = vmatpush1.bf16.msra.mxu0 %v3081
  %4271 = vmatprep.subr.bf16.mxu0 0
  %4272 = vmatpush1.bf16.msra.mxu0 %v3082
  %4273 = vmatprep.subr.bf16.mxu0 0
  %4274 = vmatpush1.bf16.msra.mxu0 %v3083
  %4275 = vmatprep.subr.bf16.mxu0 0
  %4276 = vmatpush1.bf16.msra.mxu0 %v3084
  %4277 = vmatprep.subr.bf16.mxu0 0
  %4278 = vmatpush1.bf16.msra.mxu0 %v3085
  %4279 = vmatprep.subr.bf16.mxu0 0
  %4280 = vmatpush1.bf16.msra.mxu0 %v3086
  %4281 = vmatprep.subr.bf16.mxu0 0
  %4282 = vmatpush1.bf16.msra.mxu0 %v3087
  %4283 = vmatprep.subr.bf16.mxu0 0
  %4284 = vmatpush1.bf16.msra.mxu0 %v3088
  %4285 = vmatprep.subr.bf16.mxu0 0
  %4286 = vmatpush1.bf16.msra.mxu0 %v3089
  %4287 = vmatprep.subr.bf16.mxu0 0
  %4288 = vmatpush1.bf16.msra.mxu0 %v3090
  %4289 = vmatprep.subr.bf16.mxu0 0
  %4290 = vmatpush1.bf16.msra.mxu0 %v3091
  %4291 = vmatprep.subr.bf16.mxu0 0
  %4292 = vmatpush1.bf16.msra.mxu0 %v3092
  %4293 = vmatprep.mubr.bf16.mxu0 %v1088
  %4294 = vmatmul.mubr.bf16.gmra.mrb[0].mxu0 %v1074
  %v4295 = vpop.f32.mrb[0].mxu0
  %v4296 = vadd.f32 %v4256, %v4295
  %v4297 = vpop.f32.mrb[0].mxu0
  %v4298 = vpop.f32.mrb[0].mxu0
  %v4299 = vpop.f32.mrb[0].mxu0
  %4300 = vdwg.mxu0
  %4301 = vmatprep.subr.bf16.mxu0 0
  %4302 = vmatpush1.bf16.msra.mxu0 %v3093
  %4303 = vmatprep.subr.bf16.mxu0 0
  %4304 = vmatpush1.bf16.msra.mxu0 %v3094
  %4305 = vmatprep.subr.bf16.mxu0 0
  %4306 = vmatpush1.bf16.msra.mxu0 %v3095
  %4307 = vmatprep.subr.bf16.mxu0 0
  %4308 = vmatpush1.bf16.msra.mxu0 %v3096
  %4309 = vmatprep.subr.bf16.mxu0 0
  %4310 = vmatpush1.bf16.msra.mxu0 %v3097
  %4311 = vmatprep.subr.bf16.mxu0 0
  %4312 = vmatpush1.bf16.msra.mxu0 %v3098
  %4313 = vmatprep.subr.bf16.mxu0 0
  %4314 = vmatpush1.bf16.msra.mxu0 %v3099
  %4315 = vmatprep.subr.bf16.mxu0 0
  %4316 = vmatpush1.bf16.msra.mxu0 %v3100
  %4317 = vmatprep.subr.bf16.mxu0 0
  %4318 = vmatpush1.bf16.msra.mxu0 %v3101
  %4319 = vmatprep.subr.bf16.mxu0 0
  %4320 = vmatpush1.bf16.msra.mxu0 %v3102
  %4321 = vmatprep.subr.bf16.mxu0 0
  %4322 = vmatpush1.bf16.msra.mxu0 %v3103
  %4323 = vmatprep.subr.bf16.mxu0 0
  %4324 = vmatpush1.bf16.msra.mxu0 %v3104
  %4325 = vmatprep.subr.bf16.mxu0 0
  %4326 = vmatpush1.bf16.msra.mxu0 %v3105
  %4327 = vmatprep.subr.bf16.mxu0 0
  %4328 = vmatpush1.bf16.msra.mxu0 %v3106
  %4329 = vmatprep.subr.bf16.mxu0 0
  %4330 = vmatpush1.bf16.msra.mxu0 %v3107
  %4331 = vmatprep.subr.bf16.mxu0 0
  %4332 = vmatpush1.bf16.msra.mxu0 %v3108
  %4333 = vmatprep.mubr.bf16.mxu0 %v1098
  %4334 = vmatmul.mubr.bf16.gmra.mrb[0].mxu0 %v1096
  %v4335 = vpop.f32.mrb[0].mxu0
  %v4336 = vadd.f32 %v4296, %v4335
  %v4337 = vpop.f32.mrb[0].mxu0
  %v4338 = vpop.f32.mrb[0].mxu0
  %v4339 = vpop.f32.mrb[0].mxu0
  %4340 = vdwg.mxu0
  %4341 = vmatprep.subr.bf16.mxu0 0
  %4342 = vmatpush1.bf16.msra.mxu0 %v3109
  %4343 = vmatprep.subr.bf16.mxu0 0
  %4344 = vmatpush1.bf16.msra.mxu0 %v3110
  %4345 = vmatprep.subr.bf16.mxu0 0
  %4346 = vmatpush1.bf16.msra.mxu0 %v3111
  %4347 = vmatprep.subr.bf16.mxu0 0
  %4348 = vmatpush1.bf16.msra.mxu0 %v3112
  %4349 = vmatprep.subr.bf16.mxu0 0
  %4350 = vmatpush1.bf16.msra.mxu0 %v3113
  %4351 = vmatprep.subr.bf16.mxu0 0
  %4352 = vmatpush1.bf16.msra.mxu0 %v3114
  %4353 = vmatprep.subr.bf16.mxu0 0
  %4354 = vmatpush1.bf16.msra.mxu0 %v3115
  %4355 = vmatprep.subr.bf16.mxu0 0
  %4356 = vmatpush1.bf16.msra.mxu0 %v3116
  %4357 = vmatprep.subr.bf16.mxu0 0
  %4358 = vmatpush1.bf16.msra.mxu0 %v3117
  %4359 = vmatprep.subr.bf16.mxu0 0
  %4360 = vmatpush1.bf16.msra.mxu0 %v3118
  %4361 = vmatprep.subr.bf16.mxu0 0
  %4362 = vmatpush1.bf16.msra.mxu0 %v3119
  %4363 = vmatprep.subr.bf16.mxu0 0
  %4364 = vmatpush1.bf16.msra.mxu0 %v3120
  %4365 = vmatprep.subr.bf16.mxu0 0
  %4366 = vmatpush1.bf16.msra.mxu0 %v3121
  %4367 = vmatprep.subr.bf16.mxu0 0
  %4368 = vmatpush1.bf16.msra.mxu0 %v3122
  %4369 = vmatprep.subr.bf16.mxu0 0
  %4370 = vmatpush1.bf16.msra.mxu0 %v3123
  %4371 = vmatprep.subr.bf16.mxu0 0
  %4372 = vmatpush1.bf16.msra.mxu0 %v3124
  %4373 = vmatprep.mubr.bf16.mxu0 %v1095
  %4374 = vmatmul.mubr.bf16.gmra.mrb[0].mxu0 %v1081
  %v4375 = vpop.f32.mrb[0].mxu0
  %v4376 = vadd.f32 %v4336, %v4375
  %v4377 = vpop.f32.mrb[0].mxu0
  %v4378 = vpop.f32.mrb[0].mxu0
  %v4379 = vpop.f32.mrb[0].mxu0
  %4380 = vdwg.mxu0
  %4381 = vmatprep.subr.bf16.mxu0 0
  %4382 = vmatpush1.bf16.msra.mxu0 %v3125
  %4383 = vmatprep.subr.bf16.mxu0 0
  %4384 = vmatpush1.bf16.msra.mxu0 %v3126
  %4385 = vmatprep.subr.bf16.mxu0 0
  %4386 = vmatpush1.bf16.msra.mxu0 %v3127
  %4387 = vmatprep.subr.bf16.mxu0 0
  %4388 = vmatpush1.bf16.msra.mxu0 %v3128
  %4389 = vmatprep.subr.bf16.mxu0 0
  %4390 = vmatpush1.bf16.msra.mxu0 %v3129
  %4391 = vmatprep.subr.bf16.mxu0 0
  %4392 = vmatpush1.bf16.msra.mxu0 %v3130
  %4393 = vmatprep.subr.bf16.mxu0 0
  %4394 = vmatpush1.bf16.msra.mxu0 %v3131
  %4395 = vmatprep.subr.bf16.mxu0 0
  %4396 = vmatpush1.bf16.msra.mxu0 %v3132
  %4397 = vmatprep.subr.bf16.mxu0 0
  %4398 = vmatpush1.bf16.msra.mxu0 %v3133
  %4399 = vmatprep.subr.bf16.mxu0 0
  %4400 = vmatpush1.bf16.msra.mxu0 %v3134
  %4401 = vmatprep.subr.bf16.mxu0 0
  %4402 = vmatpush1.bf16.msra.mxu0 %v3135
  %4403 = vmatprep.subr.bf16.mxu0 0
  %4404 = vmatpush1.bf16.msra.mxu0 %v3136
  %4405 = vmatprep.subr.bf16.mxu0 0
  %4406 = vmatpush1.bf16.msra.mxu0 %v3137
  %4407 = vmatprep.subr.bf16.mxu0 0
  %4408 = vmatpush1.bf16.msra.mxu0 %v3138
  %4409 = vmatprep.subr.bf16.mxu0 0
  %4410 = vmatpush1.bf16.msra.mxu0 %v3139
  %4411 = vmatprep.subr.bf16.mxu0 0
  %4412 = vmatpush1.bf16.msra.mxu0 %v3140
  %4413 = vmatprep.mubr.bf16.mxu0 %v1099
  %4414 = vmatmul.mubr.bf16.gmra.mrb[0].mxu0 %v1097
  %v4415 = vpop.f32.mrb[0].mxu0
  %v4416 = vadd.f32 %v4376, %v4415
  %v4417 = vpop.f32.mrb[0].mxu0
  %v4418 = vpop.f32.mrb[0].mxu0
  %v4419 = vpop.f32.mrb[0].mxu0
  %4420 = vdwg.mxu0
  %4421 = vmatprep.subr.bf16.mxu0 0
  %4422 = vmatpush1.bf16.msra.mxu0 %v3141
  %4423 = vmatprep.subr.bf16.mxu0 0
  %4424 = vmatpush1.bf16.msra.mxu0 %v3142
  %4425 = vmatprep.subr.bf16.mxu0 0
  %4426 = vmatpush1.bf16.msra.mxu0 %v3143
  %4427 = vmatprep.subr.bf16.mxu0 0
  %4428 = vmatpush1.bf16.msra.mxu0 %v3144
  %4429 = vmatprep.subr.bf16.mxu0 0
  %4430 = vmatpush1.bf16.msra.mxu0 %v3145
  %4431 = vmatprep.subr.bf16.mxu0 0
  %4432 = vmatpush1.bf16.msra.mxu0 %v3146
  %4433 = vmatprep.subr.bf16.mxu0 0
  %4434 = vmatpush1.bf16.msra.mxu0 %v3147
  %4435 = vmatprep.subr.bf16.mxu0 0
  %4436 = vmatpush1.bf16.msra.mxu0 %v3148
  %4437 = vmatprep.subr.bf16.mxu0 0
  %4438 = vmatpush1.bf16.msra.mxu0 %v3149
  %4439 = vmatprep.subr.bf16.mxu0 0
  %4440 = vmatpush1.bf16.msra.mxu0 %v3150
  %4441 = vmatprep.subr.bf16.mxu0 0
  %4442 = vmatpush1.bf16.msra.mxu0 %v3151
  %4443 = vmatprep.subr.bf16.mxu0 0
  %4444 = vmatpush1.bf16.msra.mxu0 %v3152
  %4445 = vmatprep.subr.bf16.mxu0 0
  %4446 = vmatpush1.bf16.msra.mxu0 %v3153
  %4447 = vmatprep.subr.bf16.mxu0 0
  %4448 = vmatpush1.bf16.msra.mxu0 %v3154
  %4449 = vmatprep.subr.bf16.mxu0 0
  %4450 = vmatpush1.bf16.msra.mxu0 %v3155
  %4451 = vmatprep.subr.bf16.mxu0 0
  %4452 = vmatpush1.bf16.msra.mxu0 %v3156
  %4453 = vmatprep.mubr.bf16.mxu0 %v1137
  %4454 = vmatmul.mubr.bf16.gmra.mrb[0].mxu0 %v1123
  %v4455 = vpop.f32.mrb[0].mxu0
  %v4456 = vadd.f32 %v4416, %v4455
  %v4457 = vpop.f32.mrb[0].mxu0
  %v4458 = vpop.f32.mrb[0].mxu0
  %v4459 = vpop.f32.mrb[0].mxu0
  %4460 = vdwg.mxu0
  %4461 = vmatprep.subr.bf16.mxu0 0
  %4462 = vmatpush1.bf16.msra.mxu0 %v3157
  %4463 = vmatprep.subr.bf16.mxu0 0
  %4464 = vmatpush1.bf16.msra.mxu0 %v3158
  %4465 = vmatprep.subr.bf16.mxu0 0
  %4466 = vmatpush1.bf16.msra.mxu0 %v3159
  %4467 = vmatprep.subr.bf16.mxu0 0
  %4468 = vmatpush1.bf16.msra.mxu0 %v3160
  %4469 = vmatprep.subr.bf16.mxu0 0
  %4470 = vmatpush1.bf16.msra.mxu0 %v3161
  %4471 = vmatprep.subr.bf16.mxu0 0
  %4472 = vmatpush1.bf16.msra.mxu0 %v3162
  %4473 = vmatprep.subr.bf16.mxu0 0
  %4474 = vmatpush1.bf16.msra.mxu0 %v3163
  %4475 = vmatprep.subr.bf16.mxu0 0
  %4476 = vmatpush1.bf16.msra.mxu0 %v3164
  %4477 = vmatprep.subr.bf16.mxu0 0
  %4478 = vmatpush1.bf16.msra.mxu0 %v3165
  %4479 = vmatprep.subr.bf16.mxu0 0
  %4480 = vmatpush1.bf16.msra.mxu0 %v3166
  %4481 = vmatprep.subr.bf16.mxu0 0
  %4482 = vmatpush1.bf16.msra.mxu0 %v3167
  %4483 = vmatprep.subr.bf16.mxu0 0
  %4484 = vmatpush1.bf16.msra.mxu0 %v3168
  %4485 = vmatprep.subr.bf16.mxu0 0
  %4486 = vmatpush1.bf16.msra.mxu0 %v3169
  %4487 = vmatprep.subr.bf16.mxu0 0
  %4488 = vmatpush1.bf16.msra.mxu0 %v3170
  %4489 = vmatprep.subr.bf16.mxu0 0
  %4490 = vmatpush1.bf16.msra.mxu0 %v3171
  %4491 = vmatprep.subr.bf16.mxu0 0
  %4492 = vmatpush1.bf16.msra.mxu0 %v3172
  %4493 = vmatprep.mubr.bf16.mxu0 %v1147
  %4494 = vmatmul.mubr.bf16.gmra.mrb[0].mxu0 %v1145
  %v4495 = vpop.f32.mrb[0].mxu0
  %v4496 = vadd.f32 %v4456, %v4495
  %v4497 = vpop.f32.mrb[0].mxu0
  %v4498 = vpop.f32.mrb[0].mxu0
  %v4499 = vpop.f32.mrb[0].mxu0
  %4500 = vdwg.mxu0
  %4501 = vmatprep.subr.bf16.mxu0 0
  %4502 = vmatpush1.bf16.msra.mxu0 %v3173
  %4503 = vmatprep.subr.bf16.mxu0 0
  %4504 = vmatpush1.bf16.msra.mxu0 %v3174
  %4505 = vmatprep.subr.bf16.mxu0 0
  %4506 = vmatpush1.bf16.msra.mxu0 %v3175
  %4507 = vmatprep.subr.bf16.mxu0 0
  %4508 = vmatpush1.bf16.msra.mxu0 %v3176
  %4509 = vmatprep.subr.bf16.mxu0 0
  %4510 = vmatpush1.bf16.msra.mxu0 %v3177
  %4511 = vmatprep.subr.bf16.mxu0 0
  %4512 = vmatpush1.bf16.msra.mxu0 %v3178
  %4513 = vmatprep.subr.bf16.mxu0 0
  %4514 = vmatpush1.bf16.msra.mxu0 %v3179
  %4515 = vmatprep.subr.bf16.mxu0 0
  %4516 = vmatpush1.bf16.msra.mxu0 %v3180
  %4517 = vmatprep.subr.bf16.mxu0 0
  %4518 = vmatpush1.bf16.msra.mxu0 %v3181
  %4519 = vmatprep.subr.bf16.mxu0 0
  %4520 = vmatpush1.bf16.msra.mxu0 %v3182
  %4521 = vmatprep.subr.bf16.mxu0 0
  %4522 = vmatpush1.bf16.msra.mxu0 %v3183
  %4523 = vmatprep.subr.bf16.mxu0 0
  %4524 = vmatpush1.bf16.msra.mxu0 %v3184
  %4525 = vmatprep.subr.bf16.mxu0 0
  %4526 = vmatpush1.bf16.msra.mxu0 %v3185
  %4527 = vmatprep.subr.bf16.mxu0 0
  %4528 = vmatpush1.bf16.msra.mxu0 %v3186
  %4529 = vmatprep.subr.bf16.mxu0 0
  %4530 = vmatpush1.bf16.msra.mxu0 %v3187
  %4531 = vmatprep.subr.bf16.mxu0 0
  %4532 = vmatpush1.bf16.msra.mxu0 %v3188
  %4533 = vmatprep.mubr.bf16.mxu0 %v1144
  %4534 = vmatmul.mubr.bf16.gmra.mrb[0].mxu0 %v1130
  %v4535 = vpop.f32.mrb[0].mxu0
  %v4536 = vadd.f32 %v4496, %v4535
  %v4537 = vpop.f32.mrb[0].mxu0
  %v4538 = vpop.f32.mrb[0].mxu0
  %v4539 = vpop.f32.mrb[0].mxu0
  %4540 = vdwg.mxu0
  %4541 = vmatprep.subr.bf16.mxu0 0
  %4542 = vmatpush1.bf16.msra.mxu0 %v3189
  %4543 = vmatprep.subr.bf16.mxu0 0
  %4544 = vmatpush1.bf16.msra.mxu0 %v3190
  %4545 = vmatprep.subr.bf16.mxu0 0
  %4546 = vmatpush1.bf16.msra.mxu0 %v3191
  %4547 = vmatprep.subr.bf16.mxu0 0
  %4548 = vmatpush1.bf16.msra.mxu0 %v3192
  %4549 = vmatprep.subr.bf16.mxu0 0
  %4550 = vmatpush1.bf16.msra.mxu0 %v3193
  %4551 = vmatprep.subr.bf16.mxu0 0
  %4552 = vmatpush1.bf16.msra.mxu0 %v3194
  %4553 = vmatprep.subr.bf16.mxu0 0
  %4554 = vmatpush1.bf16.msra.mxu0 %v3195
  %4555 = vmatprep.subr.bf16.mxu0 0
  %4556 = vmatpush1.bf16.msra.mxu0 %v3196
  %4557 = vmatprep.subr.bf16.mxu0 0
  %4558 = vmatpush1.bf16.msra.mxu0 %v3197
  %4559 = vmatprep.subr.bf16.mxu0 0
  %4560 = vmatpush1.bf16.msra.mxu0 %v3198
  %4561 = vmatprep.subr.bf16.mxu0 0
  %4562 = vmatpush1.bf16.msra.mxu0 %v3199
  %4563 = vmatprep.subr.bf16.mxu0 0
  %4564 = vmatpush1.bf16.msra.mxu0 %v3200
  %4565 = vmatprep.subr.bf16.mxu0 0
  %4566 = vmatpush1.bf16.msra.mxu0 %v3201
  %4567 = vmatprep.subr.bf16.mxu0 0
  %4568 = vmatpush1.bf16.msra.mxu0 %v3202
  %4569 = vmatprep.subr.bf16.mxu0 0
  %4570 = vmatpush1.bf16.msra.mxu0 %v3203
  %4571 = vmatprep.subr.bf16.mxu0 0
  %4572 = vmatpush1.bf16.msra.mxu0 %v3204
  %4573 = vmatprep.mubr.bf16.mxu0 %v1148
  %4574 = vmatmul.mubr.bf16.gmra.mrb[0].mxu0 %v1146
  %v4575 = vpop.f32.mrb[0].mxu0
  %v4576 = vadd.f32 %v4536, %v4575
  %v4577 = vpop.f32.mrb[0].mxu0
  %v4578 = vpop.f32.mrb[0].mxu0
  %v4579 = vpop.f32.mrb[0].mxu0
  %4580 = vdwg.mxu0
  %4581 = vmatprep.subr.bf16.mxu0 0
  %4582 = vmatpush1.bf16.msra.mxu0 %v3205
  %4583 = vmatprep.subr.bf16.mxu0 0
  %4584 = vmatpush1.bf16.msra.mxu0 %v3206
  %4585 = vmatprep.subr.bf16.mxu0 0
  %4586 = vmatpush1.bf16.msra.mxu0 %v3207
  %4587 = vmatprep.subr.bf16.mxu0 0
  %4588 = vmatpush1.bf16.msra.mxu0 %v3208
  %4589 = vmatprep.subr.bf16.mxu0 0
  %4590 = vmatpush1.bf16.msra.mxu0 %v3209
  %4591 = vmatprep.subr.bf16.mxu0 0
  %4592 = vmatpush1.bf16.msra.mxu0 %v3210
  %4593 = vmatprep.subr.bf16.mxu0 0
  %4594 = vmatpush1.bf16.msra.mxu0 %v3211
  %4595 = vmatprep.subr.bf16.mxu0 0
  %4596 = vmatpush1.bf16.msra.mxu0 %v3212
  %4597 = vmatprep.subr.bf16.mxu0 0
  %4598 = vmatpush1.bf16.msra.mxu0 %v3213
  %4599 = vmatprep.subr.bf16.mxu0 0
  %4600 = vmatpush1.bf16.msra.mxu0 %v3214
  %4601 = vmatprep.subr.bf16.mxu0 0
  %4602 = vmatpush1.bf16.msra.mxu0 %v3215
  %4603 = vmatprep.subr.bf16.mxu0 0
  %4604 = vmatpush1.bf16.msra.mxu0 %v3216
  %4605 = vmatprep.subr.bf16.mxu0 0
  %4606 = vmatpush1.bf16.msra.mxu0 %v3217
  %4607 = vmatprep.subr.bf16.mxu0 0
  %4608 = vmatpush1.bf16.msra.mxu0 %v3218
  %4609 = vmatprep.subr.bf16.mxu0 0
  %4610 = vmatpush1.bf16.msra.mxu0 %v3219
  %4611 = vmatprep.subr.bf16.mxu0 0
  %4612 = vmatpush1.bf16.msra.mxu0 %v3220
  %4613 = vmatprep.mubr.bf16.mxu0 %v1170
  %4614 = vmatmul.mubr.bf16.gmra.mrb[0].mxu0 %v1163
  %v4615 = vpop.f32.mrb[0].mxu0
  %v4616 = vadd.f32 %v4576, %v4615
  %v4617 = vpop.f32.mrb[0].mxu0
  %v4618 = vpop.f32.mrb[0].mxu0
  %v4619 = vpop.f32.mrb[0].mxu0
  %4620 = vdwg.mxu0
  %4621 = vset.pattern.permute.xlu0 1
  %4622 = vperm.xlu0 %4621, %v836
  %v4623 = vpop.permute.xlu0 %4622
  %v4625 = vlaneseq
  %v4626 = vshrl.u32 %v4625, 7
  %v4627 = vsub.s32 1, %v4626
  %v4628 = vrot.slane %v837, %v4627
  %v4629 = vmul.f32 %v4623, %v4628
  %v4630 = vadd.f32 %v4616, %v4629
  %4631 = vset.pattern.permute.xlu0 2
  %4632 = vperm.xlu0 %4631, %v836
  %v4633 = vpop.permute.xlu0 %4632
  %v4635 = vlaneseq
  %v4636 = vshrl.u32 %v4635, 7
  %v4637 = vsub.s32 2, %v4636
  %v4638 = vrot.slane %v837, %v4637
  %v4639 = vmul.f32 %v4633, %v4638
  %v4640 = vadd.f32 %v4630, %v4639
  %v4641 = vld [vmem:[%s4] sm:$0x1]
  %v4643 = vlaneseq
  %v4644 = vshrl.u32 %v4643, 7
  %v4645 = vsub.s32 0, %v4644
  %v4646 = vrot.slane %v4641, %v4645
  %v4648 = vadd.f32 %v4640, %v4646
  %v4649 = vmax.f32 %v4648, 0.0
  %v4650 = vld [vmem:[%s5] sm:$0x1]
  %v4652 = vlaneseq
  %v4653 = vshrl.u32 %v4652, 7
  %v4654 = vsub.s32 0, %v4653
  %v4655 = vrot.slane %v4650, %v4654
  %v4657 = vmul.f32 %v4649, %v4655
  %vm4658 = vcmask 1041408
  %v4659 = vsel %vm4658, %v4657, 0.0
  %4660 = vadd.xlane.f32.xlu0 %v4659
  %v4661 = vpop.xlane.xlu0 %4660
  %v4662 = vld [vmem:[#allocation2] sm:$0x1]
  %v4664 = vlaneseq
  %v4665 = vshrl.u32 %v4664, 7
  %v4666 = vsub.s32 0, %v4665
  %v4667 = vrot.slane %v4662, %v4666
  %v4669 = vadd.f32 %v4661, %v4667
  %vm4670 = vcmask 1024
  %4671 = vst.msk [vmem:[%s7] sm:$0x3] %vm4670, %v4669
  // Predicated region
  $region30: #{cnn_critic_forward.7} parent=0 // pred_check
    _
  $region31: #{cnn_critic_forward.7} parent=0 // pred_check_branch
    %4673 = sbr.rel (0) target = $region33
  $region32: #{cnn_critic_forward.7} parent=0 // pred_region
    _
  $region33: #{cnn_critic_forward.7} parent=0 // pred_fallthru
    _
  // Predicated region
  $region34: #{cnn_critic_forward.7} parent=0 // pred_check
    _
  $region35: #{cnn_critic_forward.7} parent=0 // pred_check_branch
    %4675 = sbr.rel (0) target = $region37
  $region36: #{cnn_critic_forward.7} parent=0 // pred_region
    _
  $region37: #{cnn_critic_forward.7} parent=0 // pred_fallthru
    _

</llo_original>
